<compile_context>
chip_gen: v5e
topology: v5e:2x2
jax: 0.10.0
libtpu: 0.0.40
codegen_flags: <defaults>
</compile_context>

<pallas_src>
import functools

import jax
import jax.numpy as jnp
import numpy as np
from jax.experimental import pallas as pl
from jax.experimental.pallas import tpu as pltpu

_VMEM_LIMIT = 32 * 1024 * 1024  # safe on v5e/v6e/v7x; block sizes stay well below it


# ----------------------------------------------------------------------------
# In-kernel math helpers
# ----------------------------------------------------------------------------
def _erf(x):
    # Abramowitz & Stegun 7.1.26 (float32-level accuracy).
    a1, a2, a3, a4, a5 = 0.254829592, -0.284496736, 1.421413741, -1.453152027, 1.061405429
    p = 0.3275911
    z = jnp.abs(x)
    t = 1.0 / (1.0 + p * z)
    poly = ((((a5 * t + a4) * t + a3) * t + a2) * t + a1) * t
    y = 1.0 - poly * jnp.exp(-z * z)
    return jnp.where(x >= 0.0, y, -y)


def _gelu(x):
    # exact (erf-based) GELU, matching torch.nn.GELU() default
    return 0.5 * x * (1.0 + _erf(x * 0.7071067811865476))


def _layernorm(x, g, b, eps=1e-5):
    mu = jnp.mean(x, axis=-1, keepdims=True)
    xc = x - mu
    var = jnp.mean(xc * xc, axis=-1, keepdims=True)
    return xc * jax.lax.rsqrt(var + eps) * g + b


def _rep_spec(a):
    """BlockSpec that keeps a full (small) parameter array resident for all grid steps."""
    zeros = (0,) * a.ndim
    return pl.BlockSpec(a.shape, lambda *_: zeros)


# ----------------------------------------------------------------------------
# Kernel 1: tiled matmul + folded BN/bias (+ GELU)  -- conv1x1 / Linear
# ----------------------------------------------------------------------------
def matmul_affine_kernel(x_ref, w_ref, s_ref, b_ref, o_ref, *, act):
    x = x_ref[...].astype(jnp.bfloat16)                      # bf16 MXU operands
    y = jnp.dot(x, w_ref[...], preferred_element_type=jnp.float32)
    y = y * s_ref[...] + b_ref[...]
    if act:
        y = _gelu(y)
    o_ref[...] = y


def _pick_m_tile(m, target=512):
    """Largest multiple-of-8 divisor of m that is <= target (whole array if small)."""
    if m <= target:
        return m
    for t in range(target, 7, -8):
        if m % t == 0:
            return t
    return m  # fallback: whole array (correctness-safe)


def matmul_affine(x2d, w, scale, bias, act):
    M, K = x2d.shape
    N = w.shape[1]
    tm = _pick_m_tile(M)
    cost = pl.CostEstimate(flops=2 * M * K * N,
                           transcendentals=M * N if act else 0,
                           bytes_accessed=4 * M * K + 2 * K * N + 4 * M * N)
    return pl.pallas_call(
        functools.partial(matmul_affine_kernel, act=act),
        grid=(M // tm,),
        in_specs=[pl.BlockSpec((tm, K), lambda i: (i, 0)),
                  pl.BlockSpec((K, N), lambda i: (0, 0)),
                  pl.BlockSpec((1, N), lambda i: (0, 0)),
                  pl.BlockSpec((1, N), lambda i: (0, 0))],
        out_specs=pl.BlockSpec((tm, N), lambda i: (i, 0)),
        out_shape=jax.ShapeDtypeStruct((M, N), jnp.float32),
        compiler_params=pltpu.CompilerParams(
            dimension_semantics=("parallel",),
            vmem_limit_bytes=_VMEM_LIMIT),
        cost_estimate=cost,
    )(x2d, w, scale, bias)


def conv1x1_bn(x, p, act=True):
    B, H, W, C = x.shape
    y = matmul_affine(x.reshape(B * H * W, C), p["w"], p["scale"], p["bias"], act)
    return y.reshape(B, H, W, -1)


# ----------------------------------------------------------------------------
# Kernel 2: 3x3 conv + folded BN + GELU (+ optional fused residual), 9 fused taps
# ----------------------------------------------------------------------------
def conv3x3_kernel(*refs, act, has_res):
    if has_res:
        x_ref, w_ref, s_ref, b_ref, res_ref, o_ref = refs
    else:
        x_ref, w_ref, s_ref, b_ref, o_ref = refs
        res_ref = None
    _, Hp, Wp, Cin = x_ref.shape
    H, W = Hp - 2, Wp - 2
    Cout = o_ref.shape[-1]
    xp = x_ref[0]                                   # (H+2, W+2, Cin) f32, halo-padded
    w = w_ref[...]                                  # (9, Cin, Cout) bf16
    acc = jnp.zeros((H * W, Cout), jnp.float32)
    # 9 shifted taps accumulated on the MXU (no im2col materialization in HBM).
    # NOTE: the (H, W, C)->(H*W, C) reshape is a layout no-op when W % 8 == 0.
    for kh in range(3):
        for kw in range(3):
            xs = xp[kh:kh + H, kw:kw + W, :].reshape(H * W, Cin).astype(jnp.bfloat16)
            acc = acc + jnp.dot(xs, w[kh * 3 + kw], preferred_element_type=jnp.float32)
    y = acc * s_ref[...] + b_ref[...]
    if act:
        y = _gelu(y)
    y = y.reshape(H, W, Cout)
    if has_res:
        y = y + res_ref[0]
    o_ref[0] = y


def conv3x3_bn(x, p, act=True, residual=None):
    B, H, W, Cin = x.shape
    Cout = p["w"].shape[-1]
    xp = jnp.pad(x, ((0, 0), (1, 1), (1, 1), (0, 0)))   # 1-px halo (cheap vs 9x im2col)
    has_res = residual is not None
    in_specs = [pl.BlockSpec((1, H + 2, W + 2, Cin), lambda b: (b, 0, 0, 0)),
                pl.BlockSpec((9, Cin, Cout), lambda b: (0, 0, 0)),
                pl.BlockSpec((1, Cout), lambda b: (0, 0)),
                pl.BlockSpec((1, Cout), lambda b: (0, 0))]
    args = [xp, p["w"], p["scale"], p["bias"]]
    if has_res:
        in_specs.append(pl.BlockSpec((1, H, W, Cout), lambda b: (b, 0, 0, 0)))
        args.append(residual)
    return pl.pallas_call(
        functools.partial(conv3x3_kernel, act=act, has_res=has_res),
        grid=(B,),
        in_specs=in_specs,
        out_specs=pl.BlockSpec((1, H, W, Cout), lambda b: (b, 0, 0, 0)),
        out_shape=jax.ShapeDtypeStruct((B, H, W, Cout), jnp.float32),
        compiler_params=pltpu.CompilerParams(
            dimension_semantics=("parallel",),
            vmem_limit_bytes=_VMEM_LIMIT),
    )(*args)


# ----------------------------------------------------------------------------
# Kernel 3: one fused LiteVit transformer layer per pallas_call
#   LN1 -> QKV -> per-head softmax(QK^T)V -> out-proj -> +res -> LN2 -> FFN -> +res
# ----------------------------------------------------------------------------
def vit_layer_kernel(x_ref, ln1g_ref, ln1b_ref, wqkv_ref, wout_ref, bout_ref,
                     ln2g_ref, ln2b_ref, wff1_ref, bff1_ref, wff2_ref, bff2_ref,
                     o_ref, *, heads, dim_head, scale):
    x = x_ref[0]                                     # (N, D) f32
    N, D = x.shape
    inner = heads * dim_head

    # ---- attention branch (PreNorm) ----
    xn = _layernorm(x, ln1g_ref[...], ln1b_ref[...])
    qkv = jnp.dot(xn.astype(jnp.bfloat16), wqkv_ref[...],
                  preferred_element_type=jnp.float32)          # (N, 3*inner)
    wout = wout_ref[...]                                       # (inner, D) bf16
    acc = jnp.zeros((N, D), jnp.float32)
    for h in range(heads):
        lo = h * dim_head
        q = qkv[:, lo:lo + dim_head]
        k = qkv[:, inner + lo:inner + lo + dim_head]
        v = qkv[:, 2 * inner + lo:2 * inner + lo + dim_head]
        s = jax.lax.dot_general(q, k, (((1,), (1,)), ((), ())),
                                preferred_element_type=jnp.float32) * scale
        s = s - jnp.max(s, axis=-1, keepdims=True)
        p = jnp.exp(s)
        p = p * pl.reciprocal(jnp.sum(p, axis=-1, keepdims=True), approx=True)
        o_h = jnp.dot(p, v, preferred_element_type=jnp.float32)        # (N, dh)
        # fold each head straight through its slice of the output projection
        # (avoids an in-kernel concat and any HBM head-split transposes)
        acc = acc + jnp.dot(o_h.astype(jnp.bfloat16), wout[lo:lo + dim_head, :],
                            preferred_element_type=jnp.float32)
    t = x + acc + bout_ref[...]

    # ---- feed-forward branch (PreNorm) ----
    tn = _layernorm(t, ln2g_ref[...], ln2b_ref[...])
    h1 = _gelu(jnp.dot(tn.astype(jnp.bfloat16), wff1_ref[...],
                       preferred_element_type=jnp.float32) + bff1_ref[...])
    h2 = jnp.dot(h1.astype(jnp.bfloat16), wff2_ref[...],
                 preferred_element_type=jnp.float32) + bff2_ref[...]
    o_ref[0] = t + h2


def vit_layer(t, lp, heads, dim_head):
    G, N, D = t.shape
    scale = float(dim_head) ** -0.5
    slab = pl.BlockSpec((1, N, D), lambda g: (g, 0, 0))
    args = [t,
            lp["ln1"]["g"], lp["ln1"]["b"], lp["qkv"]["w"],
            lp["out"]["w"], lp["out"]["bias"],
            lp["ln2"]["g"], lp["ln2"]["b"],
            lp["ff1"]["w"], lp["ff1"]["bias"],
            lp["ff2"]["w"], lp["ff2"]["bias"]]
    in_specs = [slab] + [_rep_spec(a) for a in args[1:]]
    return pl.pallas_call(
        functools.partial(vit_layer_kernel, heads=heads, dim_head=dim_head, scale=scale),
        grid=(G,),
        in_specs=in_specs,
        out_specs=slab,
        out_shape=jax.ShapeDtypeStruct((G, N, D), jnp.float32),
        compiler_params=pltpu.CompilerParams(
            dimension_semantics=("parallel",),
            vmem_limit_bytes=_VMEM_LIMIT),
    )(*args)


# ----------------------------------------------------------------------------
# Kernel 4: fused InvResConv (pw1 -> dw3x3 -> pw2 -> +x) + Squeeze-Excite
# ----------------------------------------------------------------------------
def invres_se_kernel(x_ref, w1_ref, s1_ref, b1_ref, wdw_ref, sdw_ref, bdw_ref,
                     w2_ref, s2_ref, b2_ref, wse1_ref, wse2_ref, o_ref, hpad_ref):
    _, H, W, C = x_ref.shape
    Ch = w1_ref.shape[1]                            # hidden = expansion * C
    LP = 8                                          # sublane-aligned left halo pad
    x3 = x_ref[0]                                   # (H, W, C)
    x2d = x3.reshape(H * W, C)

    # pw1: 1x1 conv + folded BN + GELU -- the 4x hidden tensor stays in VMEM
    h = _gelu(jnp.dot(x2d.astype(jnp.bfloat16), w1_ref[...],
                      preferred_element_type=jnp.float32) * s1_ref[...] + b1_ref[...])

    # depthwise 3x3 + folded BN + GELU via a zero halo in a VMEM scratch
    hpad_ref[...] = jnp.zeros_like(hpad_ref)
    hpad_ref[1:H + 1, LP:LP + W, :] = h.reshape(H, W, Ch)   # aligned interior store
    hp = hpad_ref[...]
    acc = jnp.zeros((H, W, Ch), jnp.float32)
    for kh in range(3):
        for kw in range(3):
            acc = acc + hp[kh:kh + H, LP - 1 + kw:LP - 1 + kw + W, :] * wdw_ref[kh * 3 + kw]
    hd = _gelu(acc * sdw_ref[...].reshape(1, 1, Ch) + bdw_ref[...].reshape(1, 1, Ch))

    # pw2: 1x1 conv + folded BN (no act), fused residual (use_res_connect)
    y = jnp.dot(hd.reshape(H * W, Ch).astype(jnp.bfloat16), w2_ref[...],
                preferred_element_type=jnp.float32) * s2_ref[...] + b2_ref[...]
    y = y + x2d

    # Squeeze-Excite (global avg pool -> fc1 -> GELU -> fc2 -> sigmoid -> scale)
    pooled = jnp.sum(y, axis=0, keepdims=True) * (1.0 / (H * W))                 # (1, C)
    h_se = _gelu(jnp.sum(pooled * wse1_ref[...], axis=1, keepdims=True))         # (Cr, 1)
    gate = jax.nn.sigmoid(jnp.sum(h_se * wse2_ref[...], axis=0, keepdims=True))  # (1, C)
    o_ref[0] = (y * gate).reshape(H, W, C)


def invres_se(x, pmv, pse):
    B, H, W, C = x.shape
    Ch = pmv["pw1"]["w"].shape[1]
    xspec = pl.BlockSpec((1, H, W, C), lambda b: (b, 0, 0, 0))
    args = [x,
            pmv["pw1"]["w"], pmv["pw1"]["scale"], pmv["pw1"]["bias"],
            pmv["dw"]["w"], pmv["dw"]["scale"], pmv["dw"]["bias"],
            pmv["pw2"]["w"], pmv["pw2"]["scale"], pmv["pw2"]["bias"],
            pse["w1"], pse["w2"]]
    in_specs = [xspec] + [_rep_spec(a) for a in args[1:]]
    return pl.pallas_call(
        invres_se_kernel,
        grid=(B,),
        in_specs=in_specs,
        out_specs=xspec,
        out_shape=jax.ShapeDtypeStruct((B, H, W, C), jnp.float32),
        scratch_shapes=[pltpu.VMEM((H + 2, W + 16, Ch), jnp.float32)],
        compiler_params=pltpu.CompilerParams(
            dimension_semantics=("parallel",),
            vmem_limit_bytes=_VMEM_LIMIT),
    )(*args)


# ----------------------------------------------------------------------------
# Module forward (composition; mirrors the PyTorch control flow)
# ----------------------------------------------------------------------------
def mixvit_forward(x, p, ph=2, pw=2, heads=4, dim_head=8):
    y = x
    h1 = conv3x3_bn(x, p["conv1"], act=True)
    h2 = conv1x1_bn(h1, p["conv2"], act=True)
    z = h2
    B, H, W, D = h2.shape
    Hh, Wh = H // ph, W // pw
    # rearrange 'b d (h ph) (w pw) -> b (ph pw) (h w) d'  (NHWC equivalent),
    # flattened to (B*ph*pw, h*w, d) slabs for the fused transformer kernel.
    t = h2.reshape(B, Hh, ph, Wh, pw, D).transpose(0, 2, 4, 1, 3, 5)
    t = t.reshape(B * ph * pw, Hh * Wh, D)
    for lp in p["layers"]:
        t = vit_layer(t, lp, heads, dim_head)
    h3 = t.reshape(B, ph, pw, Hh, Wh, D).transpose(0, 3, 1, 4, 2, 5).reshape(B, H, W, D)
    h3 = conv1x1_bn(h3, p["conv3"], act=True)
    hc = jnp.concatenate([h3, z], axis=-1)
    h4 = conv3x3_bn(hc, p["conv4"], act=True, residual=y)   # "+ y" fused in-kernel
    return invres_se(h4, p["mv01"], p["se"])                # mv01 + SE fused


def cvta_forward(x_nchw, params):
    x = jnp.transpose(x_nchw, (0, 2, 3, 1)).astype(jnp.float32)   # NCHW -> NHWC
    y = conv1x1_bn(x, params["cv1"], act=True)
    c = y.shape[-1] // 2
    a, b = y[..., :c], y[..., c:]                                  # chunk(2, dim=channel)
    for mp in params["m"]:
        a = mixvit_forward(a, mp)
    out = conv1x1_bn(jnp.concatenate([a, b], axis=-1), params["cv2"], act=True)
    # TODO(synk): nn.Dropout after cv2 is identity in eval mode (no RNG applied).
    return jnp.transpose(out, (0, 3, 1, 2))                        # back to NCHW


# ----------------------------------------------------------------------------
# Deterministic synthetic parameter initialization (BN folded; matmul weights bf16)
# ----------------------------------------------------------------------------
def _bn_fold(key, cout, eps=1e-5):
    k1, k2, k3, k4 = jax.random.split(key, 4)
    gamma = 1.0 + 0.1 * jax.random.normal(k1, (cout,), jnp.float32)
    beta = 0.1 * jax.random.normal(k2, (cout,), jnp.float32)
    mean = 0.1 * jax.random.normal(k3, (cout,), jnp.float32)
    var = 1.0 + 0.1 * jax.random.uniform(k4, (cout,), jnp.float32)
    scale = gamma / jnp.sqrt(var + eps)
    bias = beta - mean * scale
    return scale.reshape(1, -1), bias.reshape(1, -1)


def init_conv_bn(key, cin, cout, k=1):
    kw, kb = jax.random.split(key)
    if k == 1:
        w = jax.random.normal(kw, (cin, cout), jnp.float32) / np.sqrt(cin)
    else:
        w = jax.random.normal(kw, (k * k, cin, cout), jnp.float32) / np.sqrt(cin * k * k)
    s, b = _bn_fold(kb, cout)
    return {"w": w.astype(jnp.bfloat16), "scale": s, "bias": b}


def init_dwconv_bn(key, c):
    kw, kb = jax.random.split(key)
    w = jax.random.normal(kw, (9, c), jnp.float32) / 3.0
    s, b = _bn_fold(kb, c)
    return {"w": w, "scale": s, "bias": b}


def init_linear(key, fin, fout, bias=True):
    kw, kb = jax.random.split(key)
    w = (jax.random.normal(kw, (fin, fout), jnp.float32) / np.sqrt(fin)).astype(jnp.bfloat16)
    out = {"w": w}
    if bias:
        out["bias"] = (0.1 * jax.random.normal(kb, (fout,), jnp.float32)).reshape(1, fout)
    return out


def init_layernorm(key, d):
    k1, k2 = jax.random.split(key)
    return {"g": (1.0 + 0.1 * jax.random.normal(k1, (d,), jnp.float32)).reshape(1, d),
            "b": (0.1 * jax.random.normal(k2, (d,), jnp.float32)).reshape(1, d)}


def init_mixvit(key, ch, dim, depth=2, mlp_dim=128, heads=4, dim_head=8, reduction=16):
    keys = jax.random.split(key, 12)
    layers = []
    for i in range(depth):
        lk = jax.random.split(keys[6 + i], 6)
        layers.append({
            "ln1": init_layernorm(lk[0], dim),
            "qkv": init_linear(lk[1], dim, 3 * heads * dim_head, bias=False),
            "out": init_linear(lk[2], heads * dim_head, dim, bias=True),
            "ln2": init_layernorm(lk[3], dim),
            "ff1": init_linear(lk[4], dim, mlp_dim, bias=True),
            "ff2": init_linear(lk[5], mlp_dim, dim, bias=True),
        })
    hidden = ch * 4
    cr = max(ch // reduction, 1)
    return {
        "conv1": init_conv_bn(keys[0], ch, ch, 3),
        "conv2": init_conv_bn(keys[1], ch, dim, 1),
        "conv3": init_conv_bn(keys[2], dim, ch, 1),
        "conv4": init_conv_bn(keys[3], 2 * ch, ch, 3),
        "layers": layers,
        "mv01": {"pw1": init_conv_bn(keys[4], ch, hidden, 1),
                 "dw": init_dwconv_bn(keys[5], hidden),
                 "pw2": init_conv_bn(keys[8], hidden, ch, 1)},
        # w1: (Cr, C) == Linear(C, Cr).weight ; w2: (Cr, C) == Linear(Cr, C).weight.T
        "se": {"w1": jax.random.normal(keys[9], (cr, ch), jnp.float32) / np.sqrt(ch),
               "w2": jax.random.normal(keys[10], (cr, ch), jnp.float32) / np.sqrt(cr)},
    }


def init_cvta(key, c1, c2, n=1, e=0.5):
    c = int(c2 * e)
    k1, k2, k3 = jax.random.split(key, 3)
    return {
        "cv1": init_conv_bn(k1, c1, 2 * c, 1),
        "cv2": init_conv_bn(k2, 2 * c, c2, 1),
        "m": [init_mixvit(jax.random.fold_in(k3, i), c, c) for i in range(n)],
    }


# ----------------------------------------------------------------------------
if __name__ == "__main__":
    key = jax.random.PRNGKey(0)
    kx, kp = jax.random.split(key)

    # small shapes: B=2, c1=16, c2=32 (-> self.c = 16), spatial 8x8 (even for 2x2 patches)
    B, c1, c2, H, W = 2, 16, 32, 8, 8
    x = jax.random.normal(kx, (B, c1, H, W), jnp.float32)   # NCHW, like PyTorch
    params = init_cvta(kp, c1, c2, n=1, e=0.5)

    fwd = jax.jit(cvta_forward)
    out = jax.block_until_ready(fwd(x, params))

    assert out.shape == (B, c2, H, W), out.shape
    assert bool(jnp.all(jnp.isfinite(out)))
    print("KERNEL_OK")
</pallas_src>

<mosaic_0001>
module attributes {stable_mosaic.version = 11 : i64} {
  func.func @conv3x3_kernel(%arg0: i32, %arg1: memref<1x10x10x16xf32, #tpu.memory_space<vmem>>, %arg2: memref<9x16x16xbf16, #tpu.memory_space<vmem>>, %arg3: memref<1x16xf32, #tpu.memory_space<vmem>>, %arg4: memref<1x16xf32, #tpu.memory_space<vmem>>, %arg5: memref<1x8x8x16xf32, #tpu.memory_space<vmem>>) attributes {dimension_semantics = [#tpu.dimension_semantics<parallel>], iteration_bounds = array<i64: 2>, scalar_prefetch = 0 : i64, scratch_operands = 0 : i64, tpu.core_type = #tpu.core_type<tc>, window_params = [{transform_indices = @transform_0, window_bounds = array<i64: 1, 10, 10, 16>}, {pipeline_mode = #tpu.pipeline_mode<synchronous>, transform_indices = @transform_1, window_bounds = array<i64: 9, 16, 16>}, {pipeline_mode = #tpu.pipeline_mode<synchronous>, transform_indices = @transform_2, window_bounds = array<i64: 1, 16>}, {pipeline_mode = #tpu.pipeline_mode<synchronous>, transform_indices = @transform_3, window_bounds = array<i64: 1, 16>}, {transform_indices = @transform_4, window_bounds = array<i64: 1, 8, 8, 16>}]} {
    %c0 = arith.constant 0 : index
    %c0_0 = arith.constant 0 : index
    %c0_1 = arith.constant 0 : index
    %c0_2 = arith.constant 0 : index
    %0 = vector.load %arg1[%c0, %c0_0, %c0_1, %c0_2] : memref<1x10x10x16xf32, #tpu.memory_space<vmem>>, vector<1x10x10x16xf32>
    %1 = vector.shape_cast %0 : vector<1x10x10x16xf32> to vector<10x10x16xf32>
    %c0_3 = arith.constant 0 : index
    %c0_4 = arith.constant 0 : index
    %c0_5 = arith.constant 0 : index
    %2 = vector.load %arg2[%c0_3, %c0_4, %c0_5] : memref<9x16x16xbf16, #tpu.memory_space<vmem>>, vector<9x16x16xbf16>
    %cst = arith.constant 0.000000e+00 : f32
    %3 = vector.broadcast %cst : f32 to vector<64x16xf32>
    %4 = vector.extract_strided_slice %1 {offsets = [0, 0, 0], sizes = [8, 8, 16], strides = [1, 1, 1]} : vector<10x10x16xf32> to vector<8x8x16xf32>
    %5 = vector.shape_cast %4 : vector<8x8x16xf32> to vector<64x16xf32>
    %6 = arith.truncf %5 : vector<64x16xf32> to vector<64x16xbf16>
    %7 = vector.extract_strided_slice %2 {offsets = [0, 0, 0], sizes = [1, 16, 16], strides = [1, 1, 1]} : vector<9x16x16xbf16> to vector<1x16x16xbf16>
    %8 = vector.shape_cast %7 : vector<1x16x16xbf16> to vector<16x16xbf16>
    %cst_6 = arith.constant dense<0.000000e+00> : vector<64x16xf32>
    %9 = tpu.matmul %6, %8, %cst_6 {dimension_numbers = #tpu.dot_dimension_numbers<[1], [0], [0], [1], [0, 0, 1, 1], [], []>} : vector<64x16xbf16>, vector<16x16xbf16>, vector<64x16xf32> -> vector<64x16xf32>
    %10 = arith.addf %3, %9 : vector<64x16xf32>
    %11 = vector.extract_strided_slice %1 {offsets = [0, 1, 0], sizes = [8, 8, 16], strides = [1, 1, 1]} : vector<10x10x16xf32> to vector<8x8x16xf32>
    %12 = vector.shape_cast %11 : vector<8x8x16xf32> to vector<64x16xf32>
    %13 = arith.truncf %12 : vector<64x16xf32> to vector<64x16xbf16>
    %14 = vector.extract_strided_slice %2 {offsets = [1, 0, 0], sizes = [1, 16, 16], strides = [1, 1, 1]} : vector<9x16x16xbf16> to vector<1x16x16xbf16>
    %15 = vector.shape_cast %14 : vector<1x16x16xbf16> to vector<16x16xbf16>
    %cst_7 = arith.constant dense<0.000000e+00> : vector<64x16xf32>
    %16 = tpu.matmul %13, %15, %cst_7 {dimension_numbers = #tpu.dot_dimension_numbers<[1], [0], [0], [1], [0, 0, 1, 1], [], []>} : vector<64x16xbf16>, vector<16x16xbf16>, vector<64x16xf32> -> vector<64x16xf32>
    %17 = arith.addf %10, %16 : vector<64x16xf32>
    %18 = vector.extract_strided_slice %1 {offsets = [0, 2, 0], sizes = [8, 8, 16], strides = [1, 1, 1]} : vector<10x10x16xf32> to vector<8x8x16xf32>
    %19 = vector.shape_cast %18 : vector<8x8x16xf32> to vector<64x16xf32>
    %20 = arith.truncf %19 : vector<64x16xf32> to vector<64x16xbf16>
    %21 = vector.extract_strided_slice %2 {offsets = [2, 0, 0], sizes = [1, 16, 16], strides = [1, 1, 1]} : vector<9x16x16xbf16> to vector<1x16x16xbf16>
    %22 = vector.shape_cast %21 : vector<1x16x16xbf16> to vector<16x16xbf16>
    %cst_8 = arith.constant dense<0.000000e+00> : vector<64x16xf32>
    %23 = tpu.matmul %20, %22, %cst_8 {dimension_numbers = #tpu.dot_dimension_numbers<[1], [0], [0], [1], [0, 0, 1, 1], [], []>} : vector<64x16xbf16>, vector<16x16xbf16>, vector<64x16xf32> -> vector<64x16xf32>
    %24 = arith.addf %17, %23 : vector<64x16xf32>
    %25 = vector.extract_strided_slice %1 {offsets = [1, 0, 0], sizes = [8, 8, 16], strides = [1, 1, 1]} : vector<10x10x16xf32> to vector<8x8x16xf32>
    %26 = vector.shape_cast %25 : vector<8x8x16xf32> to vector<64x16xf32>
    %27 = arith.truncf %26 : vector<64x16xf32> to vector<64x16xbf16>
    %28 = vector.extract_strided_slice %2 {offsets = [3, 0, 0], sizes = [1, 16, 16], strides = [1, 1, 1]} : vector<9x16x16xbf16> to vector<1x16x16xbf16>
    %29 = vector.shape_cast %28 : vector<1x16x16xbf16> to vector<16x16xbf16>
    %cst_9 = arith.constant dense<0.000000e+00> : vector<64x16xf32>
    %30 = tpu.matmul %27, %29, %cst_9 {dimension_numbers = #tpu.dot_dimension_numbers<[1], [0], [0], [1], [0, 0, 1, 1], [], []>} : vector<64x16xbf16>, vector<16x16xbf16>, vector<64x16xf32> -> vector<64x16xf32>
    %31 = arith.addf %24, %30 : vector<64x16xf32>
    %32 = vector.extract_strided_slice %1 {offsets = [1, 1, 0], sizes = [8, 8, 16], strides = [1, 1, 1]} : vector<10x10x16xf32> to vector<8x8x16xf32>
    %33 = vector.shape_cast %32 : vector<8x8x16xf32> to vector<64x16xf32>
    %34 = arith.truncf %33 : vector<64x16xf32> to vector<64x16xbf16>
    %35 = vector.extract_strided_slice %2 {offsets = [4, 0, 0], sizes = [1, 16, 16], strides = [1, 1, 1]} : vector<9x16x16xbf16> to vector<1x16x16xbf16>
    %36 = vector.shape_cast %35 : vector<1x16x16xbf16> to vector<16x16xbf16>
    %cst_10 = arith.constant dense<0.000000e+00> : vector<64x16xf32>
    %37 = tpu.matmul %34, %36, %cst_10 {dimension_numbers = #tpu.dot_dimension_numbers<[1], [0], [0], [1], [0, 0, 1, 1], [], []>} : vector<64x16xbf16>, vector<16x16xbf16>, vector<64x16xf32> -> vector<64x16xf32>
    %38 = arith.addf %31, %37 : vector<64x16xf32>
    %39 = vector.extract_strided_slice %1 {offsets = [1, 2, 0], sizes = [8, 8, 16], strides = [1, 1, 1]} : vector<10x10x16xf32> to vector<8x8x16xf32>
    %40 = vector.shape_cast %39 : vector<8x8x16xf32> to vector<64x16xf32>
    %41 = arith.truncf %40 : vector<64x16xf32> to vector<64x16xbf16>
    %42 = vector.extract_strided_slice %2 {offsets = [5, 0, 0], sizes = [1, 16, 16], strides = [1, 1, 1]} : vector<9x16x16xbf16> to vector<1x16x16xbf16>
    %43 = vector.shape_cast %42 : vector<1x16x16xbf16> to vector<16x16xbf16>
    %cst_11 = arith.constant dense<0.000000e+00> : vector<64x16xf32>
    %44 = tpu.matmul %41, %43, %cst_11 {dimension_numbers = #tpu.dot_dimension_numbers<[1], [0], [0], [1], [0, 0, 1, 1], [], []>} : vector<64x16xbf16>, vector<16x16xbf16>, vector<64x16xf32> -> vector<64x16xf32>
    %45 = arith.addf %38, %44 : vector<64x16xf32>
    %46 = vector.extract_strided_slice %1 {offsets = [2, 0, 0], sizes = [8, 8, 16], strides = [1, 1, 1]} : vector<10x10x16xf32> to vector<8x8x16xf32>
    %47 = vector.shape_cast %46 : vector<8x8x16xf32> to vector<64x16xf32>
    %48 = arith.truncf %47 : vector<64x16xf32> to vector<64x16xbf16>
    %49 = vector.extract_strided_slice %2 {offsets = [6, 0, 0], sizes = [1, 16, 16], strides = [1, 1, 1]} : vector<9x16x16xbf16> to vector<1x16x16xbf16>
    %50 = vector.shape_cast %49 : vector<1x16x16xbf16> to vector<16x16xbf16>
    %cst_12 = arith.constant dense<0.000000e+00> : vector<64x16xf32>
    %51 = tpu.matmul %48, %50, %cst_12 {dimension_numbers = #tpu.dot_dimension_numbers<[1], [0], [0], [1], [0, 0, 1, 1], [], []>} : vector<64x16xbf16>, vector<16x16xbf16>, vector<64x16xf32> -> vector<64x16xf32>
    %52 = arith.addf %45, %51 : vector<64x16xf32>
    %53 = vector.extract_strided_slice %1 {offsets = [2, 1, 0], sizes = [8, 8, 16], strides = [1, 1, 1]} : vector<10x10x16xf32> to vector<8x8x16xf32>
    %54 = vector.shape_cast %53 : vector<8x8x16xf32> to vector<64x16xf32>
    %55 = arith.truncf %54 : vector<64x16xf32> to vector<64x16xbf16>
    %56 = vector.extract_strided_slice %2 {offsets = [7, 0, 0], sizes = [1, 16, 16], strides = [1, 1, 1]} : vector<9x16x16xbf16> to vector<1x16x16xbf16>
    %57 = vector.shape_cast %56 : vector<1x16x16xbf16> to vector<16x16xbf16>
    %cst_13 = arith.constant dense<0.000000e+00> : vector<64x16xf32>
    %58 = tpu.matmul %55, %57, %cst_13 {dimension_numbers = #tpu.dot_dimension_numbers<[1], [0], [0], [1], [0, 0, 1, 1], [], []>} : vector<64x16xbf16>, vector<16x16xbf16>, vector<64x16xf32> -> vector<64x16xf32>
    %59 = arith.addf %52, %58 : vector<64x16xf32>
    %60 = vector.extract_strided_slice %1 {offsets = [2, 2, 0], sizes = [8, 8, 16], strides = [1, 1, 1]} : vector<10x10x16xf32> to vector<8x8x16xf32>
    %61 = vector.shape_cast %60 : vector<8x8x16xf32> to vector<64x16xf32>
    %62 = arith.truncf %61 : vector<64x16xf32> to vector<64x16xbf16>
    %63 = vector.extract_strided_slice %2 {offsets = [8, 0, 0], sizes = [1, 16, 16], strides = [1, 1, 1]} : vector<9x16x16xbf16> to vector<1x16x16xbf16>
    %64 = vector.shape_cast %63 : vector<1x16x16xbf16> to vector<16x16xbf16>
    %cst_14 = arith.constant dense<0.000000e+00> : vector<64x16xf32>
    %65 = tpu.matmul %62, %64, %cst_14 {dimension_numbers = #tpu.dot_dimension_numbers<[1], [0], [0], [1], [0, 0, 1, 1], [], []>} : vector<64x16xbf16>, vector<16x16xbf16>, vector<64x16xf32> -> vector<64x16xf32>
    %66 = arith.addf %59, %65 : vector<64x16xf32>
    %c0_15 = arith.constant 0 : index
    %c0_16 = arith.constant 0 : index
    %67 = vector.load %arg3[%c0_15, %c0_16] : memref<1x16xf32, #tpu.memory_space<vmem>>, vector<1x16xf32>
    %68 = vector.broadcast %67 : vector<1x16xf32> to vector<64x16xf32>
    %69 = arith.mulf %66, %68 : vector<64x16xf32>
    %c0_17 = arith.constant 0 : index
    %c0_18 = arith.constant 0 : index
    %70 = vector.load %arg4[%c0_17, %c0_18] : memref<1x16xf32, #tpu.memory_space<vmem>>, vector<1x16xf32>
    %71 = vector.broadcast %70 : vector<1x16xf32> to vector<64x16xf32>
    %72 = arith.addf %69, %71 : vector<64x16xf32>
    %cst_19 = arith.constant 5.000000e-01 : f32
    %73 = vector.broadcast %cst_19 : f32 to vector<64x16xf32>
    %74 = arith.mulf %73, %72 : vector<64x16xf32>
    %cst_20 = arith.constant 0.707106769 : f32
    %75 = vector.broadcast %cst_20 : f32 to vector<64x16xf32>
    %76 = arith.mulf %72, %75 : vector<64x16xf32>
    %77 = math.absf %76 : vector<64x16xf32>
    %cst_21 = arith.constant 0.327591091 : f32
    %78 = vector.broadcast %cst_21 : f32 to vector<64x16xf32>
    %79 = arith.mulf %78, %77 : vector<64x16xf32>
    %cst_22 = arith.constant 1.000000e+00 : f32
    %80 = vector.broadcast %cst_22 : f32 to vector<64x16xf32>
    %81 = arith.addf %80, %79 : vector<64x16xf32>
    %cst_23 = arith.constant 1.000000e+00 : f32
    %82 = vector.broadcast %cst_23 : f32 to vector<64x16xf32>
    %83 = arith.divf %82, %81 : vector<64x16xf32>
    %cst_24 = arith.constant 1.06140542 : f32
    %84 = vector.broadcast %cst_24 : f32 to vector<64x16xf32>
    %85 = arith.mulf %84, %83 : vector<64x16xf32>
    %cst_25 = arith.constant -1.45315206 : f32
    %86 = vector.broadcast %cst_25 : f32 to vector<64x16xf32>
    %87 = arith.addf %85, %86 : vector<64x16xf32>
    %88 = arith.mulf %87, %83 : vector<64x16xf32>
    %cst_26 = arith.constant 1.42141378 : f32
    %89 = vector.broadcast %cst_26 : f32 to vector<64x16xf32>
    %90 = arith.addf %88, %89 : vector<64x16xf32>
    %91 = arith.mulf %90, %83 : vector<64x16xf32>
    %cst_27 = arith.constant -0.284496725 : f32
    %92 = vector.broadcast %cst_27 : f32 to vector<64x16xf32>
    %93 = arith.addf %91, %92 : vector<64x16xf32>
    %94 = arith.mulf %93, %83 : vector<64x16xf32>
    %cst_28 = arith.constant 0.254829586 : f32
    %95 = vector.broadcast %cst_28 : f32 to vector<64x16xf32>
    %96 = arith.addf %94, %95 : vector<64x16xf32>
    %97 = arith.mulf %96, %83 : vector<64x16xf32>
    %cst_29 = arith.constant 0.000000e+00 : f32
    %98 = vector.broadcast %cst_29 : f32 to vector<64x16xf32>
    %99 = arith.subf %98, %77 : vector<64x16xf32>
    %100 = arith.mulf %99, %77 : vector<64x16xf32>
    %101 = math.exp %100 : vector<64x16xf32>
    %102 = arith.mulf %97, %101 : vector<64x16xf32>
    %cst_30 = arith.constant 1.000000e+00 : f32
    %103 = vector.broadcast %cst_30 : f32 to vector<64x16xf32>
    %104 = arith.subf %103, %102 : vector<64x16xf32>
    %cst_31 = arith.constant 0.000000e+00 : f32
    %105 = vector.broadcast %cst_31 : f32 to vector<64x16xf32>
    %106 = arith.cmpf oge, %76, %105 : vector<64x16xf32>
    %cst_32 = arith.constant 0.000000e+00 : f32
    %107 = vector.broadcast %cst_32 : f32 to vector<64x16xf32>
    %108 = arith.subf %107, %104 : vector<64x16xf32>
    %109 = arith.select %106, %104, %108 : vector<64x16xi1>, vector<64x16xf32>
    %cst_33 = arith.constant 1.000000e+00 : f32
    %110 = vector.broadcast %cst_33 : f32 to vector<64x16xf32>
    %111 = arith.addf %110, %109 : vector<64x16xf32>
    %112 = arith.mulf %74, %111 : vector<64x16xf32>
    %113 = vector.shape_cast %112 : vector<64x16xf32> to vector<8x8x16xf32>
    %c0_34 = arith.constant 0 : index
    %c0_35 = arith.constant 0 : index
    %c0_36 = arith.constant 0 : index
    %c0_37 = arith.constant 0 : index
    %114 = vector.load %arg5[%c0_34, %c0_35, %c0_36, %c0_37] : memref<1x8x8x16xf32, #tpu.memory_space<vmem>>, vector<1x8x8x16xf32>
    %115 = vector.shape_cast %114 : vector<1x8x8x16xf32> to vector<8x8x16xf32>
    %116 = vector.shape_cast %113 : vector<8x8x16xf32> to vector<1x8x8x16xf32>
    tpu.vector_store %arg5[%c0_34, %c0_35, %c0_36, %c0_37], %116 {strides = array<i32>} : memref<1x8x8x16xf32, #tpu.memory_space<vmem>>, vector<1x8x8x16xf32>,
    return
  }
  func.func @transform_0(%arg0: i32) -> (i32, i32, i32, i32) {
    %c0_i32 = arith.constant 0 : i32
    %c0_i32_0 = arith.constant 0 : i32
    %c0_i32_1 = arith.constant 0 : i32
    %c0_i32_2 = arith.constant 0 : i32
    return %arg0, %c0_i32, %c0_i32_0, %c0_i32_1 : i32, i32, i32, i32
  }
  func.func @transform_1(%arg0: i32) -> (i32, i32, i32) {
    %c0_i32 = arith.constant 0 : i32
    %c0_i32_0 = arith.constant 0 : i32
    %c0_i32_1 = arith.constant 0 : i32
    %c0_i32_2 = arith.constant 0 : i32
    return %c0_i32, %c0_i32_0, %c0_i32_1 : i32, i32, i32
  }
  func.func @transform_2(%arg0: i32) -> (i32, i32) {
    %c0_i32 = arith.constant 0 : i32
    %c0_i32_0 = arith.constant 0 : i32
    %c0_i32_1 = arith.constant 0 : i32
    return %c0_i32, %c0_i32_0 : i32, i32
  }
  func.func @transform_3(%arg0: i32) -> (i32, i32) {
    %c0_i32 = arith.constant 0 : i32
    %c0_i32_0 = arith.constant 0 : i32
    %c0_i32_1 = arith.constant 0 : i32
    return %c0_i32, %c0_i32_0 : i32, i32
  }
  func.func @transform_4(%arg0: i32) -> (i32, i32, i32, i32) {
    %c0_i32 = arith.constant 0 : i32
    %c0_i32_0 = arith.constant 0 : i32
    %c0_i32_1 = arith.constant 0 : i32
    %c0_i32_2 = arith.constant 0 : i32
    return %arg0, %c0_i32, %c0_i32_0, %c0_i32_1 : i32, i32, i32, i32
  }
}

module attributes {stable_mosaic.version = 11 : i64} {
  func.func @matmul_affine_kernel(%arg0: i32, %arg1: memref<128x16xf32, #tpu.memory_space<vmem>>, %arg2: memref<16x32xbf16, #tpu.memory_space<vmem>>, %arg3: memref<1x32xf32, #tpu.memory_space<vmem>>, %arg4: memref<1x32xf32, #tpu.memory_space<vmem>>, %arg5: memref<128x32xf32, #tpu.memory_space<vmem>>) attributes {dimension_semantics = [#tpu.dimension_semantics<parallel>], iteration_bounds = array<i64: 1>, scalar_prefetch = 0 : i64, scratch_operands = 0 : i64, tpu.core_type = #tpu.core_type<tc>, window_params = [{transform_indices = @transform_0, window_bounds = array<i64: 128, 16>}, {pipeline_mode = #tpu.pipeline_mode<synchronous>, transform_indices = @transform_1, window_bounds = array<i64: 16, 32>}, {pipeline_mode = #tpu.pipeline_mode<synchronous>, transform_indices = @transform_2, window_bounds = array<i64: 1, 32>}, {pipeline_mode = #tpu.pipeline_mode<synchronous>, transform_indices = @transform_3, window_bounds = array<i64: 1, 32>}, {transform_indices = @transform_4, window_bounds = array<i64: 128, 32>}]} {
    %c0 = arith.constant 0 : index
    %c0_0 = arith.constant 0 : index
    %0 = vector.load %arg1[%c0, %c0_0] : memref<128x16xf32, #tpu.memory_space<vmem>>, vector<128x16xf32>
    %1 = arith.truncf %0 : vector<128x16xf32> to vector<128x16xbf16>
    %c0_1 = arith.constant 0 : index
    %c0_2 = arith.constant 0 : index
    %2 = vector.load %arg2[%c0_1, %c0_2] : memref<16x32xbf16, #tpu.memory_space<vmem>>, vector<16x32xbf16>
    %cst = arith.constant dense<0.000000e+00> : vector<128x32xf32>
    %3 = tpu.matmul %1, %2, %cst {dimension_numbers = #tpu.dot_dimension_numbers<[1], [0], [0], [1], [0, 0, 1, 1], [], []>} : vector<128x16xbf16>, vector<16x32xbf16>, vector<128x32xf32> -> vector<128x32xf32>
    %c0_3 = arith.constant 0 : index
    %c0_4 = arith.constant 0 : index
    %4 = vector.load %arg3[%c0_3, %c0_4] : memref<1x32xf32, #tpu.memory_space<vmem>>, vector<1x32xf32>
    %5 = vector.broadcast %4 : vector<1x32xf32> to vector<128x32xf32>
    %6 = arith.mulf %3, %5 : vector<128x32xf32>
    %c0_5 = arith.constant 0 : index
    %c0_6 = arith.constant 0 : index
    %7 = vector.load %arg4[%c0_5, %c0_6] : memref<1x32xf32, #tpu.memory_space<vmem>>, vector<1x32xf32>
    %8 = vector.broadcast %7 : vector<1x32xf32> to vector<128x32xf32>
    %9 = arith.addf %6, %8 : vector<128x32xf32>
    %cst_7 = arith.constant 5.000000e-01 : f32
    %10 = vector.broadcast %cst_7 : f32 to vector<128x32xf32>
    %11 = arith.mulf %10, %9 : vector<128x32xf32>
    %cst_8 = arith.constant 0.707106769 : f32
    %12 = vector.broadcast %cst_8 : f32 to vector<128x32xf32>
    %13 = arith.mulf %9, %12 : vector<128x32xf32>
    %14 = math.absf %13 : vector<128x32xf32>
    %cst_9 = arith.constant 0.327591091 : f32
    %15 = vector.broadcast %cst_9 : f32 to vector<128x32xf32>
    %16 = arith.mulf %15, %14 : vector<128x32xf32>
    %cst_10 = arith.constant 1.000000e+00 : f32
    %17 = vector.broadcast %cst_10 : f32 to vector<128x32xf32>
    %18 = arith.addf %17, %16 : vector<128x32xf32>
    %cst_11 = arith.constant 1.000000e+00 : f32
    %19 = vector.broadcast %cst_11 : f32 to vector<128x32xf32>
    %20 = arith.divf %19, %18 : vector<128x32xf32>
    %cst_12 = arith.constant 1.06140542 : f32
    %21 = vector.broadcast %cst_12 : f32 to vector<128x32xf32>
    %22 = arith.mulf %21, %20 : vector<128x32xf32>
    %cst_13 = arith.constant -1.45315206 : f32
    %23 = vector.broadcast %cst_13 : f32 to vector<128x32xf32>
    %24 = arith.addf %22, %23 : vector<128x32xf32>
    %25 = arith.mulf %24, %20 : vector<128x32xf32>
    %cst_14 = arith.constant 1.42141378 : f32
    %26 = vector.broadcast %cst_14 : f32 to vector<128x32xf32>
    %27 = arith.addf %25, %26 : vector<128x32xf32>
    %28 = arith.mulf %27, %20 : vector<128x32xf32>
    %cst_15 = arith.constant -0.284496725 : f32
    %29 = vector.broadcast %cst_15 : f32 to vector<128x32xf32>
    %30 = arith.addf %28, %29 : vector<128x32xf32>
    %31 = arith.mulf %30, %20 : vector<128x32xf32>
    %cst_16 = arith.constant 0.254829586 : f32
    %32 = vector.broadcast %cst_16 : f32 to vector<128x32xf32>
    %33 = arith.addf %31, %32 : vector<128x32xf32>
    %34 = arith.mulf %33, %20 : vector<128x32xf32>
    %cst_17 = arith.constant 0.000000e+00 : f32
    %35 = vector.broadcast %cst_17 : f32 to vector<128x32xf32>
    %36 = arith.subf %35, %14 : vector<128x32xf32>
    %37 = arith.mulf %36, %14 : vector<128x32xf32>
    %38 = math.exp %37 : vector<128x32xf32>
    %39 = arith.mulf %34, %38 : vector<128x32xf32>
    %cst_18 = arith.constant 1.000000e+00 : f32
    %40 = vector.broadcast %cst_18 : f32 to vector<128x32xf32>
    %41 = arith.subf %40, %39 : vector<128x32xf32>
    %cst_19 = arith.constant 0.000000e+00 : f32
    %42 = vector.broadcast %cst_19 : f32 to vector<128x32xf32>
    %43 = arith.cmpf oge, %13, %42 : vector<128x32xf32>
    %cst_20 = arith.constant 0.000000e+00 : f32
    %44 = vector.broadcast %cst_20 : f32 to vector<128x32xf32>
    %45 = arith.subf %44, %41 : vector<128x32xf32>
    %46 = arith.select %43, %41, %45 : vector<128x32xi1>, vector<128x32xf32>
    %cst_21 = arith.constant 1.000000e+00 : f32
    %47 = vector.broadcast %cst_21 : f32 to vector<128x32xf32>
    %48 = arith.addf %47, %46 : vector<128x32xf32>
    %49 = arith.mulf %11, %48 : vector<128x32xf32>
    %c0_22 = arith.constant 0 : index
    %c0_23 = arith.constant 0 : index
    %50 = vector.load %arg5[%c0_22, %c0_23] : memref<128x32xf32, #tpu.memory_space<vmem>>, vector<128x32xf32>
    tpu.vector_store %arg5[%c0_22, %c0_23], %49 {strides = array<i32>} : memref<128x32xf32, #tpu.memory_space<vmem>>, vector<128x32xf32>,
    return
  }
  func.func @transform_0(%arg0: i32) -> (i32, i32) {
    %c0_i32 = arith.constant 0 : i32
    %c0_i32_0 = arith.constant 0 : i32
    return %arg0, %c0_i32 : i32, i32
  }
  func.func @transform_1(%arg0: i32) -> (i32, i32) {
    %c0_i32 = arith.constant 0 : i32
    %c0_i32_0 = arith.constant 0 : i32
    %c0_i32_1 = arith.constant 0 : i32
    return %c0_i32, %c0_i32_0 : i32, i32
  }
  func.func @transform_2(%arg0: i32) -> (i32, i32) {
    %c0_i32 = arith.constant 0 : i32
    %c0_i32_0 = arith.constant 0 : i32
    %c0_i32_1 = arith.constant 0 : i32
    return %c0_i32, %c0_i32_0 : i32, i32
  }
  func.func @transform_3(%arg0: i32) -> (i32, i32) {
    %c0_i32 = arith.constant 0 : i32
    %c0_i32_0 = arith.constant 0 : i32
    %c0_i32_1 = arith.constant 0 : i32
    return %c0_i32, %c0_i32_0 : i32, i32
  }
  func.func @transform_4(%arg0: i32) -> (i32, i32) {
    %c0_i32 = arith.constant 0 : i32
    %c0_i32_0 = arith.constant 0 : i32
    return %arg0, %c0_i32 : i32, i32
  }
}

module attributes {stable_mosaic.version = 11 : i64} {
  func.func @matmul_affine_kernel(%arg0: i32, %arg1: memref<128x16xf32, #tpu.memory_space<vmem>>, %arg2: memref<16x16xbf16, #tpu.memory_space<vmem>>, %arg3: memref<1x16xf32, #tpu.memory_space<vmem>>, %arg4: memref<1x16xf32, #tpu.memory_space<vmem>>, %arg5: memref<128x16xf32, #tpu.memory_space<vmem>>) attributes {dimension_semantics = [#tpu.dimension_semantics<parallel>], iteration_bounds = array<i64: 1>, scalar_prefetch = 0 : i64, scratch_operands = 0 : i64, tpu.core_type = #tpu.core_type<tc>, window_params = [{transform_indices = @transform_0, window_bounds = array<i64: 128, 16>}, {pipeline_mode = #tpu.pipeline_mode<synchronous>, transform_indices = @transform_1, window_bounds = array<i64: 16, 16>}, {pipeline_mode = #tpu.pipeline_mode<synchronous>, transform_indices = @transform_2, window_bounds = array<i64: 1, 16>}, {pipeline_mode = #tpu.pipeline_mode<synchronous>, transform_indices = @transform_3, window_bounds = array<i64: 1, 16>}, {transform_indices = @transform_4, window_bounds = array<i64: 128, 16>}]} {
    %c0 = arith.constant 0 : index
    %c0_0 = arith.constant 0 : index
    %0 = vector.load %arg1[%c0, %c0_0] : memref<128x16xf32, #tpu.memory_space<vmem>>, vector<128x16xf32>
    %1 = arith.truncf %0 : vector<128x16xf32> to vector<128x16xbf16>
    %c0_1 = arith.constant 0 : index
    %c0_2 = arith.constant 0 : index
    %2 = vector.load %arg2[%c0_1, %c0_2] : memref<16x16xbf16, #tpu.memory_space<vmem>>, vector<16x16xbf16>
    %cst = arith.constant dense<0.000000e+00> : vector<128x16xf32>
    %3 = tpu.matmul %1, %2, %cst {dimension_numbers = #tpu.dot_dimension_numbers<[1], [0], [0], [1], [0, 0, 1, 1], [], []>} : vector<128x16xbf16>, vector<16x16xbf16>, vector<128x16xf32> -> vector<128x16xf32>
    %c0_3 = arith.constant 0 : index
    %c0_4 = arith.constant 0 : index
    %4 = vector.load %arg3[%c0_3, %c0_4] : memref<1x16xf32, #tpu.memory_space<vmem>>, vector<1x16xf32>
    %5 = vector.broadcast %4 : vector<1x16xf32> to vector<128x16xf32>
    %6 = arith.mulf %3, %5 : vector<128x16xf32>
    %c0_5 = arith.constant 0 : index
    %c0_6 = arith.constant 0 : index
    %7 = vector.load %arg4[%c0_5, %c0_6] : memref<1x16xf32, #tpu.memory_space<vmem>>, vector<1x16xf32>
    %8 = vector.broadcast %7 : vector<1x16xf32> to vector<128x16xf32>
    %9 = arith.addf %6, %8 : vector<128x16xf32>
    %cst_7 = arith.constant 5.000000e-01 : f32
    %10 = vector.broadcast %cst_7 : f32 to vector<128x16xf32>
    %11 = arith.mulf %10, %9 : vector<128x16xf32>
    %cst_8 = arith.constant 0.707106769 : f32
    %12 = vector.broadcast %cst_8 : f32 to vector<128x16xf32>
    %13 = arith.mulf %9, %12 : vector<128x16xf32>
    %14 = math.absf %13 : vector<128x16xf32>
    %cst_9 = arith.constant 0.327591091 : f32
    %15 = vector.broadcast %cst_9 : f32 to vector<128x16xf32>
    %16 = arith.mulf %15, %14 : vector<128x16xf32>
    %cst_10 = arith.constant 1.000000e+00 : f32
    %17 = vector.broadcast %cst_10 : f32 to vector<128x16xf32>
    %18 = arith.addf %17, %16 : vector<128x16xf32>
    %cst_11 = arith.constant 1.000000e+00 : f32
    %19 = vector.broadcast %cst_11 : f32 to vector<128x16xf32>
    %20 = arith.divf %19, %18 : vector<128x16xf32>
    %cst_12 = arith.constant 1.06140542 : f32
    %21 = vector.broadcast %cst_12 : f32 to vector<128x16xf32>
    %22 = arith.mulf %21, %20 : vector<128x16xf32>
    %cst_13 = arith.constant -1.45315206 : f32
    %23 = vector.broadcast %cst_13 : f32 to vector<128x16xf32>
    %24 = arith.addf %22, %23 : vector<128x16xf32>
    %25 = arith.mulf %24, %20 : vector<128x16xf32>
    %cst_14 = arith.constant 1.42141378 : f32
    %26 = vector.broadcast %cst_14 : f32 to vector<128x16xf32>
    %27 = arith.addf %25, %26 : vector<128x16xf32>
    %28 = arith.mulf %27, %20 : vector<128x16xf32>
    %cst_15 = arith.constant -0.284496725 : f32
    %29 = vector.broadcast %cst_15 : f32 to vector<128x16xf32>
    %30 = arith.addf %28, %29 : vector<128x16xf32>
    %31 = arith.mulf %30, %20 : vector<128x16xf32>
    %cst_16 = arith.constant 0.254829586 : f32
    %32 = vector.broadcast %cst_16 : f32 to vector<128x16xf32>
    %33 = arith.addf %31, %32 : vector<128x16xf32>
    %34 = arith.mulf %33, %20 : vector<128x16xf32>
    %cst_17 = arith.constant 0.000000e+00 : f32
    %35 = vector.broadcast %cst_17 : f32 to vector<128x16xf32>
    %36 = arith.subf %35, %14 : vector<128x16xf32>
    %37 = arith.mulf %36, %14 : vector<128x16xf32>
    %38 = math.exp %37 : vector<128x16xf32>
    %39 = arith.mulf %34, %38 : vector<128x16xf32>
    %cst_18 = arith.constant 1.000000e+00 : f32
    %40 = vector.broadcast %cst_18 : f32 to vector<128x16xf32>
    %41 = arith.subf %40, %39 : vector<128x16xf32>
    %cst_19 = arith.constant 0.000000e+00 : f32
    %42 = vector.broadcast %cst_19 : f32 to vector<128x16xf32>
    %43 = arith.cmpf oge, %13, %42 : vector<128x16xf32>
    %cst_20 = arith.constant 0.000000e+00 : f32
    %44 = vector.broadcast %cst_20 : f32 to vector<128x16xf32>
    %45 = arith.subf %44, %41 : vector<128x16xf32>
    %46 = arith.select %43, %41, %45 : vector<128x16xi1>, vector<128x16xf32>
    %cst_21 = arith.constant 1.000000e+00 : f32
    %47 = vector.broadcast %cst_21 : f32 to vector<128x16xf32>
    %48 = arith.addf %47, %46 : vector<128x16xf32>
    %49 = arith.mulf %11, %48 : vector<128x16xf32>
    %c0_22 = arith.constant 0 : index
    %c0_23 = arith.constant 0 : index
    %50 = vector.load %arg5[%c0_22, %c0_23] : memref<128x16xf32, #tpu.memory_space<vmem>>, vector<128x16xf32>
    tpu.vector_store %arg5[%c0_22, %c0_23], %49 {strides = array<i32>} : memref<128x16xf32, #tpu.memory_space<vmem>>, vector<128x16xf32>,
    return
  }
  func.func @transform_0(%arg0: i32) -> (i32, i32) {
    %c0_i32 = arith.constant 0 : i32
    %c0_i32_0 = arith.constant 0 : i32
    return %arg0, %c0_i32 : i32, i32
  }
  func.func @transform_1(%arg0: i32) -> (i32, i32) {
    %c0_i32 = arith.constant 0 : i32
    %c0_i32_0 = arith.constant 0 : i32
    %c0_i32_1 = arith.constant 0 : i32
    return %c0_i32, %c0_i32_0 : i32, i32
  }
  func.func @transform_2(%arg0: i32) -> (i32, i32) {
    %c0_i32 = arith.constant 0 : i32
    %c0_i32_0 = arith.constant 0 : i32
    %c0_i32_1 = arith.constant 0 : i32
    return %c0_i32, %c0_i32_0 : i32, i32
  }
  func.func @transform_3(%arg0: i32) -> (i32, i32) {
    %c0_i32 = arith.constant 0 : i32
    %c0_i32_0 = arith.constant 0 : i32
    %c0_i32_1 = arith.constant 0 : i32
    return %c0_i32, %c0_i32_0 : i32, i32
  }
  func.func @transform_4(%arg0: i32) -> (i32, i32) {
    %c0_i32 = arith.constant 0 : i32
    %c0_i32_0 = arith.constant 0 : i32
    return %arg0, %c0_i32 : i32, i32
  }
}

module attributes {stable_mosaic.version = 11 : i64} {
  func.func @vit_layer_kernel(%arg0: i32, %arg1: memref<1x16x16xf32, #tpu.memory_space<vmem>>, %arg2: memref<1x16xf32, #tpu.memory_space<vmem>>, %arg3: memref<1x16xf32, #tpu.memory_space<vmem>>, %arg4: memref<16x96xbf16, #tpu.memory_space<vmem>>, %arg5: memref<32x16xbf16, #tpu.memory_space<vmem>>, %arg6: memref<1x16xf32, #tpu.memory_space<vmem>>, %arg7: memref<1x16xf32, #tpu.memory_space<vmem>>, %arg8: memref<1x16xf32, #tpu.memory_space<vmem>>, %arg9: memref<16x128xbf16, #tpu.memory_space<vmem>>, %arg10: memref<1x128xf32, #tpu.memory_space<vmem>>, %arg11: memref<128x16xbf16, #tpu.memory_space<vmem>>, %arg12: memref<1x16xf32, #tpu.memory_space<vmem>>, %arg13: memref<1x16x16xf32, #tpu.memory_space<vmem>>) attributes {dimension_semantics = [#tpu.dimension_semantics<parallel>], iteration_bounds = array<i64: 8>, scalar_prefetch = 0 : i64, scratch_operands = 0 : i64, tpu.core_type = #tpu.core_type<tc>, window_params = [{transform_indices = @transform_0, window_bounds = array<i64: 1, 16, 16>}, {pipeline_mode = #tpu.pipeline_mode<synchronous>, transform_indices = @transform_1, window_bounds = array<i64: 1, 16>}, {pipeline_mode = #tpu.pipeline_mode<synchronous>, transform_indices = @transform_2, window_bounds = array<i64: 1, 16>}, {pipeline_mode = #tpu.pipeline_mode<synchronous>, transform_indices = @transform_3, window_bounds = array<i64: 16, 96>}, {pipeline_mode = #tpu.pipeline_mode<synchronous>, transform_indices = @transform_4, window_bounds = array<i64: 32, 16>}, {pipeline_mode = #tpu.pipeline_mode<synchronous>, transform_indices = @transform_5, window_bounds = array<i64: 1, 16>}, {pipeline_mode = #tpu.pipeline_mode<synchronous>, transform_indices = @transform_6, window_bounds = array<i64: 1, 16>}, {pipeline_mode = #tpu.pipeline_mode<synchronous>, transform_indices = @transform_7, window_bounds = array<i64: 1, 16>}, {pipeline_mode = #tpu.pipeline_mode<synchronous>, transform_indices = @transform_8, window_bounds = array<i64: 16, 128>}, {pipeline_mode = #tpu.pipeline_mode<synchronous>, transform_indices = @transform_9, window_bounds = array<i64: 1, 128>}, {pipeline_mode = #tpu.pipeline_mode<synchronous>, transform_indices = @transform_10, window_bounds = array<i64: 128, 16>}, {pipeline_mode = #tpu.pipeline_mode<synchronous>, transform_indices = @transform_11, window_bounds = array<i64: 1, 16>}, {transform_indices = @transform_12, window_bounds = array<i64: 1, 16, 16>}]} {
    %c0 = arith.constant 0 : index
    %c0_0 = arith.constant 0 : index
    %c0_1 = arith.constant 0 : index
    %0 = vector.load %arg1[%c0, %c0_0, %c0_1] : memref<1x16x16xf32, #tpu.memory_space<vmem>>, vector<1x16x16xf32>
    %1 = vector.shape_cast %0 : vector<1x16x16xf32> to vector<16x16xf32>
    %c0_2 = arith.constant 0 : index
    %c0_3 = arith.constant 0 : index
    %2 = vector.load %arg2[%c0_2, %c0_3] : memref<1x16xf32, #tpu.memory_space<vmem>>, vector<1x16xf32>
    %c0_4 = arith.constant 0 : index
    %c0_5 = arith.constant 0 : index
    %3 = vector.load %arg3[%c0_4, %c0_5] : memref<1x16xf32, #tpu.memory_space<vmem>>, vector<1x16xf32>
    %cst = arith.constant dense<0.000000e+00> : vector<16xf32>
    %4 = vector.multi_reduction <add>, %1, %cst [1] : vector<16x16xf32> to vector<16xf32>
    %5 = vector.shape_cast %4 : vector<16xf32> to vector<16x1xf32>
    %cst_6 = arith.constant 1.600000e+01 : f32
    %6 = vector.broadcast %cst_6 : f32 to vector<16x1xf32>
    %7 = arith.divf %5, %6 : vector<16x1xf32>
    %8 = vector.broadcast %7 : vector<16x1xf32> to vector<16x16xf32>
    %9 = arith.subf %1, %8 : vector<16x16xf32>
    %10 = arith.mulf %9, %9 : vector<16x16xf32>
    %cst_7 = arith.constant dense<0.000000e+00> : vector<16xf32>
    %11 = vector.multi_reduction <add>, %10, %cst_7 [1] : vector<16x16xf32> to vector<16xf32>
    %12 = vector.shape_cast %11 : vector<16xf32> to vector<16x1xf32>
    %cst_8 = arith.constant 1.600000e+01 : f32
    %13 = vector.broadcast %cst_8 : f32 to vector<16x1xf32>
    %14 = arith.divf %12, %13 : vector<16x1xf32>
    %cst_9 = arith.constant 9.99999974E-6 : f32
    %15 = vector.broadcast %cst_9 : f32 to vector<16x1xf32>
    %16 = arith.addf %14, %15 : vector<16x1xf32>
    %17 = math.rsqrt %16 : vector<16x1xf32>
    %18 = vector.broadcast %17 : vector<16x1xf32> to vector<16x16xf32>
    %19 = arith.mulf %9, %18 : vector<16x16xf32>
    %20 = vector.broadcast %2 : vector<1x16xf32> to vector<16x16xf32>
    %21 = arith.mulf %19, %20 : vector<16x16xf32>
    %22 = vector.broadcast %3 : vector<1x16xf32> to vector<16x16xf32>
    %23 = arith.addf %21, %22 : vector<16x16xf32>
    %24 = arith.truncf %23 : vector<16x16xf32> to vector<16x16xbf16>
    %c0_10 = arith.constant 0 : index
    %c0_11 = arith.constant 0 : index
    %25 = vector.load %arg4[%c0_10, %c0_11] : memref<16x96xbf16, #tpu.memory_space<vmem>>, vector<16x96xbf16>
    %cst_12 = arith.constant dense<0.000000e+00> : vector<16x96xf32>
    %26 = tpu.matmul %24, %25, %cst_12 {dimension_numbers = #tpu.dot_dimension_numbers<[1], [0], [0], [1], [0, 0, 1, 1], [], []>} : vector<16x16xbf16>, vector<16x96xbf16>, vector<16x96xf32> -> vector<16x96xf32>
    %c0_13 = arith.constant 0 : index
    %c0_14 = arith.constant 0 : index
    %27 = vector.load %arg5[%c0_13, %c0_14] : memref<32x16xbf16, #tpu.memory_space<vmem>>, vector<32x16xbf16>
    %cst_15 = arith.constant 0.000000e+00 : f32
    %28 = vector.broadcast %cst_15 : f32 to vector<16x16xf32>
    %29 = vector.extract_strided_slice %26 {offsets = [0, 0], sizes = [16, 8], strides = [1, 1]} : vector<16x96xf32> to vector<16x8xf32>
    %30 = vector.extract_strided_slice %26 {offsets = [0, 32], sizes = [16, 8], strides = [1, 1]} : vector<16x96xf32> to vector<16x8xf32>
    %31 = vector.extract_strided_slice %26 {offsets = [0, 64], sizes = [16, 8], strides = [1, 1]} : vector<16x96xf32> to vector<16x8xf32>
    %cst_16 = arith.constant dense<0.000000e+00> : vector<16x16xf32>
    %32 = tpu.matmul %29, %30, %cst_16 {dimension_numbers = #tpu.dot_dimension_numbers<[1], [1], [0], [0], [0, 0, 1, 0], [], []>} : vector<16x8xf32>, vector<16x8xf32>, vector<16x16xf32> -> vector<16x16xf32>
    %cst_17 = arith.constant 0.353553385 : f32
    %33 = vector.broadcast %cst_17 : f32 to vector<16x16xf32>
    %34 = arith.mulf %32, %33 : vector<16x16xf32>
    %cst_18 = arith.constant dense<0xFF800000> : vector<16xf32>
    %35 = vector.multi_reduction <maximumf>, %34, %cst_18 [1] : vector<16x16xf32> to vector<16xf32>
    %36 = vector.shape_cast %35 : vector<16xf32> to vector<16x1xf32>
    %37 = vector.broadcast %36 : vector<16x1xf32> to vector<16x16xf32>
    %38 = arith.subf %34, %37 : vector<16x16xf32>
    %39 = math.exp %38 : vector<16x16xf32>
    %cst_19 = arith.constant dense<0.000000e+00> : vector<16xf32>
    %40 = vector.multi_reduction <add>, %39, %cst_19 [1] : vector<16x16xf32> to vector<16xf32>
    %41 = vector.shape_cast %40 : vector<16xf32> to vector<16x1xf32>
    %42 = tpu.reciprocal %41 {approx = true} : vector<16x1xf32> -> vector<16x1xf32>
    %43 = vector.broadcast %42 : vector<16x1xf32> to vector<16x16xf32>
    %44 = arith.mulf %39, %43 : vector<16x16xf32>
    %cst_20 = arith.constant dense<0.000000e+00> : vector<16x8xf32>
    %45 = tpu.matmul %44, %31, %cst_20 {dimension_numbers = #tpu.dot_dimension_numbers<[1], [0], [0], [1], [0, 0, 1, 1], [], []>} : vector<16x16xf32>, vector<16x8xf32>, vector<16x8xf32> -> vector<16x8xf32>
    %46 = arith.truncf %45 : vector<16x8xf32> to vector<16x8xbf16>
    %47 = vector.extract_strided_slice %27 {offsets = [0, 0], sizes = [8, 16], strides = [1, 1]} : vector<32x16xbf16> to vector<8x16xbf16>
    %cst_21 = arith.constant dense<0.000000e+00> : vector<16x16xf32>
    %48 = tpu.matmul %46, %47, %cst_21 {dimension_numbers = #tpu.dot_dimension_numbers<[1], [0], [0], [1], [0, 0, 1, 1], [], []>} : vector<16x8xbf16>, vector<8x16xbf16>, vector<16x16xf32> -> vector<16x16xf32>
    %49 = arith.addf %28, %48 : vector<16x16xf32>
    %50 = vector.extract_strided_slice %26 {offsets = [0, 8], sizes = [16, 8], strides = [1, 1]} : vector<16x96xf32> to vector<16x8xf32>
    %51 = vector.extract_strided_slice %26 {offsets = [0, 40], sizes = [16, 8], strides = [1, 1]} : vector<16x96xf32> to vector<16x8xf32>
    %52 = vector.extract_strided_slice %26 {offsets = [0, 72], sizes = [16, 8], strides = [1, 1]} : vector<16x96xf32> to vector<16x8xf32>
    %cst_22 = arith.constant dense<0.000000e+00> : vector<16x16xf32>
    %53 = tpu.matmul %50, %51, %cst_22 {dimension_numbers = #tpu.dot_dimension_numbers<[1], [1], [0], [0], [0, 0, 1, 0], [], []>} : vector<16x8xf32>, vector<16x8xf32>, vector<16x16xf32> -> vector<16x16xf32>
    %cst_23 = arith.constant 0.353553385 : f32
    %54 = vector.broadcast %cst_23 : f32 to vector<16x16xf32>
    %55 = arith.mulf %53, %54 : vector<16x16xf32>
    %cst_24 = arith.constant dense<0xFF800000> : vector<16xf32>
    %56 = vector.multi_reduction <maximumf>, %55, %cst_24 [1] : vector<16x16xf32> to vector<16xf32>
    %57 = vector.shape_cast %56 : vector<16xf32> to vector<16x1xf32>
    %58 = vector.broadcast %57 : vector<16x1xf32> to vector<16x16xf32>
    %59 = arith.subf %55, %58 : vector<16x16xf32>
    %60 = math.exp %59 : vector<16x16xf32>
    %cst_25 = arith.constant dense<0.000000e+00> : vector<16xf32>
    %61 = vector.multi_reduction <add>, %60, %cst_25 [1] : vector<16x16xf32> to vector<16xf32>
    %62 = vector.shape_cast %61 : vector<16xf32> to vector<16x1xf32>
    %63 = tpu.reciprocal %62 {approx = true} : vector<16x1xf32> -> vector<16x1xf32>
    %64 = vector.broadcast %63 : vector<16x1xf32> to vector<16x16xf32>
    %65 = arith.mulf %60, %64 : vector<16x16xf32>
    %cst_26 = arith.constant dense<0.000000e+00> : vector<16x8xf32>
    %66 = tpu.matmul %65, %52, %cst_26 {dimension_numbers = #tpu.dot_dimension_numbers<[1], [0], [0], [1], [0, 0, 1, 1], [], []>} : vector<16x16xf32>, vector<16x8xf32>, vector<16x8xf32> -> vector<16x8xf32>
    %67 = arith.truncf %66 : vector<16x8xf32> to vector<16x8xbf16>
    %68 = vector.extract_strided_slice %27 {offsets = [8, 0], sizes = [8, 16], strides = [1, 1]} : vector<32x16xbf16> to vector<8x16xbf16>
    %cst_27 = arith.constant dense<0.000000e+00> : vector<16x16xf32>
    %69 = tpu.matmul %67, %68, %cst_27 {dimension_numbers = #tpu.dot_dimension_numbers<[1], [0], [0], [1], [0, 0, 1, 1], [], []>} : vector<16x8xbf16>, vector<8x16xbf16>, vector<16x16xf32> -> vector<16x16xf32>
    %70 = arith.addf %49, %69 : vector<16x16xf32>
    %71 = vector.extract_strided_slice %26 {offsets = [0, 16], sizes = [16, 8], strides = [1, 1]} : vector<16x96xf32> to vector<16x8xf32>
    %72 = vector.extract_strided_slice %26 {offsets = [0, 48], sizes = [16, 8], strides = [1, 1]} : vector<16x96xf32> to vector<16x8xf32>
    %73 = vector.extract_strided_slice %26 {offsets = [0, 80], sizes = [16, 8], strides = [1, 1]} : vector<16x96xf32> to vector<16x8xf32>
    %cst_28 = arith.constant dense<0.000000e+00> : vector<16x16xf32>
    %74 = tpu.matmul %71, %72, %cst_28 {dimension_numbers = #tpu.dot_dimension_numbers<[1], [1], [0], [0], [0, 0, 1, 0], [], []>} : vector<16x8xf32>, vector<16x8xf32>, vector<16x16xf32> -> vector<16x16xf32>
    %cst_29 = arith.constant 0.353553385 : f32
    %75 = vector.broadcast %cst_29 : f32 to vector<16x16xf32>
    %76 = arith.mulf %74, %75 : vector<16x16xf32>
    %cst_30 = arith.constant dense<0xFF800000> : vector<16xf32>
    %77 = vector.multi_reduction <maximumf>, %76, %cst_30 [1] : vector<16x16xf32> to vector<16xf32>
    %78 = vector.shape_cast %77 : vector<16xf32> to vector<16x1xf32>
    %79 = vector.broadcast %78 : vector<16x1xf32> to vector<16x16xf32>
    %80 = arith.subf %76, %79 : vector<16x16xf32>
    %81 = math.exp %80 : vector<16x16xf32>
    %cst_31 = arith.constant dense<0.000000e+00> : vector<16xf32>
    %82 = vector.multi_reduction <add>, %81, %cst_31 [1] : vector<16x16xf32> to vector<16xf32>
    %83 = vector.shape_cast %82 : vector<16xf32> to vector<16x1xf32>
    %84 = tpu.reciprocal %83 {approx = true} : vector<16x1xf32> -> vector<16x1xf32>
    %85 = vector.broadcast %84 : vector<16x1xf32> to vector<16x16xf32>
    %86 = arith.mulf %81, %85 : vector<16x16xf32>
    %cst_32 = arith.constant dense<0.000000e+00> : vector<16x8xf32>
    %87 = tpu.matmul %86, %73, %cst_32 {dimension_numbers = #tpu.dot_dimension_numbers<[1], [0], [0], [1], [0, 0, 1, 1], [], []>} : vector<16x16xf32>, vector<16x8xf32>, vector<16x8xf32> -> vector<16x8xf32>
    %88 = arith.truncf %87 : vector<16x8xf32> to vector<16x8xbf16>
    %89 = vector.extract_strided_slice %27 {offsets = [16, 0], sizes = [8, 16], strides = [1, 1]} : vector<32x16xbf16> to vector<8x16xbf16>
    %cst_33 = arith.constant dense<0.000000e+00> : vector<16x16xf32>
    %90 = tpu.matmul %88, %89, %cst_33 {dimension_numbers = #tpu.dot_dimension_numbers<[1], [0], [0], [1], [0, 0, 1, 1], [], []>} : vector<16x8xbf16>, vector<8x16xbf16>, vector<16x16xf32> -> vector<16x16xf32>
    %91 = arith.addf %70, %90 : vector<16x16xf32>
    %92 = vector.extract_strided_slice %26 {offsets = [0, 24], sizes = [16, 8], strides = [1, 1]} : vector<16x96xf32> to vector<16x8xf32>
    %93 = vector.extract_strided_slice %26 {offsets = [0, 56], sizes = [16, 8], strides = [1, 1]} : vector<16x96xf32> to vector<16x8xf32>
    %94 = vector.extract_strided_slice %26 {offsets = [0, 88], sizes = [16, 8], strides = [1, 1]} : vector<16x96xf32> to vector<16x8xf32>
    %cst_34 = arith.constant dense<0.000000e+00> : vector<16x16xf32>
    %95 = tpu.matmul %92, %93, %cst_34 {dimension_numbers = #tpu.dot_dimension_numbers<[1], [1], [0], [0], [0, 0, 1, 0], [], []>} : vector<16x8xf32>, vector<16x8xf32>, vector<16x16xf32> -> vector<16x16xf32>
    %cst_35 = arith.constant 0.353553385 : f32
    %96 = vector.broadcast %cst_35 : f32 to vector<16x16xf32>
    %97 = arith.mulf %95, %96 : vector<16x16xf32>
    %cst_36 = arith.constant dense<0xFF800000> : vector<16xf32>
    %98 = vector.multi_reduction <maximumf>, %97, %cst_36 [1] : vector<16x16xf32> to vector<16xf32>
    %99 = vector.shape_cast %98 : vector<16xf32> to vector<16x1xf32>
    %100 = vector.broadcast %99 : vector<16x1xf32> to vector<16x16xf32>
    %101 = arith.subf %97, %100 : vector<16x16xf32>
    %102 = math.exp %101 : vector<16x16xf32>
    %cst_37 = arith.constant dense<0.000000e+00> : vector<16xf32>
    %103 = vector.multi_reduction <add>, %102, %cst_37 [1] : vector<16x16xf32> to vector<16xf32>
    %104 = vector.shape_cast %103 : vector<16xf32> to vector<16x1xf32>
    %105 = tpu.reciprocal %104 {approx = true} : vector<16x1xf32> -> vector<16x1xf32>
    %106 = vector.broadcast %105 : vector<16x1xf32> to vector<16x16xf32>
    %107 = arith.mulf %102, %106 : vector<16x16xf32>
    %cst_38 = arith.constant dense<0.000000e+00> : vector<16x8xf32>
    %108 = tpu.matmul %107, %94, %cst_38 {dimension_numbers = #tpu.dot_dimension_numbers<[1], [0], [0], [1], [0, 0, 1, 1], [], []>} : vector<16x16xf32>, vector<16x8xf32>, vector<16x8xf32> -> vector<16x8xf32>
    %109 = arith.truncf %108 : vector<16x8xf32> to vector<16x8xbf16>
    %110 = vector.extract_strided_slice %27 {offsets = [24, 0], sizes = [8, 16], strides = [1, 1]} : vector<32x16xbf16> to vector<8x16xbf16>
    %cst_39 = arith.constant dense<0.000000e+00> : vector<16x16xf32>
    %111 = tpu.matmul %109, %110, %cst_39 {dimension_numbers = #tpu.dot_dimension_numbers<[1], [0], [0], [1], [0, 0, 1, 1], [], []>} : vector<16x8xbf16>, vector<8x16xbf16>, vector<16x16xf32> -> vector<16x16xf32>
    %112 = arith.addf %91, %111 : vector<16x16xf32>
    %113 = arith.addf %1, %112 : vector<16x16xf32>
    %c0_40 = arith.constant 0 : index
    %c0_41 = arith.constant 0 : index
    %114 = vector.load %arg6[%c0_40, %c0_41] : memref<1x16xf32, #tpu.memory_space<vmem>>, vector<1x16xf32>
    %115 = vector.broadcast %114 : vector<1x16xf32> to vector<16x16xf32>
    %116 = arith.addf %113, %115 : vector<16x16xf32>
    %c0_42 = arith.constant 0 : index
    %c0_43 = arith.constant 0 : index
    %117 = vector.load %arg7[%c0_42, %c0_43] : memref<1x16xf32, #tpu.memory_space<vmem>>, vector<1x16xf32>
    %c0_44 = arith.constant 0 : index
    %c0_45 = arith.constant 0 : index
    %118 = vector.load %arg8[%c0_44, %c0_45] : memref<1x16xf32, #tpu.memory_space<vmem>>, vector<1x16xf32>
    %cst_46 = arith.constant dense<0.000000e+00> : vector<16xf32>
    %119 = vector.multi_reduction <add>, %116, %cst_46 [1] : vector<16x16xf32> to vector<16xf32>
    %120 = vector.shape_cast %119 : vector<16xf32> to vector<16x1xf32>
    %cst_47 = arith.constant 1.600000e+01 : f32
    %121 = vector.broadcast %cst_47 : f32 to vector<16x1xf32>
    %122 = arith.divf %120, %121 : vector<16x1xf32>
    %123 = vector.broadcast %122 : vector<16x1xf32> to vector<16x16xf32>
    %124 = arith.subf %116, %123 : vector<16x16xf32>
    %125 = arith.mulf %124, %124 : vector<16x16xf32>
    %cst_48 = arith.constant dense<0.000000e+00> : vector<16xf32>
    %126 = vector.multi_reduction <add>, %125, %cst_48 [1] : vector<16x16xf32> to vector<16xf32>
    %127 = vector.shape_cast %126 : vector<16xf32> to vector<16x1xf32>
    %cst_49 = arith.constant 1.600000e+01 : f32
    %128 = vector.broadcast %cst_49 : f32 to vector<16x1xf32>
    %129 = arith.divf %127, %128 : vector<16x1xf32>
    %cst_50 = arith.constant 9.99999974E-6 : f32
    %130 = vector.broadcast %cst_50 : f32 to vector<16x1xf32>
    %131 = arith.addf %129, %130 : vector<16x1xf32>
    %132 = math.rsqrt %131 : vector<16x1xf32>
    %133 = vector.broadcast %132 : vector<16x1xf32> to vector<16x16xf32>
    %134 = arith.mulf %124, %133 : vector<16x16xf32>
    %135 = vector.broadcast %117 : vector<1x16xf32> to vector<16x16xf32>
    %136 = arith.mulf %134, %135 : vector<16x16xf32>
    %137 = vector.broadcast %118 : vector<1x16xf32> to vector<16x16xf32>
    %138 = arith.addf %136, %137 : vector<16x16xf32>
    %139 = arith.truncf %138 : vector<16x16xf32> to vector<16x16xbf16>
    %c0_51 = arith.constant 0 : index
    %c0_52 = arith.constant 0 : index
    %140 = vector.load %arg9[%c0_51, %c0_52] : memref<16x128xbf16, #tpu.memory_space<vmem>>, vector<16x128xbf16>
    %cst_53 = arith.constant dense<0.000000e+00> : vector<16x128xf32>
    %141 = tpu.matmul %139, %140, %cst_53 {dimension_numbers = #tpu.dot_dimension_numbers<[1], [0], [0], [1], [0, 0, 1, 1], [], []>} : vector<16x16xbf16>, vector<16x128xbf16>, vector<16x128xf32> -> vector<16x128xf32>
    %c0_54 = arith.constant 0 : index
    %c0_55 = arith.constant 0 : index
    %142 = vector.load %arg10[%c0_54, %c0_55] : memref<1x128xf32, #tpu.memory_space<vmem>>, vector<1x128xf32>
    %143 = vector.broadcast %142 : vector<1x128xf32> to vector<16x128xf32>
    %144 = arith.addf %141, %143 : vector<16x128xf32>
    %cst_56 = arith.constant 5.000000e-01 : f32
    %145 = vector.broadcast %cst_56 : f32 to vector<16x128xf32>
    %146 = arith.mulf %145, %144 : vector<16x128xf32>
    %cst_57 = arith.constant 0.707106769 : f32
    %147 = vector.broadcast %cst_57 : f32 to vector<16x128xf32>
    %148 = arith.mulf %144, %147 : vector<16x128xf32>
    %149 = math.absf %148 : vector<16x128xf32>
    %cst_58 = arith.constant 0.327591091 : f32
    %150 = vector.broadcast %cst_58 : f32 to vector<16x128xf32>
    %151 = arith.mulf %150, %149 : vector<16x128xf32>
    %cst_59 = arith.constant 1.000000e+00 : f32
    %152 = vector.broadcast %cst_59 : f32 to vector<16x128xf32>
    %153 = arith.addf %152, %151 : vector<16x128xf32>
    %cst_60 = arith.constant 1.000000e+00 : f32
    %154 = vector.broadcast %cst_60 : f32 to vector<16x128xf32>
    %155 = arith.divf %154, %153 : vector<16x128xf32>
    %cst_61 = arith.constant 1.06140542 : f32
    %156 = vector.broadcast %cst_61 : f32 to vector<16x128xf32>
    %157 = arith.mulf %156, %155 : vector<16x128xf32>
    %cst_62 = arith.constant -1.45315206 : f32
    %158 = vector.broadcast %cst_62 : f32 to vector<16x128xf32>
    %159 = arith.addf %157, %158 : vector<16x128xf32>
    %160 = arith.mulf %159, %155 : vector<16x128xf32>
    %cst_63 = arith.constant 1.42141378 : f32
    %161 = vector.broadcast %cst_63 : f32 to vector<16x128xf32>
    %162 = arith.addf %160, %161 : vector<16x128xf32>
    %163 = arith.mulf %162, %155 : vector<16x128xf32>
    %cst_64 = arith.constant -0.284496725 : f32
    %164 = vector.broadcast %cst_64 : f32 to vector<16x128xf32>
    %165 = arith.addf %163, %164 : vector<16x128xf32>
    %166 = arith.mulf %165, %155 : vector<16x128xf32>
    %cst_65 = arith.constant 0.254829586 : f32
    %167 = vector.broadcast %cst_65 : f32 to vector<16x128xf32>
    %168 = arith.addf %166, %167 : vector<16x128xf32>
    %169 = arith.mulf %168, %155 : vector<16x128xf32>
    %cst_66 = arith.constant 0.000000e+00 : f32
    %170 = vector.broadcast %cst_66 : f32 to vector<16x128xf32>
    %171 = arith.subf %170, %149 : vector<16x128xf32>
    %172 = arith.mulf %171, %149 : vector<16x128xf32>
    %173 = math.exp %172 : vector<16x128xf32>
    %174 = arith.mulf %169, %173 : vector<16x128xf32>
    %cst_67 = arith.constant 1.000000e+00 : f32
    %175 = vector.broadcast %cst_67 : f32 to vector<16x128xf32>
    %176 = arith.subf %175, %174 : vector<16x128xf32>
    %cst_68 = arith.constant 0.000000e+00 : f32
    %177 = vector.broadcast %cst_68 : f32 to vector<16x128xf32>
    %178 = arith.cmpf oge, %148, %177 : vector<16x128xf32>
    %cst_69 = arith.constant 0.000000e+00 : f32
    %179 = vector.broadcast %cst_69 : f32 to vector<16x128xf32>
    %180 = arith.subf %179, %176 : vector<16x128xf32>
    %181 = arith.select %178, %176, %180 : vector<16x128xi1>, vector<16x128xf32>
    %cst_70 = arith.constant 1.000000e+00 : f32
    %182 = vector.broadcast %cst_70 : f32 to vector<16x128xf32>
    %183 = arith.addf %182, %181 : vector<16x128xf32>
    %184 = arith.mulf %146, %183 : vector<16x128xf32>
    %185 = arith.truncf %184 : vector<16x128xf32> to vector<16x128xbf16>
    %c0_71 = arith.constant 0 : index
    %c0_72 = arith.constant 0 : index
    %186 = vector.load %arg11[%c0_71, %c0_72] : memref<128x16xbf16, #tpu.memory_space<vmem>>, vector<128x16xbf16>
    %cst_73 = arith.constant dense<0.000000e+00> : vector<16x16xf32>
    %187 = tpu.matmul %185, %186, %cst_73 {dimension_numbers = #tpu.dot_dimension_numbers<[1], [0], [0], [1], [0, 0, 1, 1], [], []>} : vector<16x128xbf16>, vector<128x16xbf16>, vector<16x16xf32> -> vector<16x16xf32>
    %c0_74 = arith.constant 0 : index
    %c0_75 = arith.constant 0 : index
    %188 = vector.load %arg12[%c0_74, %c0_75] : memref<1x16xf32, #tpu.memory_space<vmem>>, vector<1x16xf32>
    %189 = vector.broadcast %188 : vector<1x16xf32> to vector<16x16xf32>
    %190 = arith.addf %187, %189 : vector<16x16xf32>
    %191 = arith.addf %116, %190 : vector<16x16xf32>
    %c0_76 = arith.constant 0 : index
    %c0_77 = arith.constant 0 : index
    %c0_78 = arith.constant 0 : index
    %192 = vector.load %arg13[%c0_76, %c0_77, %c0_78] : memref<1x16x16xf32, #tpu.memory_space<vmem>>, vector<1x16x16xf32>
    %193 = vector.shape_cast %192 : vector<1x16x16xf32> to vector<16x16xf32>
    %194 = vector.shape_cast %191 : vector<16x16xf32> to vector<1x16x16xf32>
    tpu.vector_store %arg13[%c0_76, %c0_77, %c0_78], %194 {strides = array<i32>} : memref<1x16x16xf32, #tpu.memory_space<vmem>>, vector<1x16x16xf32>,
    return
  }
  func.func @transform_0(%arg0: i32) -> (i32, i32, i32) {
    %c0_i32 = arith.constant 0 : i32
    %c0_i32_0 = arith.constant 0 : i32
    %c0_i32_1 = arith.constant 0 : i32
    return %arg0, %c0_i32, %c0_i32_0 : i32, i32, i32
  }
  func.func @transform_1(%arg0: i32) -> (i32, i32) {
    %c0_i32 = arith.constant 0 : i32
    %c0_i32_0 = arith.constant 0 : i32
    %c0_i32_1 = arith.constant 0 : i32
    return %c0_i32, %c0_i32_0 : i32, i32
  }
  func.func @transform_2(%arg0: i32) -> (i32, i32) {
    %c0_i32 = arith.constant 0 : i32
    %c0_i32_0 = arith.constant 0 : i32
    %c0_i32_1 = arith.constant 0 : i32
    return %c0_i32, %c0_i32_0 : i32, i32
  }
  func.func @transform_3(%arg0: i32) -> (i32, i32) {
    %c0_i32 = arith.constant 0 : i32
    %c0_i32_0 = arith.constant 0 : i32
    %c0_i32_1 = arith.constant 0 : i32
    return %c0_i32, %c0_i32_0 : i32, i32
  }
  func.func @transform_4(%arg0: i32) -> (i32, i32) {
    %c0_i32 = arith.constant 0 : i32
    %c0_i32_0 = arith.constant 0 : i32
    %c0_i32_1 = arith.constant 0 : i32
    return %c0_i32, %c0_i32_0 : i32, i32
  }
  func.func @transform_5(%arg0: i32) -> (i32, i32) {
    %c0_i32 = arith.constant 0 : i32
    %c0_i32_0 = arith.constant 0 : i32
    %c0_i32_1 = arith.constant 0 : i32
    return %c0_i32, %c0_i32_0 : i32, i32
  }
  func.func @transform_6(%arg0: i32) -> (i32, i32) {
    %c0_i32 = arith.constant 0 : i32
    %c0_i32_0 = arith.constant 0 : i32
    %c0_i32_1 = arith.constant 0 : i32
    return %c0_i32, %c0_i32_0 : i32, i32
  }
  func.func @transform_7(%arg0: i32) -> (i32, i32) {
    %c0_i32 = arith.constant 0 : i32
    %c0_i32_0 = arith.constant 0 : i32
    %c0_i32_1 = arith.constant 0 : i32
    return %c0_i32, %c0_i32_0 : i32, i32
  }
  func.func @transform_8(%arg0: i32) -> (i32, i32) {
    %c0_i32 = arith.constant 0 : i32
    %c0_i32_0 = arith.constant 0 : i32
    %c0_i32_1 = arith.constant 0 : i32
    return %c0_i32, %c0_i32_0 : i32, i32
  }
  func.func @transform_9(%arg0: i32) -> (i32, i32) {
    %c0_i32 = arith.constant 0 : i32
    %c0_i32_0 = arith.constant 0 : i32
    %c0_i32_1 = arith.constant 0 : i32
    return %c0_i32, %c0_i32_0 : i32, i32
  }
  func.func @transform_10(%arg0: i32) -> (i32, i32) {
    %c0_i32 = arith.constant 0 : i32
    %c0_i32_0 = arith.constant 0 : i32
    %c0_i32_1 = arith.constant 0 : i32
    return %c0_i32, %c0_i32_0 : i32, i32
  }
  func.func @transform_11(%arg0: i32) -> (i32, i32) {
    %c0_i32 = arith.constant 0 : i32
    %c0_i32_0 = arith.constant 0 : i32
    %c0_i32_1 = arith.constant 0 : i32
    return %c0_i32, %c0_i32_0 : i32, i32
  }
  func.func @transform_12(%arg0: i32) -> (i32, i32, i32) {
    %c0_i32 = arith.constant 0 : i32
    %c0_i32_0 = arith.constant 0 : i32
    %c0_i32_1 = arith.constant 0 : i32
    return %arg0, %c0_i32, %c0_i32_0 : i32, i32, i32
  }
}

module attributes {stable_mosaic.version = 11 : i64} {
  func.func @conv3x3_kernel(%arg0: i32, %arg1: memref<1x10x10x32xf32, #tpu.memory_space<vmem>>, %arg2: memref<9x32x16xbf16, #tpu.memory_space<vmem>>, %arg3: memref<1x16xf32, #tpu.memory_space<vmem>>, %arg4: memref<1x16xf32, #tpu.memory_space<vmem>>, %arg5: memref<1x8x8x16xf32, #tpu.memory_space<vmem>>, %arg6: memref<1x8x8x16xf32, #tpu.memory_space<vmem>>) attributes {dimension_semantics = [#tpu.dimension_semantics<parallel>], iteration_bounds = array<i64: 2>, scalar_prefetch = 0 : i64, scratch_operands = 0 : i64, tpu.core_type = #tpu.core_type<tc>, window_params = [{transform_indices = @transform_0, window_bounds = array<i64: 1, 10, 10, 32>}, {pipeline_mode = #tpu.pipeline_mode<synchronous>, transform_indices = @transform_1, window_bounds = array<i64: 9, 32, 16>}, {pipeline_mode = #tpu.pipeline_mode<synchronous>, transform_indices = @transform_2, window_bounds = array<i64: 1, 16>}, {pipeline_mode = #tpu.pipeline_mode<synchronous>, transform_indices = @transform_3, window_bounds = array<i64: 1, 16>}, {transform_indices = @transform_4, window_bounds = array<i64: 1, 8, 8, 16>}, {transform_indices = @transform_5, window_bounds = array<i64: 1, 8, 8, 16>}]} {
    %c0 = arith.constant 0 : index
    %c0_0 = arith.constant 0 : index
    %c0_1 = arith.constant 0 : index
    %c0_2 = arith.constant 0 : index
    %0 = vector.load %arg1[%c0, %c0_0, %c0_1, %c0_2] : memref<1x10x10x32xf32, #tpu.memory_space<vmem>>, vector<1x10x10x32xf32>
    %1 = vector.shape_cast %0 : vector<1x10x10x32xf32> to vector<10x10x32xf32>
    %c0_3 = arith.constant 0 : index
    %c0_4 = arith.constant 0 : index
    %c0_5 = arith.constant 0 : index
    %2 = vector.load %arg2[%c0_3, %c0_4, %c0_5] : memref<9x32x16xbf16, #tpu.memory_space<vmem>>, vector<9x32x16xbf16>
    %cst = arith.constant 0.000000e+00 : f32
    %3 = vector.broadcast %cst : f32 to vector<64x16xf32>
    %4 = vector.extract_strided_slice %1 {offsets = [0, 0, 0], sizes = [8, 8, 32], strides = [1, 1, 1]} : vector<10x10x32xf32> to vector<8x8x32xf32>
    %5 = vector.shape_cast %4 : vector<8x8x32xf32> to vector<64x32xf32>
    %6 = arith.truncf %5 : vector<64x32xf32> to vector<64x32xbf16>
    %7 = vector.extract_strided_slice %2 {offsets = [0, 0, 0], sizes = [1, 32, 16], strides = [1, 1, 1]} : vector<9x32x16xbf16> to vector<1x32x16xbf16>
    %8 = vector.shape_cast %7 : vector<1x32x16xbf16> to vector<32x16xbf16>
    %cst_6 = arith.constant dense<0.000000e+00> : vector<64x16xf32>
    %9 = tpu.matmul %6, %8, %cst_6 {dimension_numbers = #tpu.dot_dimension_numbers<[1], [0], [0], [1], [0, 0, 1, 1], [], []>} : vector<64x32xbf16>, vector<32x16xbf16>, vector<64x16xf32> -> vector<64x16xf32>
    %10 = arith.addf %3, %9 : vector<64x16xf32>
    %11 = vector.extract_strided_slice %1 {offsets = [0, 1, 0], sizes = [8, 8, 32], strides = [1, 1, 1]} : vector<10x10x32xf32> to vector<8x8x32xf32>
    %12 = vector.shape_cast %11 : vector<8x8x32xf32> to vector<64x32xf32>
    %13 = arith.truncf %12 : vector<64x32xf32> to vector<64x32xbf16>
    %14 = vector.extract_strided_slice %2 {offsets = [1, 0, 0], sizes = [1, 32, 16], strides = [1, 1, 1]} : vector<9x32x16xbf16> to vector<1x32x16xbf16>
    %15 = vector.shape_cast %14 : vector<1x32x16xbf16> to vector<32x16xbf16>
    %cst_7 = arith.constant dense<0.000000e+00> : vector<64x16xf32>
    %16 = tpu.matmul %13, %15, %cst_7 {dimension_numbers = #tpu.dot_dimension_numbers<[1], [0], [0], [1], [0, 0, 1, 1], [], []>} : vector<64x32xbf16>, vector<32x16xbf16>, vector<64x16xf32> -> vector<64x16xf32>
    %17 = arith.addf %10, %16 : vector<64x16xf32>
    %18 = vector.extract_strided_slice %1 {offsets = [0, 2, 0], sizes = [8, 8, 32], strides = [1, 1, 1]} : vector<10x10x32xf32> to vector<8x8x32xf32>
    %19 = vector.shape_cast %18 : vector<8x8x32xf32> to vector<64x32xf32>
    %20 = arith.truncf %19 : vector<64x32xf32> to vector<64x32xbf16>
    %21 = vector.extract_strided_slice %2 {offsets = [2, 0, 0], sizes = [1, 32, 16], strides = [1, 1, 1]} : vector<9x32x16xbf16> to vector<1x32x16xbf16>
    %22 = vector.shape_cast %21 : vector<1x32x16xbf16> to vector<32x16xbf16>
    %cst_8 = arith.constant dense<0.000000e+00> : vector<64x16xf32>
    %23 = tpu.matmul %20, %22, %cst_8 {dimension_numbers = #tpu.dot_dimension_numbers<[1], [0], [0], [1], [0, 0, 1, 1], [], []>} : vector<64x32xbf16>, vector<32x16xbf16>, vector<64x16xf32> -> vector<64x16xf32>
    %24 = arith.addf %17, %23 : vector<64x16xf32>
    %25 = vector.extract_strided_slice %1 {offsets = [1, 0, 0], sizes = [8, 8, 32], strides = [1, 1, 1]} : vector<10x10x32xf32> to vector<8x8x32xf32>
    %26 = vector.shape_cast %25 : vector<8x8x32xf32> to vector<64x32xf32>
    %27 = arith.truncf %26 : vector<64x32xf32> to vector<64x32xbf16>
    %28 = vector.extract_strided_slice %2 {offsets = [3, 0, 0], sizes = [1, 32, 16], strides = [1, 1, 1]} : vector<9x32x16xbf16> to vector<1x32x16xbf16>
    %29 = vector.shape_cast %28 : vector<1x32x16xbf16> to vector<32x16xbf16>
    %cst_9 = arith.constant dense<0.000000e+00> : vector<64x16xf32>
    %30 = tpu.matmul %27, %29, %cst_9 {dimension_numbers = #tpu.dot_dimension_numbers<[1], [0], [0], [1], [0, 0, 1, 1], [], []>} : vector<64x32xbf16>, vector<32x16xbf16>, vector<64x16xf32> -> vector<64x16xf32>
    %31 = arith.addf %24, %30 : vector<64x16xf32>
    %32 = vector.extract_strided_slice %1 {offsets = [1, 1, 0], sizes = [8, 8, 32], strides = [1, 1, 1]} : vector<10x10x32xf32> to vector<8x8x32xf32>
    %33 = vector.shape_cast %32 : vector<8x8x32xf32> to vector<64x32xf32>
    %34 = arith.truncf %33 : vector<64x32xf32> to vector<64x32xbf16>
    %35 = vector.extract_strided_slice %2 {offsets = [4, 0, 0], sizes = [1, 32, 16], strides = [1, 1, 1]} : vector<9x32x16xbf16> to vector<1x32x16xbf16>
    %36 = vector.shape_cast %35 : vector<1x32x16xbf16> to vector<32x16xbf16>
    %cst_10 = arith.constant dense<0.000000e+00> : vector<64x16xf32>
    %37 = tpu.matmul %34, %36, %cst_10 {dimension_numbers = #tpu.dot_dimension_numbers<[1], [0], [0], [1], [0, 0, 1, 1], [], []>} : vector<64x32xbf16>, vector<32x16xbf16>, vector<64x16xf32> -> vector<64x16xf32>
    %38 = arith.addf %31, %37 : vector<64x16xf32>
    %39 = vector.extract_strided_slice %1 {offsets = [1, 2, 0], sizes = [8, 8, 32], strides = [1, 1, 1]} : vector<10x10x32xf32> to vector<8x8x32xf32>
    %40 = vector.shape_cast %39 : vector<8x8x32xf32> to vector<64x32xf32>
    %41 = arith.truncf %40 : vector<64x32xf32> to vector<64x32xbf16>
    %42 = vector.extract_strided_slice %2 {offsets = [5, 0, 0], sizes = [1, 32, 16], strides = [1, 1, 1]} : vector<9x32x16xbf16> to vector<1x32x16xbf16>
    %43 = vector.shape_cast %42 : vector<1x32x16xbf16> to vector<32x16xbf16>
    %cst_11 = arith.constant dense<0.000000e+00> : vector<64x16xf32>
    %44 = tpu.matmul %41, %43, %cst_11 {dimension_numbers = #tpu.dot_dimension_numbers<[1], [0], [0], [1], [0, 0, 1, 1], [], []>} : vector<64x32xbf16>, vector<32x16xbf16>, vector<64x16xf32> -> vector<64x16xf32>
    %45 = arith.addf %38, %44 : vector<64x16xf32>
    %46 = vector.extract_strided_slice %1 {offsets = [2, 0, 0], sizes = [8, 8, 32], strides = [1, 1, 1]} : vector<10x10x32xf32> to vector<8x8x32xf32>
    %47 = vector.shape_cast %46 : vector<8x8x32xf32> to vector<64x32xf32>
    %48 = arith.truncf %47 : vector<64x32xf32> to vector<64x32xbf16>
    %49 = vector.extract_strided_slice %2 {offsets = [6, 0, 0], sizes = [1, 32, 16], strides = [1, 1, 1]} : vector<9x32x16xbf16> to vector<1x32x16xbf16>
    %50 = vector.shape_cast %49 : vector<1x32x16xbf16> to vector<32x16xbf16>
    %cst_12 = arith.constant dense<0.000000e+00> : vector<64x16xf32>
    %51 = tpu.matmul %48, %50, %cst_12 {dimension_numbers = #tpu.dot_dimension_numbers<[1], [0], [0], [1], [0, 0, 1, 1], [], []>} : vector<64x32xbf16>, vector<32x16xbf16>, vector<64x16xf32> -> vector<64x16xf32>
    %52 = arith.addf %45, %51 : vector<64x16xf32>
    %53 = vector.extract_strided_slice %1 {offsets = [2, 1, 0], sizes = [8, 8, 32], strides = [1, 1, 1]} : vector<10x10x32xf32> to vector<8x8x32xf32>
    %54 = vector.shape_cast %53 : vector<8x8x32xf32> to vector<64x32xf32>
    %55 = arith.truncf %54 : vector<64x32xf32> to vector<64x32xbf16>
    %56 = vector.extract_strided_slice %2 {offsets = [7, 0, 0], sizes = [1, 32, 16], strides = [1, 1, 1]} : vector<9x32x16xbf16> to vector<1x32x16xbf16>
    %57 = vector.shape_cast %56 : vector<1x32x16xbf16> to vector<32x16xbf16>
    %cst_13 = arith.constant dense<0.000000e+00> : vector<64x16xf32>
    %58 = tpu.matmul %55, %57, %cst_13 {dimension_numbers = #tpu.dot_dimension_numbers<[1], [0], [0], [1], [0, 0, 1, 1], [], []>} : vector<64x32xbf16>, vector<32x16xbf16>, vector<64x16xf32> -> vector<64x16xf32>
    %59 = arith.addf %52, %58 : vector<64x16xf32>
    %60 = vector.extract_strided_slice %1 {offsets = [2, 2, 0], sizes = [8, 8, 32], strides = [1, 1, 1]} : vector<10x10x32xf32> to vector<8x8x32xf32>
    %61 = vector.shape_cast %60 : vector<8x8x32xf32> to vector<64x32xf32>
    %62 = arith.truncf %61 : vector<64x32xf32> to vector<64x32xbf16>
    %63 = vector.extract_strided_slice %2 {offsets = [8, 0, 0], sizes = [1, 32, 16], strides = [1, 1, 1]} : vector<9x32x16xbf16> to vector<1x32x16xbf16>
    %64 = vector.shape_cast %63 : vector<1x32x16xbf16> to vector<32x16xbf16>
    %cst_14 = arith.constant dense<0.000000e+00> : vector<64x16xf32>
    %65 = tpu.matmul %62, %64, %cst_14 {dimension_numbers = #tpu.dot_dimension_numbers<[1], [0], [0], [1], [0, 0, 1, 1], [], []>} : vector<64x32xbf16>, vector<32x16xbf16>, vector<64x16xf32> -> vector<64x16xf32>
    %66 = arith.addf %59, %65 : vector<64x16xf32>
    %c0_15 = arith.constant 0 : index
    %c0_16 = arith.constant 0 : index
    %67 = vector.load %arg3[%c0_15, %c0_16] : memref<1x16xf32, #tpu.memory_space<vmem>>, vector<1x16xf32>
    %68 = vector.broadcast %67 : vector<1x16xf32> to vector<64x16xf32>
    %69 = arith.mulf %66, %68 : vector<64x16xf32>
    %c0_17 = arith.constant 0 : index
    %c0_18 = arith.constant 0 : index
    %70 = vector.load %arg4[%c0_17, %c0_18] : memref<1x16xf32, #tpu.memory_space<vmem>>, vector<1x16xf32>
    %71 = vector.broadcast %70 : vector<1x16xf32> to vector<64x16xf32>
    %72 = arith.addf %69, %71 : vector<64x16xf32>
    %cst_19 = arith.constant 5.000000e-01 : f32
    %73 = vector.broadcast %cst_19 : f32 to vector<64x16xf32>
    %74 = arith.mulf %73, %72 : vector<64x16xf32>
    %cst_20 = arith.constant 0.707106769 : f32
    %75 = vector.broadcast %cst_20 : f32 to vector<64x16xf32>
    %76 = arith.mulf %72, %75 : vector<64x16xf32>
    %77 = math.absf %76 : vector<64x16xf32>
    %cst_21 = arith.constant 0.327591091 : f32
    %78 = vector.broadcast %cst_21 : f32 to vector<64x16xf32>
    %79 = arith.mulf %78, %77 : vector<64x16xf32>
    %cst_22 = arith.constant 1.000000e+00 : f32
    %80 = vector.broadcast %cst_22 : f32 to vector<64x16xf32>
    %81 = arith.addf %80, %79 : vector<64x16xf32>
    %cst_23 = arith.constant 1.000000e+00 : f32
    %82 = vector.broadcast %cst_23 : f32 to vector<64x16xf32>
    %83 = arith.divf %82, %81 : vector<64x16xf32>
    %cst_24 = arith.constant 1.06140542 : f32
    %84 = vector.broadcast %cst_24 : f32 to vector<64x16xf32>
    %85 = arith.mulf %84, %83 : vector<64x16xf32>
    %cst_25 = arith.constant -1.45315206 : f32
    %86 = vector.broadcast %cst_25 : f32 to vector<64x16xf32>
    %87 = arith.addf %85, %86 : vector<64x16xf32>
    %88 = arith.mulf %87, %83 : vector<64x16xf32>
    %cst_26 = arith.constant 1.42141378 : f32
    %89 = vector.broadcast %cst_26 : f32 to vector<64x16xf32>
    %90 = arith.addf %88, %89 : vector<64x16xf32>
    %91 = arith.mulf %90, %83 : vector<64x16xf32>
    %cst_27 = arith.constant -0.284496725 : f32
    %92 = vector.broadcast %cst_27 : f32 to vector<64x16xf32>
    %93 = arith.addf %91, %92 : vector<64x16xf32>
    %94 = arith.mulf %93, %83 : vector<64x16xf32>
    %cst_28 = arith.constant 0.254829586 : f32
    %95 = vector.broadcast %cst_28 : f32 to vector<64x16xf32>
    %96 = arith.addf %94, %95 : vector<64x16xf32>
    %97 = arith.mulf %96, %83 : vector<64x16xf32>
    %cst_29 = arith.constant 0.000000e+00 : f32
    %98 = vector.broadcast %cst_29 : f32 to vector<64x16xf32>
    %99 = arith.subf %98, %77 : vector<64x16xf32>
    %100 = arith.mulf %99, %77 : vector<64x16xf32>
    %101 = math.exp %100 : vector<64x16xf32>
    %102 = arith.mulf %97, %101 : vector<64x16xf32>
    %cst_30 = arith.constant 1.000000e+00 : f32
    %103 = vector.broadcast %cst_30 : f32 to vector<64x16xf32>
    %104 = arith.subf %103, %102 : vector<64x16xf32>
    %cst_31 = arith.constant 0.000000e+00 : f32
    %105 = vector.broadcast %cst_31 : f32 to vector<64x16xf32>
    %106 = arith.cmpf oge, %76, %105 : vector<64x16xf32>
    %cst_32 = arith.constant 0.000000e+00 : f32
    %107 = vector.broadcast %cst_32 : f32 to vector<64x16xf32>
    %108 = arith.subf %107, %104 : vector<64x16xf32>
    %109 = arith.select %106, %104, %108 : vector<64x16xi1>, vector<64x16xf32>
    %cst_33 = arith.constant 1.000000e+00 : f32
    %110 = vector.broadcast %cst_33 : f32 to vector<64x16xf32>
    %111 = arith.addf %110, %109 : vector<64x16xf32>
    %112 = arith.mulf %74, %111 : vector<64x16xf32>
    %113 = vector.shape_cast %112 : vector<64x16xf32> to vector<8x8x16xf32>
    %c0_34 = arith.constant 0 : index
    %c0_35 = arith.constant 0 : index
    %c0_36 = arith.constant 0 : index
    %c0_37 = arith.constant 0 : index
    %114 = vector.load %arg5[%c0_34, %c0_35, %c0_36, %c0_37] : memref<1x8x8x16xf32, #tpu.memory_space<vmem>>, vector<1x8x8x16xf32>
    %115 = vector.shape_cast %114 : vector<1x8x8x16xf32> to vector<8x8x16xf32>
    %116 = arith.addf %113, %115 : vector<8x8x16xf32>
    %c0_38 = arith.constant 0 : index
    %c0_39 = arith.constant 0 : index
    %c0_40 = arith.constant 0 : index
    %c0_41 = arith.constant 0 : index
    %117 = vector.load %arg6[%c0_38, %c0_39, %c0_40, %c0_41] : memref<1x8x8x16xf32, #tpu.memory_space<vmem>>, vector<1x8x8x16xf32>
    %118 = vector.shape_cast %117 : vector<1x8x8x16xf32> to vector<8x8x16xf32>
    %119 = vector.shape_cast %116 : vector<8x8x16xf32> to vector<1x8x8x16xf32>
    tpu.vector_store %arg6[%c0_38, %c0_39, %c0_40, %c0_41], %119 {strides = array<i32>} : memref<1x8x8x16xf32, #tpu.memory_space<vmem>>, vector<1x8x8x16xf32>,
    return
  }
  func.func @transform_0(%arg0: i32) -> (i32, i32, i32, i32) {
    %c0_i32 = arith.constant 0 : i32
    %c0_i32_0 = arith.constant 0 : i32
    %c0_i32_1 = arith.constant 0 : i32
    %c0_i32_2 = arith.constant 0 : i32
    return %arg0, %c0_i32, %c0_i32_0, %c0_i32_1 : i32, i32, i32, i32
  }
  func.func @transform_1(%arg0: i32) -> (i32, i32, i32) {
    %c0_i32 = arith.constant 0 : i32
    %c0_i32_0 = arith.constant 0 : i32
    %c0_i32_1 = arith.constant 0 : i32
    %c0_i32_2 = arith.constant 0 : i32
    return %c0_i32, %c0_i32_0, %c0_i32_1 : i32, i32, i32
  }
  func.func @transform_2(%arg0: i32) -> (i32, i32) {
    %c0_i32 = arith.constant 0 : i32
    %c0_i32_0 = arith.constant 0 : i32
    %c0_i32_1 = arith.constant 0 : i32
    return %c0_i32, %c0_i32_0 : i32, i32
  }
  func.func @transform_3(%arg0: i32) -> (i32, i32) {
    %c0_i32 = arith.constant 0 : i32
    %c0_i32_0 = arith.constant 0 : i32
    %c0_i32_1 = arith.constant 0 : i32
    return %c0_i32, %c0_i32_0 : i32, i32
  }
  func.func @transform_4(%arg0: i32) -> (i32, i32, i32, i32) {
    %c0_i32 = arith.constant 0 : i32
    %c0_i32_0 = arith.constant 0 : i32
    %c0_i32_1 = arith.constant 0 : i32
    %c0_i32_2 = arith.constant 0 : i32
    return %arg0, %c0_i32, %c0_i32_0, %c0_i32_1 : i32, i32, i32, i32
  }
  func.func @transform_5(%arg0: i32) -> (i32, i32, i32, i32) {
    %c0_i32 = arith.constant 0 : i32
    %c0_i32_0 = arith.constant 0 : i32
    %c0_i32_1 = arith.constant 0 : i32
    %c0_i32_2 = arith.constant 0 : i32
    return %arg0, %c0_i32, %c0_i32_0, %c0_i32_1 : i32, i32, i32, i32
  }
}

module attributes {stable_mosaic.version = 11 : i64} {
  func.func @invres_se_kernel(%arg0: i32, %arg1: memref<1x8x8x16xf32, #tpu.memory_space<vmem>>, %arg2: memref<16x64xbf16, #tpu.memory_space<vmem>>, %arg3: memref<1x64xf32, #tpu.memory_space<vmem>>, %arg4: memref<1x64xf32, #tpu.memory_space<vmem>>, %arg5: memref<9x64xf32, #tpu.memory_space<vmem>>, %arg6: memref<1x64xf32, #tpu.memory_space<vmem>>, %arg7: memref<1x64xf32, #tpu.memory_space<vmem>>, %arg8: memref<64x16xbf16, #tpu.memory_space<vmem>>, %arg9: memref<1x16xf32, #tpu.memory_space<vmem>>, %arg10: memref<1x16xf32, #tpu.memory_space<vmem>>, %arg11: memref<1x16xf32, #tpu.memory_space<vmem>>, %arg12: memref<1x16xf32, #tpu.memory_space<vmem>>, %arg13: memref<1x8x8x16xf32, #tpu.memory_space<vmem>>, %arg14: memref<10x24x64xf32, #tpu.memory_space<vmem>>) attributes {dimension_semantics = [#tpu.dimension_semantics<parallel>], iteration_bounds = array<i64: 2>, scalar_prefetch = 0 : i64, scratch_operands = 1 : i64, tpu.core_type = #tpu.core_type<tc>, window_params = [{transform_indices = @transform_0, window_bounds = array<i64: 1, 8, 8, 16>}, {pipeline_mode = #tpu.pipeline_mode<synchronous>, transform_indices = @transform_1, window_bounds = array<i64: 16, 64>}, {pipeline_mode = #tpu.pipeline_mode<synchronous>, transform_indices = @transform_2, window_bounds = array<i64: 1, 64>}, {pipeline_mode = #tpu.pipeline_mode<synchronous>, transform_indices = @transform_3, window_bounds = array<i64: 1, 64>}, {pipeline_mode = #tpu.pipeline_mode<synchronous>, transform_indices = @transform_4, window_bounds = array<i64: 9, 64>}, {pipeline_mode = #tpu.pipeline_mode<synchronous>, transform_indices = @transform_5, window_bounds = array<i64: 1, 64>}, {pipeline_mode = #tpu.pipeline_mode<synchronous>, transform_indices = @transform_6, window_bounds = array<i64: 1, 64>}, {pipeline_mode = #tpu.pipeline_mode<synchronous>, transform_indices = @transform_7, window_bounds = array<i64: 64, 16>}, {pipeline_mode = #tpu.pipeline_mode<synchronous>, transform_indices = @transform_8, window_bounds = array<i64: 1, 16>}, {pipeline_mode = #tpu.pipeline_mode<synchronous>, transform_indices = @transform_9, window_bounds = array<i64: 1, 16>}, {pipeline_mode = #tpu.pipeline_mode<synchronous>, transform_indices = @transform_10, window_bounds = array<i64: 1, 16>}, {pipeline_mode = #tpu.pipeline_mode<synchronous>, transform_indices = @transform_11, window_bounds = array<i64: 1, 16>}, {transform_indices = @transform_12, window_bounds = array<i64: 1, 8, 8, 16>}]} {
    %c0 = arith.constant 0 : index
    %c0_0 = arith.constant 0 : index
    %c0_1 = arith.constant 0 : index
    %c0_2 = arith.constant 0 : index
    %0 = vector.load %arg1[%c0, %c0_0, %c0_1, %c0_2] : memref<1x8x8x16xf32, #tpu.memory_space<vmem>>, vector<1x8x8x16xf32>
    %1 = vector.shape_cast %0 : vector<1x8x8x16xf32> to vector<8x8x16xf32>
    %2 = vector.shape_cast %1 : vector<8x8x16xf32> to vector<64x16xf32>
    %3 = arith.truncf %2 : vector<64x16xf32> to vector<64x16xbf16>
    %c0_3 = arith.constant 0 : index
    %c0_4 = arith.constant 0 : index
    %4 = vector.load %arg2[%c0_3, %c0_4] : memref<16x64xbf16, #tpu.memory_space<vmem>>, vector<16x64xbf16>
    %cst = arith.constant dense<0.000000e+00> : vector<64x64xf32>
    %5 = tpu.matmul %3, %4, %cst {dimension_numbers = #tpu.dot_dimension_numbers<[1], [0], [0], [1], [0, 0, 1, 1], [], []>} : vector<64x16xbf16>, vector<16x64xbf16>, vector<64x64xf32> -> vector<64x64xf32>
    %c0_5 = arith.constant 0 : index
    %c0_6 = arith.constant 0 : index
    %6 = vector.load %arg3[%c0_5, %c0_6] : memref<1x64xf32, #tpu.memory_space<vmem>>, vector<1x64xf32>
    %7 = vector.broadcast %6 : vector<1x64xf32> to vector<64x64xf32>
    %8 = arith.mulf %5, %7 : vector<64x64xf32>
    %c0_7 = arith.constant 0 : index
    %c0_8 = arith.constant 0 : index
    %9 = vector.load %arg4[%c0_7, %c0_8] : memref<1x64xf32, #tpu.memory_space<vmem>>, vector<1x64xf32>
    %10 = vector.broadcast %9 : vector<1x64xf32> to vector<64x64xf32>
    %11 = arith.addf %8, %10 : vector<64x64xf32>
    %cst_9 = arith.constant 5.000000e-01 : f32
    %12 = vector.broadcast %cst_9 : f32 to vector<64x64xf32>
    %13 = arith.mulf %12, %11 : vector<64x64xf32>
    %cst_10 = arith.constant 0.707106769 : f32
    %14 = vector.broadcast %cst_10 : f32 to vector<64x64xf32>
    %15 = arith.mulf %11, %14 : vector<64x64xf32>
    %16 = math.absf %15 : vector<64x64xf32>
    %cst_11 = arith.constant 0.327591091 : f32
    %17 = vector.broadcast %cst_11 : f32 to vector<64x64xf32>
    %18 = arith.mulf %17, %16 : vector<64x64xf32>
    %cst_12 = arith.constant 1.000000e+00 : f32
    %19 = vector.broadcast %cst_12 : f32 to vector<64x64xf32>
    %20 = arith.addf %19, %18 : vector<64x64xf32>
    %cst_13 = arith.constant 1.000000e+00 : f32
    %21 = vector.broadcast %cst_13 : f32 to vector<64x64xf32>
    %22 = arith.divf %21, %20 : vector<64x64xf32>
    %cst_14 = arith.constant 1.06140542 : f32
    %23 = vector.broadcast %cst_14 : f32 to vector<64x64xf32>
    %24 = arith.mulf %23, %22 : vector<64x64xf32>
    %cst_15 = arith.constant -1.45315206 : f32
    %25 = vector.broadcast %cst_15 : f32 to vector<64x64xf32>
    %26 = arith.addf %24, %25 : vector<64x64xf32>
    %27 = arith.mulf %26, %22 : vector<64x64xf32>
    %cst_16 = arith.constant 1.42141378 : f32
    %28 = vector.broadcast %cst_16 : f32 to vector<64x64xf32>
    %29 = arith.addf %27, %28 : vector<64x64xf32>
    %30 = arith.mulf %29, %22 : vector<64x64xf32>
    %cst_17 = arith.constant -0.284496725 : f32
    %31 = vector.broadcast %cst_17 : f32 to vector<64x64xf32>
    %32 = arith.addf %30, %31 : vector<64x64xf32>
    %33 = arith.mulf %32, %22 : vector<64x64xf32>
    %cst_18 = arith.constant 0.254829586 : f32
    %34 = vector.broadcast %cst_18 : f32 to vector<64x64xf32>
    %35 = arith.addf %33, %34 : vector<64x64xf32>
    %36 = arith.mulf %35, %22 : vector<64x64xf32>
    %cst_19 = arith.constant 0.000000e+00 : f32
    %37 = vector.broadcast %cst_19 : f32 to vector<64x64xf32>
    %38 = arith.subf %37, %16 : vector<64x64xf32>
    %39 = arith.mulf %38, %16 : vector<64x64xf32>
    %40 = math.exp %39 : vector<64x64xf32>
    %41 = arith.mulf %36, %40 : vector<64x64xf32>
    %cst_20 = arith.constant 1.000000e+00 : f32
    %42 = vector.broadcast %cst_20 : f32 to vector<64x64xf32>
    %43 = arith.subf %42, %41 : vector<64x64xf32>
    %cst_21 = arith.constant 0.000000e+00 : f32
    %44 = vector.broadcast %cst_21 : f32 to vector<64x64xf32>
    %45 = arith.cmpf oge, %15, %44 : vector<64x64xf32>
    %cst_22 = arith.constant 0.000000e+00 : f32
    %46 = vector.broadcast %cst_22 : f32 to vector<64x64xf32>
    %47 = arith.subf %46, %43 : vector<64x64xf32>
    %48 = arith.select %45, %43, %47 : vector<64x64xi1>, vector<64x64xf32>
    %cst_23 = arith.constant 1.000000e+00 : f32
    %49 = vector.broadcast %cst_23 : f32 to vector<64x64xf32>
    %50 = arith.addf %49, %48 : vector<64x64xf32>
    %51 = arith.mulf %13, %50 : vector<64x64xf32>
    %cst_24 = arith.constant 0.000000e+00 : f32
    %52 = vector.broadcast %cst_24 : f32 to vector<10x24x64xf32>
    %c0_25 = arith.constant 0 : index
    %c0_26 = arith.constant 0 : index
    %c0_27 = arith.constant 0 : index
    %53 = vector.load %arg14[%c0_25, %c0_26, %c0_27] : memref<10x24x64xf32, #tpu.memory_space<vmem>>, vector<10x24x64xf32>
    tpu.vector_store %arg14[%c0_25, %c0_26, %c0_27], %52 {strides = array<i32>} : memref<10x24x64xf32, #tpu.memory_space<vmem>>, vector<10x24x64xf32>,
    %54 = vector.shape_cast %51 : vector<64x64xf32> to vector<8x8x64xf32>
    %c1 = arith.constant 1 : index
    %c8 = arith.constant 8 : index
    %c0_28 = arith.constant 0 : index
    %55 = vector.load %arg14[%c1, %c8, %c0_28] : memref<10x24x64xf32, #tpu.memory_space<vmem>>, vector<8x8x64xf32>
    tpu.vector_store %arg14[%c1, %c8, %c0_28], %54 {strides = array<i32>} : memref<10x24x64xf32, #tpu.memory_space<vmem>>, vector<8x8x64xf32>,
    %c0_29 = arith.constant 0 : index
    %c0_30 = arith.constant 0 : index
    %c0_31 = arith.constant 0 : index
    %56 = vector.load %arg14[%c0_29, %c0_30, %c0_31] : memref<10x24x64xf32, #tpu.memory_space<vmem>>, vector<10x24x64xf32>
    %cst_32 = arith.constant 0.000000e+00 : f32
    %57 = vector.broadcast %cst_32 : f32 to vector<8x8x64xf32>
    %58 = vector.extract_strided_slice %56 {offsets = [0, 7, 0], sizes = [8, 8, 64], strides = [1, 1, 1]} : vector<10x24x64xf32> to vector<8x8x64xf32>
    %c0_33 = arith.constant 0 : index
    %c0_34 = arith.constant 0 : index
    %59 = vector.load %arg5[%c0_33, %c0_34] : memref<9x64xf32, #tpu.memory_space<vmem>>, vector<1x64xf32>
    %60 = vector.shape_cast %59 : vector<1x64xf32> to vector<64xf32>
    %61 = vector.shape_cast %60 : vector<64xf32> to vector<1x1x64xf32>
    %62 = vector.broadcast %61 : vector<1x1x64xf32> to vector<8x8x64xf32>
    %63 = arith.mulf %58, %62 : vector<8x8x64xf32>
    %64 = arith.addf %57, %63 : vector<8x8x64xf32>
    %65 = vector.extract_strided_slice %56 {offsets = [0, 8, 0], sizes = [8, 8, 64], strides = [1, 1, 1]} : vector<10x24x64xf32> to vector<8x8x64xf32>
    %c1_35 = arith.constant 1 : index
    %c0_36 = arith.constant 0 : index
    %66 = vector.load %arg5[%c1_35, %c0_36] : memref<9x64xf32, #tpu.memory_space<vmem>>, vector<1x64xf32>
    %67 = vector.shape_cast %66 : vector<1x64xf32> to vector<64xf32>
    %68 = vector.shape_cast %67 : vector<64xf32> to vector<1x1x64xf32>
    %69 = vector.broadcast %68 : vector<1x1x64xf32> to vector<8x8x64xf32>
    %70 = arith.mulf %65, %69 : vector<8x8x64xf32>
    %71 = arith.addf %64, %70 : vector<8x8x64xf32>
    %72 = vector.extract_strided_slice %56 {offsets = [0, 9, 0], sizes = [8, 8, 64], strides = [1, 1, 1]} : vector<10x24x64xf32> to vector<8x8x64xf32>
    %c2 = arith.constant 2 : index
    %c0_37 = arith.constant 0 : index
    %73 = vector.load %arg5[%c2, %c0_37] : memref<9x64xf32, #tpu.memory_space<vmem>>, vector<1x64xf32>
    %74 = vector.shape_cast %73 : vector<1x64xf32> to vector<64xf32>
    %75 = vector.shape_cast %74 : vector<64xf32> to vector<1x1x64xf32>
    %76 = vector.broadcast %75 : vector<1x1x64xf32> to vector<8x8x64xf32>
    %77 = arith.mulf %72, %76 : vector<8x8x64xf32>
    %78 = arith.addf %71, %77 : vector<8x8x64xf32>
    %79 = vector.extract_strided_slice %56 {offsets = [1, 7, 0], sizes = [8, 8, 64], strides = [1, 1, 1]} : vector<10x24x64xf32> to vector<8x8x64xf32>
    %c3 = arith.constant 3 : index
    %c0_38 = arith.constant 0 : index
    %80 = vector.load %arg5[%c3, %c0_38] : memref<9x64xf32, #tpu.memory_space<vmem>>, vector<1x64xf32>
    %81 = vector.shape_cast %80 : vector<1x64xf32> to vector<64xf32>
    %82 = vector.shape_cast %81 : vector<64xf32> to vector<1x1x64xf32>
    %83 = vector.broadcast %82 : vector<1x1x64xf32> to vector<8x8x64xf32>
    %84 = arith.mulf %79, %83 : vector<8x8x64xf32>
    %85 = arith.addf %78, %84 : vector<8x8x64xf32>
    %86 = vector.extract_strided_slice %56 {offsets = [1, 8, 0], sizes = [8, 8, 64], strides = [1, 1, 1]} : vector<10x24x64xf32> to vector<8x8x64xf32>
    %c4 = arith.constant 4 : index
    %c0_39 = arith.constant 0 : index
    %87 = vector.load %arg5[%c4, %c0_39] : memref<9x64xf32, #tpu.memory_space<vmem>>, vector<1x64xf32>
    %88 = vector.shape_cast %87 : vector<1x64xf32> to vector<64xf32>
    %89 = vector.shape_cast %88 : vector<64xf32> to vector<1x1x64xf32>
    %90 = vector.broadcast %89 : vector<1x1x64xf32> to vector<8x8x64xf32>
    %91 = arith.mulf %86, %90 : vector<8x8x64xf32>
    %92 = arith.addf %85, %91 : vector<8x8x64xf32>
    %93 = vector.extract_strided_slice %56 {offsets = [1, 9, 0], sizes = [8, 8, 64], strides = [1, 1, 1]} : vector<10x24x64xf32> to vector<8x8x64xf32>
    %c5 = arith.constant 5 : index
    %c0_40 = arith.constant 0 : index
    %94 = vector.load %arg5[%c5, %c0_40] : memref<9x64xf32, #tpu.memory_space<vmem>>, vector<1x64xf32>
    %95 = vector.shape_cast %94 : vector<1x64xf32> to vector<64xf32>
    %96 = vector.shape_cast %95 : vector<64xf32> to vector<1x1x64xf32>
    %97 = vector.broadcast %96 : vector<1x1x64xf32> to vector<8x8x64xf32>
    %98 = arith.mulf %93, %97 : vector<8x8x64xf32>
    %99 = arith.addf %92, %98 : vector<8x8x64xf32>
    %100 = vector.extract_strided_slice %56 {offsets = [2, 7, 0], sizes = [8, 8, 64], strides = [1, 1, 1]} : vector<10x24x64xf32> to vector<8x8x64xf32>
    %c6 = arith.constant 6 : index
    %c0_41 = arith.constant 0 : index
    %101 = vector.load %arg5[%c6, %c0_41] : memref<9x64xf32, #tpu.memory_space<vmem>>, vector<1x64xf32>
    %102 = vector.shape_cast %101 : vector<1x64xf32> to vector<64xf32>
    %103 = vector.shape_cast %102 : vector<64xf32> to vector<1x1x64xf32>
    %104 = vector.broadcast %103 : vector<1x1x64xf32> to vector<8x8x64xf32>
    %105 = arith.mulf %100, %104 : vector<8x8x64xf32>
    %106 = arith.addf %99, %105 : vector<8x8x64xf32>
    %107 = vector.extract_strided_slice %56 {offsets = [2, 8, 0], sizes = [8, 8, 64], strides = [1, 1, 1]} : vector<10x24x64xf32> to vector<8x8x64xf32>
    %c7 = arith.constant 7 : index
    %c0_42 = arith.constant 0 : index
    %108 = vector.load %arg5[%c7, %c0_42] : memref<9x64xf32, #tpu.memory_space<vmem>>, vector<1x64xf32>
    %109 = vector.shape_cast %108 : vector<1x64xf32> to vector<64xf32>
    %110 = vector.shape_cast %109 : vector<64xf32> to vector<1x1x64xf32>
    %111 = vector.broadcast %110 : vector<1x1x64xf32> to vector<8x8x64xf32>
    %112 = arith.mulf %107, %111 : vector<8x8x64xf32>
    %113 = arith.addf %106, %112 : vector<8x8x64xf32>
    %114 = vector.extract_strided_slice %56 {offsets = [2, 9, 0], sizes = [8, 8, 64], strides = [1, 1, 1]} : vector<10x24x64xf32> to vector<8x8x64xf32>
    %c8_43 = arith.constant 8 : index
    %c0_44 = arith.constant 0 : index
    %115 = vector.load %arg5[%c8_43, %c0_44] : memref<9x64xf32, #tpu.memory_space<vmem>>, vector<1x64xf32>
    %116 = vector.shape_cast %115 : vector<1x64xf32> to vector<64xf32>
    %117 = vector.shape_cast %116 : vector<64xf32> to vector<1x1x64xf32>
    %118 = vector.broadcast %117 : vector<1x1x64xf32> to vector<8x8x64xf32>
    %119 = arith.mulf %114, %118 : vector<8x8x64xf32>
    %120 = arith.addf %113, %119 : vector<8x8x64xf32>
    %c0_45 = arith.constant 0 : index
    %c0_46 = arith.constant 0 : index
    %121 = vector.load %arg6[%c0_45, %c0_46] : memref<1x64xf32, #tpu.memory_space<vmem>>, vector<1x64xf32>
    %122 = vector.shape_cast %121 : vector<1x64xf32> to vector<1x1x64xf32>
    %123 = vector.broadcast %122 : vector<1x1x64xf32> to vector<8x8x64xf32>
    %124 = arith.mulf %120, %123 : vector<8x8x64xf32>
    %c0_47 = arith.constant 0 : index
    %c0_48 = arith.constant 0 : index
    %125 = vector.load %arg7[%c0_47, %c0_48] : memref<1x64xf32, #tpu.memory_space<vmem>>, vector<1x64xf32>
    %126 = vector.shape_cast %125 : vector<1x64xf32> to vector<1x1x64xf32>
    %127 = vector.broadcast %126 : vector<1x1x64xf32> to vector<8x8x64xf32>
    %128 = arith.addf %124, %127 : vector<8x8x64xf32>
    %cst_49 = arith.constant 5.000000e-01 : f32
    %129 = vector.broadcast %cst_49 : f32 to vector<8x8x64xf32>
    %130 = arith.mulf %129, %128 : vector<8x8x64xf32>
    %cst_50 = arith.constant 0.707106769 : f32
    %131 = vector.broadcast %cst_50 : f32 to vector<8x8x64xf32>
    %132 = arith.mulf %128, %131 : vector<8x8x64xf32>
    %133 = math.absf %132 : vector<8x8x64xf32>
    %cst_51 = arith.constant 0.327591091 : f32
    %134 = vector.broadcast %cst_51 : f32 to vector<8x8x64xf32>
    %135 = arith.mulf %134, %133 : vector<8x8x64xf32>
    %cst_52 = arith.constant 1.000000e+00 : f32
    %136 = vector.broadcast %cst_52 : f32 to vector<8x8x64xf32>
    %137 = arith.addf %136, %135 : vector<8x8x64xf32>
    %cst_53 = arith.constant 1.000000e+00 : f32
    %138 = vector.broadcast %cst_53 : f32 to vector<8x8x64xf32>
    %139 = arith.divf %138, %137 : vector<8x8x64xf32>
    %cst_54 = arith.constant 1.06140542 : f32
    %140 = vector.broadcast %cst_54 : f32 to vector<8x8x64xf32>
    %141 = arith.mulf %140, %139 : vector<8x8x64xf32>
    %cst_55 = arith.constant -1.45315206 : f32
    %142 = vector.broadcast %cst_55 : f32 to vector<8x8x64xf32>
    %143 = arith.addf %141, %142 : vector<8x8x64xf32>
    %144 = arith.mulf %143, %139 : vector<8x8x64xf32>
    %cst_56 = arith.constant 1.42141378 : f32
    %145 = vector.broadcast %cst_56 : f32 to vector<8x8x64xf32>
    %146 = arith.addf %144, %145 : vector<8x8x64xf32>
    %147 = arith.mulf %146, %139 : vector<8x8x64xf32>
    %cst_57 = arith.constant -0.284496725 : f32
    %148 = vector.broadcast %cst_57 : f32 to vector<8x8x64xf32>
    %149 = arith.addf %147, %148 : vector<8x8x64xf32>
    %150 = arith.mulf %149, %139 : vector<8x8x64xf32>
    %cst_58 = arith.constant 0.254829586 : f32
    %151 = vector.broadcast %cst_58 : f32 to vector<8x8x64xf32>
    %152 = arith.addf %150, %151 : vector<8x8x64xf32>
    %153 = arith.mulf %152, %139 : vector<8x8x64xf32>
    %cst_59 = arith.constant 0.000000e+00 : f32
    %154 = vector.broadcast %cst_59 : f32 to vector<8x8x64xf32>
    %155 = arith.subf %154, %133 : vector<8x8x64xf32>
    %156 = arith.mulf %155, %133 : vector<8x8x64xf32>
    %157 = math.exp %156 : vector<8x8x64xf32>
    %158 = arith.mulf %153, %157 : vector<8x8x64xf32>
    %cst_60 = arith.constant 1.000000e+00 : f32
    %159 = vector.broadcast %cst_60 : f32 to vector<8x8x64xf32>
    %160 = arith.subf %159, %158 : vector<8x8x64xf32>
    %cst_61 = arith.constant 0.000000e+00 : f32
    %161 = vector.broadcast %cst_61 : f32 to vector<8x8x64xf32>
    %162 = arith.cmpf oge, %132, %161 : vector<8x8x64xf32>
    %cst_62 = arith.constant 0.000000e+00 : f32
    %163 = vector.broadcast %cst_62 : f32 to vector<8x8x64xf32>
    %164 = arith.subf %163, %160 : vector<8x8x64xf32>
    %165 = arith.select %162, %160, %164 : vector<8x8x64xi1>, vector<8x8x64xf32>
    %cst_63 = arith.constant 1.000000e+00 : f32
    %166 = vector.broadcast %cst_63 : f32 to vector<8x8x64xf32>
    %167 = arith.addf %166, %165 : vector<8x8x64xf32>
    %168 = arith.mulf %130, %167 : vector<8x8x64xf32>
    %169 = vector.shape_cast %168 : vector<8x8x64xf32> to vector<64x64xf32>
    %170 = arith.truncf %169 : vector<64x64xf32> to vector<64x64xbf16>
    %c0_64 = arith.constant 0 : index
    %c0_65 = arith.constant 0 : index
    %171 = vector.load %arg8[%c0_64, %c0_65] : memref<64x16xbf16, #tpu.memory_space<vmem>>, vector<64x16xbf16>
    %cst_66 = arith.constant dense<0.000000e+00> : vector<64x16xf32>
    %172 = tpu.matmul %170, %171, %cst_66 {dimension_numbers = #tpu.dot_dimension_numbers<[1], [0], [0], [1], [0, 0, 1, 1], [], []>} : vector<64x64xbf16>, vector<64x16xbf16>, vector<64x16xf32> -> vector<64x16xf32>
    %c0_67 = arith.constant 0 : index
    %c0_68 = arith.constant 0 : index
    %173 = vector.load %arg9[%c0_67, %c0_68] : memref<1x16xf32, #tpu.memory_space<vmem>>, vector<1x16xf32>
    %174 = vector.broadcast %173 : vector<1x16xf32> to vector<64x16xf32>
    %175 = arith.mulf %172, %174 : vector<64x16xf32>
    %c0_69 = arith.constant 0 : index
    %c0_70 = arith.constant 0 : index
    %176 = vector.load %arg10[%c0_69, %c0_70] : memref<1x16xf32, #tpu.memory_space<vmem>>, vector<1x16xf32>
    %177 = vector.broadcast %176 : vector<1x16xf32> to vector<64x16xf32>
    %178 = arith.addf %175, %177 : vector<64x16xf32>
    %179 = arith.addf %178, %2 : vector<64x16xf32>
    %cst_71 = arith.constant dense<0.000000e+00> : vector<16xf32>
    %180 = vector.multi_reduction <add>, %179, %cst_71 [0] : vector<64x16xf32> to vector<16xf32>
    %181 = vector.shape_cast %180 : vector<16xf32> to vector<1x16xf32>
    %cst_72 = arith.constant 1.562500e-02 : f32
    %182 = vector.broadcast %cst_72 : f32 to vector<1x16xf32>
    %183 = arith.mulf %181, %182 : vector<1x16xf32>
    %c0_73 = arith.constant 0 : index
    %c0_74 = arith.constant 0 : index
    %184 = vector.load %arg11[%c0_73, %c0_74] : memref<1x16xf32, #tpu.memory_space<vmem>>, vector<1x16xf32>
    %185 = arith.mulf %183, %184 : vector<1x16xf32>
    %cst_75 = arith.constant dense<0.000000e+00> : vector<1xf32>
    %186 = vector.multi_reduction <add>, %185, %cst_75 [1] : vector<1x16xf32> to vector<1xf32>
    %187 = vector.shape_cast %186 : vector<1xf32> to vector<1x1xf32>
    %cst_76 = arith.constant 5.000000e-01 : f32
    %188 = vector.broadcast %cst_76 : f32 to vector<1x1xf32>
    %189 = arith.mulf %188, %187 : vector<1x1xf32>
    %cst_77 = arith.constant 0.707106769 : f32
    %190 = vector.broadcast %cst_77 : f32 to vector<1x1xf32>
    %191 = arith.mulf %187, %190 : vector<1x1xf32>
    %192 = math.absf %191 : vector<1x1xf32>
    %cst_78 = arith.constant 0.327591091 : f32
    %193 = vector.broadcast %cst_78 : f32 to vector<1x1xf32>
    %194 = arith.mulf %193, %192 : vector<1x1xf32>
    %cst_79 = arith.constant 1.000000e+00 : f32
    %195 = vector.broadcast %cst_79 : f32 to vector<1x1xf32>
    %196 = arith.addf %195, %194 : vector<1x1xf32>
    %cst_80 = arith.constant 1.000000e+00 : f32
    %197 = vector.broadcast %cst_80 : f32 to vector<1x1xf32>
    %198 = arith.divf %197, %196 : vector<1x1xf32>
    %cst_81 = arith.constant 1.06140542 : f32
    %199 = vector.broadcast %cst_81 : f32 to vector<1x1xf32>
    %200 = arith.mulf %199, %198 : vector<1x1xf32>
    %cst_82 = arith.constant -1.45315206 : f32
    %201 = vector.broadcast %cst_82 : f32 to vector<1x1xf32>
    %202 = arith.addf %200, %201 : vector<1x1xf32>
    %203 = arith.mulf %202, %198 : vector<1x1xf32>
    %cst_83 = arith.constant 1.42141378 : f32
    %204 = vector.broadcast %cst_83 : f32 to vector<1x1xf32>
    %205 = arith.addf %203, %204 : vector<1x1xf32>
    %206 = arith.mulf %205, %198 : vector<1x1xf32>
    %cst_84 = arith.constant -0.284496725 : f32
    %207 = vector.broadcast %cst_84 : f32 to vector<1x1xf32>
    %208 = arith.addf %206, %207 : vector<1x1xf32>
    %209 = arith.mulf %208, %198 : vector<1x1xf32>
    %cst_85 = arith.constant 0.254829586 : f32
    %210 = vector.broadcast %cst_85 : f32 to vector<1x1xf32>
    %211 = arith.addf %209, %210 : vector<1x1xf32>
    %212 = arith.mulf %211, %198 : vector<1x1xf32>
    %cst_86 = arith.constant 0.000000e+00 : f32
    %213 = vector.broadcast %cst_86 : f32 to vector<1x1xf32>
    %214 = arith.subf %213, %192 : vector<1x1xf32>
    %215 = arith.mulf %214, %192 : vector<1x1xf32>
    %216 = math.exp %215 : vector<1x1xf32>
    %217 = arith.mulf %212, %216 : vector<1x1xf32>
    %cst_87 = arith.constant 1.000000e+00 : f32
    %218 = vector.broadcast %cst_87 : f32 to vector<1x1xf32>
    %219 = arith.subf %218, %217 : vector<1x1xf32>
    %cst_88 = arith.constant 0.000000e+00 : f32
    %220 = vector.broadcast %cst_88 : f32 to vector<1x1xf32>
    %221 = arith.cmpf oge, %191, %220 : vector<1x1xf32>
    %cst_89 = arith.constant 0.000000e+00 : f32
    %222 = vector.broadcast %cst_89 : f32 to vector<1x1xf32>
    %223 = arith.subf %222, %219 : vector<1x1xf32>
    %224 = arith.select %221, %219, %223 : vector<1x1xi1>, vector<1x1xf32>
    %cst_90 = arith.constant 1.000000e+00 : f32
    %225 = vector.broadcast %cst_90 : f32 to vector<1x1xf32>
    %226 = arith.addf %225, %224 : vector<1x1xf32>
    %227 = arith.mulf %189, %226 : vector<1x1xf32>
    %c0_91 = arith.constant 0 : index
    %c0_92 = arith.constant 0 : index
    %228 = vector.load %arg12[%c0_91, %c0_92] : memref<1x16xf32, #tpu.memory_space<vmem>>, vector<1x16xf32>
    %229 = vector.broadcast %227 : vector<1x1xf32> to vector<1x16xf32>
    %230 = arith.mulf %229, %228 : vector<1x16xf32>
    %cst_93 = arith.constant dense<0.000000e+00> : vector<16xf32>
    %231 = vector.multi_reduction <add>, %230, %cst_93 [0] : vector<1x16xf32> to vector<16xf32>
    %232 = vector.shape_cast %231 : vector<16xf32> to vector<1x16xf32>
    %233 = arith.negf %232 : vector<1x16xf32>
    %234 = math.exp %233 : vector<1x16xf32>
    %cst_94 = arith.constant 1.000000e+00 : f32
    %235 = vector.broadcast %cst_94 : f32 to vector<1x16xf32>
    %236 = arith.addf %235, %234 : vector<1x16xf32>
    %237 = arith.divf %235, %236 : vector<1x16xf32>
    %238 = vector.broadcast %237 : vector<1x16xf32> to vector<64x16xf32>
    %239 = arith.mulf %179, %238 : vector<64x16xf32>
    %240 = vector.shape_cast %239 : vector<64x16xf32> to vector<8x8x16xf32>
    %c0_95 = arith.constant 0 : index
    %c0_96 = arith.constant 0 : index
    %c0_97 = arith.constant 0 : index
    %c0_98 = arith.constant 0 : index
    %241 = vector.load %arg13[%c0_95, %c0_96, %c0_97, %c0_98] : memref<1x8x8x16xf32, #tpu.memory_space<vmem>>, vector<1x8x8x16xf32>
    %242 = vector.shape_cast %241 : vector<1x8x8x16xf32> to vector<8x8x16xf32>
    %243 = vector.shape_cast %240 : vector<8x8x16xf32> to vector<1x8x8x16xf32>
    tpu.vector_store %arg13[%c0_95, %c0_96, %c0_97, %c0_98], %243 {strides = array<i32>} : memref<1x8x8x16xf32, #tpu.memory_space<vmem>>, vector<1x8x8x16xf32>,
    return
  }
  func.func @transform_0(%arg0: i32) -> (i32, i32, i32, i32) {
    %c0_i32 = arith.constant 0 : i32
    %c0_i32_0 = arith.constant 0 : i32
    %c0_i32_1 = arith.constant 0 : i32
    %c0_i32_2 = arith.constant 0 : i32
    return %arg0, %c0_i32, %c0_i32_0, %c0_i32_1 : i32, i32, i32, i32
  }
  func.func @transform_1(%arg0: i32) -> (i32, i32) {
    %c0_i32 = arith.constant 0 : i32
    %c0_i32_0 = arith.constant 0 : i32
    %c0_i32_1 = arith.constant 0 : i32
    return %c0_i32, %c0_i32_0 : i32, i32
  }
  func.func @transform_2(%arg0: i32) -> (i32, i32) {
    %c0_i32 = arith.constant 0 : i32
    %c0_i32_0 = arith.constant 0 : i32
    %c0_i32_1 = arith.constant 0 : i32
    return %c0_i32, %c0_i32_0 : i32, i32
  }
  func.func @transform_3(%arg0: i32) -> (i32, i32) {
    %c0_i32 = arith.constant 0 : i32
    %c0_i32_0 = arith.constant 0 : i32
    %c0_i32_1 = arith.constant 0 : i32
    return %c0_i32, %c0_i32_0 : i32, i32
  }
  func.func @transform_4(%arg0: i32) -> (i32, i32) {
    %c0_i32 = arith.constant 0 : i32
    %c0_i32_0 = arith.constant 0 : i32
    %c0_i32_1 = arith.constant 0 : i32
    return %c0_i32, %c0_i32_0 : i32, i32
  }
  func.func @transform_5(%arg0: i32) -> (i32, i32) {
    %c0_i32 = arith.constant 0 : i32
    %c0_i32_0 = arith.constant 0 : i32
    %c0_i32_1 = arith.constant 0 : i32
    return %c0_i32, %c0_i32_0 : i32, i32
  }
  func.func @transform_6(%arg0: i32) -> (i32, i32) {
    %c0_i32 = arith.constant 0 : i32
    %c0_i32_0 = arith.constant 0 : i32
    %c0_i32_1 = arith.constant 0 : i32
    return %c0_i32, %c0_i32_0 : i32, i32
  }
  func.func @transform_7(%arg0: i32) -> (i32, i32) {
    %c0_i32 = arith.constant 0 : i32
    %c0_i32_0 = arith.constant 0 : i32
    %c0_i32_1 = arith.constant 0 : i32
    return %c0_i32, %c0_i32_0 : i32, i32
  }
  func.func @transform_8(%arg0: i32) -> (i32, i32) {
    %c0_i32 = arith.constant 0 : i32
    %c0_i32_0 = arith.constant 0 : i32
    %c0_i32_1 = arith.constant 0 : i32
    return %c0_i32, %c0_i32_0 : i32, i32
  }
  func.func @transform_9(%arg0: i32) -> (i32, i32) {
    %c0_i32 = arith.constant 0 : i32
    %c0_i32_0 = arith.constant 0 : i32
    %c0_i32_1 = arith.constant 0 : i32
    return %c0_i32, %c0_i32_0 : i32, i32
  }
  func.func @transform_10(%arg0: i32) -> (i32, i32) {
    %c0_i32 = arith.constant 0 : i32
    %c0_i32_0 = arith.constant 0 : i32
    %c0_i32_1 = arith.constant 0 : i32
    return %c0_i32, %c0_i32_0 : i32, i32
  }
  func.func @transform_11(%arg0: i32) -> (i32, i32) {
    %c0_i32 = arith.constant 0 : i32
    %c0_i32_0 = arith.constant 0 : i32
    %c0_i32_1 = arith.constant 0 : i32
    return %c0_i32, %c0_i32_0 : i32, i32
  }
  func.func @transform_12(%arg0: i32) -> (i32, i32, i32, i32) {
    %c0_i32 = arith.constant 0 : i32
    %c0_i32_0 = arith.constant 0 : i32
    %c0_i32_1 = arith.constant 0 : i32
    %c0_i32_2 = arith.constant 0 : i32
    return %arg0, %c0_i32, %c0_i32_0, %c0_i32_1 : i32, i32, i32, i32
  }
}

module attributes {stable_mosaic.version = 11 : i64} {
  func.func @matmul_affine_kernel(%arg0: i32, %arg1: memref<128x32xf32, #tpu.memory_space<vmem>>, %arg2: memref<32x32xbf16, #tpu.memory_space<vmem>>, %arg3: memref<1x32xf32, #tpu.memory_space<vmem>>, %arg4: memref<1x32xf32, #tpu.memory_space<vmem>>, %arg5: memref<128x32xf32, #tpu.memory_space<vmem>>) attributes {dimension_semantics = [#tpu.dimension_semantics<parallel>], iteration_bounds = array<i64: 1>, scalar_prefetch = 0 : i64, scratch_operands = 0 : i64, tpu.core_type = #tpu.core_type<tc>, window_params = [{transform_indices = @transform_0, window_bounds = array<i64: 128, 32>}, {pipeline_mode = #tpu.pipeline_mode<synchronous>, transform_indices = @transform_1, window_bounds = array<i64: 32, 32>}, {pipeline_mode = #tpu.pipeline_mode<synchronous>, transform_indices = @transform_2, window_bounds = array<i64: 1, 32>}, {pipeline_mode = #tpu.pipeline_mode<synchronous>, transform_indices = @transform_3, window_bounds = array<i64: 1, 32>}, {transform_indices = @transform_4, window_bounds = array<i64: 128, 32>}]} {
    %c0 = arith.constant 0 : index
    %c0_0 = arith.constant 0 : index
    %0 = vector.load %arg1[%c0, %c0_0] : memref<128x32xf32, #tpu.memory_space<vmem>>, vector<128x32xf32>
    %1 = arith.truncf %0 : vector<128x32xf32> to vector<128x32xbf16>
    %c0_1 = arith.constant 0 : index
    %c0_2 = arith.constant 0 : index
    %2 = vector.load %arg2[%c0_1, %c0_2] : memref<32x32xbf16, #tpu.memory_space<vmem>>, vector<32x32xbf16>
    %cst = arith.constant dense<0.000000e+00> : vector<128x32xf32>
    %3 = tpu.matmul %1, %2, %cst {dimension_numbers = #tpu.dot_dimension_numbers<[1], [0], [0], [1], [0, 0, 1, 1], [], []>} : vector<128x32xbf16>, vector<32x32xbf16>, vector<128x32xf32> -> vector<128x32xf32>
    %c0_3 = arith.constant 0 : index
    %c0_4 = arith.constant 0 : index
    %4 = vector.load %arg3[%c0_3, %c0_4] : memref<1x32xf32, #tpu.memory_space<vmem>>, vector<1x32xf32>
    %5 = vector.broadcast %4 : vector<1x32xf32> to vector<128x32xf32>
    %6 = arith.mulf %3, %5 : vector<128x32xf32>
    %c0_5 = arith.constant 0 : index
    %c0_6 = arith.constant 0 : index
    %7 = vector.load %arg4[%c0_5, %c0_6] : memref<1x32xf32, #tpu.memory_space<vmem>>, vector<1x32xf32>
    %8 = vector.broadcast %7 : vector<1x32xf32> to vector<128x32xf32>
    %9 = arith.addf %6, %8 : vector<128x32xf32>
    %cst_7 = arith.constant 5.000000e-01 : f32
    %10 = vector.broadcast %cst_7 : f32 to vector<128x32xf32>
    %11 = arith.mulf %10, %9 : vector<128x32xf32>
    %cst_8 = arith.constant 0.707106769 : f32
    %12 = vector.broadcast %cst_8 : f32 to vector<128x32xf32>
    %13 = arith.mulf %9, %12 : vector<128x32xf32>
    %14 = math.absf %13 : vector<128x32xf32>
    %cst_9 = arith.constant 0.327591091 : f32
    %15 = vector.broadcast %cst_9 : f32 to vector<128x32xf32>
    %16 = arith.mulf %15, %14 : vector<128x32xf32>
    %cst_10 = arith.constant 1.000000e+00 : f32
    %17 = vector.broadcast %cst_10 : f32 to vector<128x32xf32>
    %18 = arith.addf %17, %16 : vector<128x32xf32>
    %cst_11 = arith.constant 1.000000e+00 : f32
    %19 = vector.broadcast %cst_11 : f32 to vector<128x32xf32>
    %20 = arith.divf %19, %18 : vector<128x32xf32>
    %cst_12 = arith.constant 1.06140542 : f32
    %21 = vector.broadcast %cst_12 : f32 to vector<128x32xf32>
    %22 = arith.mulf %21, %20 : vector<128x32xf32>
    %cst_13 = arith.constant -1.45315206 : f32
    %23 = vector.broadcast %cst_13 : f32 to vector<128x32xf32>
    %24 = arith.addf %22, %23 : vector<128x32xf32>
    %25 = arith.mulf %24, %20 : vector<128x32xf32>
    %cst_14 = arith.constant 1.42141378 : f32
    %26 = vector.broadcast %cst_14 : f32 to vector<128x32xf32>
    %27 = arith.addf %25, %26 : vector<128x32xf32>
    %28 = arith.mulf %27, %20 : vector<128x32xf32>
    %cst_15 = arith.constant -0.284496725 : f32
    %29 = vector.broadcast %cst_15 : f32 to vector<128x32xf32>
    %30 = arith.addf %28, %29 : vector<128x32xf32>
    %31 = arith.mulf %30, %20 : vector<128x32xf32>
    %cst_16 = arith.constant 0.254829586 : f32
    %32 = vector.broadcast %cst_16 : f32 to vector<128x32xf32>
    %33 = arith.addf %31, %32 : vector<128x32xf32>
    %34 = arith.mulf %33, %20 : vector<128x32xf32>
    %cst_17 = arith.constant 0.000000e+00 : f32
    %35 = vector.broadcast %cst_17 : f32 to vector<128x32xf32>
    %36 = arith.subf %35, %14 : vector<128x32xf32>
    %37 = arith.mulf %36, %14 : vector<128x32xf32>
    %38 = math.exp %37 : vector<128x32xf32>
    %39 = arith.mulf %34, %38 : vector<128x32xf32>
    %cst_18 = arith.constant 1.000000e+00 : f32
    %40 = vector.broadcast %cst_18 : f32 to vector<128x32xf32>
    %41 = arith.subf %40, %39 : vector<128x32xf32>
    %cst_19 = arith.constant 0.000000e+00 : f32
    %42 = vector.broadcast %cst_19 : f32 to vector<128x32xf32>
    %43 = arith.cmpf oge, %13, %42 : vector<128x32xf32>
    %cst_20 = arith.constant 0.000000e+00 : f32
    %44 = vector.broadcast %cst_20 : f32 to vector<128x32xf32>
    %45 = arith.subf %44, %41 : vector<128x32xf32>
    %46 = arith.select %43, %41, %45 : vector<128x32xi1>, vector<128x32xf32>
    %cst_21 = arith.constant 1.000000e+00 : f32
    %47 = vector.broadcast %cst_21 : f32 to vector<128x32xf32>
    %48 = arith.addf %47, %46 : vector<128x32xf32>
    %49 = arith.mulf %11, %48 : vector<128x32xf32>
    %c0_22 = arith.constant 0 : index
    %c0_23 = arith.constant 0 : index
    %50 = vector.load %arg5[%c0_22, %c0_23] : memref<128x32xf32, #tpu.memory_space<vmem>>, vector<128x32xf32>
    tpu.vector_store %arg5[%c0_22, %c0_23], %49 {strides = array<i32>} : memref<128x32xf32, #tpu.memory_space<vmem>>, vector<128x32xf32>,
    return
  }
  func.func @transform_0(%arg0: i32) -> (i32, i32) {
    %c0_i32 = arith.constant 0 : i32
    %c0_i32_0 = arith.constant 0 : i32
    return %arg0, %c0_i32 : i32, i32
  }
  func.func @transform_1(%arg0: i32) -> (i32, i32) {
    %c0_i32 = arith.constant 0 : i32
    %c0_i32_0 = arith.constant 0 : i32
    %c0_i32_1 = arith.constant 0 : i32
    return %c0_i32, %c0_i32_0 : i32, i32
  }
  func.func @transform_2(%arg0: i32) -> (i32, i32) {
    %c0_i32 = arith.constant 0 : i32
    %c0_i32_0 = arith.constant 0 : i32
    %c0_i32_1 = arith.constant 0 : i32
    return %c0_i32, %c0_i32_0 : i32, i32
  }
  func.func @transform_3(%arg0: i32) -> (i32, i32) {
    %c0_i32 = arith.constant 0 : i32
    %c0_i32_0 = arith.constant 0 : i32
    %c0_i32_1 = arith.constant 0 : i32
    return %c0_i32, %c0_i32_0 : i32, i32
  }
  func.func @transform_4(%arg0: i32) -> (i32, i32) {
    %c0_i32 = arith.constant 0 : i32
    %c0_i32_0 = arith.constant 0 : i32
    return %arg0, %c0_i32 : i32, i32
  }
}

</mosaic_0001>

<llo_original>
// kernel: cvta_forward.9
$region0: #{cvta_forward.9}
  #allocation0 [shape = 'u32[]', space=smem, size = 0x4, offset = 0x4, fixed_abs, tag = 'smem constant byte address 0x4 - core index']
  #allocation1 [shape = 'u32[72,128]{1,0:T(1,128)}', space=vmem, size = 0x9000, scoped, tag = 'internal scratch']
  %s0 = inlined_call_operand.hbm [shape: f32[128,16], index: 0, kind: input, shape index: {}]
  %s1 = inlined_call_operand.vmem [shape: bf16[16,32], index: 1, kind: input, shape index: {}]
  %s2 = inlined_call_operand.vmem [shape: f32[1,32], index: 2, kind: input, shape index: {}]
  %s3 = inlined_call_operand.vmem [shape: f32[1,32], index: 3, kind: input, shape index: {}]
  %s4 = inlined_call_operand.vmem [shape: f32[128,32], index: 4, kind: output, shape index: {}]
  %s5 = sld [smem:[#allocation0]]
  $region30: #{cvta_forward.9} parent=0
    _
  %s7 = ssub.s32 1, %s5
  %s8 = scalar_select 0, %s7, %s5
  $region1: #{cvta_forward.9} parent=0
    #allocation2 [shape = 'u8[65536]{0}', space=vmem, size = 0x10000, scoped, tag = 'input window, operand 0, single buffered']
    #allocation3 [shape = 's32[1]{0}', space=sflag, size = 0x4, scoped, tag = 'scoped memory for cvta_forward.9']
    %9 = vsyncpa [#allocation3], 0
    // Predicated region
    $region2: #{cvta_forward.9} parent=1 // pred_check
      _
    $region3: #{cvta_forward.9} parent=1 // pred_check_branch
      %11 = sbr.rel (0) target = $region5
    $region4: #{cvta_forward.9} parent=1 // pred_region
      %13 = vsyncadd [#allocation3], 0
      %s14 = sshll.u32 %s0, 4
      %s15 = int_to_ptr.hbm [resolvable:$true] %s14
      %s16 = sshll.u32 [#allocation2], 4
      %s17 = int_to_ptr.vmem [resolvable:$true] %s16
      %22 = dma.hbm_to_vmem [thread:$0]  %s15, 2048, %s17, [#allocation3], 128, 128, 8
    $region5: #{cvta_forward.9} parent=1 // pred_fallthru
      _
    // Predicated region
    $region6: #{cvta_forward.9} parent=1 // pred_check
      _
    $region7: #{cvta_forward.9} parent=1 // pred_check_branch
      %24 = sbr.rel (0) target = $region9
    $region8: #{cvta_forward.9} parent=1 // pred_region
      _
    $region9: #{cvta_forward.9} parent=1 // pred_fallthru
      _
    // Predicated region
    $region10: #{cvta_forward.9} parent=1 // pred_check
      _
    $region11: #{cvta_forward.9} parent=1 // pred_check_branch
      %26 = sbr.rel (0) target = $region13
    $region12: #{cvta_forward.9} parent=1 // pred_region
      _
    $region13: #{cvta_forward.9} parent=1 // pred_fallthru
      _
    // Predicated region
    $region14: #{cvta_forward.9} parent=1 // pred_check
      _
    $region15: #{cvta_forward.9} parent=1 // pred_check_branch
      %28 = sbr.rel (0) target = $region17
    $region16: #{cvta_forward.9} parent=1 // pred_region
      _
    $region17: #{cvta_forward.9} parent=1 // pred_fallthru
      _
    // Predicated region
    $region18: #{cvta_forward.9} parent=1 // pred_check
      _
    $region19: #{cvta_forward.9} parent=1 // pred_check_branch
      %30 = sbr.rel (0) target = $region21
    $region20: #{cvta_forward.9} parent=1 // pred_region
      %32 = dma.done [#allocation3], 2048
    $region21: #{cvta_forward.9} parent=1 // pred_fallthru
      _
    %v34 = vld [vmem:[#allocation2] sm:$0xff]
    %v35 = vld [vmem:[#allocation2 + $0x8] sm:$0xff]
    %v36 = vld [vmem:[#allocation2 + $0x10] sm:$0xff]
    %v37 = vld [vmem:[#allocation2 + $0x18] sm:$0xff]
    %v38 = vld [vmem:[#allocation2 + $0x20] sm:$0xff]
    %v39 = vld [vmem:[#allocation2 + $0x28] sm:$0xff]
    %v40 = vld [vmem:[#allocation2 + $0x30] sm:$0xff]
    %v41 = vld [vmem:[#allocation2 + $0x38] sm:$0xff]
    %v42 = vld [vmem:[#allocation2 + $0x40] sm:$0xff]
    %v43 = vld [vmem:[#allocation2 + $0x48] sm:$0xff]
    %v44 = vld [vmem:[#allocation2 + $0x50] sm:$0xff]
    %v45 = vld [vmem:[#allocation2 + $0x58] sm:$0xff]
    %v46 = vld [vmem:[#allocation2 + $0x60] sm:$0xff]
    %v47 = vld [vmem:[#allocation2 + $0x68] sm:$0xff]
    %v48 = vld [vmem:[#allocation2 + $0x70] sm:$0xff]
    %v49 = vld [vmem:[#allocation2 + $0x78] sm:$0xff]
    %v50 = vpack.c.bf16 %v35, %v34
    %v51 = vpack.c.bf16 %v37, %v36
    %v52 = vpack.c.bf16 %v39, %v38
    %v53 = vpack.c.bf16 %v41, %v40
    %v54 = vpack.c.bf16 %v43, %v42
    %v55 = vpack.c.bf16 %v45, %v44
    %v56 = vpack.c.bf16 %v47, %v46
    %v57 = vpack.c.bf16 %v49, %v48
    %v58 = vld [vmem:[%s1] sm:$0xf]
    %v59 = vld [vmem:[%s1 + $0x4] sm:$0xf]
    %v62 = vunpack.c.l.b16 %v58
    %v63 = vunpack.c.l.b16 %v59
    %v64 = vpack.c.b16 %v63, %v62
    %vm66 = vcmask 130048
    %v68 = vsel %vm66, %v50, 0
    %v71 = vsel %vm66, %v51, 0
    %v74 = vsel %vm66, %v52, 0
    %v77 = vsel %vm66, %v53, 0
    %v80 = vsel %vm66, %v54, 0
    %v83 = vsel %vm66, %v55, 0
    %v86 = vsel %vm66, %v56, 0
    %v89 = vsel %vm66, %v57, 0
    %91 = vmatpush.bf16.msra.mxu0 0
    %92 = vmatpush.bf16.msra.mxu0 0
    %93 = vmatpush.bf16.msra.mxu0 0
    %94 = vmatpush.bf16.msra.mxu0 0
    %95 = vmatpush.bf16.msra.mxu0 0
    %96 = vmatpush.bf16.msra.mxu0 0
    %97 = vmatpush.bf16.msra.mxu0 0
    %98 = vmatpush.bf16.msra.mxu0 %v64
    %99 = vmatmul.bf16.gmra.mxu0 %v68
    %v100 = vpop.f32.mrf.mxu0
    %v101 = vadd.f32 0.0, %v100
    %v102 = vpop.f32.mrf.mxu0
    %v103 = vadd.f32 0.0, %v102
    %104 = vmatmul.bf16.gmra.mxu0 %v71
    %v105 = vpop.f32.mrf.mxu0
    %v106 = vadd.f32 0.0, %v105
    %v107 = vpop.f32.mrf.mxu0
    %v108 = vadd.f32 0.0, %v107
    %109 = vmatmul.bf16.gmra.mxu0 %v74
    %v110 = vpop.f32.mrf.mxu0
    %v111 = vadd.f32 0.0, %v110
    %v112 = vpop.f32.mrf.mxu0
    %v113 = vadd.f32 0.0, %v112
    %114 = vmatmul.bf16.gmra.mxu0 %v77
    %v115 = vpop.f32.mrf.mxu0
    %v116 = vadd.f32 0.0, %v115
    %v117 = vpop.f32.mrf.mxu0
    %v118 = vadd.f32 0.0, %v117
    %119 = vmatmul.bf16.gmra.mxu0 %v80
    %v120 = vpop.f32.mrf.mxu0
    %v121 = vadd.f32 0.0, %v120
    %v122 = vpop.f32.mrf.mxu0
    %v123 = vadd.f32 0.0, %v122
    %124 = vmatmul.bf16.gmra.mxu0 %v83
    %v125 = vpop.f32.mrf.mxu0
    %v126 = vadd.f32 0.0, %v125
    %v127 = vpop.f32.mrf.mxu0
    %v128 = vadd.f32 0.0, %v127
    %129 = vmatmul.bf16.gmra.mxu0 %v86
    %v130 = vpop.f32.mrf.mxu0
    %v131 = vadd.f32 0.0, %v130
    %v132 = vpop.f32.mrf.mxu0
    %v133 = vadd.f32 0.0, %v132
    %134 = vmatmul.bf16.gmra.mxu0 %v89
    %v135 = vpop.f32.mrf.mxu0
    %v136 = vadd.f32 0.0, %v135
    %v137 = vpop.f32.mrf.mxu0
    %v138 = vadd.f32 0.0, %v137
    %139 = vdwg.mxu0
    %v140 = vld [vmem:[%s2] sm:$0x1]
    %v142 = vperm.slane %v140, 0
    %v144 = vmul.f32 %v101, %v142
    %v145 = vmul.f32 %v103, %v142
    %v146 = vmul.f32 %v106, %v142
    %v147 = vmul.f32 %v108, %v142
    %v148 = vmul.f32 %v111, %v142
    %v149 = vmul.f32 %v113, %v142
    %v150 = vmul.f32 %v116, %v142
    %v151 = vmul.f32 %v118, %v142
    %v152 = vmul.f32 %v121, %v142
    %v153 = vmul.f32 %v123, %v142
    %v154 = vmul.f32 %v126, %v142
    %v155 = vmul.f32 %v128, %v142
    %v156 = vmul.f32 %v131, %v142
    %v157 = vmul.f32 %v133, %v142
    %v158 = vmul.f32 %v136, %v142
    %v159 = vmul.f32 %v138, %v142
    %v160 = vld [vmem:[%s3] sm:$0x1]
    %v162 = vperm.slane %v160, 0
    %v164 = vadd.f32 %v144, %v162
    %v165 = vadd.f32 %v145, %v162
    %v166 = vadd.f32 %v146, %v162
    %v167 = vadd.f32 %v147, %v162
    %v168 = vadd.f32 %v148, %v162
    %v169 = vadd.f32 %v149, %v162
    %v170 = vadd.f32 %v150, %v162
    %v171 = vadd.f32 %v151, %v162
    %v172 = vadd.f32 %v152, %v162
    %v173 = vadd.f32 %v153, %v162
    %v174 = vadd.f32 %v154, %v162
    %v175 = vadd.f32 %v155, %v162
    %v176 = vadd.f32 %v156, %v162
    %v177 = vadd.f32 %v157, %v162
    %v178 = vadd.f32 %v158, %v162
    %v179 = vadd.f32 %v159, %v162
    %v180 = vmul.f32 %v164, 0.5
    %v181 = vmul.f32 %v165, 0.5
    %v182 = vmul.f32 %v166, 0.5
    %v183 = vmul.f32 %v167, 0.5
    %v184 = vmul.f32 %v168, 0.5
    %v185 = vmul.f32 %v169, 0.5
    %v186 = vmul.f32 %v170, 0.5
    %v187 = vmul.f32 %v171, 0.5
    %v188 = vmul.f32 %v172, 0.5
    %v189 = vmul.f32 %v173, 0.5
    %v190 = vmul.f32 %v174, 0.5
    %v191 = vmul.f32 %v175, 0.5
    %v192 = vmul.f32 %v176, 0.5
    %v193 = vmul.f32 %v177, 0.5
    %v194 = vmul.f32 %v178, 0.5
    %v195 = vmul.f32 %v179, 0.5
    %v196 = vmul.f32 %v164, 0.70710677
    %v197 = vmul.f32 %v165, 0.70710677
    %v198 = vmul.f32 %v166, 0.70710677
    %v199 = vmul.f32 %v167, 0.70710677
    %v200 = vmul.f32 %v168, 0.70710677
    %v201 = vmul.f32 %v169, 0.70710677
    %v202 = vmul.f32 %v170, 0.70710677
    %v203 = vmul.f32 %v171, 0.70710677
    %v204 = vmul.f32 %v172, 0.70710677
    %v205 = vmul.f32 %v173, 0.70710677
    %v206 = vmul.f32 %v174, 0.70710677
    %v207 = vmul.f32 %v175, 0.70710677
    %v208 = vmul.f32 %v176, 0.70710677
    %v209 = vmul.f32 %v177, 0.70710677
    %v210 = vmul.f32 %v178, 0.70710677
    %v211 = vmul.f32 %v179, 0.70710677
    %v212 = vand.u32 2147483647, %v196
    %v213 = vand.u32 2147483647, %v197
    %v214 = vand.u32 2147483647, %v198
    %v215 = vand.u32 2147483647, %v199
    %v216 = vand.u32 2147483647, %v200
    %v217 = vand.u32 2147483647, %v201
    %v218 = vand.u32 2147483647, %v202
    %v219 = vand.u32 2147483647, %v203
    %v220 = vand.u32 2147483647, %v204
    %v221 = vand.u32 2147483647, %v205
    %v222 = vand.u32 2147483647, %v206
    %v223 = vand.u32 2147483647, %v207
    %v224 = vand.u32 2147483647, %v208
    %v225 = vand.u32 2147483647, %v209
    %v226 = vand.u32 2147483647, %v210
    %v227 = vand.u32 2147483647, %v211
    %v228 = vmul.f32 %v212, 0.3275911
    %v229 = vmul.f32 %v213, 0.3275911
    %v230 = vmul.f32 %v214, 0.3275911
    %v231 = vmul.f32 %v215, 0.3275911
    %v232 = vmul.f32 %v216, 0.3275911
    %v233 = vmul.f32 %v217, 0.3275911
    %v234 = vmul.f32 %v218, 0.3275911
    %v235 = vmul.f32 %v219, 0.3275911
    %v236 = vmul.f32 %v220, 0.3275911
    %v237 = vmul.f32 %v221, 0.3275911
    %v238 = vmul.f32 %v222, 0.3275911
    %v239 = vmul.f32 %v223, 0.3275911
    %v240 = vmul.f32 %v224, 0.3275911
    %v241 = vmul.f32 %v225, 0.3275911
    %v242 = vmul.f32 %v226, 0.3275911
    %v243 = vmul.f32 %v227, 0.3275911
    %v244 = vadd.f32 %v228, 1.0
    %v245 = vadd.f32 %v229, 1.0
    %v246 = vadd.f32 %v230, 1.0
    %v247 = vadd.f32 %v231, 1.0
    %v248 = vadd.f32 %v232, 1.0
    %v249 = vadd.f32 %v233, 1.0
    %v250 = vadd.f32 %v234, 1.0
    %v251 = vadd.f32 %v235, 1.0
    %v252 = vadd.f32 %v236, 1.0
    %v253 = vadd.f32 %v237, 1.0
    %v254 = vadd.f32 %v238, 1.0
    %v255 = vadd.f32 %v239, 1.0
    %v256 = vadd.f32 %v240, 1.0
    %v257 = vadd.f32 %v241, 1.0
    %v258 = vadd.f32 %v242, 1.0
    %v259 = vadd.f32 %v243, 1.0
    %v260 = vrcp.pop %v244
    %v261 = vmul.f32 %v244, %v260
    %v262 = vsub.f32 1.0, %v261
    %v263 = vmul.f32 %v260, %v262
    %v264 = vadd.f32 %v260, %v263
    %vm265 = vweird.f32 %v244
    %vm266 = vweird.f32 %v260
    %vm267 = vmor %vm265, %vm266
    %v268 = vsel %vm267, %v260, %v264
    %v269 = vand.u32 2147483647, %v244
    %vm270 = vcmp.eq.f32.partialorder %v269, 8.507059e+37
    %v271 = vand.u32 %v244, 2147483648
    %v272 = vor.u32 1.1754944e-38, %v271
    %v273 = vsel %vm270, %v272, %v268
    %v274 = vmul.f32 1.0, %v273
    %v275 = vrcp.pop %v245
    %v276 = vmul.f32 %v245, %v275
    %v277 = vsub.f32 1.0, %v276
    %v278 = vmul.f32 %v275, %v277
    %v279 = vadd.f32 %v275, %v278
    %vm280 = vweird.f32 %v245
    %vm281 = vweird.f32 %v275
    %vm282 = vmor %vm280, %vm281
    %v283 = vsel %vm282, %v275, %v279
    %v284 = vand.u32 2147483647, %v245
    %vm285 = vcmp.eq.f32.partialorder %v284, 8.507059e+37
    %v286 = vand.u32 %v245, 2147483648
    %v287 = vor.u32 1.1754944e-38, %v286
    %v288 = vsel %vm285, %v287, %v283
    %v289 = vmul.f32 1.0, %v288
    %v290 = vrcp.pop %v246
    %v291 = vmul.f32 %v246, %v290
    %v292 = vsub.f32 1.0, %v291
    %v293 = vmul.f32 %v290, %v292
    %v294 = vadd.f32 %v290, %v293
    %vm295 = vweird.f32 %v246
    %vm296 = vweird.f32 %v290
    %vm297 = vmor %vm295, %vm296
    %v298 = vsel %vm297, %v290, %v294
    %v299 = vand.u32 2147483647, %v246
    %vm300 = vcmp.eq.f32.partialorder %v299, 8.507059e+37
    %v301 = vand.u32 %v246, 2147483648
    %v302 = vor.u32 1.1754944e-38, %v301
    %v303 = vsel %vm300, %v302, %v298
    %v304 = vmul.f32 1.0, %v303
    %v305 = vrcp.pop %v247
    %v306 = vmul.f32 %v247, %v305
    %v307 = vsub.f32 1.0, %v306
    %v308 = vmul.f32 %v305, %v307
    %v309 = vadd.f32 %v305, %v308
    %vm310 = vweird.f32 %v247
    %vm311 = vweird.f32 %v305
    %vm312 = vmor %vm310, %vm311
    %v313 = vsel %vm312, %v305, %v309
    %v314 = vand.u32 2147483647, %v247
    %vm315 = vcmp.eq.f32.partialorder %v314, 8.507059e+37
    %v316 = vand.u32 %v247, 2147483648
    %v317 = vor.u32 1.1754944e-38, %v316
    %v318 = vsel %vm315, %v317, %v313
    %v319 = vmul.f32 1.0, %v318
    %v320 = vrcp.pop %v248
    %v321 = vmul.f32 %v248, %v320
    %v322 = vsub.f32 1.0, %v321
    %v323 = vmul.f32 %v320, %v322
    %v324 = vadd.f32 %v320, %v323
    %vm325 = vweird.f32 %v248
    %vm326 = vweird.f32 %v320
    %vm327 = vmor %vm325, %vm326
    %v328 = vsel %vm327, %v320, %v324
    %v329 = vand.u32 2147483647, %v248
    %vm330 = vcmp.eq.f32.partialorder %v329, 8.507059e+37
    %v331 = vand.u32 %v248, 2147483648
    %v332 = vor.u32 1.1754944e-38, %v331
    %v333 = vsel %vm330, %v332, %v328
    %v334 = vmul.f32 1.0, %v333
    %v335 = vrcp.pop %v249
    %v336 = vmul.f32 %v249, %v335
    %v337 = vsub.f32 1.0, %v336
    %v338 = vmul.f32 %v335, %v337
    %v339 = vadd.f32 %v335, %v338
    %vm340 = vweird.f32 %v249
    %vm341 = vweird.f32 %v335
    %vm342 = vmor %vm340, %vm341
    %v343 = vsel %vm342, %v335, %v339
    %v344 = vand.u32 2147483647, %v249
    %vm345 = vcmp.eq.f32.partialorder %v344, 8.507059e+37
    %v346 = vand.u32 %v249, 2147483648
    %v347 = vor.u32 1.1754944e-38, %v346
    %v348 = vsel %vm345, %v347, %v343
    %v349 = vmul.f32 1.0, %v348
    %v350 = vrcp.pop %v250
    %v351 = vmul.f32 %v250, %v350
    %v352 = vsub.f32 1.0, %v351
    %v353 = vmul.f32 %v350, %v352
    %v354 = vadd.f32 %v350, %v353
    %vm355 = vweird.f32 %v250
    %vm356 = vweird.f32 %v350
    %vm357 = vmor %vm355, %vm356
    %v358 = vsel %vm357, %v350, %v354
    %v359 = vand.u32 2147483647, %v250
    %vm360 = vcmp.eq.f32.partialorder %v359, 8.507059e+37
    %v361 = vand.u32 %v250, 2147483648
    %v362 = vor.u32 1.1754944e-38, %v361
    %v363 = vsel %vm360, %v362, %v358
    %v364 = vmul.f32 1.0, %v363
    %v365 = vrcp.pop %v251
    %v366 = vmul.f32 %v251, %v365
    %v367 = vsub.f32 1.0, %v366
    %v368 = vmul.f32 %v365, %v367
    %v369 = vadd.f32 %v365, %v368
    %vm370 = vweird.f32 %v251
    %vm371 = vweird.f32 %v365
    %vm372 = vmor %vm370, %vm371
    %v373 = vsel %vm372, %v365, %v369
    %v374 = vand.u32 2147483647, %v251
    %vm375 = vcmp.eq.f32.partialorder %v374, 8.507059e+37
    %v376 = vand.u32 %v251, 2147483648
    %v377 = vor.u32 1.1754944e-38, %v376
    %v378 = vsel %vm375, %v377, %v373
    %v379 = vmul.f32 1.0, %v378
    %v380 = vrcp.pop %v252
    %v381 = vmul.f32 %v252, %v380
    %v382 = vsub.f32 1.0, %v381
    %v383 = vmul.f32 %v380, %v382
    %v384 = vadd.f32 %v380, %v383
    %vm385 = vweird.f32 %v252
    %vm386 = vweird.f32 %v380
    %vm387 = vmor %vm385, %vm386
    %v388 = vsel %vm387, %v380, %v384
    %v389 = vand.u32 2147483647, %v252
    %vm390 = vcmp.eq.f32.partialorder %v389, 8.507059e+37
    %v391 = vand.u32 %v252, 2147483648
    %v392 = vor.u32 1.1754944e-38, %v391
    %v393 = vsel %vm390, %v392, %v388
    %v394 = vmul.f32 1.0, %v393
    %v395 = vrcp.pop %v253
    %v396 = vmul.f32 %v253, %v395
    %v397 = vsub.f32 1.0, %v396
    %v398 = vmul.f32 %v395, %v397
    %v399 = vadd.f32 %v395, %v398
    %vm400 = vweird.f32 %v253
    %vm401 = vweird.f32 %v395
    %vm402 = vmor %vm400, %vm401
    %v403 = vsel %vm402, %v395, %v399
    %v404 = vand.u32 2147483647, %v253
    %vm405 = vcmp.eq.f32.partialorder %v404, 8.507059e+37
    %v406 = vand.u32 %v253, 2147483648
    %v407 = vor.u32 1.1754944e-38, %v406
    %v408 = vsel %vm405, %v407, %v403
    %v409 = vmul.f32 1.0, %v408
    %v410 = vrcp.pop %v254
    %v411 = vmul.f32 %v254, %v410
    %v412 = vsub.f32 1.0, %v411
    %v413 = vmul.f32 %v410, %v412
    %v414 = vadd.f32 %v410, %v413
    %vm415 = vweird.f32 %v254
    %vm416 = vweird.f32 %v410
    %vm417 = vmor %vm415, %vm416
    %v418 = vsel %vm417, %v410, %v414
    %v419 = vand.u32 2147483647, %v254
    %vm420 = vcmp.eq.f32.partialorder %v419, 8.507059e+37
    %v421 = vand.u32 %v254, 2147483648
    %v422 = vor.u32 1.1754944e-38, %v421
    %v423 = vsel %vm420, %v422, %v418
    %v424 = vmul.f32 1.0, %v423
    %v425 = vrcp.pop %v255
    %v426 = vmul.f32 %v255, %v425
    %v427 = vsub.f32 1.0, %v426
    %v428 = vmul.f32 %v425, %v427
    %v429 = vadd.f32 %v425, %v428
    %vm430 = vweird.f32 %v255
    %vm431 = vweird.f32 %v425
    %vm432 = vmor %vm430, %vm431
    %v433 = vsel %vm432, %v425, %v429
    %v434 = vand.u32 2147483647, %v255
    %vm435 = vcmp.eq.f32.partialorder %v434, 8.507059e+37
    %v436 = vand.u32 %v255, 2147483648
    %v437 = vor.u32 1.1754944e-38, %v436
    %v438 = vsel %vm435, %v437, %v433
    %v439 = vmul.f32 1.0, %v438
    %v440 = vrcp.pop %v256
    %v441 = vmul.f32 %v256, %v440
    %v442 = vsub.f32 1.0, %v441
    %v443 = vmul.f32 %v440, %v442
    %v444 = vadd.f32 %v440, %v443
    %vm445 = vweird.f32 %v256
    %vm446 = vweird.f32 %v440
    %vm447 = vmor %vm445, %vm446
    %v448 = vsel %vm447, %v440, %v444
    %v449 = vand.u32 2147483647, %v256
    %vm450 = vcmp.eq.f32.partialorder %v449, 8.507059e+37
    %v451 = vand.u32 %v256, 2147483648
    %v452 = vor.u32 1.1754944e-38, %v451
    %v453 = vsel %vm450, %v452, %v448
    %v454 = vmul.f32 1.0, %v453
    %v455 = vrcp.pop %v257
    %v456 = vmul.f32 %v257, %v455
    %v457 = vsub.f32 1.0, %v456
    %v458 = vmul.f32 %v455, %v457
    %v459 = vadd.f32 %v455, %v458
    %vm460 = vweird.f32 %v257
    %vm461 = vweird.f32 %v455
    %vm462 = vmor %vm460, %vm461
    %v463 = vsel %vm462, %v455, %v459
    %v464 = vand.u32 2147483647, %v257
    %vm465 = vcmp.eq.f32.partialorder %v464, 8.507059e+37
    %v466 = vand.u32 %v257, 2147483648
    %v467 = vor.u32 1.1754944e-38, %v466
    %v468 = vsel %vm465, %v467, %v463
    %v469 = vmul.f32 1.0, %v468
    %v470 = vrcp.pop %v258
    %v471 = vmul.f32 %v258, %v470
    %v472 = vsub.f32 1.0, %v471
    %v473 = vmul.f32 %v470, %v472
    %v474 = vadd.f32 %v470, %v473
    %vm475 = vweird.f32 %v258
    %vm476 = vweird.f32 %v470
    %vm477 = vmor %vm475, %vm476
    %v478 = vsel %vm477, %v470, %v474
    %v479 = vand.u32 2147483647, %v258
    %vm480 = vcmp.eq.f32.partialorder %v479, 8.507059e+37
    %v481 = vand.u32 %v258, 2147483648
    %v482 = vor.u32 1.1754944e-38, %v481
    %v483 = vsel %vm480, %v482, %v478
    %v484 = vmul.f32 1.0, %v483
    %v485 = vrcp.pop %v259
    %v486 = vmul.f32 %v259, %v485
    %v487 = vsub.f32 1.0, %v486
    %v488 = vmul.f32 %v485, %v487
    %v489 = vadd.f32 %v485, %v488
    %vm490 = vweird.f32 %v259
    %vm491 = vweird.f32 %v485
    %vm492 = vmor %vm490, %vm491
    %v493 = vsel %vm492, %v485, %v489
    %v494 = vand.u32 2147483647, %v259
    %vm495 = vcmp.eq.f32.partialorder %v494, 8.507059e+37
    %v496 = vand.u32 %v259, 2147483648
    %v497 = vor.u32 1.1754944e-38, %v496
    %v498 = vsel %vm495, %v497, %v493
    %v499 = vmul.f32 1.0, %v498
    %v500 = vmul.f32 %v274, 1.0614054
    %v501 = vmul.f32 %v289, 1.0614054
    %v502 = vmul.f32 %v304, 1.0614054
    %v503 = vmul.f32 %v319, 1.0614054
    %v504 = vmul.f32 %v334, 1.0614054
    %v505 = vmul.f32 %v349, 1.0614054
    %v506 = vmul.f32 %v364, 1.0614054
    %v507 = vmul.f32 %v379, 1.0614054
    %v508 = vmul.f32 %v394, 1.0614054
    %v509 = vmul.f32 %v409, 1.0614054
    %v510 = vmul.f32 %v424, 1.0614054
    %v511 = vmul.f32 %v439, 1.0614054
    %v512 = vmul.f32 %v454, 1.0614054
    %v513 = vmul.f32 %v469, 1.0614054
    %v514 = vmul.f32 %v484, 1.0614054
    %v515 = vmul.f32 %v499, 1.0614054
    %v516 = vadd.f32 %v500, -1.4531521
    %v517 = vadd.f32 %v501, -1.4531521
    %v518 = vadd.f32 %v502, -1.4531521
    %v519 = vadd.f32 %v503, -1.4531521
    %v520 = vadd.f32 %v504, -1.4531521
    %v521 = vadd.f32 %v505, -1.4531521
    %v522 = vadd.f32 %v506, -1.4531521
    %v523 = vadd.f32 %v507, -1.4531521
    %v524 = vadd.f32 %v508, -1.4531521
    %v525 = vadd.f32 %v509, -1.4531521
    %v526 = vadd.f32 %v510, -1.4531521
    %v527 = vadd.f32 %v511, -1.4531521
    %v528 = vadd.f32 %v512, -1.4531521
    %v529 = vadd.f32 %v513, -1.4531521
    %v530 = vadd.f32 %v514, -1.4531521
    %v531 = vadd.f32 %v515, -1.4531521
    %v532 = vmul.f32 %v516, %v274
    %v533 = vmul.f32 %v517, %v289
    %v534 = vmul.f32 %v518, %v304
    %v535 = vmul.f32 %v519, %v319
    %v536 = vmul.f32 %v520, %v334
    %v537 = vmul.f32 %v521, %v349
    %v538 = vmul.f32 %v522, %v364
    %v539 = vmul.f32 %v523, %v379
    %v540 = vmul.f32 %v524, %v394
    %v541 = vmul.f32 %v525, %v409
    %v542 = vmul.f32 %v526, %v424
    %v543 = vmul.f32 %v527, %v439
    %v544 = vmul.f32 %v528, %v454
    %v545 = vmul.f32 %v529, %v469
    %v546 = vmul.f32 %v530, %v484
    %v547 = vmul.f32 %v531, %v499
    %v548 = vadd.f32 %v532, 1.4214138
    %v549 = vadd.f32 %v533, 1.4214138
    %v550 = vadd.f32 %v534, 1.4214138
    %v551 = vadd.f32 %v535, 1.4214138
    %v552 = vadd.f32 %v536, 1.4214138
    %v553 = vadd.f32 %v537, 1.4214138
    %v554 = vadd.f32 %v538, 1.4214138
    %v555 = vadd.f32 %v539, 1.4214138
    %v556 = vadd.f32 %v540, 1.4214138
    %v557 = vadd.f32 %v541, 1.4214138
    %v558 = vadd.f32 %v542, 1.4214138
    %v559 = vadd.f32 %v543, 1.4214138
    %v560 = vadd.f32 %v544, 1.4214138
    %v561 = vadd.f32 %v545, 1.4214138
    %v562 = vadd.f32 %v546, 1.4214138
    %v563 = vadd.f32 %v547, 1.4214138
    %v564 = vmul.f32 %v548, %v274
    %v565 = vmul.f32 %v549, %v289
    %v566 = vmul.f32 %v550, %v304
    %v567 = vmul.f32 %v551, %v319
    %v568 = vmul.f32 %v552, %v334
    %v569 = vmul.f32 %v553, %v349
    %v570 = vmul.f32 %v554, %v364
    %v571 = vmul.f32 %v555, %v379
    %v572 = vmul.f32 %v556, %v394
    %v573 = vmul.f32 %v557, %v409
    %v574 = vmul.f32 %v558, %v424
    %v575 = vmul.f32 %v559, %v439
    %v576 = vmul.f32 %v560, %v454
    %v577 = vmul.f32 %v561, %v469
    %v578 = vmul.f32 %v562, %v484
    %v579 = vmul.f32 %v563, %v499
    %v580 = vadd.f32 %v564, -0.28449672
    %v581 = vadd.f32 %v565, -0.28449672
    %v582 = vadd.f32 %v566, -0.28449672
    %v583 = vadd.f32 %v567, -0.28449672
    %v584 = vadd.f32 %v568, -0.28449672
    %v585 = vadd.f32 %v569, -0.28449672
    %v586 = vadd.f32 %v570, -0.28449672
    %v587 = vadd.f32 %v571, -0.28449672
    %v588 = vadd.f32 %v572, -0.28449672
    %v589 = vadd.f32 %v573, -0.28449672
    %v590 = vadd.f32 %v574, -0.28449672
    %v591 = vadd.f32 %v575, -0.28449672
    %v592 = vadd.f32 %v576, -0.28449672
    %v593 = vadd.f32 %v577, -0.28449672
    %v594 = vadd.f32 %v578, -0.28449672
    %v595 = vadd.f32 %v579, -0.28449672
    %v596 = vmul.f32 %v580, %v274
    %v597 = vmul.f32 %v581, %v289
    %v598 = vmul.f32 %v582, %v304
    %v599 = vmul.f32 %v583, %v319
    %v600 = vmul.f32 %v584, %v334
    %v601 = vmul.f32 %v585, %v349
    %v602 = vmul.f32 %v586, %v364
    %v603 = vmul.f32 %v587, %v379
    %v604 = vmul.f32 %v588, %v394
    %v605 = vmul.f32 %v589, %v409
    %v606 = vmul.f32 %v590, %v424
    %v607 = vmul.f32 %v591, %v439
    %v608 = vmul.f32 %v592, %v454
    %v609 = vmul.f32 %v593, %v469
    %v610 = vmul.f32 %v594, %v484
    %v611 = vmul.f32 %v595, %v499
    %v612 = vadd.f32 %v596, 0.2548296
    %v613 = vadd.f32 %v597, 0.2548296
    %v614 = vadd.f32 %v598, 0.2548296
    %v615 = vadd.f32 %v599, 0.2548296
    %v616 = vadd.f32 %v600, 0.2548296
    %v617 = vadd.f32 %v601, 0.2548296
    %v618 = vadd.f32 %v602, 0.2548296
    %v619 = vadd.f32 %v603, 0.2548296
    %v620 = vadd.f32 %v604, 0.2548296
    %v621 = vadd.f32 %v605, 0.2548296
    %v622 = vadd.f32 %v606, 0.2548296
    %v623 = vadd.f32 %v607, 0.2548296
    %v624 = vadd.f32 %v608, 0.2548296
    %v625 = vadd.f32 %v609, 0.2548296
    %v626 = vadd.f32 %v610, 0.2548296
    %v627 = vadd.f32 %v611, 0.2548296
    %v628 = vmul.f32 %v612, %v274
    %v629 = vmul.f32 %v613, %v289
    %v630 = vmul.f32 %v614, %v304
    %v631 = vmul.f32 %v615, %v319
    %v632 = vmul.f32 %v616, %v334
    %v633 = vmul.f32 %v617, %v349
    %v634 = vmul.f32 %v618, %v364
    %v635 = vmul.f32 %v619, %v379
    %v636 = vmul.f32 %v620, %v394
    %v637 = vmul.f32 %v621, %v409
    %v638 = vmul.f32 %v622, %v424
    %v639 = vmul.f32 %v623, %v439
    %v640 = vmul.f32 %v624, %v454
    %v641 = vmul.f32 %v625, %v469
    %v642 = vmul.f32 %v626, %v484
    %v643 = vmul.f32 %v627, %v499
    %v644 = vsub.f32 0.0, %v212
    %v645 = vsub.f32 0.0, %v213
    %v646 = vsub.f32 0.0, %v214
    %v647 = vsub.f32 0.0, %v215
    %v648 = vsub.f32 0.0, %v216
    %v649 = vsub.f32 0.0, %v217
    %v650 = vsub.f32 0.0, %v218
    %v651 = vsub.f32 0.0, %v219
    %v652 = vsub.f32 0.0, %v220
    %v653 = vsub.f32 0.0, %v221
    %v654 = vsub.f32 0.0, %v222
    %v655 = vsub.f32 0.0, %v223
    %v656 = vsub.f32 0.0, %v224
    %v657 = vsub.f32 0.0, %v225
    %v658 = vsub.f32 0.0, %v226
    %v659 = vsub.f32 0.0, %v227
    %v660 = vmul.f32 %v644, %v212
    %v661 = vmul.f32 %v645, %v213
    %v662 = vmul.f32 %v646, %v214
    %v663 = vmul.f32 %v647, %v215
    %v664 = vmul.f32 %v648, %v216
    %v665 = vmul.f32 %v649, %v217
    %v666 = vmul.f32 %v650, %v218
    %v667 = vmul.f32 %v651, %v219
    %v668 = vmul.f32 %v652, %v220
    %v669 = vmul.f32 %v653, %v221
    %v670 = vmul.f32 %v654, %v222
    %v671 = vmul.f32 %v655, %v223
    %v672 = vmul.f32 %v656, %v224
    %v673 = vmul.f32 %v657, %v225
    %v674 = vmul.f32 %v658, %v226
    %v675 = vmul.f32 %v659, %v227
    %v676 = vmul.f32 %v660, 1.442695
    %v677 = vpow.pop %v676
    %v678 = vmul.f32 %v661, 1.442695
    %v679 = vpow.pop %v678
    %v680 = vmul.f32 %v662, 1.442695
    %v681 = vpow.pop %v680
    %v682 = vmul.f32 %v663, 1.442695
    %v683 = vpow.pop %v682
    %v684 = vmul.f32 %v664, 1.442695
    %v685 = vpow.pop %v684
    %v686 = vmul.f32 %v665, 1.442695
    %v687 = vpow.pop %v686
    %v688 = vmul.f32 %v666, 1.442695
    %v689 = vpow.pop %v688
    %v690 = vmul.f32 %v667, 1.442695
    %v691 = vpow.pop %v690
    %v692 = vmul.f32 %v668, 1.442695
    %v693 = vpow.pop %v692
    %v694 = vmul.f32 %v669, 1.442695
    %v695 = vpow.pop %v694
    %v696 = vmul.f32 %v670, 1.442695
    %v697 = vpow.pop %v696
    %v698 = vmul.f32 %v671, 1.442695
    %v699 = vpow.pop %v698
    %v700 = vmul.f32 %v672, 1.442695
    %v701 = vpow.pop %v700
    %v702 = vmul.f32 %v673, 1.442695
    %v703 = vpow.pop %v702
    %v704 = vmul.f32 %v674, 1.442695
    %v705 = vpow.pop %v704
    %v706 = vmul.f32 %v675, 1.442695
    %v707 = vpow.pop %v706
    %v708 = vmul.f32 %v628, %v677
    %v709 = vmul.f32 %v629, %v679
    %v710 = vmul.f32 %v630, %v681
    %v711 = vmul.f32 %v631, %v683
    %v712 = vmul.f32 %v632, %v685
    %v713 = vmul.f32 %v633, %v687
    %v714 = vmul.f32 %v634, %v689
    %v715 = vmul.f32 %v635, %v691
    %v716 = vmul.f32 %v636, %v693
    %v717 = vmul.f32 %v637, %v695
    %v718 = vmul.f32 %v638, %v697
    %v719 = vmul.f32 %v639, %v699
    %v720 = vmul.f32 %v640, %v701
    %v721 = vmul.f32 %v641, %v703
    %v722 = vmul.f32 %v642, %v705
    %v723 = vmul.f32 %v643, %v707
    %v724 = vsub.f32 1.0, %v708
    %v725 = vsub.f32 1.0, %v709
    %v726 = vsub.f32 1.0, %v710
    %v727 = vsub.f32 1.0, %v711
    %v728 = vsub.f32 1.0, %v712
    %v729 = vsub.f32 1.0, %v713
    %v730 = vsub.f32 1.0, %v714
    %v731 = vsub.f32 1.0, %v715
    %v732 = vsub.f32 1.0, %v716
    %v733 = vsub.f32 1.0, %v717
    %v734 = vsub.f32 1.0, %v718
    %v735 = vsub.f32 1.0, %v719
    %v736 = vsub.f32 1.0, %v720
    %v737 = vsub.f32 1.0, %v721
    %v738 = vsub.f32 1.0, %v722
    %v739 = vsub.f32 1.0, %v723
    %vm740 = vcmp.ge.f32.partialorder %v196, 0.0
    %vm741 = vcmp.ge.f32.partialorder %v197, 0.0
    %vm742 = vcmp.ge.f32.partialorder %v198, 0.0
    %vm743 = vcmp.ge.f32.partialorder %v199, 0.0
    %vm744 = vcmp.ge.f32.partialorder %v200, 0.0
    %vm745 = vcmp.ge.f32.partialorder %v201, 0.0
    %vm746 = vcmp.ge.f32.partialorder %v202, 0.0
    %vm747 = vcmp.ge.f32.partialorder %v203, 0.0
    %vm748 = vcmp.ge.f32.partialorder %v204, 0.0
    %vm749 = vcmp.ge.f32.partialorder %v205, 0.0
    %vm750 = vcmp.ge.f32.partialorder %v206, 0.0
    %vm751 = vcmp.ge.f32.partialorder %v207, 0.0
    %vm752 = vcmp.ge.f32.partialorder %v208, 0.0
    %vm753 = vcmp.ge.f32.partialorder %v209, 0.0
    %vm754 = vcmp.ge.f32.partialorder %v210, 0.0
    %vm755 = vcmp.ge.f32.partialorder %v211, 0.0
    %v756 = vsub.f32 0.0, %v724
    %v757 = vsub.f32 0.0, %v725
    %v758 = vsub.f32 0.0, %v726
    %v759 = vsub.f32 0.0, %v727
    %v760 = vsub.f32 0.0, %v728
    %v761 = vsub.f32 0.0, %v729
    %v762 = vsub.f32 0.0, %v730
    %v763 = vsub.f32 0.0, %v731
    %v764 = vsub.f32 0.0, %v732
    %v765 = vsub.f32 0.0, %v733
    %v766 = vsub.f32 0.0, %v734
    %v767 = vsub.f32 0.0, %v735
    %v768 = vsub.f32 0.0, %v736
    %v769 = vsub.f32 0.0, %v737
    %v770 = vsub.f32 0.0, %v738
    %v771 = vsub.f32 0.0, %v739
    %v772 = vsel %vm740, %v724, %v756
    %v773 = vsel %vm741, %v725, %v757
    %v774 = vsel %vm742, %v726, %v758
    %v775 = vsel %vm743, %v727, %v759
    %v776 = vsel %vm744, %v728, %v760
    %v777 = vsel %vm745, %v729, %v761
    %v778 = vsel %vm746, %v730, %v762
    %v779 = vsel %vm747, %v731, %v763
    %v780 = vsel %vm748, %v732, %v764
    %v781 = vsel %vm749, %v733, %v765
    %v782 = vsel %vm750, %v734, %v766
    %v783 = vsel %vm751, %v735, %v767
    %v784 = vsel %vm752, %v736, %v768
    %v785 = vsel %vm753, %v737, %v769
    %v786 = vsel %vm754, %v738, %v770
    %v787 = vsel %vm755, %v739, %v771
    %v788 = vadd.f32 %v772, 1.0
    %v789 = vadd.f32 %v773, 1.0
    %v790 = vadd.f32 %v774, 1.0
    %v791 = vadd.f32 %v775, 1.0
    %v792 = vadd.f32 %v776, 1.0
    %v793 = vadd.f32 %v777, 1.0
    %v794 = vadd.f32 %v778, 1.0
    %v795 = vadd.f32 %v779, 1.0
    %v796 = vadd.f32 %v780, 1.0
    %v797 = vadd.f32 %v781, 1.0
    %v798 = vadd.f32 %v782, 1.0
    %v799 = vadd.f32 %v783, 1.0
    %v800 = vadd.f32 %v784, 1.0
    %v801 = vadd.f32 %v785, 1.0
    %v802 = vadd.f32 %v786, 1.0
    %v803 = vadd.f32 %v787, 1.0
    %v804 = vmul.f32 %v180, %v788
    %v805 = vmul.f32 %v181, %v789
    %v806 = vmul.f32 %v182, %v790
    %v807 = vmul.f32 %v183, %v791
    %v808 = vmul.f32 %v184, %v792
    %v809 = vmul.f32 %v185, %v793
    %v810 = vmul.f32 %v186, %v794
    %v811 = vmul.f32 %v187, %v795
    %v812 = vmul.f32 %v188, %v796
    %v813 = vmul.f32 %v189, %v797
    %v814 = vmul.f32 %v190, %v798
    %v815 = vmul.f32 %v191, %v799
    %v816 = vmul.f32 %v192, %v800
    %v817 = vmul.f32 %v193, %v801
    %v818 = vmul.f32 %v194, %v802
    %v819 = vmul.f32 %v195, %v803
    %vm820 = vcmask 261120
    %821 = vst.msk [vmem:[%s4] sm:$0xff] %vm820, %v804
    %822 = vst.msk [vmem:[%s4 + $0x8] sm:$0xff] %vm820, %v805
    %823 = vst.msk [vmem:[%s4 + $0x10] sm:$0xff] %vm820, %v806
    %824 = vst.msk [vmem:[%s4 + $0x18] sm:$0xff] %vm820, %v807
    %825 = vst.msk [vmem:[%s4 + $0x20] sm:$0xff] %vm820, %v808
    %826 = vst.msk [vmem:[%s4 + $0x28] sm:$0xff] %vm820, %v809
    %827 = vst.msk [vmem:[%s4 + $0x30] sm:$0xff] %vm820, %v810
    %828 = vst.msk [vmem:[%s4 + $0x38] sm:$0xff] %vm820, %v811
    %829 = vst.msk [vmem:[%s4 + $0x40] sm:$0xff] %vm820, %v812
    %830 = vst.msk [vmem:[%s4 + $0x48] sm:$0xff] %vm820, %v813
    %831 = vst.msk [vmem:[%s4 + $0x50] sm:$0xff] %vm820, %v814
    %832 = vst.msk [vmem:[%s4 + $0x58] sm:$0xff] %vm820, %v815
    %833 = vst.msk [vmem:[%s4 + $0x60] sm:$0xff] %vm820, %v816
    %834 = vst.msk [vmem:[%s4 + $0x68] sm:$0xff] %vm820, %v817
    %835 = vst.msk [vmem:[%s4 + $0x70] sm:$0xff] %vm820, %v818
    %836 = vst.msk [vmem:[%s4 + $0x78] sm:$0xff] %vm820, %v819
    // Predicated region
    $region22: #{cvta_forward.9} parent=1 // pred_check
      _
    $region23: #{cvta_forward.9} parent=1 // pred_check_branch
      %838 = sbr.rel (0) target = $region25
    $region24: #{cvta_forward.9} parent=1 // pred_region
      _
    $region25: #{cvta_forward.9} parent=1 // pred_fallthru
      _
    // Predicated region
    $region26: #{cvta_forward.9} parent=1 // pred_check
      _
    $region27: #{cvta_forward.9} parent=1 // pred_check_branch
      %840 = sbr.rel (0) target = $region29
    $region28: #{cvta_forward.9} parent=1 // pred_region
      _
    $region29: #{cvta_forward.9} parent=1 // pred_fallthru
      _
    %841 = vsyncpa [#allocation3], 1

// kernel: cvta_forward.10
$region0: #{cvta_forward.10}
  #allocation0 [shape = 'u32[]', space=smem, size = 0x4, offset = 0x4, fixed_abs, tag = 'smem constant byte address 0x4 - core index']
  #allocation1 [shape = 'u32[72,128]{1,0:T(1,128)}', space=vmem, size = 0x9000, scoped, tag = 'internal scratch']
  %s0 = inlined_call_operand.vmem [shape: f32[2,10,10,16], index: 0, kind: input, shape index: {}]
  %s1 = inlined_call_operand.vmem [shape: bf16[9,16,16], index: 1, kind: input, shape index: {}]
  %s2 = inlined_call_operand.vmem [shape: f32[1,16], index: 2, kind: input, shape index: {}]
  %s3 = inlined_call_operand.vmem [shape: f32[1,16], index: 3, kind: input, shape index: {}]
  %s4 = inlined_call_operand.vmem [shape: f32[2,8,8,16], index: 4, kind: output, shape index: {}]
  %s5 = sld [smem:[#allocation0]]
  $region49: #{cvta_forward.10} parent=0
    _
  %s7 = ssub.s32 1, %s5
  %s8 = scalar_select 0, %s7, %s5
  loop: start=0, step=1, limit=4
  $region2: #{cvta_forward.10} parent=0 // loop_pre_header
    _
  $region3: #{cvta_forward.10} parent=0 // loop_header
    %s10 = sphi 0, %s14
    %p11 = scmp.ge.s32.totalorder %s10, 4
    %s20 = sphi 0, %s22
    %s23 = sphi 0, %s20
    %s24 = sphi 0, %s23
    %s40 = sphi 0, %s24
    %s44 = sphi 0, %s44
    %s46 = sphi 0, %s44
    %s47 = sphi 0, %s46
    %s61 = sphi 0, %s47
    %s65 = sphi 0, %s65
    %s67 = sphi 0, %s65
    %s68 = sphi 0, %s67
    %s82 = sphi 0, %s68
    %s86 = sphi 0, %s86
    %s88 = sphi 0, %s86
    %s89 = sphi 0, %s88
    %s103 = sphi 0, %s89
    %s109 = sphi 0, %s111
    %s112 = sphi 0, %s109
    %s113 = sphi 0, %s112
    %s129 = sphi 0, %s113
  $region4: #{cvta_forward.10} parent=0 // loop_header_branch
    %13 = sbr.rel (%p11) target = $region8
  $region5: #{cvta_forward.10} parent=0 // loop_body
    %s15 = ssub.s32 %s10, 1
    %s16 = ssub.s32 %s10, 2
    %s17 = sadd.s32 %s10, 1
    %s18 = ssub.s32 %s10, %s17
    %p19 = scmp.eq.s32.totalorder %s18, 0
    %s21 = sadd.s32 %s20, 1
    %s22 = scalar_select %p19, %s20, %s21
    %p25 = pneg %p19
    %p26 = scmp.eq.s32.totalorder %s10, 1
    %p27 = por %p25, %p26
    %p28 = scmp.ne.s32.totalorder %s20, %s23
    %p29 = scmp.eq.s32.totalorder %s10, 0
    %p30 = por %p28, %p29
    %p31 = scmp.ne.s32.totalorder %s20, %s23
    %p32 = scmp.eq.s32.totalorder %s15, 1
    %p33 = por %p31, %p32
    %p34 = scmp.ne.s32.totalorder %s23, %s24
    %p35 = scmp.eq.s32.totalorder %s15, 0
    %p36 = por %p34, %p35
    %p37 = scmp.ne.s32.totalorder %s23, %s24
    %p38 = scmp.eq.s32.totalorder %s16, 1
    %p39 = por %p37, %p38
    %p41 = scmp.ne.s32.totalorder %s24, %s40
    %p42 = scmp.eq.s32.totalorder %s16, 0
    %p43 = por %p41, %p42
    %s45 = sadd.s32 %s44, 1
    %p48 = scmp.eq.s32.totalorder %s10, 1
    %p49 = scmp.ne.s32.totalorder %s44, %s46
    %p50 = scmp.eq.s32.totalorder %s10, 0
    %p51 = por %p49, %p50
    %p52 = scmp.ne.s32.totalorder %s44, %s46
    %p53 = scmp.eq.s32.totalorder %s15, 1
    %p54 = por %p52, %p53
    %p55 = scmp.ne.s32.totalorder %s46, %s47
    %p56 = scmp.eq.s32.totalorder %s15, 0
    %p57 = por %p55, %p56
    %p58 = scmp.ne.s32.totalorder %s46, %s47
    %p59 = scmp.eq.s32.totalorder %s16, 1
    %p60 = por %p58, %p59
    %p62 = scmp.ne.s32.totalorder %s47, %s61
    %p63 = scmp.eq.s32.totalorder %s16, 0
    %p64 = por %p62, %p63
    %s66 = sadd.s32 %s65, 1
    %p69 = scmp.eq.s32.totalorder %s10, 1
    %p70 = scmp.ne.s32.totalorder %s65, %s67
    %p71 = scmp.eq.s32.totalorder %s10, 0
    %p72 = por %p70, %p71
    %p73 = scmp.ne.s32.totalorder %s65, %s67
    %p74 = scmp.eq.s32.totalorder %s15, 1
    %p75 = por %p73, %p74
    %p76 = scmp.ne.s32.totalorder %s67, %s68
    %p77 = scmp.eq.s32.totalorder %s15, 0
    %p78 = por %p76, %p77
    %p79 = scmp.ne.s32.totalorder %s67, %s68
    %p80 = scmp.eq.s32.totalorder %s16, 1
    %p81 = por %p79, %p80
    %p83 = scmp.ne.s32.totalorder %s68, %s82
    %p84 = scmp.eq.s32.totalorder %s16, 0
    %p85 = por %p83, %p84
    %s87 = sadd.s32 %s86, 1
    %p90 = scmp.eq.s32.totalorder %s10, 1
    %p91 = scmp.ne.s32.totalorder %s86, %s88
    %p92 = scmp.eq.s32.totalorder %s10, 0
    %p93 = por %p91, %p92
    %p94 = scmp.ne.s32.totalorder %s86, %s88
    %p95 = scmp.eq.s32.totalorder %s15, 1
    %p96 = por %p94, %p95
    %p97 = scmp.ne.s32.totalorder %s88, %s89
    %p98 = scmp.eq.s32.totalorder %s15, 0
    %p99 = por %p97, %p98
    %p100 = scmp.ne.s32.totalorder %s88, %s89
    %p101 = scmp.eq.s32.totalorder %s16, 1
    %p102 = por %p100, %p101
    %p104 = scmp.ne.s32.totalorder %s89, %s103
    %p105 = scmp.eq.s32.totalorder %s16, 0
    %p106 = por %p104, %p105
    %s107 = ssub.s32 %s10, %s17
    %p108 = scmp.eq.s32.totalorder %s107, 0
    %s110 = sadd.s32 %s109, 1
    %s111 = scalar_select %p108, %s109, %s110
    %p114 = pneg %p108
    %p115 = scmp.eq.s32.totalorder %s10, 1
    %p116 = por %p114, %p115
    %p117 = scmp.ne.s32.totalorder %s109, %s112
    %p118 = scmp.eq.s32.totalorder %s10, 0
    %p119 = por %p117, %p118
    %p120 = scmp.ne.s32.totalorder %s109, %s112
    %p121 = scmp.eq.s32.totalorder %s15, 1
    %p122 = por %p120, %p121
    %p123 = scmp.ne.s32.totalorder %s112, %s113
    %p124 = scmp.eq.s32.totalorder %s15, 0
    %p125 = por %p123, %p124
    %p126 = scmp.ne.s32.totalorder %s112, %s113
    %p127 = scmp.eq.s32.totalorder %s16, 1
    %p128 = por %p126, %p127
    %p130 = scmp.ne.s32.totalorder %s113, %s129
    %p131 = scmp.eq.s32.totalorder %s16, 0
    %p132 = por %p130, %p131
    %p133 = scmp.le.s32.totalorder 1, %s10
    %p134 = scmp.lt.s32.totalorder %s10, 3
    %p135 = pnand %p133, %p134
    %p136 = pneg %p135
    // Predicated region
    $region9: #{cvta_forward.10} parent=5 // pred_check
      _
    $region10: #{cvta_forward.10} parent=5 // pred_check_branch
      %138 = sbr.rel (%p135) target = $region12
    $region11: #{cvta_forward.10} parent=5 // pred_region
      %s139 = ssub.s32 %s10, 1
      // Predicated region
      $region13: #{cvta_forward.10} parent=11 // pred_check
        %p140 = pneg %p57
      $region14: #{cvta_forward.10} parent=11 // pred_check_branch
        %142 = sbr.rel (%p140) target = $region16
      $region15: #{cvta_forward.10} parent=11 // pred_region
        _
      $region16: #{cvta_forward.10} parent=11 // pred_fallthru
        _
      // Predicated region
      $region17: #{cvta_forward.10} parent=11 // pred_check
        %p143 = pneg %p78
      $region18: #{cvta_forward.10} parent=11 // pred_check_branch
        %145 = sbr.rel (%p143) target = $region20
      $region19: #{cvta_forward.10} parent=11 // pred_region
        _
      $region20: #{cvta_forward.10} parent=11 // pred_fallthru
        _
      // Predicated region
      $region21: #{cvta_forward.10} parent=11 // pred_check
        %p146 = pneg %p99
      $region22: #{cvta_forward.10} parent=11 // pred_check_branch
        %148 = sbr.rel (%p146) target = $region24
      $region23: #{cvta_forward.10} parent=11 // pred_region
        _
      $region24: #{cvta_forward.10} parent=11 // pred_fallthru
        _
    $region12: #{cvta_forward.10} parent=5 // pred_fallthru
      _
    %p149 = scmp.lt.s32.totalorder %s10, 2
    // Predicated region
    $region25: #{cvta_forward.10} parent=5 // pred_check
      %p150 = pneg %p149
    $region26: #{cvta_forward.10} parent=5 // pred_check_branch
      %152 = sbr.rel (%p150) target = $region28
    $region27: #{cvta_forward.10} parent=5 // pred_region
      // Predicated region
      $region29: #{cvta_forward.10} parent=27 // pred_check
        %p153 = pneg %p30
      $region30: #{cvta_forward.10} parent=27 // pred_check_branch
        %155 = sbr.rel (%p153) target = $region32
      $region31: #{cvta_forward.10} parent=27 // pred_region
        %p156 = scmp.lt.s32.totalorder %s10, 1
        %s157 = scalar_select %p156, %s10, 1
        %s158 = smul.addr %s157, 20
        %s159 = smul.addr %s158, 8
        %s160 = scalar_lea.vmem %s0, %s159
      $region32: #{cvta_forward.10} parent=27 // pred_fallthru
        _
    $region28: #{cvta_forward.10} parent=5 // pred_fallthru
      _
    %p161 = scmp.le.s32.totalorder 1, %s10
    %p162 = scmp.lt.s32.totalorder %s10, 3
    %p163 = pnand %p161, %p162
    %p164 = pneg %p163
    // Predicated region
    $region33: #{cvta_forward.10} parent=5 // pred_check
      _
    $region34: #{cvta_forward.10} parent=5 // pred_check_branch
      %166 = sbr.rel (%p163) target = $region36
    $region35: #{cvta_forward.10} parent=5 // pred_region
      %s167 = ssub.s32 %s10, 1
      %p168 = scmp.lt.s32.totalorder %s15, 1
      %s169 = scalar_select %p168, %s15, 1
      %s170 = smul.addr %s169, 20
      %s171 = smul.addr %s170, 8
      %s172 = scalar_lea.vmem %s0, %s171
      %p173 = pneg %p36
      %p174 = pneg %p33
      %p175 = pneg %p57
      %p176 = pneg %p54
      %p177 = pneg %p78
      %p178 = pneg %p75
      %p179 = pneg %p99
      %p180 = pneg %p96
      %p181 = pneg %p125
      %p182 = pneg %p122
      %p183 = scmp.lt.s32.totalorder %s15, 1
      %s184 = scalar_select %p183, %s15, 1
      %s185 = smul.addr %s184, 8
      %s186 = smul.addr %s185, 8
      %s187 = scalar_lea.vmem %s4, %s186
      %p188 = scmp.lt.s32.totalorder %s15, 1
      %s189 = scalar_select %p188, %s15, 1
      %s190 = smul.addr %s189, 20
      %s191 = smul.addr %s190, 8
      %s192 = scalar_lea.vmem %s0, %s191
      %p193 = scmp.lt.s32.totalorder %s15, 1
      %s194 = scalar_select %p193, %s15, 1
      %s195 = smul.addr %s194, 8
      %s196 = smul.addr %s195, 8
      %s197 = scalar_lea.vmem %s4, %s196
      %v199 = vld [vmem:[%s192] sm:$0xff]
      %v200 = vld [vmem:[%s192 + $0x8] sm:$0x3]
      %v201 = vld [vmem:[%s192 + $0x10] sm:$0xff]
      %v202 = vld [vmem:[%s192 + $0x18] sm:$0x3]
      %v203 = vld [vmem:[%s192 + $0x20] sm:$0xff]
      %v204 = vld [vmem:[%s192 + $0x28] sm:$0x3]
      %v205 = vld [vmem:[%s192 + $0x30] sm:$0xff]
      %v206 = vld [vmem:[%s192 + $0x38] sm:$0x3]
      %v207 = vld [vmem:[%s192 + $0x40] sm:$0xff]
      %v208 = vld [vmem:[%s192 + $0x48] sm:$0x3]
      %v209 = vld [vmem:[%s192 + $0x50] sm:$0xff]
      %v210 = vld [vmem:[%s192 + $0x58] sm:$0x3]
      %v211 = vld [vmem:[%s192 + $0x60] sm:$0xff]
      %v212 = vld [vmem:[%s192 + $0x68] sm:$0x3]
      %v213 = vld [vmem:[%s192 + $0x70] sm:$0xff]
      %v214 = vld [vmem:[%s192 + $0x78] sm:$0x3]
      %v215 = vld [vmem:[%s192 + $0x80] sm:$0xff]
      %v216 = vld [vmem:[%s192 + $0x88] sm:$0x3]
      %v217 = vld [vmem:[%s192 + $0x90] sm:$0xff]
      %v218 = vld [vmem:[%s192 + $0x98] sm:$0x3]
      %v219 = vld [vmem:[%s1] sm:$0xf]
      %v220 = vld [vmem:[%s1 + $0x4] sm:$0xf]
      %v221 = vld [vmem:[%s1 + $0x8] sm:$0xf]
      %v222 = vld [vmem:[%s1 + $0xc] sm:$0xf]
      %v223 = vld [vmem:[%s1 + $0x10] sm:$0xf]
      %v224 = vld [vmem:[%s1 + $0x14] sm:$0xf]
      %v225 = vld [vmem:[%s1 + $0x18] sm:$0xf]
      %v226 = vld [vmem:[%s1 + $0x1c] sm:$0xf]
      %v227 = vld [vmem:[%s1 + $0x20] sm:$0xf]
      %v228 = vld [vmem:[%s1 + $0x24] sm:$0xf]
      %v229 = vld [vmem:[%s1 + $0x28] sm:$0xf]
      %v230 = vld [vmem:[%s1 + $0x2c] sm:$0xf]
      %v231 = vld [vmem:[%s1 + $0x30] sm:$0xf]
      %v232 = vld [vmem:[%s1 + $0x34] sm:$0xf]
      %v233 = vld [vmem:[%s1 + $0x38] sm:$0xf]
      %v234 = vld [vmem:[%s1 + $0x3c] sm:$0xf]
      %v235 = vld [vmem:[%s1 + $0x40] sm:$0xf]
      %v236 = vld [vmem:[%s1 + $0x44] sm:$0xf]
      %v237 = vpack.c.bf16 %v201, %v199
      %v238 = vpack.c.bf16 %v205, %v203
      %v239 = vpack.c.bf16 %v209, %v207
      %v240 = vpack.c.bf16 %v213, %v211
      %vm257 = vcmask 1046528
      %v258 = vrot.slane %v199, 1
      %v259 = vrot.slane %v200, 1
      %v260 = vsel %vm257, %v258, %v259
      %v261 = vrot.slane %v201, 1
      %v262 = vrot.slane %v202, 1
      %v263 = vsel %vm257, %v261, %v262
      %v264 = vrot.slane %v203, 1
      %v265 = vrot.slane %v204, 1
      %v266 = vsel %vm257, %v264, %v265
      %v267 = vrot.slane %v205, 1
      %v268 = vrot.slane %v206, 1
      %v269 = vsel %vm257, %v267, %v268
      %v270 = vrot.slane %v207, 1
      %v271 = vrot.slane %v208, 1
      %v272 = vsel %vm257, %v270, %v271
      %v273 = vrot.slane %v209, 1
      %v274 = vrot.slane %v210, 1
      %v275 = vsel %vm257, %v273, %v274
      %v276 = vrot.slane %v211, 1
      %v277 = vrot.slane %v212, 1
      %v278 = vsel %vm257, %v276, %v277
      %v279 = vrot.slane %v213, 1
      %v280 = vrot.slane %v214, 1
      %v281 = vsel %vm257, %v279, %v280
      %v290 = vpack.c.bf16 %v263, %v260
      %v291 = vpack.c.bf16 %v269, %v266
      %v292 = vpack.c.bf16 %v275, %v272
      %v293 = vpack.c.bf16 %v281, %v278
      %v296 = vunpack.c.l.b16 %v221
      %v297 = vunpack.c.l.b16 %v222
      %v298 = vpack.c.b16 %v297, %v296
      %vm300 = vcmask 130048
      %v302 = vsel %vm300, %v290, 0
      %v305 = vsel %vm300, %v291, 0
      %v308 = vsel %vm300, %v292, 0
      %v311 = vsel %vm300, %v293, 0
      %313 = vmatpush.bf16.msra.mxu0 0
      %314 = vmatpush.bf16.msra.mxu0 0
      %315 = vmatpush.bf16.msra.mxu0 0
      %316 = vmatpush.bf16.msra.mxu0 0
      %317 = vmatpush.bf16.msra.mxu0 0
      %318 = vmatpush.bf16.msra.mxu0 0
      %319 = vmatpush.bf16.msra.mxu0 0
      %320 = vmatpush.bf16.msra.mxu0 %v298
      %321 = vmatmul.bf16.gmra.mxu0 %v302
      %v322 = vpop.f32.mrf.mxu0
      %v323 = vadd.f32 0.0, %v322
      %v324 = vpop.f32.mrf.mxu0
      %v325 = vadd.f32 0.0, %v324
      %326 = vmatmul.bf16.gmra.mxu0 %v305
      %v327 = vpop.f32.mrf.mxu0
      %v328 = vadd.f32 0.0, %v327
      %v329 = vpop.f32.mrf.mxu0
      %v330 = vadd.f32 0.0, %v329
      %331 = vmatmul.bf16.gmra.mxu0 %v308
      %v332 = vpop.f32.mrf.mxu0
      %v333 = vadd.f32 0.0, %v332
      %v334 = vpop.f32.mrf.mxu0
      %v335 = vadd.f32 0.0, %v334
      %336 = vmatmul.bf16.gmra.mxu0 %v311
      %v337 = vpop.f32.mrf.mxu0
      %v338 = vadd.f32 0.0, %v337
      %v339 = vpop.f32.mrf.mxu0
      %v340 = vadd.f32 0.0, %v339
      %341 = vdwg.mxu0
      %v344 = vunpack.c.l.b16 %v219
      %v345 = vunpack.c.l.b16 %v220
      %v346 = vpack.c.b16 %v345, %v344
      %v349 = vsel %vm300, %v237, 0
      %v352 = vsel %vm300, %v238, 0
      %v355 = vsel %vm300, %v239, 0
      %v358 = vsel %vm300, %v240, 0
      %360 = vmatpush.bf16.msra.mxu0 0
      %361 = vmatpush.bf16.msra.mxu0 0
      %362 = vmatpush.bf16.msra.mxu0 0
      %363 = vmatpush.bf16.msra.mxu0 0
      %364 = vmatpush.bf16.msra.mxu0 0
      %365 = vmatpush.bf16.msra.mxu0 0
      %366 = vmatpush.bf16.msra.mxu0 0
      %367 = vmatpush.bf16.msra.mxu0 %v346
      %368 = vmatmul.bf16.gmra.mxu0 %v349
      %v369 = vpop.f32.mrf.mxu0
      %v370 = vadd.f32 %v323, %v369
      %v371 = vpop.f32.mrf.mxu0
      %v372 = vadd.f32 %v325, %v371
      %373 = vmatmul.bf16.gmra.mxu0 %v352
      %v374 = vpop.f32.mrf.mxu0
      %v375 = vadd.f32 %v328, %v374
      %v376 = vpop.f32.mrf.mxu0
      %v377 = vadd.f32 %v330, %v376
      %378 = vmatmul.bf16.gmra.mxu0 %v355
      %v379 = vpop.f32.mrf.mxu0
      %v380 = vadd.f32 %v333, %v379
      %v381 = vpop.f32.mrf.mxu0
      %v382 = vadd.f32 %v335, %v381
      %383 = vmatmul.bf16.gmra.mxu0 %v358
      %v384 = vpop.f32.mrf.mxu0
      %v385 = vadd.f32 %v338, %v384
      %v386 = vpop.f32.mrf.mxu0
      %v387 = vadd.f32 %v340, %v386
      %388 = vdwg.mxu0
      %vm389 = vcmask 1045504
      %v390 = vrot.slane %v199, 2
      %v391 = vrot.slane %v200, 2
      %v392 = vsel %vm389, %v390, %v391
      %v393 = vrot.slane %v201, 2
      %v394 = vrot.slane %v202, 2
      %v395 = vsel %vm389, %v393, %v394
      %v396 = vrot.slane %v203, 2
      %v397 = vrot.slane %v204, 2
      %v398 = vsel %vm389, %v396, %v397
      %v399 = vrot.slane %v205, 2
      %v400 = vrot.slane %v206, 2
      %v401 = vsel %vm389, %v399, %v400
      %v402 = vrot.slane %v207, 2
      %v403 = vrot.slane %v208, 2
      %v404 = vsel %vm389, %v402, %v403
      %v405 = vrot.slane %v209, 2
      %v406 = vrot.slane %v210, 2
      %v407 = vsel %vm389, %v405, %v406
      %v408 = vrot.slane %v211, 2
      %v409 = vrot.slane %v212, 2
      %v410 = vsel %vm389, %v408, %v409
      %v411 = vrot.slane %v213, 2
      %v412 = vrot.slane %v214, 2
      %v413 = vsel %vm389, %v411, %v412
      %v422 = vpack.c.bf16 %v395, %v392
      %v423 = vpack.c.bf16 %v401, %v398
      %v424 = vpack.c.bf16 %v407, %v404
      %v425 = vpack.c.bf16 %v413, %v410
      %v428 = vunpack.c.l.b16 %v223
      %v429 = vunpack.c.l.b16 %v224
      %v430 = vpack.c.b16 %v429, %v428
      %v433 = vsel %vm300, %v422, 0
      %v436 = vsel %vm300, %v423, 0
      %v439 = vsel %vm300, %v424, 0
      %v442 = vsel %vm300, %v425, 0
      %444 = vmatpush.bf16.msra.mxu0 0
      %445 = vmatpush.bf16.msra.mxu0 0
      %446 = vmatpush.bf16.msra.mxu0 0
      %447 = vmatpush.bf16.msra.mxu0 0
      %448 = vmatpush.bf16.msra.mxu0 0
      %449 = vmatpush.bf16.msra.mxu0 0
      %450 = vmatpush.bf16.msra.mxu0 0
      %451 = vmatpush.bf16.msra.mxu0 %v430
      %452 = vmatmul.bf16.gmra.mxu0 %v433
      %v453 = vpop.f32.mrf.mxu0
      %v454 = vadd.f32 0.0, %v453
      %v455 = vpop.f32.mrf.mxu0
      %v456 = vadd.f32 0.0, %v455
      %457 = vmatmul.bf16.gmra.mxu0 %v436
      %v458 = vpop.f32.mrf.mxu0
      %v459 = vadd.f32 0.0, %v458
      %v460 = vpop.f32.mrf.mxu0
      %v461 = vadd.f32 0.0, %v460
      %462 = vmatmul.bf16.gmra.mxu0 %v439
      %v463 = vpop.f32.mrf.mxu0
      %v464 = vadd.f32 0.0, %v463
      %v465 = vpop.f32.mrf.mxu0
      %v466 = vadd.f32 0.0, %v465
      %467 = vmatmul.bf16.gmra.mxu0 %v442
      %v468 = vpop.f32.mrf.mxu0
      %v469 = vadd.f32 0.0, %v468
      %v470 = vpop.f32.mrf.mxu0
      %v471 = vadd.f32 0.0, %v470
      %472 = vdwg.mxu0
      %v473 = vadd.f32 %v370, %v454
      %v474 = vadd.f32 %v372, %v456
      %v475 = vadd.f32 %v375, %v459
      %v476 = vadd.f32 %v377, %v461
      %v477 = vadd.f32 %v380, %v464
      %v478 = vadd.f32 %v382, %v466
      %v479 = vadd.f32 %v385, %v469
      %v480 = vadd.f32 %v387, %v471
      %v481 = vpack.c.bf16 %v203, %v201
      %v482 = vpack.c.bf16 %v207, %v205
      %v483 = vpack.c.bf16 %v211, %v209
      %v484 = vpack.c.bf16 %v215, %v213
      %v487 = vunpack.c.l.b16 %v225
      %v488 = vunpack.c.l.b16 %v226
      %v489 = vpack.c.b16 %v488, %v487
      %v492 = vsel %vm300, %v481, 0
      %v495 = vsel %vm300, %v482, 0
      %v498 = vsel %vm300, %v483, 0
      %v501 = vsel %vm300, %v484, 0
      %503 = vmatpush.bf16.msra.mxu0 0
      %504 = vmatpush.bf16.msra.mxu0 0
      %505 = vmatpush.bf16.msra.mxu0 0
      %506 = vmatpush.bf16.msra.mxu0 0
      %507 = vmatpush.bf16.msra.mxu0 0
      %508 = vmatpush.bf16.msra.mxu0 0
      %509 = vmatpush.bf16.msra.mxu0 0
      %510 = vmatpush.bf16.msra.mxu0 %v489
      %511 = vmatmul.bf16.gmra.mxu0 %v492
      %v512 = vpop.f32.mrf.mxu0
      %v513 = vadd.f32 0.0, %v512
      %v514 = vpop.f32.mrf.mxu0
      %v515 = vadd.f32 0.0, %v514
      %516 = vmatmul.bf16.gmra.mxu0 %v495
      %v517 = vpop.f32.mrf.mxu0
      %v518 = vadd.f32 0.0, %v517
      %v519 = vpop.f32.mrf.mxu0
      %v520 = vadd.f32 0.0, %v519
      %521 = vmatmul.bf16.gmra.mxu0 %v498
      %v522 = vpop.f32.mrf.mxu0
      %v523 = vadd.f32 0.0, %v522
      %v524 = vpop.f32.mrf.mxu0
      %v525 = vadd.f32 0.0, %v524
      %526 = vmatmul.bf16.gmra.mxu0 %v501
      %v527 = vpop.f32.mrf.mxu0
      %v528 = vadd.f32 0.0, %v527
      %v529 = vpop.f32.mrf.mxu0
      %v530 = vadd.f32 0.0, %v529
      %531 = vdwg.mxu0
      %v532 = vadd.f32 %v473, %v513
      %v533 = vadd.f32 %v474, %v515
      %v534 = vadd.f32 %v475, %v518
      %v535 = vadd.f32 %v476, %v520
      %v536 = vadd.f32 %v477, %v523
      %v537 = vadd.f32 %v478, %v525
      %v538 = vadd.f32 %v479, %v528
      %v539 = vadd.f32 %v480, %v530
      %v542 = vrot.slane %v215, 1
      %v543 = vrot.slane %v216, 1
      %v544 = vsel %vm257, %v542, %v543
      %v546 = vpack.c.bf16 %v266, %v263
      %v547 = vpack.c.bf16 %v272, %v269
      %v548 = vpack.c.bf16 %v278, %v275
      %v549 = vpack.c.bf16 %v544, %v281
      %v552 = vunpack.c.l.b16 %v227
      %v553 = vunpack.c.l.b16 %v228
      %v554 = vpack.c.b16 %v553, %v552
      %v557 = vsel %vm300, %v546, 0
      %v560 = vsel %vm300, %v547, 0
      %v563 = vsel %vm300, %v548, 0
      %v566 = vsel %vm300, %v549, 0
      %568 = vmatpush.bf16.msra.mxu0 0
      %569 = vmatpush.bf16.msra.mxu0 0
      %570 = vmatpush.bf16.msra.mxu0 0
      %571 = vmatpush.bf16.msra.mxu0 0
      %572 = vmatpush.bf16.msra.mxu0 0
      %573 = vmatpush.bf16.msra.mxu0 0
      %574 = vmatpush.bf16.msra.mxu0 0
      %575 = vmatpush.bf16.msra.mxu0 %v554
      %576 = vmatmul.bf16.gmra.mxu0 %v557
      %v577 = vpop.f32.mrf.mxu0
      %v578 = vadd.f32 0.0, %v577
      %v579 = vpop.f32.mrf.mxu0
      %v580 = vadd.f32 0.0, %v579
      %581 = vmatmul.bf16.gmra.mxu0 %v560
      %v582 = vpop.f32.mrf.mxu0
      %v583 = vadd.f32 0.0, %v582
      %v584 = vpop.f32.mrf.mxu0
      %v585 = vadd.f32 0.0, %v584
      %586 = vmatmul.bf16.gmra.mxu0 %v563
      %v587 = vpop.f32.mrf.mxu0
      %v588 = vadd.f32 0.0, %v587
      %v589 = vpop.f32.mrf.mxu0
      %v590 = vadd.f32 0.0, %v589
      %591 = vmatmul.bf16.gmra.mxu0 %v566
      %v592 = vpop.f32.mrf.mxu0
      %v593 = vadd.f32 0.0, %v592
      %v594 = vpop.f32.mrf.mxu0
      %v595 = vadd.f32 0.0, %v594
      %596 = vdwg.mxu0
      %v597 = vadd.f32 %v532, %v578
      %v598 = vadd.f32 %v533, %v580
      %v599 = vadd.f32 %v534, %v583
      %v600 = vadd.f32 %v535, %v585
      %v601 = vadd.f32 %v536, %v588
      %v602 = vadd.f32 %v537, %v590
      %v603 = vadd.f32 %v538, %v593
      %v604 = vadd.f32 %v539, %v595
      %v605 = vrot.slane %v215, 2
      %v606 = vrot.slane %v216, 2
      %v607 = vsel %vm389, %v605, %v606
      %v609 = vpack.c.bf16 %v398, %v395
      %v610 = vpack.c.bf16 %v404, %v401
      %v611 = vpack.c.bf16 %v410, %v407
      %v612 = vpack.c.bf16 %v607, %v413
      %v615 = vunpack.c.l.b16 %v229
      %v616 = vunpack.c.l.b16 %v230
      %v617 = vpack.c.b16 %v616, %v615
      %v620 = vsel %vm300, %v609, 0
      %v623 = vsel %vm300, %v610, 0
      %v626 = vsel %vm300, %v611, 0
      %v629 = vsel %vm300, %v612, 0
      %631 = vmatpush.bf16.msra.mxu0 0
      %632 = vmatpush.bf16.msra.mxu0 0
      %633 = vmatpush.bf16.msra.mxu0 0
      %634 = vmatpush.bf16.msra.mxu0 0
      %635 = vmatpush.bf16.msra.mxu0 0
      %636 = vmatpush.bf16.msra.mxu0 0
      %637 = vmatpush.bf16.msra.mxu0 0
      %638 = vmatpush.bf16.msra.mxu0 %v617
      %639 = vmatmul.bf16.gmra.mxu0 %v620
      %v640 = vpop.f32.mrf.mxu0
      %v641 = vadd.f32 0.0, %v640
      %v642 = vpop.f32.mrf.mxu0
      %v643 = vadd.f32 0.0, %v642
      %644 = vmatmul.bf16.gmra.mxu0 %v623
      %v645 = vpop.f32.mrf.mxu0
      %v646 = vadd.f32 0.0, %v645
      %v647 = vpop.f32.mrf.mxu0
      %v648 = vadd.f32 0.0, %v647
      %649 = vmatmul.bf16.gmra.mxu0 %v626
      %v650 = vpop.f32.mrf.mxu0
      %v651 = vadd.f32 0.0, %v650
      %v652 = vpop.f32.mrf.mxu0
      %v653 = vadd.f32 0.0, %v652
      %654 = vmatmul.bf16.gmra.mxu0 %v629
      %v655 = vpop.f32.mrf.mxu0
      %v656 = vadd.f32 0.0, %v655
      %v657 = vpop.f32.mrf.mxu0
      %v658 = vadd.f32 0.0, %v657
      %659 = vdwg.mxu0
      %v660 = vadd.f32 %v597, %v641
      %v661 = vadd.f32 %v598, %v643
      %v662 = vadd.f32 %v599, %v646
      %v663 = vadd.f32 %v600, %v648
      %v664 = vadd.f32 %v601, %v651
      %v665 = vadd.f32 %v602, %v653
      %v666 = vadd.f32 %v603, %v656
      %v667 = vadd.f32 %v604, %v658
      %v668 = vpack.c.bf16 %v217, %v215
      %v671 = vunpack.c.l.b16 %v231
      %v672 = vunpack.c.l.b16 %v232
      %v673 = vpack.c.b16 %v672, %v671
      %v676 = vsel %vm300, %v668, 0
      %678 = vmatpush.bf16.msra.mxu0 0
      %679 = vmatpush.bf16.msra.mxu0 0
      %680 = vmatpush.bf16.msra.mxu0 0
      %681 = vmatpush.bf16.msra.mxu0 0
      %682 = vmatpush.bf16.msra.mxu0 0
      %683 = vmatpush.bf16.msra.mxu0 0
      %684 = vmatpush.bf16.msra.mxu0 0
      %685 = vmatpush.bf16.msra.mxu0 %v673
      %686 = vmatmul.bf16.gmra.mxu0 %v352
      %v687 = vpop.f32.mrf.mxu0
      %v688 = vadd.f32 0.0, %v687
      %v689 = vpop.f32.mrf.mxu0
      %v690 = vadd.f32 0.0, %v689
      %691 = vmatmul.bf16.gmra.mxu0 %v355
      %v692 = vpop.f32.mrf.mxu0
      %v693 = vadd.f32 0.0, %v692
      %v694 = vpop.f32.mrf.mxu0
      %v695 = vadd.f32 0.0, %v694
      %696 = vmatmul.bf16.gmra.mxu0 %v358
      %v697 = vpop.f32.mrf.mxu0
      %v698 = vadd.f32 0.0, %v697
      %v699 = vpop.f32.mrf.mxu0
      %v700 = vadd.f32 0.0, %v699
      %701 = vmatmul.bf16.gmra.mxu0 %v676
      %v702 = vpop.f32.mrf.mxu0
      %v703 = vadd.f32 0.0, %v702
      %v704 = vpop.f32.mrf.mxu0
      %v705 = vadd.f32 0.0, %v704
      %706 = vdwg.mxu0
      %v707 = vadd.f32 %v660, %v688
      %v708 = vadd.f32 %v661, %v690
      %v709 = vadd.f32 %v662, %v693
      %v710 = vadd.f32 %v663, %v695
      %v711 = vadd.f32 %v664, %v698
      %v712 = vadd.f32 %v665, %v700
      %v713 = vadd.f32 %v666, %v703
      %v714 = vadd.f32 %v667, %v705
      %v717 = vrot.slane %v217, 1
      %v718 = vrot.slane %v218, 1
      %v719 = vsel %vm257, %v717, %v718
      %v721 = vpack.c.bf16 %v719, %v544
      %v724 = vunpack.c.l.b16 %v233
      %v725 = vunpack.c.l.b16 %v234
      %v726 = vpack.c.b16 %v725, %v724
      %v729 = vsel %vm300, %v721, 0
      %731 = vmatpush.bf16.msra.mxu0 0
      %732 = vmatpush.bf16.msra.mxu0 0
      %733 = vmatpush.bf16.msra.mxu0 0
      %734 = vmatpush.bf16.msra.mxu0 0
      %735 = vmatpush.bf16.msra.mxu0 0
      %736 = vmatpush.bf16.msra.mxu0 0
      %737 = vmatpush.bf16.msra.mxu0 0
      %738 = vmatpush.bf16.msra.mxu0 %v726
      %739 = vmatmul.bf16.gmra.mxu0 %v305
      %v740 = vpop.f32.mrf.mxu0
      %v741 = vadd.f32 0.0, %v740
      %v742 = vpop.f32.mrf.mxu0
      %v743 = vadd.f32 0.0, %v742
      %744 = vmatmul.bf16.gmra.mxu0 %v308
      %v745 = vpop.f32.mrf.mxu0
      %v746 = vadd.f32 0.0, %v745
      %v747 = vpop.f32.mrf.mxu0
      %v748 = vadd.f32 0.0, %v747
      %749 = vmatmul.bf16.gmra.mxu0 %v311
      %v750 = vpop.f32.mrf.mxu0
      %v751 = vadd.f32 0.0, %v750
      %v752 = vpop.f32.mrf.mxu0
      %v753 = vadd.f32 0.0, %v752
      %754 = vmatmul.bf16.gmra.mxu0 %v729
      %v755 = vpop.f32.mrf.mxu0
      %v756 = vadd.f32 0.0, %v755
      %v757 = vpop.f32.mrf.mxu0
      %v758 = vadd.f32 0.0, %v757
      %759 = vdwg.mxu0
      %v760 = vadd.f32 %v707, %v741
      %v761 = vadd.f32 %v708, %v743
      %v762 = vadd.f32 %v709, %v746
      %v763 = vadd.f32 %v710, %v748
      %v764 = vadd.f32 %v711, %v751
      %v765 = vadd.f32 %v712, %v753
      %v766 = vadd.f32 %v713, %v756
      %v767 = vadd.f32 %v714, %v758
      %v768 = vrot.slane %v217, 2
      %v769 = vrot.slane %v218, 2
      %v770 = vsel %vm389, %v768, %v769
      %v772 = vpack.c.bf16 %v770, %v607
      %v775 = vunpack.c.l.b16 %v235
      %v776 = vunpack.c.l.b16 %v236
      %v777 = vpack.c.b16 %v776, %v775
      %v780 = vsel %vm300, %v772, 0
      %782 = vmatpush.bf16.msra.mxu0 0
      %783 = vmatpush.bf16.msra.mxu0 0
      %784 = vmatpush.bf16.msra.mxu0 0
      %785 = vmatpush.bf16.msra.mxu0 0
      %786 = vmatpush.bf16.msra.mxu0 0
      %787 = vmatpush.bf16.msra.mxu0 0
      %788 = vmatpush.bf16.msra.mxu0 0
      %789 = vmatpush.bf16.msra.mxu0 %v777
      %790 = vmatmul.bf16.gmra.mxu0 %v436
      %v791 = vpop.f32.mrf.mxu0
      %v792 = vadd.f32 0.0, %v791
      %v793 = vpop.f32.mrf.mxu0
      %v794 = vadd.f32 0.0, %v793
      %795 = vmatmul.bf16.gmra.mxu0 %v439
      %v796 = vpop.f32.mrf.mxu0
      %v797 = vadd.f32 0.0, %v796
      %v798 = vpop.f32.mrf.mxu0
      %v799 = vadd.f32 0.0, %v798
      %800 = vmatmul.bf16.gmra.mxu0 %v442
      %v801 = vpop.f32.mrf.mxu0
      %v802 = vadd.f32 0.0, %v801
      %v803 = vpop.f32.mrf.mxu0
      %v804 = vadd.f32 0.0, %v803
      %805 = vmatmul.bf16.gmra.mxu0 %v780
      %v806 = vpop.f32.mrf.mxu0
      %v807 = vadd.f32 0.0, %v806
      %v808 = vpop.f32.mrf.mxu0
      %v809 = vadd.f32 0.0, %v808
      %810 = vdwg.mxu0
      %v811 = vadd.f32 %v760, %v792
      %v812 = vadd.f32 %v761, %v794
      %v813 = vadd.f32 %v762, %v797
      %v814 = vadd.f32 %v763, %v799
      %v815 = vadd.f32 %v764, %v802
      %v816 = vadd.f32 %v765, %v804
      %v817 = vadd.f32 %v766, %v807
      %v818 = vadd.f32 %v767, %v809
      %v819 = vld [vmem:[%s2] sm:$0x1]
      %v821 = vperm.slane %v819, 0
      %v823 = vmul.f32 %v811, %v821
      %v824 = vmul.f32 %v812, %v821
      %v825 = vmul.f32 %v813, %v821
      %v826 = vmul.f32 %v814, %v821
      %v827 = vmul.f32 %v815, %v821
      %v828 = vmul.f32 %v816, %v821
      %v829 = vmul.f32 %v817, %v821
      %v830 = vmul.f32 %v818, %v821
      %v831 = vld [vmem:[%s3] sm:$0x1]
      %v833 = vperm.slane %v831, 0
      %v835 = vadd.f32 %v823, %v833
      %v836 = vadd.f32 %v824, %v833
      %v837 = vadd.f32 %v825, %v833
      %v838 = vadd.f32 %v826, %v833
      %v839 = vadd.f32 %v827, %v833
      %v840 = vadd.f32 %v828, %v833
      %v841 = vadd.f32 %v829, %v833
      %v842 = vadd.f32 %v830, %v833
      %v843 = vmul.f32 %v835, 0.5
      %v844 = vmul.f32 %v836, 0.5
      %v845 = vmul.f32 %v837, 0.5
      %v846 = vmul.f32 %v838, 0.5
      %v847 = vmul.f32 %v839, 0.5
      %v848 = vmul.f32 %v840, 0.5
      %v849 = vmul.f32 %v841, 0.5
      %v850 = vmul.f32 %v842, 0.5
      %v851 = vmul.f32 %v835, 0.70710677
      %v852 = vmul.f32 %v836, 0.70710677
      %v853 = vmul.f32 %v837, 0.70710677
      %v854 = vmul.f32 %v838, 0.70710677
      %v855 = vmul.f32 %v839, 0.70710677
      %v856 = vmul.f32 %v840, 0.70710677
      %v857 = vmul.f32 %v841, 0.70710677
      %v858 = vmul.f32 %v842, 0.70710677
      %v859 = vand.u32 2147483647, %v851
      %v860 = vand.u32 2147483647, %v852
      %v861 = vand.u32 2147483647, %v853
      %v862 = vand.u32 2147483647, %v854
      %v863 = vand.u32 2147483647, %v855
      %v864 = vand.u32 2147483647, %v856
      %v865 = vand.u32 2147483647, %v857
      %v866 = vand.u32 2147483647, %v858
      %v867 = vmul.f32 %v859, 0.3275911
      %v868 = vmul.f32 %v860, 0.3275911
      %v869 = vmul.f32 %v861, 0.3275911
      %v870 = vmul.f32 %v862, 0.3275911
      %v871 = vmul.f32 %v863, 0.3275911
      %v872 = vmul.f32 %v864, 0.3275911
      %v873 = vmul.f32 %v865, 0.3275911
      %v874 = vmul.f32 %v866, 0.3275911
      %v875 = vadd.f32 %v867, 1.0
      %v876 = vadd.f32 %v868, 1.0
      %v877 = vadd.f32 %v869, 1.0
      %v878 = vadd.f32 %v870, 1.0
      %v879 = vadd.f32 %v871, 1.0
      %v880 = vadd.f32 %v872, 1.0
      %v881 = vadd.f32 %v873, 1.0
      %v882 = vadd.f32 %v874, 1.0
      %v883 = vrcp.pop %v875
      %v884 = vmul.f32 %v875, %v883
      %v885 = vsub.f32 1.0, %v884
      %v886 = vmul.f32 %v883, %v885
      %v887 = vadd.f32 %v883, %v886
      %vm888 = vweird.f32 %v875
      %vm889 = vweird.f32 %v883
      %vm890 = vmor %vm888, %vm889
      %v891 = vsel %vm890, %v883, %v887
      %v892 = vand.u32 2147483647, %v875
      %vm893 = vcmp.eq.f32.partialorder %v892, 8.507059e+37
      %v894 = vand.u32 %v875, 2147483648
      %v895 = vor.u32 1.1754944e-38, %v894
      %v896 = vsel %vm893, %v895, %v891
      %v897 = vmul.f32 1.0, %v896
      %v898 = vrcp.pop %v876
      %v899 = vmul.f32 %v876, %v898
      %v900 = vsub.f32 1.0, %v899
      %v901 = vmul.f32 %v898, %v900
      %v902 = vadd.f32 %v898, %v901
      %vm903 = vweird.f32 %v876
      %vm904 = vweird.f32 %v898
      %vm905 = vmor %vm903, %vm904
      %v906 = vsel %vm905, %v898, %v902
      %v907 = vand.u32 2147483647, %v876
      %vm908 = vcmp.eq.f32.partialorder %v907, 8.507059e+37
      %v909 = vand.u32 %v876, 2147483648
      %v910 = vor.u32 1.1754944e-38, %v909
      %v911 = vsel %vm908, %v910, %v906
      %v912 = vmul.f32 1.0, %v911
      %v913 = vrcp.pop %v877
      %v914 = vmul.f32 %v877, %v913
      %v915 = vsub.f32 1.0, %v914
      %v916 = vmul.f32 %v913, %v915
      %v917 = vadd.f32 %v913, %v916
      %vm918 = vweird.f32 %v877
      %vm919 = vweird.f32 %v913
      %vm920 = vmor %vm918, %vm919
      %v921 = vsel %vm920, %v913, %v917
      %v922 = vand.u32 2147483647, %v877
      %vm923 = vcmp.eq.f32.partialorder %v922, 8.507059e+37
      %v924 = vand.u32 %v877, 2147483648
      %v925 = vor.u32 1.1754944e-38, %v924
      %v926 = vsel %vm923, %v925, %v921
      %v927 = vmul.f32 1.0, %v926
      %v928 = vrcp.pop %v878
      %v929 = vmul.f32 %v878, %v928
      %v930 = vsub.f32 1.0, %v929
      %v931 = vmul.f32 %v928, %v930
      %v932 = vadd.f32 %v928, %v931
      %vm933 = vweird.f32 %v878
      %vm934 = vweird.f32 %v928
      %vm935 = vmor %vm933, %vm934
      %v936 = vsel %vm935, %v928, %v932
      %v937 = vand.u32 2147483647, %v878
      %vm938 = vcmp.eq.f32.partialorder %v937, 8.507059e+37
      %v939 = vand.u32 %v878, 2147483648
      %v940 = vor.u32 1.1754944e-38, %v939
      %v941 = vsel %vm938, %v940, %v936
      %v942 = vmul.f32 1.0, %v941
      %v943 = vrcp.pop %v879
      %v944 = vmul.f32 %v879, %v943
      %v945 = vsub.f32 1.0, %v944
      %v946 = vmul.f32 %v943, %v945
      %v947 = vadd.f32 %v943, %v946
      %vm948 = vweird.f32 %v879
      %vm949 = vweird.f32 %v943
      %vm950 = vmor %vm948, %vm949
      %v951 = vsel %vm950, %v943, %v947
      %v952 = vand.u32 2147483647, %v879
      %vm953 = vcmp.eq.f32.partialorder %v952, 8.507059e+37
      %v954 = vand.u32 %v879, 2147483648
      %v955 = vor.u32 1.1754944e-38, %v954
      %v956 = vsel %vm953, %v955, %v951
      %v957 = vmul.f32 1.0, %v956
      %v958 = vrcp.pop %v880
      %v959 = vmul.f32 %v880, %v958
      %v960 = vsub.f32 1.0, %v959
      %v961 = vmul.f32 %v958, %v960
      %v962 = vadd.f32 %v958, %v961
      %vm963 = vweird.f32 %v880
      %vm964 = vweird.f32 %v958
      %vm965 = vmor %vm963, %vm964
      %v966 = vsel %vm965, %v958, %v962
      %v967 = vand.u32 2147483647, %v880
      %vm968 = vcmp.eq.f32.partialorder %v967, 8.507059e+37
      %v969 = vand.u32 %v880, 2147483648
      %v970 = vor.u32 1.1754944e-38, %v969
      %v971 = vsel %vm968, %v970, %v966
      %v972 = vmul.f32 1.0, %v971
      %v973 = vrcp.pop %v881
      %v974 = vmul.f32 %v881, %v973
      %v975 = vsub.f32 1.0, %v974
      %v976 = vmul.f32 %v973, %v975
      %v977 = vadd.f32 %v973, %v976
      %vm978 = vweird.f32 %v881
      %vm979 = vweird.f32 %v973
      %vm980 = vmor %vm978, %vm979
      %v981 = vsel %vm980, %v973, %v977
      %v982 = vand.u32 2147483647, %v881
      %vm983 = vcmp.eq.f32.partialorder %v982, 8.507059e+37
      %v984 = vand.u32 %v881, 2147483648
      %v985 = vor.u32 1.1754944e-38, %v984
      %v986 = vsel %vm983, %v985, %v981
      %v987 = vmul.f32 1.0, %v986
      %v988 = vrcp.pop %v882
      %v989 = vmul.f32 %v882, %v988
      %v990 = vsub.f32 1.0, %v989
      %v991 = vmul.f32 %v988, %v990
      %v992 = vadd.f32 %v988, %v991
      %vm993 = vweird.f32 %v882
      %vm994 = vweird.f32 %v988
      %vm995 = vmor %vm993, %vm994
      %v996 = vsel %vm995, %v988, %v992
      %v997 = vand.u32 2147483647, %v882
      %vm998 = vcmp.eq.f32.partialorder %v997, 8.507059e+37
      %v999 = vand.u32 %v882, 2147483648
      %v1000 = vor.u32 1.1754944e-38, %v999
      %v1001 = vsel %vm998, %v1000, %v996
      %v1002 = vmul.f32 1.0, %v1001
      %v1003 = vmul.f32 %v897, 1.0614054
      %v1004 = vmul.f32 %v912, 1.0614054
      %v1005 = vmul.f32 %v927, 1.0614054
      %v1006 = vmul.f32 %v942, 1.0614054
      %v1007 = vmul.f32 %v957, 1.0614054
      %v1008 = vmul.f32 %v972, 1.0614054
      %v1009 = vmul.f32 %v987, 1.0614054
      %v1010 = vmul.f32 %v1002, 1.0614054
      %v1011 = vadd.f32 %v1003, -1.4531521
      %v1012 = vadd.f32 %v1004, -1.4531521
      %v1013 = vadd.f32 %v1005, -1.4531521
      %v1014 = vadd.f32 %v1006, -1.4531521
      %v1015 = vadd.f32 %v1007, -1.4531521
      %v1016 = vadd.f32 %v1008, -1.4531521
      %v1017 = vadd.f32 %v1009, -1.4531521
      %v1018 = vadd.f32 %v1010, -1.4531521
      %v1019 = vmul.f32 %v1011, %v897
      %v1020 = vmul.f32 %v1012, %v912
      %v1021 = vmul.f32 %v1013, %v927
      %v1022 = vmul.f32 %v1014, %v942
      %v1023 = vmul.f32 %v1015, %v957
      %v1024 = vmul.f32 %v1016, %v972
      %v1025 = vmul.f32 %v1017, %v987
      %v1026 = vmul.f32 %v1018, %v1002
      %v1027 = vadd.f32 %v1019, 1.4214138
      %v1028 = vadd.f32 %v1020, 1.4214138
      %v1029 = vadd.f32 %v1021, 1.4214138
      %v1030 = vadd.f32 %v1022, 1.4214138
      %v1031 = vadd.f32 %v1023, 1.4214138
      %v1032 = vadd.f32 %v1024, 1.4214138
      %v1033 = vadd.f32 %v1025, 1.4214138
      %v1034 = vadd.f32 %v1026, 1.4214138
      %v1035 = vmul.f32 %v1027, %v897
      %v1036 = vmul.f32 %v1028, %v912
      %v1037 = vmul.f32 %v1029, %v927
      %v1038 = vmul.f32 %v1030, %v942
      %v1039 = vmul.f32 %v1031, %v957
      %v1040 = vmul.f32 %v1032, %v972
      %v1041 = vmul.f32 %v1033, %v987
      %v1042 = vmul.f32 %v1034, %v1002
      %v1043 = vadd.f32 %v1035, -0.28449672
      %v1044 = vadd.f32 %v1036, -0.28449672
      %v1045 = vadd.f32 %v1037, -0.28449672
      %v1046 = vadd.f32 %v1038, -0.28449672
      %v1047 = vadd.f32 %v1039, -0.28449672
      %v1048 = vadd.f32 %v1040, -0.28449672
      %v1049 = vadd.f32 %v1041, -0.28449672
      %v1050 = vadd.f32 %v1042, -0.28449672
      %v1051 = vmul.f32 %v1043, %v897
      %v1052 = vmul.f32 %v1044, %v912
      %v1053 = vmul.f32 %v1045, %v927
      %v1054 = vmul.f32 %v1046, %v942
      %v1055 = vmul.f32 %v1047, %v957
      %v1056 = vmul.f32 %v1048, %v972
      %v1057 = vmul.f32 %v1049, %v987
      %v1058 = vmul.f32 %v1050, %v1002
      %v1059 = vadd.f32 %v1051, 0.2548296
      %v1060 = vadd.f32 %v1052, 0.2548296
      %v1061 = vadd.f32 %v1053, 0.2548296
      %v1062 = vadd.f32 %v1054, 0.2548296
      %v1063 = vadd.f32 %v1055, 0.2548296
      %v1064 = vadd.f32 %v1056, 0.2548296
      %v1065 = vadd.f32 %v1057, 0.2548296
      %v1066 = vadd.f32 %v1058, 0.2548296
      %v1067 = vmul.f32 %v1059, %v897
      %v1068 = vmul.f32 %v1060, %v912
      %v1069 = vmul.f32 %v1061, %v927
      %v1070 = vmul.f32 %v1062, %v942
      %v1071 = vmul.f32 %v1063, %v957
      %v1072 = vmul.f32 %v1064, %v972
      %v1073 = vmul.f32 %v1065, %v987
      %v1074 = vmul.f32 %v1066, %v1002
      %v1075 = vsub.f32 0.0, %v859
      %v1076 = vsub.f32 0.0, %v860
      %v1077 = vsub.f32 0.0, %v861
      %v1078 = vsub.f32 0.0, %v862
      %v1079 = vsub.f32 0.0, %v863
      %v1080 = vsub.f32 0.0, %v864
      %v1081 = vsub.f32 0.0, %v865
      %v1082 = vsub.f32 0.0, %v866
      %v1083 = vmul.f32 %v1075, %v859
      %v1084 = vmul.f32 %v1076, %v860
      %v1085 = vmul.f32 %v1077, %v861
      %v1086 = vmul.f32 %v1078, %v862
      %v1087 = vmul.f32 %v1079, %v863
      %v1088 = vmul.f32 %v1080, %v864
      %v1089 = vmul.f32 %v1081, %v865
      %v1090 = vmul.f32 %v1082, %v866
      %v1091 = vmul.f32 %v1083, 1.442695
      %v1092 = vpow.pop %v1091
      %v1093 = vmul.f32 %v1084, 1.442695
      %v1094 = vpow.pop %v1093
      %v1095 = vmul.f32 %v1085, 1.442695
      %v1096 = vpow.pop %v1095
      %v1097 = vmul.f32 %v1086, 1.442695
      %v1098 = vpow.pop %v1097
      %v1099 = vmul.f32 %v1087, 1.442695
      %v1100 = vpow.pop %v1099
      %v1101 = vmul.f32 %v1088, 1.442695
      %v1102 = vpow.pop %v1101
      %v1103 = vmul.f32 %v1089, 1.442695
      %v1104 = vpow.pop %v1103
      %v1105 = vmul.f32 %v1090, 1.442695
      %v1106 = vpow.pop %v1105
      %v1107 = vmul.f32 %v1067, %v1092
      %v1108 = vmul.f32 %v1068, %v1094
      %v1109 = vmul.f32 %v1069, %v1096
      %v1110 = vmul.f32 %v1070, %v1098
      %v1111 = vmul.f32 %v1071, %v1100
      %v1112 = vmul.f32 %v1072, %v1102
      %v1113 = vmul.f32 %v1073, %v1104
      %v1114 = vmul.f32 %v1074, %v1106
      %v1115 = vsub.f32 1.0, %v1107
      %v1116 = vsub.f32 1.0, %v1108
      %v1117 = vsub.f32 1.0, %v1109
      %v1118 = vsub.f32 1.0, %v1110
      %v1119 = vsub.f32 1.0, %v1111
      %v1120 = vsub.f32 1.0, %v1112
      %v1121 = vsub.f32 1.0, %v1113
      %v1122 = vsub.f32 1.0, %v1114
      %vm1123 = vcmp.ge.f32.partialorder %v851, 0.0
      %vm1124 = vcmp.ge.f32.partialorder %v852, 0.0
      %vm1125 = vcmp.ge.f32.partialorder %v853, 0.0
      %vm1126 = vcmp.ge.f32.partialorder %v854, 0.0
      %vm1127 = vcmp.ge.f32.partialorder %v855, 0.0
      %vm1128 = vcmp.ge.f32.partialorder %v856, 0.0
      %vm1129 = vcmp.ge.f32.partialorder %v857, 0.0
      %vm1130 = vcmp.ge.f32.partialorder %v858, 0.0
      %v1131 = vsub.f32 0.0, %v1115
      %v1132 = vsub.f32 0.0, %v1116
      %v1133 = vsub.f32 0.0, %v1117
      %v1134 = vsub.f32 0.0, %v1118
      %v1135 = vsub.f32 0.0, %v1119
      %v1136 = vsub.f32 0.0, %v1120
      %v1137 = vsub.f32 0.0, %v1121
      %v1138 = vsub.f32 0.0, %v1122
      %v1139 = vsel %vm1123, %v1115, %v1131
      %v1140 = vsel %vm1124, %v1116, %v1132
      %v1141 = vsel %vm1125, %v1117, %v1133
      %v1142 = vsel %vm1126, %v1118, %v1134
      %v1143 = vsel %vm1127, %v1119, %v1135
      %v1144 = vsel %vm1128, %v1120, %v1136
      %v1145 = vsel %vm1129, %v1121, %v1137
      %v1146 = vsel %vm1130, %v1122, %v1138
      %v1147 = vadd.f32 %v1139, 1.0
      %v1148 = vadd.f32 %v1140, 1.0
      %v1149 = vadd.f32 %v1141, 1.0
      %v1150 = vadd.f32 %v1142, 1.0
      %v1151 = vadd.f32 %v1143, 1.0
      %v1152 = vadd.f32 %v1144, 1.0
      %v1153 = vadd.f32 %v1145, 1.0
      %v1154 = vadd.f32 %v1146, 1.0
      %v1155 = vmul.f32 %v843, %v1147
      %v1156 = vmul.f32 %v844, %v1148
      %v1157 = vmul.f32 %v845, %v1149
      %v1158 = vmul.f32 %v846, %v1150
      %v1159 = vmul.f32 %v847, %v1151
      %v1160 = vmul.f32 %v848, %v1152
      %v1161 = vmul.f32 %v849, %v1153
      %v1162 = vmul.f32 %v850, %v1154
      %1163 = vst.msk [vmem:[%s197] sm:$0xff] %vm300, %v1155
      %1164 = vst.msk [vmem:[%s197 + $0x8] sm:$0xff] %vm300, %v1156
      %1165 = vst.msk [vmem:[%s197 + $0x10] sm:$0xff] %vm300, %v1157
      %1166 = vst.msk [vmem:[%s197 + $0x18] sm:$0xff] %vm300, %v1158
      %1167 = vst.msk [vmem:[%s197 + $0x20] sm:$0xff] %vm300, %v1159
      %1168 = vst.msk [vmem:[%s197 + $0x28] sm:$0xff] %vm300, %v1160
      %1169 = vst.msk [vmem:[%s197 + $0x30] sm:$0xff] %vm300, %v1161
      %1170 = vst.msk [vmem:[%s197 + $0x38] sm:$0xff] %vm300, %v1162
      %p1171 = scmp.lt.s32.totalorder %s15, 1
      %s1172 = scalar_select %p1171, %s15, 1
      %s1173 = smul.addr %s1172, 8
      %s1174 = smul.addr %s1173, 8
      %s1175 = scalar_lea.vmem %s4, %s1174
      // Predicated region
      $region37: #{cvta_forward.10} parent=35 // pred_check
        %p1176 = pneg %p122
      $region38: #{cvta_forward.10} parent=35 // pred_check_branch
        %1178 = sbr.rel (%p1176) target = $region40
      $region39: #{cvta_forward.10} parent=35 // pred_region
        _
      $region40: #{cvta_forward.10} parent=35 // pred_fallthru
        _
    $region36: #{cvta_forward.10} parent=5 // pred_fallthru
      _
    %p1179 = scmp.le.s32.totalorder 2, %s10
    // Predicated region
    $region41: #{cvta_forward.10} parent=5 // pred_check
      %p1180 = pneg %p1179
    $region42: #{cvta_forward.10} parent=5 // pred_check_branch
      %1182 = sbr.rel (%p1180) target = $region44
    $region43: #{cvta_forward.10} parent=5 // pred_region
      %s1183 = ssub.s32 %s10, 2
      // Predicated region
      $region45: #{cvta_forward.10} parent=43 // pred_check
        %p1184 = pneg %p128
      $region46: #{cvta_forward.10} parent=43 // pred_check_branch
        %1186 = sbr.rel (%p1184) target = $region48
      $region47: #{cvta_forward.10} parent=43 // pred_region
        %p1187 = scmp.lt.s32.totalorder %s16, 1
        %s1188 = scalar_select %p1187, %s16, 1
        %s1189 = smul.addr %s1188, 8
        %s1190 = smul.addr %s1189, 8
        %s1191 = scalar_lea.vmem %s4, %s1190
      $region48: #{cvta_forward.10} parent=43 // pred_fallthru
        _
    $region44: #{cvta_forward.10} parent=5 // pred_fallthru
      _
  $region6: #{cvta_forward.10} parent=0 // loop_footer
    %s14 = sadd.s32 1, %s10
  $region7: #{cvta_forward.10} parent=0 // loop_footer_branch
    %9 = sbr.rel target = $region3
  $region8: #{cvta_forward.10} parent=0 // loop_exit
    _

// kernel: cvta_forward.11
$region0: #{cvta_forward.11}
  #allocation0 [shape = 'u32[]', space=smem, size = 0x4, offset = 0x4, fixed_abs, tag = 'smem constant byte address 0x4 - core index']
  #allocation1 [shape = 'u32[72,128]{1,0:T(1,128)}', space=vmem, size = 0x9000, scoped, tag = 'internal scratch']
  %s0 = inlined_call_operand.vmem [shape: f32[128,16], index: 0, kind: input, shape index: {}]
  %s1 = inlined_call_operand.vmem [shape: bf16[16,16], index: 1, kind: input, shape index: {}]
  %s2 = inlined_call_operand.vmem [shape: f32[1,16], index: 2, kind: input, shape index: {}]
  %s3 = inlined_call_operand.vmem [shape: f32[1,16], index: 3, kind: input, shape index: {}]
  %s4 = inlined_call_operand.vmem [shape: f32[128,16], index: 4, kind: output, shape index: {}]
  %s5 = sld [smem:[#allocation0]]
  $region26: #{cvta_forward.11} parent=0
    _
  %s7 = ssub.s32 1, %s5
  %s8 = scalar_select 0, %s7, %s5
  // Predicated region
  $region2: #{cvta_forward.11} parent=0 // pred_check
    _
  $region3: #{cvta_forward.11} parent=0 // pred_check_branch
    %10 = sbr.rel (0) target = $region5
  $region4: #{cvta_forward.11} parent=0 // pred_region
    _
  $region5: #{cvta_forward.11} parent=0 // pred_fallthru
    _
  // Predicated region
  $region6: #{cvta_forward.11} parent=0 // pred_check
    _
  $region7: #{cvta_forward.11} parent=0 // pred_check_branch
    %12 = sbr.rel (0) target = $region9
  $region8: #{cvta_forward.11} parent=0 // pred_region
    _
  $region9: #{cvta_forward.11} parent=0 // pred_fallthru
    _
  // Predicated region
  $region10: #{cvta_forward.11} parent=0 // pred_check
    _
  $region11: #{cvta_forward.11} parent=0 // pred_check_branch
    %14 = sbr.rel (0) target = $region13
  $region12: #{cvta_forward.11} parent=0 // pred_region
    _
  $region13: #{cvta_forward.11} parent=0 // pred_fallthru
    _
  // Predicated region
  $region14: #{cvta_forward.11} parent=0 // pred_check
    _
  $region15: #{cvta_forward.11} parent=0 // pred_check_branch
    %16 = sbr.rel (0) target = $region17
  $region16: #{cvta_forward.11} parent=0 // pred_region
    _
  $region17: #{cvta_forward.11} parent=0 // pred_fallthru
    _
  %v18 = vld [vmem:[%s0] sm:$0xff]
  %v19 = vld [vmem:[%s0 + $0x8] sm:$0xff]
  %v20 = vld [vmem:[%s0 + $0x10] sm:$0xff]
  %v21 = vld [vmem:[%s0 + $0x18] sm:$0xff]
  %v22 = vld [vmem:[%s0 + $0x20] sm:$0xff]
  %v23 = vld [vmem:[%s0 + $0x28] sm:$0xff]
  %v24 = vld [vmem:[%s0 + $0x30] sm:$0xff]
  %v25 = vld [vmem:[%s0 + $0x38] sm:$0xff]
  %v26 = vld [vmem:[%s0 + $0x40] sm:$0xff]
  %v27 = vld [vmem:[%s0 + $0x48] sm:$0xff]
  %v28 = vld [vmem:[%s0 + $0x50] sm:$0xff]
  %v29 = vld [vmem:[%s0 + $0x58] sm:$0xff]
  %v30 = vld [vmem:[%s0 + $0x60] sm:$0xff]
  %v31 = vld [vmem:[%s0 + $0x68] sm:$0xff]
  %v32 = vld [vmem:[%s0 + $0x70] sm:$0xff]
  %v33 = vld [vmem:[%s0 + $0x78] sm:$0xff]
  %v34 = vpack.c.bf16 %v19, %v18
  %v35 = vpack.c.bf16 %v21, %v20
  %v36 = vpack.c.bf16 %v23, %v22
  %v37 = vpack.c.bf16 %v25, %v24
  %v38 = vpack.c.bf16 %v27, %v26
  %v39 = vpack.c.bf16 %v29, %v28
  %v40 = vpack.c.bf16 %v31, %v30
  %v41 = vpack.c.bf16 %v33, %v32
  %v42 = vld [vmem:[%s1] sm:$0xf]
  %v43 = vld [vmem:[%s1 + $0x4] sm:$0xf]
  %v46 = vunpack.c.l.b16 %v42
  %v47 = vunpack.c.l.b16 %v43
  %v48 = vpack.c.b16 %v47, %v46
  %vm50 = vcmask 130048
  %v52 = vsel %vm50, %v34, 0
  %v55 = vsel %vm50, %v35, 0
  %v58 = vsel %vm50, %v36, 0
  %v61 = vsel %vm50, %v37, 0
  %v64 = vsel %vm50, %v38, 0
  %v67 = vsel %vm50, %v39, 0
  %v70 = vsel %vm50, %v40, 0
  %v73 = vsel %vm50, %v41, 0
  %75 = vmatpush.bf16.msra.mxu0 0
  %76 = vmatpush.bf16.msra.mxu0 0
  %77 = vmatpush.bf16.msra.mxu0 0
  %78 = vmatpush.bf16.msra.mxu0 0
  %79 = vmatpush.bf16.msra.mxu0 0
  %80 = vmatpush.bf16.msra.mxu0 0
  %81 = vmatpush.bf16.msra.mxu0 0
  %82 = vmatpush.bf16.msra.mxu0 %v48
  %83 = vmatmul.bf16.gmra.mxu0 %v52
  %v84 = vpop.f32.mrf.mxu0
  %v85 = vadd.f32 0.0, %v84
  %v86 = vpop.f32.mrf.mxu0
  %v87 = vadd.f32 0.0, %v86
  %88 = vmatmul.bf16.gmra.mxu0 %v55
  %v89 = vpop.f32.mrf.mxu0
  %v90 = vadd.f32 0.0, %v89
  %v91 = vpop.f32.mrf.mxu0
  %v92 = vadd.f32 0.0, %v91
  %93 = vmatmul.bf16.gmra.mxu0 %v58
  %v94 = vpop.f32.mrf.mxu0
  %v95 = vadd.f32 0.0, %v94
  %v96 = vpop.f32.mrf.mxu0
  %v97 = vadd.f32 0.0, %v96
  %98 = vmatmul.bf16.gmra.mxu0 %v61
  %v99 = vpop.f32.mrf.mxu0
  %v100 = vadd.f32 0.0, %v99
  %v101 = vpop.f32.mrf.mxu0
  %v102 = vadd.f32 0.0, %v101
  %103 = vmatmul.bf16.gmra.mxu0 %v64
  %v104 = vpop.f32.mrf.mxu0
  %v105 = vadd.f32 0.0, %v104
  %v106 = vpop.f32.mrf.mxu0
  %v107 = vadd.f32 0.0, %v106
  %108 = vmatmul.bf16.gmra.mxu0 %v67
  %v109 = vpop.f32.mrf.mxu0
  %v110 = vadd.f32 0.0, %v109
  %v111 = vpop.f32.mrf.mxu0
  %v112 = vadd.f32 0.0, %v111
  %113 = vmatmul.bf16.gmra.mxu0 %v70
  %v114 = vpop.f32.mrf.mxu0
  %v115 = vadd.f32 0.0, %v114
  %v116 = vpop.f32.mrf.mxu0
  %v117 = vadd.f32 0.0, %v116
  %118 = vmatmul.bf16.gmra.mxu0 %v73
  %v119 = vpop.f32.mrf.mxu0
  %v120 = vadd.f32 0.0, %v119
  %v121 = vpop.f32.mrf.mxu0
  %v122 = vadd.f32 0.0, %v121
  %123 = vdwg.mxu0
  %v124 = vld [vmem:[%s2] sm:$0x1]
  %v126 = vperm.slane %v124, 0
  %v128 = vmul.f32 %v85, %v126
  %v129 = vmul.f32 %v87, %v126
  %v130 = vmul.f32 %v90, %v126
  %v131 = vmul.f32 %v92, %v126
  %v132 = vmul.f32 %v95, %v126
  %v133 = vmul.f32 %v97, %v126
  %v134 = vmul.f32 %v100, %v126
  %v135 = vmul.f32 %v102, %v126
  %v136 = vmul.f32 %v105, %v126
  %v137 = vmul.f32 %v107, %v126
  %v138 = vmul.f32 %v110, %v126
  %v139 = vmul.f32 %v112, %v126
  %v140 = vmul.f32 %v115, %v126
  %v141 = vmul.f32 %v117, %v126
  %v142 = vmul.f32 %v120, %v126
  %v143 = vmul.f32 %v122, %v126
  %v144 = vld [vmem:[%s3] sm:$0x1]
  %v146 = vperm.slane %v144, 0
  %v148 = vadd.f32 %v128, %v146
  %v149 = vadd.f32 %v129, %v146
  %v150 = vadd.f32 %v130, %v146
  %v151 = vadd.f32 %v131, %v146
  %v152 = vadd.f32 %v132, %v146
  %v153 = vadd.f32 %v133, %v146
  %v154 = vadd.f32 %v134, %v146
  %v155 = vadd.f32 %v135, %v146
  %v156 = vadd.f32 %v136, %v146
  %v157 = vadd.f32 %v137, %v146
  %v158 = vadd.f32 %v138, %v146
  %v159 = vadd.f32 %v139, %v146
  %v160 = vadd.f32 %v140, %v146
  %v161 = vadd.f32 %v141, %v146
  %v162 = vadd.f32 %v142, %v146
  %v163 = vadd.f32 %v143, %v146
  %v164 = vmul.f32 %v148, 0.5
  %v165 = vmul.f32 %v149, 0.5
  %v166 = vmul.f32 %v150, 0.5
  %v167 = vmul.f32 %v151, 0.5
  %v168 = vmul.f32 %v152, 0.5
  %v169 = vmul.f32 %v153, 0.5
  %v170 = vmul.f32 %v154, 0.5
  %v171 = vmul.f32 %v155, 0.5
  %v172 = vmul.f32 %v156, 0.5
  %v173 = vmul.f32 %v157, 0.5
  %v174 = vmul.f32 %v158, 0.5
  %v175 = vmul.f32 %v159, 0.5
  %v176 = vmul.f32 %v160, 0.5
  %v177 = vmul.f32 %v161, 0.5
  %v178 = vmul.f32 %v162, 0.5
  %v179 = vmul.f32 %v163, 0.5
  %v180 = vmul.f32 %v148, 0.70710677
  %v181 = vmul.f32 %v149, 0.70710677
  %v182 = vmul.f32 %v150, 0.70710677
  %v183 = vmul.f32 %v151, 0.70710677
  %v184 = vmul.f32 %v152, 0.70710677
  %v185 = vmul.f32 %v153, 0.70710677
  %v186 = vmul.f32 %v154, 0.70710677
  %v187 = vmul.f32 %v155, 0.70710677
  %v188 = vmul.f32 %v156, 0.70710677
  %v189 = vmul.f32 %v157, 0.70710677
  %v190 = vmul.f32 %v158, 0.70710677
  %v191 = vmul.f32 %v159, 0.70710677
  %v192 = vmul.f32 %v160, 0.70710677
  %v193 = vmul.f32 %v161, 0.70710677
  %v194 = vmul.f32 %v162, 0.70710677
  %v195 = vmul.f32 %v163, 0.70710677
  %v196 = vand.u32 2147483647, %v180
  %v197 = vand.u32 2147483647, %v181
  %v198 = vand.u32 2147483647, %v182
  %v199 = vand.u32 2147483647, %v183
  %v200 = vand.u32 2147483647, %v184
  %v201 = vand.u32 2147483647, %v185
  %v202 = vand.u32 2147483647, %v186
  %v203 = vand.u32 2147483647, %v187
  %v204 = vand.u32 2147483647, %v188
  %v205 = vand.u32 2147483647, %v189
  %v206 = vand.u32 2147483647, %v190
  %v207 = vand.u32 2147483647, %v191
  %v208 = vand.u32 2147483647, %v192
  %v209 = vand.u32 2147483647, %v193
  %v210 = vand.u32 2147483647, %v194
  %v211 = vand.u32 2147483647, %v195
  %v212 = vmul.f32 %v196, 0.3275911
  %v213 = vmul.f32 %v197, 0.3275911
  %v214 = vmul.f32 %v198, 0.3275911
  %v215 = vmul.f32 %v199, 0.3275911
  %v216 = vmul.f32 %v200, 0.3275911
  %v217 = vmul.f32 %v201, 0.3275911
  %v218 = vmul.f32 %v202, 0.3275911
  %v219 = vmul.f32 %v203, 0.3275911
  %v220 = vmul.f32 %v204, 0.3275911
  %v221 = vmul.f32 %v205, 0.3275911
  %v222 = vmul.f32 %v206, 0.3275911
  %v223 = vmul.f32 %v207, 0.3275911
  %v224 = vmul.f32 %v208, 0.3275911
  %v225 = vmul.f32 %v209, 0.3275911
  %v226 = vmul.f32 %v210, 0.3275911
  %v227 = vmul.f32 %v211, 0.3275911
  %v228 = vadd.f32 %v212, 1.0
  %v229 = vadd.f32 %v213, 1.0
  %v230 = vadd.f32 %v214, 1.0
  %v231 = vadd.f32 %v215, 1.0
  %v232 = vadd.f32 %v216, 1.0
  %v233 = vadd.f32 %v217, 1.0
  %v234 = vadd.f32 %v218, 1.0
  %v235 = vadd.f32 %v219, 1.0
  %v236 = vadd.f32 %v220, 1.0
  %v237 = vadd.f32 %v221, 1.0
  %v238 = vadd.f32 %v222, 1.0
  %v239 = vadd.f32 %v223, 1.0
  %v240 = vadd.f32 %v224, 1.0
  %v241 = vadd.f32 %v225, 1.0
  %v242 = vadd.f32 %v226, 1.0
  %v243 = vadd.f32 %v227, 1.0
  %v244 = vrcp.pop %v228
  %v245 = vmul.f32 %v228, %v244
  %v246 = vsub.f32 1.0, %v245
  %v247 = vmul.f32 %v244, %v246
  %v248 = vadd.f32 %v244, %v247
  %vm249 = vweird.f32 %v228
  %vm250 = vweird.f32 %v244
  %vm251 = vmor %vm249, %vm250
  %v252 = vsel %vm251, %v244, %v248
  %v253 = vand.u32 2147483647, %v228
  %vm254 = vcmp.eq.f32.partialorder %v253, 8.507059e+37
  %v255 = vand.u32 %v228, 2147483648
  %v256 = vor.u32 1.1754944e-38, %v255
  %v257 = vsel %vm254, %v256, %v252
  %v258 = vmul.f32 1.0, %v257
  %v259 = vrcp.pop %v229
  %v260 = vmul.f32 %v229, %v259
  %v261 = vsub.f32 1.0, %v260
  %v262 = vmul.f32 %v259, %v261
  %v263 = vadd.f32 %v259, %v262
  %vm264 = vweird.f32 %v229
  %vm265 = vweird.f32 %v259
  %vm266 = vmor %vm264, %vm265
  %v267 = vsel %vm266, %v259, %v263
  %v268 = vand.u32 2147483647, %v229
  %vm269 = vcmp.eq.f32.partialorder %v268, 8.507059e+37
  %v270 = vand.u32 %v229, 2147483648
  %v271 = vor.u32 1.1754944e-38, %v270
  %v272 = vsel %vm269, %v271, %v267
  %v273 = vmul.f32 1.0, %v272
  %v274 = vrcp.pop %v230
  %v275 = vmul.f32 %v230, %v274
  %v276 = vsub.f32 1.0, %v275
  %v277 = vmul.f32 %v274, %v276
  %v278 = vadd.f32 %v274, %v277
  %vm279 = vweird.f32 %v230
  %vm280 = vweird.f32 %v274
  %vm281 = vmor %vm279, %vm280
  %v282 = vsel %vm281, %v274, %v278
  %v283 = vand.u32 2147483647, %v230
  %vm284 = vcmp.eq.f32.partialorder %v283, 8.507059e+37
  %v285 = vand.u32 %v230, 2147483648
  %v286 = vor.u32 1.1754944e-38, %v285
  %v287 = vsel %vm284, %v286, %v282
  %v288 = vmul.f32 1.0, %v287
  %v289 = vrcp.pop %v231
  %v290 = vmul.f32 %v231, %v289
  %v291 = vsub.f32 1.0, %v290
  %v292 = vmul.f32 %v289, %v291
  %v293 = vadd.f32 %v289, %v292
  %vm294 = vweird.f32 %v231
  %vm295 = vweird.f32 %v289
  %vm296 = vmor %vm294, %vm295
  %v297 = vsel %vm296, %v289, %v293
  %v298 = vand.u32 2147483647, %v231
  %vm299 = vcmp.eq.f32.partialorder %v298, 8.507059e+37
  %v300 = vand.u32 %v231, 2147483648
  %v301 = vor.u32 1.1754944e-38, %v300
  %v302 = vsel %vm299, %v301, %v297
  %v303 = vmul.f32 1.0, %v302
  %v304 = vrcp.pop %v232
  %v305 = vmul.f32 %v232, %v304
  %v306 = vsub.f32 1.0, %v305
  %v307 = vmul.f32 %v304, %v306
  %v308 = vadd.f32 %v304, %v307
  %vm309 = vweird.f32 %v232
  %vm310 = vweird.f32 %v304
  %vm311 = vmor %vm309, %vm310
  %v312 = vsel %vm311, %v304, %v308
  %v313 = vand.u32 2147483647, %v232
  %vm314 = vcmp.eq.f32.partialorder %v313, 8.507059e+37
  %v315 = vand.u32 %v232, 2147483648
  %v316 = vor.u32 1.1754944e-38, %v315
  %v317 = vsel %vm314, %v316, %v312
  %v318 = vmul.f32 1.0, %v317
  %v319 = vrcp.pop %v233
  %v320 = vmul.f32 %v233, %v319
  %v321 = vsub.f32 1.0, %v320
  %v322 = vmul.f32 %v319, %v321
  %v323 = vadd.f32 %v319, %v322
  %vm324 = vweird.f32 %v233
  %vm325 = vweird.f32 %v319
  %vm326 = vmor %vm324, %vm325
  %v327 = vsel %vm326, %v319, %v323
  %v328 = vand.u32 2147483647, %v233
  %vm329 = vcmp.eq.f32.partialorder %v328, 8.507059e+37
  %v330 = vand.u32 %v233, 2147483648
  %v331 = vor.u32 1.1754944e-38, %v330
  %v332 = vsel %vm329, %v331, %v327
  %v333 = vmul.f32 1.0, %v332
  %v334 = vrcp.pop %v234
  %v335 = vmul.f32 %v234, %v334
  %v336 = vsub.f32 1.0, %v335
  %v337 = vmul.f32 %v334, %v336
  %v338 = vadd.f32 %v334, %v337
  %vm339 = vweird.f32 %v234
  %vm340 = vweird.f32 %v334
  %vm341 = vmor %vm339, %vm340
  %v342 = vsel %vm341, %v334, %v338
  %v343 = vand.u32 2147483647, %v234
  %vm344 = vcmp.eq.f32.partialorder %v343, 8.507059e+37
  %v345 = vand.u32 %v234, 2147483648
  %v346 = vor.u32 1.1754944e-38, %v345
  %v347 = vsel %vm344, %v346, %v342
  %v348 = vmul.f32 1.0, %v347
  %v349 = vrcp.pop %v235
  %v350 = vmul.f32 %v235, %v349
  %v351 = vsub.f32 1.0, %v350
  %v352 = vmul.f32 %v349, %v351
  %v353 = vadd.f32 %v349, %v352
  %vm354 = vweird.f32 %v235
  %vm355 = vweird.f32 %v349
  %vm356 = vmor %vm354, %vm355
  %v357 = vsel %vm356, %v349, %v353
  %v358 = vand.u32 2147483647, %v235
  %vm359 = vcmp.eq.f32.partialorder %v358, 8.507059e+37
  %v360 = vand.u32 %v235, 2147483648
  %v361 = vor.u32 1.1754944e-38, %v360
  %v362 = vsel %vm359, %v361, %v357
  %v363 = vmul.f32 1.0, %v362
  %v364 = vrcp.pop %v236
  %v365 = vmul.f32 %v236, %v364
  %v366 = vsub.f32 1.0, %v365
  %v367 = vmul.f32 %v364, %v366
  %v368 = vadd.f32 %v364, %v367
  %vm369 = vweird.f32 %v236
  %vm370 = vweird.f32 %v364
  %vm371 = vmor %vm369, %vm370
  %v372 = vsel %vm371, %v364, %v368
  %v373 = vand.u32 2147483647, %v236
  %vm374 = vcmp.eq.f32.partialorder %v373, 8.507059e+37
  %v375 = vand.u32 %v236, 2147483648
  %v376 = vor.u32 1.1754944e-38, %v375
  %v377 = vsel %vm374, %v376, %v372
  %v378 = vmul.f32 1.0, %v377
  %v379 = vrcp.pop %v237
  %v380 = vmul.f32 %v237, %v379
  %v381 = vsub.f32 1.0, %v380
  %v382 = vmul.f32 %v379, %v381
  %v383 = vadd.f32 %v379, %v382
  %vm384 = vweird.f32 %v237
  %vm385 = vweird.f32 %v379
  %vm386 = vmor %vm384, %vm385
  %v387 = vsel %vm386, %v379, %v383
  %v388 = vand.u32 2147483647, %v237
  %vm389 = vcmp.eq.f32.partialorder %v388, 8.507059e+37
  %v390 = vand.u32 %v237, 2147483648
  %v391 = vor.u32 1.1754944e-38, %v390
  %v392 = vsel %vm389, %v391, %v387
  %v393 = vmul.f32 1.0, %v392
  %v394 = vrcp.pop %v238
  %v395 = vmul.f32 %v238, %v394
  %v396 = vsub.f32 1.0, %v395
  %v397 = vmul.f32 %v394, %v396
  %v398 = vadd.f32 %v394, %v397
  %vm399 = vweird.f32 %v238
  %vm400 = vweird.f32 %v394
  %vm401 = vmor %vm399, %vm400
  %v402 = vsel %vm401, %v394, %v398
  %v403 = vand.u32 2147483647, %v238
  %vm404 = vcmp.eq.f32.partialorder %v403, 8.507059e+37
  %v405 = vand.u32 %v238, 2147483648
  %v406 = vor.u32 1.1754944e-38, %v405
  %v407 = vsel %vm404, %v406, %v402
  %v408 = vmul.f32 1.0, %v407
  %v409 = vrcp.pop %v239
  %v410 = vmul.f32 %v239, %v409
  %v411 = vsub.f32 1.0, %v410
  %v412 = vmul.f32 %v409, %v411
  %v413 = vadd.f32 %v409, %v412
  %vm414 = vweird.f32 %v239
  %vm415 = vweird.f32 %v409
  %vm416 = vmor %vm414, %vm415
  %v417 = vsel %vm416, %v409, %v413
  %v418 = vand.u32 2147483647, %v239
  %vm419 = vcmp.eq.f32.partialorder %v418, 8.507059e+37
  %v420 = vand.u32 %v239, 2147483648
  %v421 = vor.u32 1.1754944e-38, %v420
  %v422 = vsel %vm419, %v421, %v417
  %v423 = vmul.f32 1.0, %v422
  %v424 = vrcp.pop %v240
  %v425 = vmul.f32 %v240, %v424
  %v426 = vsub.f32 1.0, %v425
  %v427 = vmul.f32 %v424, %v426
  %v428 = vadd.f32 %v424, %v427
  %vm429 = vweird.f32 %v240
  %vm430 = vweird.f32 %v424
  %vm431 = vmor %vm429, %vm430
  %v432 = vsel %vm431, %v424, %v428
  %v433 = vand.u32 2147483647, %v240
  %vm434 = vcmp.eq.f32.partialorder %v433, 8.507059e+37
  %v435 = vand.u32 %v240, 2147483648
  %v436 = vor.u32 1.1754944e-38, %v435
  %v437 = vsel %vm434, %v436, %v432
  %v438 = vmul.f32 1.0, %v437
  %v439 = vrcp.pop %v241
  %v440 = vmul.f32 %v241, %v439
  %v441 = vsub.f32 1.0, %v440
  %v442 = vmul.f32 %v439, %v441
  %v443 = vadd.f32 %v439, %v442
  %vm444 = vweird.f32 %v241
  %vm445 = vweird.f32 %v439
  %vm446 = vmor %vm444, %vm445
  %v447 = vsel %vm446, %v439, %v443
  %v448 = vand.u32 2147483647, %v241
  %vm449 = vcmp.eq.f32.partialorder %v448, 8.507059e+37
  %v450 = vand.u32 %v241, 2147483648
  %v451 = vor.u32 1.1754944e-38, %v450
  %v452 = vsel %vm449, %v451, %v447
  %v453 = vmul.f32 1.0, %v452
  %v454 = vrcp.pop %v242
  %v455 = vmul.f32 %v242, %v454
  %v456 = vsub.f32 1.0, %v455
  %v457 = vmul.f32 %v454, %v456
  %v458 = vadd.f32 %v454, %v457
  %vm459 = vweird.f32 %v242
  %vm460 = vweird.f32 %v454
  %vm461 = vmor %vm459, %vm460
  %v462 = vsel %vm461, %v454, %v458
  %v463 = vand.u32 2147483647, %v242
  %vm464 = vcmp.eq.f32.partialorder %v463, 8.507059e+37
  %v465 = vand.u32 %v242, 2147483648
  %v466 = vor.u32 1.1754944e-38, %v465
  %v467 = vsel %vm464, %v466, %v462
  %v468 = vmul.f32 1.0, %v467
  %v469 = vrcp.pop %v243
  %v470 = vmul.f32 %v243, %v469
  %v471 = vsub.f32 1.0, %v470
  %v472 = vmul.f32 %v469, %v471
  %v473 = vadd.f32 %v469, %v472
  %vm474 = vweird.f32 %v243
  %vm475 = vweird.f32 %v469
  %vm476 = vmor %vm474, %vm475
  %v477 = vsel %vm476, %v469, %v473
  %v478 = vand.u32 2147483647, %v243
  %vm479 = vcmp.eq.f32.partialorder %v478, 8.507059e+37
  %v480 = vand.u32 %v243, 2147483648
  %v481 = vor.u32 1.1754944e-38, %v480
  %v482 = vsel %vm479, %v481, %v477
  %v483 = vmul.f32 1.0, %v482
  %v484 = vmul.f32 %v258, 1.0614054
  %v485 = vmul.f32 %v273, 1.0614054
  %v486 = vmul.f32 %v288, 1.0614054
  %v487 = vmul.f32 %v303, 1.0614054
  %v488 = vmul.f32 %v318, 1.0614054
  %v489 = vmul.f32 %v333, 1.0614054
  %v490 = vmul.f32 %v348, 1.0614054
  %v491 = vmul.f32 %v363, 1.0614054
  %v492 = vmul.f32 %v378, 1.0614054
  %v493 = vmul.f32 %v393, 1.0614054
  %v494 = vmul.f32 %v408, 1.0614054
  %v495 = vmul.f32 %v423, 1.0614054
  %v496 = vmul.f32 %v438, 1.0614054
  %v497 = vmul.f32 %v453, 1.0614054
  %v498 = vmul.f32 %v468, 1.0614054
  %v499 = vmul.f32 %v483, 1.0614054
  %v500 = vadd.f32 %v484, -1.4531521
  %v501 = vadd.f32 %v485, -1.4531521
  %v502 = vadd.f32 %v486, -1.4531521
  %v503 = vadd.f32 %v487, -1.4531521
  %v504 = vadd.f32 %v488, -1.4531521
  %v505 = vadd.f32 %v489, -1.4531521
  %v506 = vadd.f32 %v490, -1.4531521
  %v507 = vadd.f32 %v491, -1.4531521
  %v508 = vadd.f32 %v492, -1.4531521
  %v509 = vadd.f32 %v493, -1.4531521
  %v510 = vadd.f32 %v494, -1.4531521
  %v511 = vadd.f32 %v495, -1.4531521
  %v512 = vadd.f32 %v496, -1.4531521
  %v513 = vadd.f32 %v497, -1.4531521
  %v514 = vadd.f32 %v498, -1.4531521
  %v515 = vadd.f32 %v499, -1.4531521
  %v516 = vmul.f32 %v500, %v258
  %v517 = vmul.f32 %v501, %v273
  %v518 = vmul.f32 %v502, %v288
  %v519 = vmul.f32 %v503, %v303
  %v520 = vmul.f32 %v504, %v318
  %v521 = vmul.f32 %v505, %v333
  %v522 = vmul.f32 %v506, %v348
  %v523 = vmul.f32 %v507, %v363
  %v524 = vmul.f32 %v508, %v378
  %v525 = vmul.f32 %v509, %v393
  %v526 = vmul.f32 %v510, %v408
  %v527 = vmul.f32 %v511, %v423
  %v528 = vmul.f32 %v512, %v438
  %v529 = vmul.f32 %v513, %v453
  %v530 = vmul.f32 %v514, %v468
  %v531 = vmul.f32 %v515, %v483
  %v532 = vadd.f32 %v516, 1.4214138
  %v533 = vadd.f32 %v517, 1.4214138
  %v534 = vadd.f32 %v518, 1.4214138
  %v535 = vadd.f32 %v519, 1.4214138
  %v536 = vadd.f32 %v520, 1.4214138
  %v537 = vadd.f32 %v521, 1.4214138
  %v538 = vadd.f32 %v522, 1.4214138
  %v539 = vadd.f32 %v523, 1.4214138
  %v540 = vadd.f32 %v524, 1.4214138
  %v541 = vadd.f32 %v525, 1.4214138
  %v542 = vadd.f32 %v526, 1.4214138
  %v543 = vadd.f32 %v527, 1.4214138
  %v544 = vadd.f32 %v528, 1.4214138
  %v545 = vadd.f32 %v529, 1.4214138
  %v546 = vadd.f32 %v530, 1.4214138
  %v547 = vadd.f32 %v531, 1.4214138
  %v548 = vmul.f32 %v532, %v258
  %v549 = vmul.f32 %v533, %v273
  %v550 = vmul.f32 %v534, %v288
  %v551 = vmul.f32 %v535, %v303
  %v552 = vmul.f32 %v536, %v318
  %v553 = vmul.f32 %v537, %v333
  %v554 = vmul.f32 %v538, %v348
  %v555 = vmul.f32 %v539, %v363
  %v556 = vmul.f32 %v540, %v378
  %v557 = vmul.f32 %v541, %v393
  %v558 = vmul.f32 %v542, %v408
  %v559 = vmul.f32 %v543, %v423
  %v560 = vmul.f32 %v544, %v438
  %v561 = vmul.f32 %v545, %v453
  %v562 = vmul.f32 %v546, %v468
  %v563 = vmul.f32 %v547, %v483
  %v564 = vadd.f32 %v548, -0.28449672
  %v565 = vadd.f32 %v549, -0.28449672
  %v566 = vadd.f32 %v550, -0.28449672
  %v567 = vadd.f32 %v551, -0.28449672
  %v568 = vadd.f32 %v552, -0.28449672
  %v569 = vadd.f32 %v553, -0.28449672
  %v570 = vadd.f32 %v554, -0.28449672
  %v571 = vadd.f32 %v555, -0.28449672
  %v572 = vadd.f32 %v556, -0.28449672
  %v573 = vadd.f32 %v557, -0.28449672
  %v574 = vadd.f32 %v558, -0.28449672
  %v575 = vadd.f32 %v559, -0.28449672
  %v576 = vadd.f32 %v560, -0.28449672
  %v577 = vadd.f32 %v561, -0.28449672
  %v578 = vadd.f32 %v562, -0.28449672
  %v579 = vadd.f32 %v563, -0.28449672
  %v580 = vmul.f32 %v564, %v258
  %v581 = vmul.f32 %v565, %v273
  %v582 = vmul.f32 %v566, %v288
  %v583 = vmul.f32 %v567, %v303
  %v584 = vmul.f32 %v568, %v318
  %v585 = vmul.f32 %v569, %v333
  %v586 = vmul.f32 %v570, %v348
  %v587 = vmul.f32 %v571, %v363
  %v588 = vmul.f32 %v572, %v378
  %v589 = vmul.f32 %v573, %v393
  %v590 = vmul.f32 %v574, %v408
  %v591 = vmul.f32 %v575, %v423
  %v592 = vmul.f32 %v576, %v438
  %v593 = vmul.f32 %v577, %v453
  %v594 = vmul.f32 %v578, %v468
  %v595 = vmul.f32 %v579, %v483
  %v596 = vadd.f32 %v580, 0.2548296
  %v597 = vadd.f32 %v581, 0.2548296
  %v598 = vadd.f32 %v582, 0.2548296
  %v599 = vadd.f32 %v583, 0.2548296
  %v600 = vadd.f32 %v584, 0.2548296
  %v601 = vadd.f32 %v585, 0.2548296
  %v602 = vadd.f32 %v586, 0.2548296
  %v603 = vadd.f32 %v587, 0.2548296
  %v604 = vadd.f32 %v588, 0.2548296
  %v605 = vadd.f32 %v589, 0.2548296
  %v606 = vadd.f32 %v590, 0.2548296
  %v607 = vadd.f32 %v591, 0.2548296
  %v608 = vadd.f32 %v592, 0.2548296
  %v609 = vadd.f32 %v593, 0.2548296
  %v610 = vadd.f32 %v594, 0.2548296
  %v611 = vadd.f32 %v595, 0.2548296
  %v612 = vmul.f32 %v596, %v258
  %v613 = vmul.f32 %v597, %v273
  %v614 = vmul.f32 %v598, %v288
  %v615 = vmul.f32 %v599, %v303
  %v616 = vmul.f32 %v600, %v318
  %v617 = vmul.f32 %v601, %v333
  %v618 = vmul.f32 %v602, %v348
  %v619 = vmul.f32 %v603, %v363
  %v620 = vmul.f32 %v604, %v378
  %v621 = vmul.f32 %v605, %v393
  %v622 = vmul.f32 %v606, %v408
  %v623 = vmul.f32 %v607, %v423
  %v624 = vmul.f32 %v608, %v438
  %v625 = vmul.f32 %v609, %v453
  %v626 = vmul.f32 %v610, %v468
  %v627 = vmul.f32 %v611, %v483
  %v628 = vsub.f32 0.0, %v196
  %v629 = vsub.f32 0.0, %v197
  %v630 = vsub.f32 0.0, %v198
  %v631 = vsub.f32 0.0, %v199
  %v632 = vsub.f32 0.0, %v200
  %v633 = vsub.f32 0.0, %v201
  %v634 = vsub.f32 0.0, %v202
  %v635 = vsub.f32 0.0, %v203
  %v636 = vsub.f32 0.0, %v204
  %v637 = vsub.f32 0.0, %v205
  %v638 = vsub.f32 0.0, %v206
  %v639 = vsub.f32 0.0, %v207
  %v640 = vsub.f32 0.0, %v208
  %v641 = vsub.f32 0.0, %v209
  %v642 = vsub.f32 0.0, %v210
  %v643 = vsub.f32 0.0, %v211
  %v644 = vmul.f32 %v628, %v196
  %v645 = vmul.f32 %v629, %v197
  %v646 = vmul.f32 %v630, %v198
  %v647 = vmul.f32 %v631, %v199
  %v648 = vmul.f32 %v632, %v200
  %v649 = vmul.f32 %v633, %v201
  %v650 = vmul.f32 %v634, %v202
  %v651 = vmul.f32 %v635, %v203
  %v652 = vmul.f32 %v636, %v204
  %v653 = vmul.f32 %v637, %v205
  %v654 = vmul.f32 %v638, %v206
  %v655 = vmul.f32 %v639, %v207
  %v656 = vmul.f32 %v640, %v208
  %v657 = vmul.f32 %v641, %v209
  %v658 = vmul.f32 %v642, %v210
  %v659 = vmul.f32 %v643, %v211
  %v660 = vmul.f32 %v644, 1.442695
  %v661 = vpow.pop %v660
  %v662 = vmul.f32 %v645, 1.442695
  %v663 = vpow.pop %v662
  %v664 = vmul.f32 %v646, 1.442695
  %v665 = vpow.pop %v664
  %v666 = vmul.f32 %v647, 1.442695
  %v667 = vpow.pop %v666
  %v668 = vmul.f32 %v648, 1.442695
  %v669 = vpow.pop %v668
  %v670 = vmul.f32 %v649, 1.442695
  %v671 = vpow.pop %v670
  %v672 = vmul.f32 %v650, 1.442695
  %v673 = vpow.pop %v672
  %v674 = vmul.f32 %v651, 1.442695
  %v675 = vpow.pop %v674
  %v676 = vmul.f32 %v652, 1.442695
  %v677 = vpow.pop %v676
  %v678 = vmul.f32 %v653, 1.442695
  %v679 = vpow.pop %v678
  %v680 = vmul.f32 %v654, 1.442695
  %v681 = vpow.pop %v680
  %v682 = vmul.f32 %v655, 1.442695
  %v683 = vpow.pop %v682
  %v684 = vmul.f32 %v656, 1.442695
  %v685 = vpow.pop %v684
  %v686 = vmul.f32 %v657, 1.442695
  %v687 = vpow.pop %v686
  %v688 = vmul.f32 %v658, 1.442695
  %v689 = vpow.pop %v688
  %v690 = vmul.f32 %v659, 1.442695
  %v691 = vpow.pop %v690
  %v692 = vmul.f32 %v612, %v661
  %v693 = vmul.f32 %v613, %v663
  %v694 = vmul.f32 %v614, %v665
  %v695 = vmul.f32 %v615, %v667
  %v696 = vmul.f32 %v616, %v669
  %v697 = vmul.f32 %v617, %v671
  %v698 = vmul.f32 %v618, %v673
  %v699 = vmul.f32 %v619, %v675
  %v700 = vmul.f32 %v620, %v677
  %v701 = vmul.f32 %v621, %v679
  %v702 = vmul.f32 %v622, %v681
  %v703 = vmul.f32 %v623, %v683
  %v704 = vmul.f32 %v624, %v685
  %v705 = vmul.f32 %v625, %v687
  %v706 = vmul.f32 %v626, %v689
  %v707 = vmul.f32 %v627, %v691
  %v708 = vsub.f32 1.0, %v692
  %v709 = vsub.f32 1.0, %v693
  %v710 = vsub.f32 1.0, %v694
  %v711 = vsub.f32 1.0, %v695
  %v712 = vsub.f32 1.0, %v696
  %v713 = vsub.f32 1.0, %v697
  %v714 = vsub.f32 1.0, %v698
  %v715 = vsub.f32 1.0, %v699
  %v716 = vsub.f32 1.0, %v700
  %v717 = vsub.f32 1.0, %v701
  %v718 = vsub.f32 1.0, %v702
  %v719 = vsub.f32 1.0, %v703
  %v720 = vsub.f32 1.0, %v704
  %v721 = vsub.f32 1.0, %v705
  %v722 = vsub.f32 1.0, %v706
  %v723 = vsub.f32 1.0, %v707
  %vm724 = vcmp.ge.f32.partialorder %v180, 0.0
  %vm725 = vcmp.ge.f32.partialorder %v181, 0.0
  %vm726 = vcmp.ge.f32.partialorder %v182, 0.0
  %vm727 = vcmp.ge.f32.partialorder %v183, 0.0
  %vm728 = vcmp.ge.f32.partialorder %v184, 0.0
  %vm729 = vcmp.ge.f32.partialorder %v185, 0.0
  %vm730 = vcmp.ge.f32.partialorder %v186, 0.0
  %vm731 = vcmp.ge.f32.partialorder %v187, 0.0
  %vm732 = vcmp.ge.f32.partialorder %v188, 0.0
  %vm733 = vcmp.ge.f32.partialorder %v189, 0.0
  %vm734 = vcmp.ge.f32.partialorder %v190, 0.0
  %vm735 = vcmp.ge.f32.partialorder %v191, 0.0
  %vm736 = vcmp.ge.f32.partialorder %v192, 0.0
  %vm737 = vcmp.ge.f32.partialorder %v193, 0.0
  %vm738 = vcmp.ge.f32.partialorder %v194, 0.0
  %vm739 = vcmp.ge.f32.partialorder %v195, 0.0
  %v740 = vsub.f32 0.0, %v708
  %v741 = vsub.f32 0.0, %v709
  %v742 = vsub.f32 0.0, %v710
  %v743 = vsub.f32 0.0, %v711
  %v744 = vsub.f32 0.0, %v712
  %v745 = vsub.f32 0.0, %v713
  %v746 = vsub.f32 0.0, %v714
  %v747 = vsub.f32 0.0, %v715
  %v748 = vsub.f32 0.0, %v716
  %v749 = vsub.f32 0.0, %v717
  %v750 = vsub.f32 0.0, %v718
  %v751 = vsub.f32 0.0, %v719
  %v752 = vsub.f32 0.0, %v720
  %v753 = vsub.f32 0.0, %v721
  %v754 = vsub.f32 0.0, %v722
  %v755 = vsub.f32 0.0, %v723
  %v756 = vsel %vm724, %v708, %v740
  %v757 = vsel %vm725, %v709, %v741
  %v758 = vsel %vm726, %v710, %v742
  %v759 = vsel %vm727, %v711, %v743
  %v760 = vsel %vm728, %v712, %v744
  %v761 = vsel %vm729, %v713, %v745
  %v762 = vsel %vm730, %v714, %v746
  %v763 = vsel %vm731, %v715, %v747
  %v764 = vsel %vm732, %v716, %v748
  %v765 = vsel %vm733, %v717, %v749
  %v766 = vsel %vm734, %v718, %v750
  %v767 = vsel %vm735, %v719, %v751
  %v768 = vsel %vm736, %v720, %v752
  %v769 = vsel %vm737, %v721, %v753
  %v770 = vsel %vm738, %v722, %v754
  %v771 = vsel %vm739, %v723, %v755
  %v772 = vadd.f32 %v756, 1.0
  %v773 = vadd.f32 %v757, 1.0
  %v774 = vadd.f32 %v758, 1.0
  %v775 = vadd.f32 %v759, 1.0
  %v776 = vadd.f32 %v760, 1.0
  %v777 = vadd.f32 %v761, 1.0
  %v778 = vadd.f32 %v762, 1.0
  %v779 = vadd.f32 %v763, 1.0
  %v780 = vadd.f32 %v764, 1.0
  %v781 = vadd.f32 %v765, 1.0
  %v782 = vadd.f32 %v766, 1.0
  %v783 = vadd.f32 %v767, 1.0
  %v784 = vadd.f32 %v768, 1.0
  %v785 = vadd.f32 %v769, 1.0
  %v786 = vadd.f32 %v770, 1.0
  %v787 = vadd.f32 %v771, 1.0
  %v788 = vmul.f32 %v164, %v772
  %v789 = vmul.f32 %v165, %v773
  %v790 = vmul.f32 %v166, %v774
  %v791 = vmul.f32 %v167, %v775
  %v792 = vmul.f32 %v168, %v776
  %v793 = vmul.f32 %v169, %v777
  %v794 = vmul.f32 %v170, %v778
  %v795 = vmul.f32 %v171, %v779
  %v796 = vmul.f32 %v172, %v780
  %v797 = vmul.f32 %v173, %v781
  %v798 = vmul.f32 %v174, %v782
  %v799 = vmul.f32 %v175, %v783
  %v800 = vmul.f32 %v176, %v784
  %v801 = vmul.f32 %v177, %v785
  %v802 = vmul.f32 %v178, %v786
  %v803 = vmul.f32 %v179, %v787
  %804 = vst.msk [vmem:[%s4] sm:$0xff] %vm50, %v788
  %805 = vst.msk [vmem:[%s4 + $0x8] sm:$0xff] %vm50, %v789
  %806 = vst.msk [vmem:[%s4 + $0x10] sm:$0xff] %vm50, %v790
  %807 = vst.msk [vmem:[%s4 + $0x18] sm:$0xff] %vm50, %v791
  %808 = vst.msk [vmem:[%s4 + $0x20] sm:$0xff] %vm50, %v792
  %809 = vst.msk [vmem:[%s4 + $0x28] sm:$0xff] %vm50, %v793
  %810 = vst.msk [vmem:[%s4 + $0x30] sm:$0xff] %vm50, %v794
  %811 = vst.msk [vmem:[%s4 + $0x38] sm:$0xff] %vm50, %v795
  %812 = vst.msk [vmem:[%s4 + $0x40] sm:$0xff] %vm50, %v796
  %813 = vst.msk [vmem:[%s4 + $0x48] sm:$0xff] %vm50, %v797
  %814 = vst.msk [vmem:[%s4 + $0x50] sm:$0xff] %vm50, %v798
  %815 = vst.msk [vmem:[%s4 + $0x58] sm:$0xff] %vm50, %v799
  %816 = vst.msk [vmem:[%s4 + $0x60] sm:$0xff] %vm50, %v800
  %817 = vst.msk [vmem:[%s4 + $0x68] sm:$0xff] %vm50, %v801
  %818 = vst.msk [vmem:[%s4 + $0x70] sm:$0xff] %vm50, %v802
  %819 = vst.msk [vmem:[%s4 + $0x78] sm:$0xff] %vm50, %v803
  // Predicated region
  $region18: #{cvta_forward.11} parent=0 // pred_check
    _
  $region19: #{cvta_forward.11} parent=0 // pred_check_branch
    %821 = sbr.rel (0) target = $region21
  $region20: #{cvta_forward.11} parent=0 // pred_region
    _
  $region21: #{cvta_forward.11} parent=0 // pred_fallthru
    _
  // Predicated region
  $region22: #{cvta_forward.11} parent=0 // pred_check
    _
  $region23: #{cvta_forward.11} parent=0 // pred_check_branch
    %823 = sbr.rel (0) target = $region25
  $region24: #{cvta_forward.11} parent=0 // pred_region
    _
  $region25: #{cvta_forward.11} parent=0 // pred_fallthru
    _

// kernel: cvta_forward.12
$region0: #{cvta_forward.12}
  #allocation0 [shape = 'u32[]', space=smem, size = 0x4, offset = 0x4, fixed_abs, tag = 'smem constant byte address 0x4 - core index']
  #allocation1 [shape = 'u32[72,128]{1,0:T(1,128)}', space=vmem, size = 0x9000, scoped, tag = 'internal scratch']
  %s0 = inlined_call_operand.vmem [shape: f32[8,16,16], index: 0, kind: input, shape index: {}]
  %s1 = inlined_call_operand.vmem [shape: f32[1,16], index: 1, kind: input, shape index: {}]
  %s2 = inlined_call_operand.vmem [shape: f32[1,16], index: 2, kind: input, shape index: {}]
  %s3 = inlined_call_operand.vmem [shape: bf16[16,96], index: 3, kind: input, shape index: {}]
  %s4 = inlined_call_operand.vmem [shape: bf16[32,16], index: 4, kind: input, shape index: {}]
  %s5 = inlined_call_operand.vmem [shape: f32[1,16], index: 5, kind: input, shape index: {}]
  %s6 = inlined_call_operand.vmem [shape: f32[1,16], index: 6, kind: input, shape index: {}]
  %s7 = inlined_call_operand.vmem [shape: f32[1,16], index: 7, kind: input, shape index: {}]
  %s8 = inlined_call_operand.vmem [shape: bf16[16,128], index: 8, kind: input, shape index: {}]
  %s9 = inlined_call_operand.vmem [shape: f32[1,128], index: 9, kind: input, shape index: {}]
  %s10 = inlined_call_operand.vmem [shape: bf16[128,16], index: 10, kind: input, shape index: {}]
  %s11 = inlined_call_operand.vmem [shape: f32[1,16], index: 11, kind: input, shape index: {}]
  %s12 = inlined_call_operand.vmem [shape: f32[8,16,16], index: 12, kind: output, shape index: {}]
  %s13 = sld [smem:[#allocation0]]
  $region81: #{cvta_forward.12} parent=0
    _
  %s15 = ssub.s32 1, %s13
  %s16 = scalar_select 0, %s15, %s13
  loop: start=0, step=1, limit=10
  $region2: #{cvta_forward.12} parent=0 // loop_pre_header
    _
  $region3: #{cvta_forward.12} parent=0 // loop_header
    %s18 = sphi 0, %s22
    %p19 = scmp.ge.s32.totalorder %s18, 10
    %s28 = sphi 0, %s30
    %s31 = sphi 0, %s28
    %s32 = sphi 0, %s31
    %s48 = sphi 0, %s32
    %s52 = sphi 0, %s52
    %s54 = sphi 0, %s52
    %s55 = sphi 0, %s54
    %s69 = sphi 0, %s55
    %s73 = sphi 0, %s73
    %s75 = sphi 0, %s73
    %s76 = sphi 0, %s75
    %s90 = sphi 0, %s76
    %s94 = sphi 0, %s94
    %s96 = sphi 0, %s94
    %s97 = sphi 0, %s96
    %s111 = sphi 0, %s97
    %s115 = sphi 0, %s115
    %s117 = sphi 0, %s115
    %s118 = sphi 0, %s117
    %s132 = sphi 0, %s118
    %s136 = sphi 0, %s136
    %s138 = sphi 0, %s136
    %s139 = sphi 0, %s138
    %s153 = sphi 0, %s139
    %s157 = sphi 0, %s157
    %s159 = sphi 0, %s157
    %s160 = sphi 0, %s159
    %s174 = sphi 0, %s160
    %s178 = sphi 0, %s178
    %s180 = sphi 0, %s178
    %s181 = sphi 0, %s180
    %s195 = sphi 0, %s181
    %s199 = sphi 0, %s199
    %s201 = sphi 0, %s199
    %s202 = sphi 0, %s201
    %s216 = sphi 0, %s202
    %s220 = sphi 0, %s220
    %s222 = sphi 0, %s220
    %s223 = sphi 0, %s222
    %s237 = sphi 0, %s223
    %s241 = sphi 0, %s241
    %s243 = sphi 0, %s241
    %s244 = sphi 0, %s243
    %s258 = sphi 0, %s244
    %s262 = sphi 0, %s262
    %s264 = sphi 0, %s262
    %s265 = sphi 0, %s264
    %s279 = sphi 0, %s265
    %s285 = sphi 0, %s287
    %s288 = sphi 0, %s285
    %s289 = sphi 0, %s288
    %s305 = sphi 0, %s289
  $region4: #{cvta_forward.12} parent=0 // loop_header_branch
    %21 = sbr.rel (%p19) target = $region8
  $region5: #{cvta_forward.12} parent=0 // loop_body
    %s23 = ssub.s32 %s18, 1
    %s24 = ssub.s32 %s18, 2
    %s25 = sadd.s32 %s18, 1
    %s26 = ssub.s32 %s18, %s25
    %p27 = scmp.eq.s32.totalorder %s26, 0
    %s29 = sadd.s32 %s28, 1
    %s30 = scalar_select %p27, %s28, %s29
    %p33 = pneg %p27
    %p34 = scmp.eq.s32.totalorder %s18, 7
    %p35 = por %p33, %p34
    %p36 = scmp.ne.s32.totalorder %s28, %s31
    %p37 = scmp.eq.s32.totalorder %s18, 0
    %p38 = por %p36, %p37
    %p39 = scmp.ne.s32.totalorder %s28, %s31
    %p40 = scmp.eq.s32.totalorder %s23, 7
    %p41 = por %p39, %p40
    %p42 = scmp.ne.s32.totalorder %s31, %s32
    %p43 = scmp.eq.s32.totalorder %s23, 0
    %p44 = por %p42, %p43
    %p45 = scmp.ne.s32.totalorder %s31, %s32
    %p46 = scmp.eq.s32.totalorder %s24, 7
    %p47 = por %p45, %p46
    %p49 = scmp.ne.s32.totalorder %s32, %s48
    %p50 = scmp.eq.s32.totalorder %s24, 0
    %p51 = por %p49, %p50
    %s53 = sadd.s32 %s52, 1
    %p56 = scmp.eq.s32.totalorder %s18, 7
    %p57 = scmp.ne.s32.totalorder %s52, %s54
    %p58 = scmp.eq.s32.totalorder %s18, 0
    %p59 = por %p57, %p58
    %p60 = scmp.ne.s32.totalorder %s52, %s54
    %p61 = scmp.eq.s32.totalorder %s23, 7
    %p62 = por %p60, %p61
    %p63 = scmp.ne.s32.totalorder %s54, %s55
    %p64 = scmp.eq.s32.totalorder %s23, 0
    %p65 = por %p63, %p64
    %p66 = scmp.ne.s32.totalorder %s54, %s55
    %p67 = scmp.eq.s32.totalorder %s24, 7
    %p68 = por %p66, %p67
    %p70 = scmp.ne.s32.totalorder %s55, %s69
    %p71 = scmp.eq.s32.totalorder %s24, 0
    %p72 = por %p70, %p71
    %s74 = sadd.s32 %s73, 1
    %p77 = scmp.eq.s32.totalorder %s18, 7
    %p78 = scmp.ne.s32.totalorder %s73, %s75
    %p79 = scmp.eq.s32.totalorder %s18, 0
    %p80 = por %p78, %p79
    %p81 = scmp.ne.s32.totalorder %s73, %s75
    %p82 = scmp.eq.s32.totalorder %s23, 7
    %p83 = por %p81, %p82
    %p84 = scmp.ne.s32.totalorder %s75, %s76
    %p85 = scmp.eq.s32.totalorder %s23, 0
    %p86 = por %p84, %p85
    %p87 = scmp.ne.s32.totalorder %s75, %s76
    %p88 = scmp.eq.s32.totalorder %s24, 7
    %p89 = por %p87, %p88
    %p91 = scmp.ne.s32.totalorder %s76, %s90
    %p92 = scmp.eq.s32.totalorder %s24, 0
    %p93 = por %p91, %p92
    %s95 = sadd.s32 %s94, 1
    %p98 = scmp.eq.s32.totalorder %s18, 7
    %p99 = scmp.ne.s32.totalorder %s94, %s96
    %p100 = scmp.eq.s32.totalorder %s18, 0
    %p101 = por %p99, %p100
    %p102 = scmp.ne.s32.totalorder %s94, %s96
    %p103 = scmp.eq.s32.totalorder %s23, 7
    %p104 = por %p102, %p103
    %p105 = scmp.ne.s32.totalorder %s96, %s97
    %p106 = scmp.eq.s32.totalorder %s23, 0
    %p107 = por %p105, %p106
    %p108 = scmp.ne.s32.totalorder %s96, %s97
    %p109 = scmp.eq.s32.totalorder %s24, 7
    %p110 = por %p108, %p109
    %p112 = scmp.ne.s32.totalorder %s97, %s111
    %p113 = scmp.eq.s32.totalorder %s24, 0
    %p114 = por %p112, %p113
    %s116 = sadd.s32 %s115, 1
    %p119 = scmp.eq.s32.totalorder %s18, 7
    %p120 = scmp.ne.s32.totalorder %s115, %s117
    %p121 = scmp.eq.s32.totalorder %s18, 0
    %p122 = por %p120, %p121
    %p123 = scmp.ne.s32.totalorder %s115, %s117
    %p124 = scmp.eq.s32.totalorder %s23, 7
    %p125 = por %p123, %p124
    %p126 = scmp.ne.s32.totalorder %s117, %s118
    %p127 = scmp.eq.s32.totalorder %s23, 0
    %p128 = por %p126, %p127
    %p129 = scmp.ne.s32.totalorder %s117, %s118
    %p130 = scmp.eq.s32.totalorder %s24, 7
    %p131 = por %p129, %p130
    %p133 = scmp.ne.s32.totalorder %s118, %s132
    %p134 = scmp.eq.s32.totalorder %s24, 0
    %p135 = por %p133, %p134
    %s137 = sadd.s32 %s136, 1
    %p140 = scmp.eq.s32.totalorder %s18, 7
    %p141 = scmp.ne.s32.totalorder %s136, %s138
    %p142 = scmp.eq.s32.totalorder %s18, 0
    %p143 = por %p141, %p142
    %p144 = scmp.ne.s32.totalorder %s136, %s138
    %p145 = scmp.eq.s32.totalorder %s23, 7
    %p146 = por %p144, %p145
    %p147 = scmp.ne.s32.totalorder %s138, %s139
    %p148 = scmp.eq.s32.totalorder %s23, 0
    %p149 = por %p147, %p148
    %p150 = scmp.ne.s32.totalorder %s138, %s139
    %p151 = scmp.eq.s32.totalorder %s24, 7
    %p152 = por %p150, %p151
    %p154 = scmp.ne.s32.totalorder %s139, %s153
    %p155 = scmp.eq.s32.totalorder %s24, 0
    %p156 = por %p154, %p155
    %s158 = sadd.s32 %s157, 1
    %p161 = scmp.eq.s32.totalorder %s18, 7
    %p162 = scmp.ne.s32.totalorder %s157, %s159
    %p163 = scmp.eq.s32.totalorder %s18, 0
    %p164 = por %p162, %p163
    %p165 = scmp.ne.s32.totalorder %s157, %s159
    %p166 = scmp.eq.s32.totalorder %s23, 7
    %p167 = por %p165, %p166
    %p168 = scmp.ne.s32.totalorder %s159, %s160
    %p169 = scmp.eq.s32.totalorder %s23, 0
    %p170 = por %p168, %p169
    %p171 = scmp.ne.s32.totalorder %s159, %s160
    %p172 = scmp.eq.s32.totalorder %s24, 7
    %p173 = por %p171, %p172
    %p175 = scmp.ne.s32.totalorder %s160, %s174
    %p176 = scmp.eq.s32.totalorder %s24, 0
    %p177 = por %p175, %p176
    %s179 = sadd.s32 %s178, 1
    %p182 = scmp.eq.s32.totalorder %s18, 7
    %p183 = scmp.ne.s32.totalorder %s178, %s180
    %p184 = scmp.eq.s32.totalorder %s18, 0
    %p185 = por %p183, %p184
    %p186 = scmp.ne.s32.totalorder %s178, %s180
    %p187 = scmp.eq.s32.totalorder %s23, 7
    %p188 = por %p186, %p187
    %p189 = scmp.ne.s32.totalorder %s180, %s181
    %p190 = scmp.eq.s32.totalorder %s23, 0
    %p191 = por %p189, %p190
    %p192 = scmp.ne.s32.totalorder %s180, %s181
    %p193 = scmp.eq.s32.totalorder %s24, 7
    %p194 = por %p192, %p193
    %p196 = scmp.ne.s32.totalorder %s181, %s195
    %p197 = scmp.eq.s32.totalorder %s24, 0
    %p198 = por %p196, %p197
    %s200 = sadd.s32 %s199, 1
    %p203 = scmp.eq.s32.totalorder %s18, 7
    %p204 = scmp.ne.s32.totalorder %s199, %s201
    %p205 = scmp.eq.s32.totalorder %s18, 0
    %p206 = por %p204, %p205
    %p207 = scmp.ne.s32.totalorder %s199, %s201
    %p208 = scmp.eq.s32.totalorder %s23, 7
    %p209 = por %p207, %p208
    %p210 = scmp.ne.s32.totalorder %s201, %s202
    %p211 = scmp.eq.s32.totalorder %s23, 0
    %p212 = por %p210, %p211
    %p213 = scmp.ne.s32.totalorder %s201, %s202
    %p214 = scmp.eq.s32.totalorder %s24, 7
    %p215 = por %p213, %p214
    %p217 = scmp.ne.s32.totalorder %s202, %s216
    %p218 = scmp.eq.s32.totalorder %s24, 0
    %p219 = por %p217, %p218
    %s221 = sadd.s32 %s220, 1
    %p224 = scmp.eq.s32.totalorder %s18, 7
    %p225 = scmp.ne.s32.totalorder %s220, %s222
    %p226 = scmp.eq.s32.totalorder %s18, 0
    %p227 = por %p225, %p226
    %p228 = scmp.ne.s32.totalorder %s220, %s222
    %p229 = scmp.eq.s32.totalorder %s23, 7
    %p230 = por %p228, %p229
    %p231 = scmp.ne.s32.totalorder %s222, %s223
    %p232 = scmp.eq.s32.totalorder %s23, 0
    %p233 = por %p231, %p232
    %p234 = scmp.ne.s32.totalorder %s222, %s223
    %p235 = scmp.eq.s32.totalorder %s24, 7
    %p236 = por %p234, %p235
    %p238 = scmp.ne.s32.totalorder %s223, %s237
    %p239 = scmp.eq.s32.totalorder %s24, 0
    %p240 = por %p238, %p239
    %s242 = sadd.s32 %s241, 1
    %p245 = scmp.eq.s32.totalorder %s18, 7
    %p246 = scmp.ne.s32.totalorder %s241, %s243
    %p247 = scmp.eq.s32.totalorder %s18, 0
    %p248 = por %p246, %p247
    %p249 = scmp.ne.s32.totalorder %s241, %s243
    %p250 = scmp.eq.s32.totalorder %s23, 7
    %p251 = por %p249, %p250
    %p252 = scmp.ne.s32.totalorder %s243, %s244
    %p253 = scmp.eq.s32.totalorder %s23, 0
    %p254 = por %p252, %p253
    %p255 = scmp.ne.s32.totalorder %s243, %s244
    %p256 = scmp.eq.s32.totalorder %s24, 7
    %p257 = por %p255, %p256
    %p259 = scmp.ne.s32.totalorder %s244, %s258
    %p260 = scmp.eq.s32.totalorder %s24, 0
    %p261 = por %p259, %p260
    %s263 = sadd.s32 %s262, 1
    %p266 = scmp.eq.s32.totalorder %s18, 7
    %p267 = scmp.ne.s32.totalorder %s262, %s264
    %p268 = scmp.eq.s32.totalorder %s18, 0
    %p269 = por %p267, %p268
    %p270 = scmp.ne.s32.totalorder %s262, %s264
    %p271 = scmp.eq.s32.totalorder %s23, 7
    %p272 = por %p270, %p271
    %p273 = scmp.ne.s32.totalorder %s264, %s265
    %p274 = scmp.eq.s32.totalorder %s23, 0
    %p275 = por %p273, %p274
    %p276 = scmp.ne.s32.totalorder %s264, %s265
    %p277 = scmp.eq.s32.totalorder %s24, 7
    %p278 = por %p276, %p277
    %p280 = scmp.ne.s32.totalorder %s265, %s279
    %p281 = scmp.eq.s32.totalorder %s24, 0
    %p282 = por %p280, %p281
    %s283 = ssub.s32 %s18, %s25
    %p284 = scmp.eq.s32.totalorder %s283, 0
    %s286 = sadd.s32 %s285, 1
    %s287 = scalar_select %p284, %s285, %s286
    %p290 = pneg %p284
    %p291 = scmp.eq.s32.totalorder %s18, 7
    %p292 = por %p290, %p291
    %p293 = scmp.ne.s32.totalorder %s285, %s288
    %p294 = scmp.eq.s32.totalorder %s18, 0
    %p295 = por %p293, %p294
    %p296 = scmp.ne.s32.totalorder %s285, %s288
    %p297 = scmp.eq.s32.totalorder %s23, 7
    %p298 = por %p296, %p297
    %p299 = scmp.ne.s32.totalorder %s288, %s289
    %p300 = scmp.eq.s32.totalorder %s23, 0
    %p301 = por %p299, %p300
    %p302 = scmp.ne.s32.totalorder %s288, %s289
    %p303 = scmp.eq.s32.totalorder %s24, 7
    %p304 = por %p302, %p303
    %p306 = scmp.ne.s32.totalorder %s289, %s305
    %p307 = scmp.eq.s32.totalorder %s24, 0
    %p308 = por %p306, %p307
    %p309 = scmp.le.s32.totalorder 1, %s18
    %p310 = scmp.lt.s32.totalorder %s18, 9
    %p311 = pnand %p309, %p310
    %p312 = pneg %p311
    // Predicated region
    $region9: #{cvta_forward.12} parent=5 // pred_check
      _
    $region10: #{cvta_forward.12} parent=5 // pred_check_branch
      %314 = sbr.rel (%p311) target = $region12
    $region11: #{cvta_forward.12} parent=5 // pred_region
      %s315 = ssub.s32 %s18, 1
      // Predicated region
      $region13: #{cvta_forward.12} parent=11 // pred_check
        %p316 = pneg %p65
      $region14: #{cvta_forward.12} parent=11 // pred_check_branch
        %318 = sbr.rel (%p316) target = $region16
      $region15: #{cvta_forward.12} parent=11 // pred_region
        _
      $region16: #{cvta_forward.12} parent=11 // pred_fallthru
        _
      // Predicated region
      $region17: #{cvta_forward.12} parent=11 // pred_check
        %p319 = pneg %p86
      $region18: #{cvta_forward.12} parent=11 // pred_check_branch
        %321 = sbr.rel (%p319) target = $region20
      $region19: #{cvta_forward.12} parent=11 // pred_region
        _
      $region20: #{cvta_forward.12} parent=11 // pred_fallthru
        _
      // Predicated region
      $region21: #{cvta_forward.12} parent=11 // pred_check
        %p322 = pneg %p107
      $region22: #{cvta_forward.12} parent=11 // pred_check_branch
        %324 = sbr.rel (%p322) target = $region24
      $region23: #{cvta_forward.12} parent=11 // pred_region
        _
      $region24: #{cvta_forward.12} parent=11 // pred_fallthru
        _
      // Predicated region
      $region25: #{cvta_forward.12} parent=11 // pred_check
        %p325 = pneg %p128
      $region26: #{cvta_forward.12} parent=11 // pred_check_branch
        %327 = sbr.rel (%p325) target = $region28
      $region27: #{cvta_forward.12} parent=11 // pred_region
        _
      $region28: #{cvta_forward.12} parent=11 // pred_fallthru
        _
      // Predicated region
      $region29: #{cvta_forward.12} parent=11 // pred_check
        %p328 = pneg %p149
      $region30: #{cvta_forward.12} parent=11 // pred_check_branch
        %330 = sbr.rel (%p328) target = $region32
      $region31: #{cvta_forward.12} parent=11 // pred_region
        _
      $region32: #{cvta_forward.12} parent=11 // pred_fallthru
        _
      // Predicated region
      $region33: #{cvta_forward.12} parent=11 // pred_check
        %p331 = pneg %p170
      $region34: #{cvta_forward.12} parent=11 // pred_check_branch
        %333 = sbr.rel (%p331) target = $region36
      $region35: #{cvta_forward.12} parent=11 // pred_region
        _
      $region36: #{cvta_forward.12} parent=11 // pred_fallthru
        _
      // Predicated region
      $region37: #{cvta_forward.12} parent=11 // pred_check
        %p334 = pneg %p191
      $region38: #{cvta_forward.12} parent=11 // pred_check_branch
        %336 = sbr.rel (%p334) target = $region40
      $region39: #{cvta_forward.12} parent=11 // pred_region
        _
      $region40: #{cvta_forward.12} parent=11 // pred_fallthru
        _
      // Predicated region
      $region41: #{cvta_forward.12} parent=11 // pred_check
        %p337 = pneg %p212
      $region42: #{cvta_forward.12} parent=11 // pred_check_branch
        %339 = sbr.rel (%p337) target = $region44
      $region43: #{cvta_forward.12} parent=11 // pred_region
        _
      $region44: #{cvta_forward.12} parent=11 // pred_fallthru
        _
      // Predicated region
      $region45: #{cvta_forward.12} parent=11 // pred_check
        %p340 = pneg %p233
      $region46: #{cvta_forward.12} parent=11 // pred_check_branch
        %342 = sbr.rel (%p340) target = $region48
      $region47: #{cvta_forward.12} parent=11 // pred_region
        _
      $region48: #{cvta_forward.12} parent=11 // pred_fallthru
        _
      // Predicated region
      $region49: #{cvta_forward.12} parent=11 // pred_check
        %p343 = pneg %p254
      $region50: #{cvta_forward.12} parent=11 // pred_check_branch
        %345 = sbr.rel (%p343) target = $region52
      $region51: #{cvta_forward.12} parent=11 // pred_region
        _
      $region52: #{cvta_forward.12} parent=11 // pred_fallthru
        _
      // Predicated region
      $region53: #{cvta_forward.12} parent=11 // pred_check
        %p346 = pneg %p275
      $region54: #{cvta_forward.12} parent=11 // pred_check_branch
        %348 = sbr.rel (%p346) target = $region56
      $region55: #{cvta_forward.12} parent=11 // pred_region
        _
      $region56: #{cvta_forward.12} parent=11 // pred_fallthru
        _
    $region12: #{cvta_forward.12} parent=5 // pred_fallthru
      _
    %p349 = scmp.lt.s32.totalorder %s18, 8
    // Predicated region
    $region57: #{cvta_forward.12} parent=5 // pred_check
      %p350 = pneg %p349
    $region58: #{cvta_forward.12} parent=5 // pred_check_branch
      %352 = sbr.rel (%p350) target = $region60
    $region59: #{cvta_forward.12} parent=5 // pred_region
      // Predicated region
      $region61: #{cvta_forward.12} parent=59 // pred_check
        %p353 = pneg %p38
      $region62: #{cvta_forward.12} parent=59 // pred_check_branch
        %355 = sbr.rel (%p353) target = $region64
      $region63: #{cvta_forward.12} parent=59 // pred_region
        %p356 = scmp.lt.s32.totalorder %s18, 7
        %s357 = scalar_select %p356, %s18, 7
        %s358 = smul.addr %s357, 2
        %s359 = smul.addr %s358, 8
        %s360 = scalar_lea.vmem %s0, %s359
      $region64: #{cvta_forward.12} parent=59 // pred_fallthru
        _
    $region60: #{cvta_forward.12} parent=5 // pred_fallthru
      _
    %p361 = scmp.le.s32.totalorder 1, %s18
    %p362 = scmp.lt.s32.totalorder %s18, 9
    %p363 = pnand %p361, %p362
    %p364 = pneg %p363
    // Predicated region
    $region65: #{cvta_forward.12} parent=5 // pred_check
      _
    $region66: #{cvta_forward.12} parent=5 // pred_check_branch
      %366 = sbr.rel (%p363) target = $region68
    $region67: #{cvta_forward.12} parent=5 // pred_region
      %s367 = ssub.s32 %s18, 1
      %p368 = scmp.lt.s32.totalorder %s23, 7
      %s369 = scalar_select %p368, %s23, 7
      %s370 = smul.addr %s369, 2
      %s371 = smul.addr %s370, 8
      %s372 = scalar_lea.vmem %s0, %s371
      %p373 = pneg %p44
      %p374 = pneg %p41
      %p375 = pneg %p65
      %p376 = pneg %p62
      %p377 = pneg %p86
      %p378 = pneg %p83
      %p379 = pneg %p107
      %p380 = pneg %p104
      %p381 = pneg %p128
      %p382 = pneg %p125
      %p383 = pneg %p149
      %p384 = pneg %p146
      %p385 = pneg %p170
      %p386 = pneg %p167
      %p387 = pneg %p191
      %p388 = pneg %p188
      %p389 = pneg %p212
      %p390 = pneg %p209
      %p391 = pneg %p233
      %p392 = pneg %p230
      %p393 = pneg %p254
      %p394 = pneg %p251
      %p395 = pneg %p275
      %p396 = pneg %p272
      %p397 = pneg %p301
      %p398 = pneg %p298
      %p399 = scmp.lt.s32.totalorder %s23, 7
      %s400 = scalar_select %p399, %s23, 7
      %s401 = smul.addr %s400, 2
      %s402 = smul.addr %s401, 8
      %s403 = scalar_lea.vmem %s12, %s402
      %p404 = scmp.lt.s32.totalorder %s23, 7
      %s405 = scalar_select %p404, %s23, 7
      %s406 = smul.addr %s405, 2
      %s407 = smul.addr %s406, 8
      %s408 = scalar_lea.vmem %s0, %s407
      %p409 = scmp.lt.s32.totalorder %s23, 7
      %s410 = scalar_select %p409, %s23, 7
      %s411 = smul.addr %s410, 2
      %s412 = smul.addr %s411, 8
      %s413 = scalar_lea.vmem %s12, %s412
      %v415 = vld [vmem:[%s408] sm:$0xff]
      %v416 = vld [vmem:[%s408 + $0x8] sm:$0xff]
      %v417 = vld [vmem:[%s1] sm:$0x1]
      %v418 = vld [vmem:[%s2] sm:$0x1]
      %vm419 = vcmask 130048
      %v420 = vsel %vm419, %v415, 0.0
      %421 = vadd.xlane.f32.xlu0 %v420
      %v422 = vpop.xlane.xlu0 %421
      %v423 = vsel %vm419, %v416, 0.0
      %424 = vadd.xlane.f32.xlu0 %v423
      %v425 = vpop.xlane.xlu0 %424
      %v426 = vrcp.pop 16.0
      %v427 = vmul.f32 16.0, %v426
      %v428 = vsub.f32 1.0, %v427
      %v429 = vmul.f32 %v426, %v428
      %v430 = vadd.f32 %v426, %v429
      %vm431 = vweird.f32 %v426
      %v432 = vsel %vm431, %v426, %v430
      %v433 = vmul.f32 %v422, %v432
      %v434 = vmul.f32 %v425, %v432
      %v435 = vsub.f32 %v415, %v433
      %v436 = vsub.f32 %v416, %v434
      %v437 = vmul.f32 %v435, %v435
      %v438 = vmul.f32 %v436, %v436
      %v439 = vsel %vm419, %v437, 0.0
      %440 = vadd.xlane.f32.xlu0 %v439
      %v441 = vpop.xlane.xlu0 %440
      %v442 = vsel %vm419, %v438, 0.0
      %443 = vadd.xlane.f32.xlu0 %v442
      %v444 = vpop.xlane.xlu0 %443
      %v445 = vmul.f32 %v441, %v432
      %v446 = vmul.f32 %v444, %v432
      %v447 = vadd.f32 %v445, 1e-05
      %v448 = vadd.f32 %v446, 1e-05
      %v449 = vrsqrt.pop %v447
      %v450 = vmul.f32 %v449, %v447
      %v451 = vmul.f32 %v450, %v449
      %v452 = vmul.f32 0.5, %v451
      %v453 = vsub.f32 1.5, %v452
      %v454 = vmul.f32 %v449, %v453
      %vm455 = vweird.f32 %v447
      %vm456 = vweird.f32 %v449
      %vm457 = vmor %vm455, %vm456
      %v458 = vsel %vm457, %v449, %v454
      %v459 = vrsqrt.pop %v448
      %v460 = vmul.f32 %v459, %v448
      %v461 = vmul.f32 %v460, %v459
      %v462 = vmul.f32 0.5, %v461
      %v463 = vsub.f32 1.5, %v462
      %v464 = vmul.f32 %v459, %v463
      %vm465 = vweird.f32 %v448
      %vm466 = vweird.f32 %v459
      %vm467 = vmor %vm465, %vm466
      %v468 = vsel %vm467, %v459, %v464
      %v469 = vmul.f32 %v435, %v458
      %v470 = vmul.f32 %v436, %v468
      %v472 = vperm.slane %v417, 0
      %v474 = vmul.f32 %v469, %v472
      %v475 = vmul.f32 %v470, %v472
      %v477 = vperm.slane %v418, 0
      %v479 = vadd.f32 %v474, %v477
      %v480 = vadd.f32 %v475, %v477
      %v481 = vpack.c.bf16 %v480, %v479
      %v482 = vld [vmem:[%s3] sm:$0xf]
      %v483 = vld [vmem:[%s3 + $0x4] sm:$0xf]
      %v486 = vunpack.c.l.b16 %v482
      %v487 = vunpack.c.l.b16 %v483
      %v488 = vpack.c.b16 %v487, %v486
      %v491 = vsel %vm419, %v481, 0
      %493 = vmatpush.bf16.msra.mxu0 0
      %494 = vmatpush.bf16.msra.mxu0 0
      %495 = vmatpush.bf16.msra.mxu0 0
      %496 = vmatpush.bf16.msra.mxu0 0
      %497 = vmatpush.bf16.msra.mxu0 0
      %498 = vmatpush.bf16.msra.mxu0 0
      %499 = vmatpush.bf16.msra.mxu0 0
      %500 = vmatpush.bf16.msra.mxu0 %v488
      %501 = vmatmul.bf16.gmra.mxu0 %v491
      %v502 = vpop.f32.mrf.mxu0
      %v503 = vadd.f32 0.0, %v502
      %v504 = vpop.f32.mrf.mxu0
      %v505 = vadd.f32 0.0, %v504
      %506 = vdwg.mxu0
      %v507 = vld [vmem:[%s4] sm:$0xf]
      %v508 = vld [vmem:[%s4 + $0x4] sm:$0xf]
      %v509 = vld [vmem:[%s4 + $0x8] sm:$0xf]
      %v510 = vld [vmem:[%s4 + $0xc] sm:$0xf]
      %513 = vrot.lane.b32.xlu0 %v503, 96
      %v514 = vpop.permute.xlu0 %513
      %515 = vrot.lane.b32.xlu0 %v505, 96
      %v516 = vpop.permute.xlu0 %515
      %vm517 = vcmask 64512
      %v518 = vsel %vm517, %v503, 0
      %v520 = vsel %vm517, %v505, 0
      %v522 = vsel %vm517, %v514, 0
      %v524 = vsel %vm517, %v516, 0
      %526 = vmatpush.xpose.msra.mxu0 0.0
      %527 = vmatpush.xpose.msra.mxu0 0.0
      %528 = vmatpush.xpose.msra.mxu0 0.0
      %529 = vmatpush.xpose.msra.mxu0 0.0
      %530 = vmatpush.xpose.msra.mxu0 0.0
      %531 = vmatpush.xpose.msra.mxu0 0.0
      %532 = vmatpush.xpose.msra.mxu0 0.0
      %533 = vmatpush.xpose.msra.mxu0 0.0
      %534 = vmatpush.xpose.msra.mxu0 0.0
      %535 = vmatpush.xpose.msra.mxu0 0.0
      %536 = vmatpush.xpose.msra.mxu0 0.0
      %537 = vmatpush.xpose.msra.mxu0 0.0
      %538 = vmatpush.xpose.msra.mxu0 0.0
      %539 = vmatpush.xpose.msra.mxu0 0.0
      %540 = vmatpush.xpose.msra.mxu0 %v524
      %541 = vmatpush.xpose.msra.mxu0 %v522
      %542 = vmatmul.f32.gmra.mxu0 %v518
      %v543 = vpop.f32.mrf.mxu0
      %v544 = vadd.f32 0.0, %v543
      %545 = vmatmul.f32.gmra.mxu0 %v520
      %v546 = vpop.f32.mrf.mxu0
      %v547 = vadd.f32 0.0, %v546
      %548 = vdwg.mxu0
      %v549 = vmul.f32 %v544, 0.35355338
      %v550 = vmul.f32 %v547, 0.35355338
      %v551 = vsel %vm419, %v549, -inf
      %552 = vmax.xlane.f32.xlu0 %v551
      %v553 = vpop.xlane.xlu0 %552
      %v554 = vsel %vm419, %v550, -inf
      %555 = vmax.xlane.f32.xlu0 %v554
      %v556 = vpop.xlane.xlu0 %555
      %v557 = vsub.f32 %v549, %v553
      %v558 = vsub.f32 %v550, %v556
      %v559 = vmul.f32 %v557, 1.442695
      %v560 = vpow.pop %v559
      %v561 = vmul.f32 %v558, 1.442695
      %v562 = vpow.pop %v561
      %v563 = vsel %vm419, %v560, 0.0
      %564 = vadd.xlane.f32.xlu0 %v563
      %v565 = vpop.xlane.xlu0 %564
      %v566 = vsel %vm419, %v562, 0.0
      %567 = vadd.xlane.f32.xlu0 %v566
      %v568 = vpop.xlane.xlu0 %567
      %v569 = vrcp.pop %v565
      %v570 = vrcp.pop %v568
      %v571 = vmul.f32 %v560, %v569
      %v572 = vmul.f32 %v562, %v570
      %573 = vrot.lane.b32.xlu0 %v503, 64
      %v574 = vpop.permute.xlu0 %573
      %575 = vrot.lane.b32.xlu0 %v505, 64
      %v576 = vpop.permute.xlu0 %575
      %v580 = vsel %vm419, %v571, 0
      %v583 = vsel %vm419, %v572, 0
      %585 = vmatpush.msra.mxu0 0.0
      %586 = vmatpush.msra.mxu0 0.0
      %587 = vmatpush.msra.mxu0 0.0
      %588 = vmatpush.msra.mxu0 0.0
      %589 = vmatpush.msra.mxu0 0.0
      %590 = vmatpush.msra.mxu0 0.0
      %591 = vmatpush.msra.mxu0 0.0
      %592 = vmatpush.msra.mxu0 0.0
      %593 = vmatpush.msra.mxu0 0.0
      %594 = vmatpush.msra.mxu0 0.0
      %595 = vmatpush.msra.mxu0 0.0
      %596 = vmatpush.msra.mxu0 0.0
      %597 = vmatpush.msra.mxu0 0.0
      %598 = vmatpush.msra.mxu0 0.0
      %599 = vmatpush.msra.mxu0 %v576
      %600 = vmatpush.msra.mxu0 %v574
      %601 = vmatmul.f32.gmra.mxu0 %v580
      %v602 = vpop.f32.mrf.mxu0
      %v603 = vadd.f32 0.0, %v602
      %604 = vmatmul.f32.gmra.mxu0 %v583
      %v605 = vpop.f32.mrf.mxu0
      %v606 = vadd.f32 0.0, %v605
      %607 = vdwg.mxu0
      %v608 = vpack.c.bf16 %v606, %v603
      %609 = vrot.lane.b32.xlu0 %v503, 120
      %v610 = vpop.permute.xlu0 %609
      %611 = vrot.lane.b32.xlu0 %v505, 120
      %v612 = vpop.permute.xlu0 %611
      %613 = vrot.lane.b32.xlu0 %v503, 88
      %v614 = vpop.permute.xlu0 %613
      %615 = vrot.lane.b32.xlu0 %v505, 88
      %v616 = vpop.permute.xlu0 %615
      %v617 = vsel %vm517, %v610, 0
      %v619 = vsel %vm517, %v612, 0
      %v621 = vsel %vm517, %v614, 0
      %v623 = vsel %vm517, %v616, 0
      %625 = vmatpush.xpose.msra.mxu0 0.0
      %626 = vmatpush.xpose.msra.mxu0 0.0
      %627 = vmatpush.xpose.msra.mxu0 0.0
      %628 = vmatpush.xpose.msra.mxu0 0.0
      %629 = vmatpush.xpose.msra.mxu0 0.0
      %630 = vmatpush.xpose.msra.mxu0 0.0
      %631 = vmatpush.xpose.msra.mxu0 0.0
      %632 = vmatpush.xpose.msra.mxu0 0.0
      %633 = vmatpush.xpose.msra.mxu0 0.0
      %634 = vmatpush.xpose.msra.mxu0 0.0
      %635 = vmatpush.xpose.msra.mxu0 0.0
      %636 = vmatpush.xpose.msra.mxu0 0.0
      %637 = vmatpush.xpose.msra.mxu0 0.0
      %638 = vmatpush.xpose.msra.mxu0 0.0
      %639 = vmatpush.xpose.msra.mxu0 %v623
      %640 = vmatpush.xpose.msra.mxu0 %v621
      %641 = vmatmul.f32.gmra.mxu0 %v617
      %v642 = vpop.f32.mrf.mxu0
      %v643 = vadd.f32 0.0, %v642
      %644 = vmatmul.f32.gmra.mxu0 %v619
      %v645 = vpop.f32.mrf.mxu0
      %v646 = vadd.f32 0.0, %v645
      %647 = vdwg.mxu0
      %v648 = vmul.f32 %v643, 0.35355338
      %v649 = vmul.f32 %v646, 0.35355338
      %v650 = vsel %vm419, %v648, -inf
      %651 = vmax.xlane.f32.xlu0 %v650
      %v652 = vpop.xlane.xlu0 %651
      %v653 = vsel %vm419, %v649, -inf
      %654 = vmax.xlane.f32.xlu0 %v653
      %v655 = vpop.xlane.xlu0 %654
      %v656 = vsub.f32 %v648, %v652
      %v657 = vsub.f32 %v649, %v655
      %v658 = vmul.f32 %v656, 1.442695
      %v659 = vpow.pop %v658
      %v660 = vmul.f32 %v657, 1.442695
      %v661 = vpow.pop %v660
      %v662 = vsel %vm419, %v659, 0.0
      %663 = vadd.xlane.f32.xlu0 %v662
      %v664 = vpop.xlane.xlu0 %663
      %v665 = vsel %vm419, %v661, 0.0
      %666 = vadd.xlane.f32.xlu0 %v665
      %v667 = vpop.xlane.xlu0 %666
      %v668 = vrcp.pop %v664
      %v669 = vrcp.pop %v667
      %v670 = vmul.f32 %v659, %v668
      %v671 = vmul.f32 %v661, %v669
      %672 = vrot.lane.b32.xlu0 %v503, 56
      %v673 = vpop.permute.xlu0 %672
      %674 = vrot.lane.b32.xlu0 %v505, 56
      %v675 = vpop.permute.xlu0 %674
      %v679 = vsel %vm419, %v670, 0
      %v682 = vsel %vm419, %v671, 0
      %684 = vmatpush.msra.mxu0 0.0
      %685 = vmatpush.msra.mxu0 0.0
      %686 = vmatpush.msra.mxu0 0.0
      %687 = vmatpush.msra.mxu0 0.0
      %688 = vmatpush.msra.mxu0 0.0
      %689 = vmatpush.msra.mxu0 0.0
      %690 = vmatpush.msra.mxu0 0.0
      %691 = vmatpush.msra.mxu0 0.0
      %692 = vmatpush.msra.mxu0 0.0
      %693 = vmatpush.msra.mxu0 0.0
      %694 = vmatpush.msra.mxu0 0.0
      %695 = vmatpush.msra.mxu0 0.0
      %696 = vmatpush.msra.mxu0 0.0
      %697 = vmatpush.msra.mxu0 0.0
      %698 = vmatpush.msra.mxu0 %v675
      %699 = vmatpush.msra.mxu0 %v673
      %700 = vmatmul.f32.gmra.mxu0 %v679
      %v701 = vpop.f32.mrf.mxu0
      %v702 = vadd.f32 0.0, %v701
      %703 = vmatmul.f32.gmra.mxu0 %v682
      %v704 = vpop.f32.mrf.mxu0
      %v705 = vadd.f32 0.0, %v704
      %706 = vdwg.mxu0
      %v707 = vpack.c.bf16 %v705, %v702
      %v709 = vsel %vm517, %v707, 0
      %vm711 = vcmask 1043456
      %v713 = vsel %vm711, %v508, 0
      %715 = vmatpush.bf16.msra.mxu0 0
      %716 = vmatpush.bf16.msra.mxu0 0
      %717 = vmatpush.bf16.msra.mxu0 0
      %718 = vmatpush.bf16.msra.mxu0 0
      %719 = vmatpush.bf16.msra.mxu0 0
      %720 = vmatpush.bf16.msra.mxu0 0
      %721 = vmatpush.bf16.msra.mxu0 0
      %722 = vmatpush.bf16.msra.mxu0 %v713
      %723 = vmatmul.bf16.gmra.mxu0 %v709
      %v724 = vpop.f32.mrf.mxu0
      %v725 = vadd.f32 0.0, %v724
      %v726 = vpop.f32.mrf.mxu0
      %v727 = vadd.f32 0.0, %v726
      %728 = vdwg.mxu0
      %v730 = vsel %vm517, %v608, 0
      %v733 = vsel %vm711, %v507, 0
      %735 = vmatpush.bf16.msra.mxu0 0
      %736 = vmatpush.bf16.msra.mxu0 0
      %737 = vmatpush.bf16.msra.mxu0 0
      %738 = vmatpush.bf16.msra.mxu0 0
      %739 = vmatpush.bf16.msra.mxu0 0
      %740 = vmatpush.bf16.msra.mxu0 0
      %741 = vmatpush.bf16.msra.mxu0 0
      %742 = vmatpush.bf16.msra.mxu0 %v733
      %743 = vmatmul.bf16.gmra.mxu0 %v730
      %v744 = vpop.f32.mrf.mxu0
      %v745 = vadd.f32 %v725, %v744
      %v746 = vpop.f32.mrf.mxu0
      %v747 = vadd.f32 %v727, %v746
      %748 = vdwg.mxu0
      %749 = vrot.lane.b32.xlu0 %v503, 112
      %v750 = vpop.permute.xlu0 %749
      %751 = vrot.lane.b32.xlu0 %v505, 112
      %v752 = vpop.permute.xlu0 %751
      %753 = vrot.lane.b32.xlu0 %v503, 80
      %v754 = vpop.permute.xlu0 %753
      %755 = vrot.lane.b32.xlu0 %v505, 80
      %v756 = vpop.permute.xlu0 %755
      %v757 = vsel %vm517, %v750, 0
      %v759 = vsel %vm517, %v752, 0
      %v761 = vsel %vm517, %v754, 0
      %v763 = vsel %vm517, %v756, 0
      %765 = vmatpush.xpose.msra.mxu0 0.0
      %766 = vmatpush.xpose.msra.mxu0 0.0
      %767 = vmatpush.xpose.msra.mxu0 0.0
      %768 = vmatpush.xpose.msra.mxu0 0.0
      %769 = vmatpush.xpose.msra.mxu0 0.0
      %770 = vmatpush.xpose.msra.mxu0 0.0
      %771 = vmatpush.xpose.msra.mxu0 0.0
      %772 = vmatpush.xpose.msra.mxu0 0.0
      %773 = vmatpush.xpose.msra.mxu0 0.0
      %774 = vmatpush.xpose.msra.mxu0 0.0
      %775 = vmatpush.xpose.msra.mxu0 0.0
      %776 = vmatpush.xpose.msra.mxu0 0.0
      %777 = vmatpush.xpose.msra.mxu0 0.0
      %778 = vmatpush.xpose.msra.mxu0 0.0
      %779 = vmatpush.xpose.msra.mxu0 %v763
      %780 = vmatpush.xpose.msra.mxu0 %v761
      %781 = vmatmul.f32.gmra.mxu0 %v757
      %v782 = vpop.f32.mrf.mxu0
      %v783 = vadd.f32 0.0, %v782
      %784 = vmatmul.f32.gmra.mxu0 %v759
      %v785 = vpop.f32.mrf.mxu0
      %v786 = vadd.f32 0.0, %v785
      %787 = vdwg.mxu0
      %v788 = vmul.f32 %v783, 0.35355338
      %v789 = vmul.f32 %v786, 0.35355338
      %v790 = vsel %vm419, %v788, -inf
      %791 = vmax.xlane.f32.xlu0 %v790
      %v792 = vpop.xlane.xlu0 %791
      %v793 = vsel %vm419, %v789, -inf
      %794 = vmax.xlane.f32.xlu0 %v793
      %v795 = vpop.xlane.xlu0 %794
      %v796 = vsub.f32 %v788, %v792
      %v797 = vsub.f32 %v789, %v795
      %v798 = vmul.f32 %v796, 1.442695
      %v799 = vpow.pop %v798
      %v800 = vmul.f32 %v797, 1.442695
      %v801 = vpow.pop %v800
      %v802 = vsel %vm419, %v799, 0.0
      %803 = vadd.xlane.f32.xlu0 %v802
      %v804 = vpop.xlane.xlu0 %803
      %v805 = vsel %vm419, %v801, 0.0
      %806 = vadd.xlane.f32.xlu0 %v805
      %v807 = vpop.xlane.xlu0 %806
      %v808 = vrcp.pop %v804
      %v809 = vrcp.pop %v807
      %v810 = vmul.f32 %v799, %v808
      %v811 = vmul.f32 %v801, %v809
      %812 = vrot.lane.b32.xlu0 %v503, 48
      %v813 = vpop.permute.xlu0 %812
      %814 = vrot.lane.b32.xlu0 %v505, 48
      %v815 = vpop.permute.xlu0 %814
      %v819 = vsel %vm419, %v810, 0
      %v822 = vsel %vm419, %v811, 0
      %824 = vmatpush.msra.mxu0 0.0
      %825 = vmatpush.msra.mxu0 0.0
      %826 = vmatpush.msra.mxu0 0.0
      %827 = vmatpush.msra.mxu0 0.0
      %828 = vmatpush.msra.mxu0 0.0
      %829 = vmatpush.msra.mxu0 0.0
      %830 = vmatpush.msra.mxu0 0.0
      %831 = vmatpush.msra.mxu0 0.0
      %832 = vmatpush.msra.mxu0 0.0
      %833 = vmatpush.msra.mxu0 0.0
      %834 = vmatpush.msra.mxu0 0.0
      %835 = vmatpush.msra.mxu0 0.0
      %836 = vmatpush.msra.mxu0 0.0
      %837 = vmatpush.msra.mxu0 0.0
      %838 = vmatpush.msra.mxu0 %v815
      %839 = vmatpush.msra.mxu0 %v813
      %840 = vmatmul.f32.gmra.mxu0 %v819
      %v841 = vpop.f32.mrf.mxu0
      %v842 = vadd.f32 0.0, %v841
      %843 = vmatmul.f32.gmra.mxu0 %v822
      %v844 = vpop.f32.mrf.mxu0
      %v845 = vadd.f32 0.0, %v844
      %846 = vdwg.mxu0
      %v847 = vpack.c.bf16 %v845, %v842
      %v849 = vsel %vm517, %v847, 0
      %v852 = vsel %vm711, %v509, 0
      %854 = vmatpush.bf16.msra.mxu0 0
      %855 = vmatpush.bf16.msra.mxu0 0
      %856 = vmatpush.bf16.msra.mxu0 0
      %857 = vmatpush.bf16.msra.mxu0 0
      %858 = vmatpush.bf16.msra.mxu0 0
      %859 = vmatpush.bf16.msra.mxu0 0
      %860 = vmatpush.bf16.msra.mxu0 0
      %861 = vmatpush.bf16.msra.mxu0 %v852
      %862 = vmatmul.bf16.gmra.mxu0 %v849
      %v863 = vpop.f32.mrf.mxu0
      %v864 = vadd.f32 0.0, %v863
      %v865 = vpop.f32.mrf.mxu0
      %v866 = vadd.f32 0.0, %v865
      %867 = vdwg.mxu0
      %v868 = vadd.f32 %v745, %v864
      %v869 = vadd.f32 %v747, %v866
      %870 = vrot.lane.b32.xlu0 %v503, 104
      %v871 = vpop.permute.xlu0 %870
      %872 = vrot.lane.b32.xlu0 %v505, 104
      %v873 = vpop.permute.xlu0 %872
      %874 = vrot.lane.b32.xlu0 %v503, 72
      %v875 = vpop.permute.xlu0 %874
      %876 = vrot.lane.b32.xlu0 %v505, 72
      %v877 = vpop.permute.xlu0 %876
      %v878 = vsel %vm517, %v871, 0
      %v880 = vsel %vm517, %v873, 0
      %v882 = vsel %vm517, %v875, 0
      %v884 = vsel %vm517, %v877, 0
      %886 = vmatpush.xpose.msra.mxu0 0.0
      %887 = vmatpush.xpose.msra.mxu0 0.0
      %888 = vmatpush.xpose.msra.mxu0 0.0
      %889 = vmatpush.xpose.msra.mxu0 0.0
      %890 = vmatpush.xpose.msra.mxu0 0.0
      %891 = vmatpush.xpose.msra.mxu0 0.0
      %892 = vmatpush.xpose.msra.mxu0 0.0
      %893 = vmatpush.xpose.msra.mxu0 0.0
      %894 = vmatpush.xpose.msra.mxu0 0.0
      %895 = vmatpush.xpose.msra.mxu0 0.0
      %896 = vmatpush.xpose.msra.mxu0 0.0
      %897 = vmatpush.xpose.msra.mxu0 0.0
      %898 = vmatpush.xpose.msra.mxu0 0.0
      %899 = vmatpush.xpose.msra.mxu0 0.0
      %900 = vmatpush.xpose.msra.mxu0 %v884
      %901 = vmatpush.xpose.msra.mxu0 %v882
      %902 = vmatmul.f32.gmra.mxu0 %v878
      %v903 = vpop.f32.mrf.mxu0
      %v904 = vadd.f32 0.0, %v903
      %905 = vmatmul.f32.gmra.mxu0 %v880
      %v906 = vpop.f32.mrf.mxu0
      %v907 = vadd.f32 0.0, %v906
      %908 = vdwg.mxu0
      %v909 = vmul.f32 %v904, 0.35355338
      %v910 = vmul.f32 %v907, 0.35355338
      %v911 = vsel %vm419, %v909, -inf
      %912 = vmax.xlane.f32.xlu0 %v911
      %v913 = vpop.xlane.xlu0 %912
      %v914 = vsel %vm419, %v910, -inf
      %915 = vmax.xlane.f32.xlu0 %v914
      %v916 = vpop.xlane.xlu0 %915
      %v917 = vsub.f32 %v909, %v913
      %v918 = vsub.f32 %v910, %v916
      %v919 = vmul.f32 %v917, 1.442695
      %v920 = vpow.pop %v919
      %v921 = vmul.f32 %v918, 1.442695
      %v922 = vpow.pop %v921
      %v923 = vsel %vm419, %v920, 0.0
      %924 = vadd.xlane.f32.xlu0 %v923
      %v925 = vpop.xlane.xlu0 %924
      %v926 = vsel %vm419, %v922, 0.0
      %927 = vadd.xlane.f32.xlu0 %v926
      %v928 = vpop.xlane.xlu0 %927
      %v929 = vrcp.pop %v925
      %v930 = vrcp.pop %v928
      %v931 = vmul.f32 %v920, %v929
      %v932 = vmul.f32 %v922, %v930
      %933 = vrot.lane.b32.xlu0 %v503, 40
      %v934 = vpop.permute.xlu0 %933
      %935 = vrot.lane.b32.xlu0 %v505, 40
      %v936 = vpop.permute.xlu0 %935
      %v940 = vsel %vm419, %v931, 0
      %v943 = vsel %vm419, %v932, 0
      %945 = vmatpush.msra.mxu0 0.0
      %946 = vmatpush.msra.mxu0 0.0
      %947 = vmatpush.msra.mxu0 0.0
      %948 = vmatpush.msra.mxu0 0.0
      %949 = vmatpush.msra.mxu0 0.0
      %950 = vmatpush.msra.mxu0 0.0
      %951 = vmatpush.msra.mxu0 0.0
      %952 = vmatpush.msra.mxu0 0.0
      %953 = vmatpush.msra.mxu0 0.0
      %954 = vmatpush.msra.mxu0 0.0
      %955 = vmatpush.msra.mxu0 0.0
      %956 = vmatpush.msra.mxu0 0.0
      %957 = vmatpush.msra.mxu0 0.0
      %958 = vmatpush.msra.mxu0 0.0
      %959 = vmatpush.msra.mxu0 %v936
      %960 = vmatpush.msra.mxu0 %v934
      %961 = vmatmul.f32.gmra.mxu0 %v940
      %v962 = vpop.f32.mrf.mxu0
      %v963 = vadd.f32 0.0, %v962
      %964 = vmatmul.f32.gmra.mxu0 %v943
      %v965 = vpop.f32.mrf.mxu0
      %v966 = vadd.f32 0.0, %v965
      %967 = vdwg.mxu0
      %v968 = vpack.c.bf16 %v966, %v963
      %v970 = vsel %vm517, %v968, 0
      %v973 = vsel %vm711, %v510, 0
      %975 = vmatpush.bf16.msra.mxu0 0
      %976 = vmatpush.bf16.msra.mxu0 0
      %977 = vmatpush.bf16.msra.mxu0 0
      %978 = vmatpush.bf16.msra.mxu0 0
      %979 = vmatpush.bf16.msra.mxu0 0
      %980 = vmatpush.bf16.msra.mxu0 0
      %981 = vmatpush.bf16.msra.mxu0 0
      %982 = vmatpush.bf16.msra.mxu0 %v973
      %983 = vmatmul.bf16.gmra.mxu0 %v970
      %v984 = vpop.f32.mrf.mxu0
      %v985 = vadd.f32 0.0, %v984
      %v986 = vpop.f32.mrf.mxu0
      %v987 = vadd.f32 0.0, %v986
      %988 = vdwg.mxu0
      %v989 = vadd.f32 %v868, %v985
      %v990 = vadd.f32 %v869, %v987
      %v991 = vadd.f32 %v415, %v989
      %v992 = vadd.f32 %v416, %v990
      %v993 = vld [vmem:[%s5] sm:$0x1]
      %v995 = vperm.slane %v993, 0
      %v997 = vadd.f32 %v991, %v995
      %v998 = vadd.f32 %v992, %v995
      %v999 = vld [vmem:[%s6] sm:$0x1]
      %v1000 = vld [vmem:[%s7] sm:$0x1]
      %v1001 = vsel %vm419, %v997, 0.0
      %1002 = vadd.xlane.f32.xlu0 %v1001
      %v1003 = vpop.xlane.xlu0 %1002
      %v1004 = vsel %vm419, %v998, 0.0
      %1005 = vadd.xlane.f32.xlu0 %v1004
      %v1006 = vpop.xlane.xlu0 %1005
      %v1007 = vmul.f32 %v1003, %v432
      %v1008 = vmul.f32 %v1006, %v432
      %v1009 = vsub.f32 %v997, %v1007
      %v1010 = vsub.f32 %v998, %v1008
      %v1011 = vmul.f32 %v1009, %v1009
      %v1012 = vmul.f32 %v1010, %v1010
      %v1013 = vsel %vm419, %v1011, 0.0
      %1014 = vadd.xlane.f32.xlu0 %v1013
      %v1015 = vpop.xlane.xlu0 %1014
      %v1016 = vsel %vm419, %v1012, 0.0
      %1017 = vadd.xlane.f32.xlu0 %v1016
      %v1018 = vpop.xlane.xlu0 %1017
      %v1019 = vmul.f32 %v1015, %v432
      %v1020 = vmul.f32 %v1018, %v432
      %v1021 = vadd.f32 %v1019, 1e-05
      %v1022 = vadd.f32 %v1020, 1e-05
      %v1023 = vrsqrt.pop %v1021
      %v1024 = vmul.f32 %v1023, %v1021
      %v1025 = vmul.f32 %v1024, %v1023
      %v1026 = vmul.f32 0.5, %v1025
      %v1027 = vsub.f32 1.5, %v1026
      %v1028 = vmul.f32 %v1023, %v1027
      %vm1029 = vweird.f32 %v1021
      %vm1030 = vweird.f32 %v1023
      %vm1031 = vmor %vm1029, %vm1030
      %v1032 = vsel %vm1031, %v1023, %v1028
      %v1033 = vrsqrt.pop %v1022
      %v1034 = vmul.f32 %v1033, %v1022
      %v1035 = vmul.f32 %v1034, %v1033
      %v1036 = vmul.f32 0.5, %v1035
      %v1037 = vsub.f32 1.5, %v1036
      %v1038 = vmul.f32 %v1033, %v1037
      %vm1039 = vweird.f32 %v1022
      %vm1040 = vweird.f32 %v1033
      %vm1041 = vmor %vm1039, %vm1040
      %v1042 = vsel %vm1041, %v1033, %v1038
      %v1043 = vmul.f32 %v1009, %v1032
      %v1044 = vmul.f32 %v1010, %v1042
      %v1046 = vperm.slane %v999, 0
      %v1048 = vmul.f32 %v1043, %v1046
      %v1049 = vmul.f32 %v1044, %v1046
      %v1051 = vperm.slane %v1000, 0
      %v1053 = vadd.f32 %v1048, %v1051
      %v1054 = vadd.f32 %v1049, %v1051
      %v1055 = vpack.c.bf16 %v1054, %v1053
      %v1056 = vld [vmem:[%s8] sm:$0xf]
      %v1057 = vld [vmem:[%s8 + $0x4] sm:$0xf]
      %v1058 = vld [vmem:[%s9] sm:$0x1]
      %v1060 = vperm.slane %v1058, 0
      %v1064 = vunpack.c.l.b16 %v1056
      %v1065 = vunpack.c.l.b16 %v1057
      %v1066 = vpack.c.b16 %v1065, %v1064
      %v1069 = vsel %vm419, %v1055, 0
      %1071 = vmatpush.bf16.msra.mxu0 0
      %1072 = vmatpush.bf16.msra.mxu0 0
      %1073 = vmatpush.bf16.msra.mxu0 0
      %1074 = vmatpush.bf16.msra.mxu0 0
      %1075 = vmatpush.bf16.msra.mxu0 0
      %1076 = vmatpush.bf16.msra.mxu0 0
      %1077 = vmatpush.bf16.msra.mxu0 0
      %1078 = vmatpush.bf16.msra.mxu0 %v1066
      %1079 = vmatmul.bf16.gmra.mxu0 %v1069
      %v1080 = vpop.f32.mrf.mxu0
      %v1081 = vadd.f32 %v1060, %v1080
      %v1082 = vpop.f32.mrf.mxu0
      %v1083 = vadd.f32 %v1060, %v1082
      %1084 = vdwg.mxu0
      %v1085 = vmul.f32 %v1081, 0.5
      %v1086 = vmul.f32 %v1083, 0.5
      %v1087 = vmul.f32 %v1081, 0.70710677
      %v1088 = vmul.f32 %v1083, 0.70710677
      %v1089 = vand.u32 2147483647, %v1087
      %v1090 = vand.u32 2147483647, %v1088
      %v1091 = vmul.f32 %v1089, 0.3275911
      %v1092 = vmul.f32 %v1090, 0.3275911
      %v1093 = vadd.f32 %v1091, 1.0
      %v1094 = vadd.f32 %v1092, 1.0
      %v1095 = vrcp.pop %v1093
      %v1096 = vmul.f32 %v1093, %v1095
      %v1097 = vsub.f32 1.0, %v1096
      %v1098 = vmul.f32 %v1095, %v1097
      %v1099 = vadd.f32 %v1095, %v1098
      %vm1100 = vweird.f32 %v1093
      %vm1101 = vweird.f32 %v1095
      %vm1102 = vmor %vm1100, %vm1101
      %v1103 = vsel %vm1102, %v1095, %v1099
      %v1104 = vand.u32 2147483647, %v1093
      %vm1105 = vcmp.eq.f32.partialorder %v1104, 8.507059e+37
      %v1106 = vand.u32 %v1093, 2147483648
      %v1107 = vor.u32 1.1754944e-38, %v1106
      %v1108 = vsel %vm1105, %v1107, %v1103
      %v1109 = vmul.f32 1.0, %v1108
      %v1110 = vrcp.pop %v1094
      %v1111 = vmul.f32 %v1094, %v1110
      %v1112 = vsub.f32 1.0, %v1111
      %v1113 = vmul.f32 %v1110, %v1112
      %v1114 = vadd.f32 %v1110, %v1113
      %vm1115 = vweird.f32 %v1094
      %vm1116 = vweird.f32 %v1110
      %vm1117 = vmor %vm1115, %vm1116
      %v1118 = vsel %vm1117, %v1110, %v1114
      %v1119 = vand.u32 2147483647, %v1094
      %vm1120 = vcmp.eq.f32.partialorder %v1119, 8.507059e+37
      %v1121 = vand.u32 %v1094, 2147483648
      %v1122 = vor.u32 1.1754944e-38, %v1121
      %v1123 = vsel %vm1120, %v1122, %v1118
      %v1124 = vmul.f32 1.0, %v1123
      %v1125 = vmul.f32 %v1109, 1.0614054
      %v1126 = vmul.f32 %v1124, 1.0614054
      %v1127 = vadd.f32 %v1125, -1.4531521
      %v1128 = vadd.f32 %v1126, -1.4531521
      %v1129 = vmul.f32 %v1127, %v1109
      %v1130 = vmul.f32 %v1128, %v1124
      %v1131 = vadd.f32 %v1129, 1.4214138
      %v1132 = vadd.f32 %v1130, 1.4214138
      %v1133 = vmul.f32 %v1131, %v1109
      %v1134 = vmul.f32 %v1132, %v1124
      %v1135 = vadd.f32 %v1133, -0.28449672
      %v1136 = vadd.f32 %v1134, -0.28449672
      %v1137 = vmul.f32 %v1135, %v1109
      %v1138 = vmul.f32 %v1136, %v1124
      %v1139 = vadd.f32 %v1137, 0.2548296
      %v1140 = vadd.f32 %v1138, 0.2548296
      %v1141 = vmul.f32 %v1139, %v1109
      %v1142 = vmul.f32 %v1140, %v1124
      %v1143 = vsub.f32 0.0, %v1089
      %v1144 = vsub.f32 0.0, %v1090
      %v1145 = vmul.f32 %v1143, %v1089
      %v1146 = vmul.f32 %v1144, %v1090
      %v1147 = vmul.f32 %v1145, 1.442695
      %v1148 = vpow.pop %v1147
      %v1149 = vmul.f32 %v1146, 1.442695
      %v1150 = vpow.pop %v1149
      %v1151 = vmul.f32 %v1141, %v1148
      %v1152 = vmul.f32 %v1142, %v1150
      %v1153 = vsub.f32 1.0, %v1151
      %v1154 = vsub.f32 1.0, %v1152
      %vm1155 = vcmp.ge.f32.partialorder %v1087, 0.0
      %vm1156 = vcmp.ge.f32.partialorder %v1088, 0.0
      %v1157 = vsub.f32 0.0, %v1153
      %v1158 = vsub.f32 0.0, %v1154
      %v1159 = vsel %vm1155, %v1153, %v1157
      %v1160 = vsel %vm1156, %v1154, %v1158
      %v1161 = vadd.f32 %v1159, 1.0
      %v1162 = vadd.f32 %v1160, 1.0
      %v1163 = vmul.f32 %v1085, %v1161
      %v1164 = vmul.f32 %v1086, %v1162
      %v1165 = vpack.c.bf16 %v1164, %v1163
      %v1166 = vld [vmem:[%s10] sm:$0xf]
      %v1167 = vld [vmem:[%s10 + $0x4] sm:$0xf]
      %v1168 = vld [vmem:[%s10 + $0x8] sm:$0xf]
      %v1169 = vld [vmem:[%s10 + $0xc] sm:$0xf]
      %v1170 = vld [vmem:[%s10 + $0x10] sm:$0xf]
      %v1171 = vld [vmem:[%s10 + $0x14] sm:$0xf]
      %v1172 = vld [vmem:[%s10 + $0x18] sm:$0xf]
      %v1173 = vld [vmem:[%s10 + $0x1c] sm:$0xf]
      %v1174 = vld [vmem:[%s10 + $0x20] sm:$0xf]
      %v1175 = vld [vmem:[%s10 + $0x24] sm:$0xf]
      %v1176 = vld [vmem:[%s10 + $0x28] sm:$0xf]
      %v1177 = vld [vmem:[%s10 + $0x2c] sm:$0xf]
      %v1178 = vld [vmem:[%s10 + $0x30] sm:$0xf]
      %v1179 = vld [vmem:[%s10 + $0x34] sm:$0xf]
      %v1180 = vld [vmem:[%s10 + $0x38] sm:$0xf]
      %v1181 = vld [vmem:[%s10 + $0x3c] sm:$0xf]
      %v1182 = vld [vmem:[%s11] sm:$0x1]
      %v1184 = vperm.slane %v1182, 0
      %v1202 = vunpack.c.l.b16 %v1166
      %v1203 = vunpack.c.l.b16 %v1167
      %v1204 = vunpack.c.l.b16 %v1168
      %v1205 = vunpack.c.l.b16 %v1169
      %v1206 = vunpack.c.l.b16 %v1170
      %v1207 = vunpack.c.l.b16 %v1171
      %v1208 = vunpack.c.l.b16 %v1172
      %v1209 = vunpack.c.l.b16 %v1173
      %v1210 = vunpack.c.l.b16 %v1174
      %v1211 = vunpack.c.l.b16 %v1175
      %v1212 = vunpack.c.l.b16 %v1176
      %v1213 = vunpack.c.l.b16 %v1177
      %v1214 = vunpack.c.l.b16 %v1178
      %v1215 = vunpack.c.l.b16 %v1179
      %v1216 = vunpack.c.l.b16 %v1180
      %v1217 = vunpack.c.l.b16 %v1181
      %v1218 = vpack.c.b16 %v1203, %v1202
      %v1219 = vpack.c.b16 %v1205, %v1204
      %v1220 = vpack.c.b16 %v1207, %v1206
      %v1221 = vpack.c.b16 %v1209, %v1208
      %v1222 = vpack.c.b16 %v1211, %v1210
      %v1223 = vpack.c.b16 %v1213, %v1212
      %v1224 = vpack.c.b16 %v1215, %v1214
      %v1225 = vpack.c.b16 %v1217, %v1216
      %1234 = vmatpush.bf16.msra.mxu0 %v1225
      %1235 = vmatpush.bf16.msra.mxu0 %v1224
      %1236 = vmatpush.bf16.msra.mxu0 %v1223
      %1237 = vmatpush.bf16.msra.mxu0 %v1222
      %1238 = vmatpush.bf16.msra.mxu0 %v1221
      %1239 = vmatpush.bf16.msra.mxu0 %v1220
      %1240 = vmatpush.bf16.msra.mxu0 %v1219
      %1241 = vmatpush.bf16.msra.mxu0 %v1218
      %1242 = vmatmul.bf16.gmra.mxu0 %v1165
      %v1243 = vpop.f32.mrf.mxu0
      %v1244 = vadd.f32 %v1184, %v1243
      %v1245 = vpop.f32.mrf.mxu0
      %v1246 = vadd.f32 %v1184, %v1245
      %1247 = vdwg.mxu0
      %v1248 = vadd.f32 %v997, %v1244
      %v1249 = vadd.f32 %v998, %v1246
      %1250 = vst.msk [vmem:[%s413] sm:$0xff] %vm419, %v1248
      %1251 = vst.msk [vmem:[%s413 + $0x8] sm:$0xff] %vm419, %v1249
      %p1252 = scmp.lt.s32.totalorder %s23, 7
      %s1253 = scalar_select %p1252, %s23, 7
      %s1254 = smul.addr %s1253, 2
      %s1255 = smul.addr %s1254, 8
      %s1256 = scalar_lea.vmem %s12, %s1255
      // Predicated region
      $region69: #{cvta_forward.12} parent=67 // pred_check
        %p1257 = pneg %p298
      $region70: #{cvta_forward.12} parent=67 // pred_check_branch
        %1259 = sbr.rel (%p1257) target = $region72
      $region71: #{cvta_forward.12} parent=67 // pred_region
        _
      $region72: #{cvta_forward.12} parent=67 // pred_fallthru
        _
    $region68: #{cvta_forward.12} parent=5 // pred_fallthru
      _
    %p1260 = scmp.le.s32.totalorder 2, %s18
    // Predicated region
    $region73: #{cvta_forward.12} parent=5 // pred_check
      %p1261 = pneg %p1260
    $region74: #{cvta_forward.12} parent=5 // pred_check_branch
      %1263 = sbr.rel (%p1261) target = $region76
    $region75: #{cvta_forward.12} parent=5 // pred_region
      %s1264 = ssub.s32 %s18, 2
      // Predicated region
      $region77: #{cvta_forward.12} parent=75 // pred_check
        %p1265 = pneg %p304
      $region78: #{cvta_forward.12} parent=75 // pred_check_branch
        %1267 = sbr.rel (%p1265) target = $region80
      $region79: #{cvta_forward.12} parent=75 // pred_region
        %p1268 = scmp.lt.s32.totalorder %s24, 7
        %s1269 = scalar_select %p1268, %s24, 7
        %s1270 = smul.addr %s1269, 2
        %s1271 = smul.addr %s1270, 8
        %s1272 = scalar_lea.vmem %s12, %s1271
      $region80: #{cvta_forward.12} parent=75 // pred_fallthru
        _
    $region76: #{cvta_forward.12} parent=5 // pred_fallthru
      _
  $region6: #{cvta_forward.12} parent=0 // loop_footer
    %s22 = sadd.s32 1, %s18
  $region7: #{cvta_forward.12} parent=0 // loop_footer_branch
    %17 = sbr.rel target = $region3
  $region8: #{cvta_forward.12} parent=0 // loop_exit
    _

// kernel: cvta_forward.15
$region0: #{cvta_forward.15}
  #allocation0 [shape = 'u32[]', space=smem, size = 0x4, offset = 0x4, fixed_abs, tag = 'smem constant byte address 0x4 - core index']
  #allocation1 [shape = 'u32[72,128]{1,0:T(1,128)}', space=vmem, size = 0x9000, scoped, tag = 'internal scratch']
  %s0 = inlined_call_operand.vmem [shape: f32[2,10,10,32], index: 0, kind: input, shape index: {}]
  %s1 = inlined_call_operand.vmem [shape: bf16[9,32,16], index: 1, kind: input, shape index: {}]
  %s2 = inlined_call_operand.vmem [shape: f32[1,16], index: 2, kind: input, shape index: {}]
  %s3 = inlined_call_operand.vmem [shape: f32[1,16], index: 3, kind: input, shape index: {}]
  %s4 = inlined_call_operand.vmem [shape: f32[2,8,8,16], index: 4, kind: input, shape index: {}]
  %s5 = inlined_call_operand.vmem [shape: f32[2,8,8,16], index: 5, kind: output, shape index: {}]
  %s6 = sld [smem:[#allocation0]]
  $region53: #{cvta_forward.15} parent=0
    _
  %s8 = ssub.s32 1, %s6
  %s9 = scalar_select 0, %s8, %s6
  loop: start=0, step=1, limit=4
  $region2: #{cvta_forward.15} parent=0 // loop_pre_header
    _
  $region3: #{cvta_forward.15} parent=0 // loop_header
    %s11 = sphi 0, %s15
    %p12 = scmp.ge.s32.totalorder %s11, 4
    %s21 = sphi 0, %s23
    %s24 = sphi 0, %s21
    %s25 = sphi 0, %s24
    %s41 = sphi 0, %s25
    %s45 = sphi 0, %s45
    %s47 = sphi 0, %s45
    %s48 = sphi 0, %s47
    %s62 = sphi 0, %s48
    %s66 = sphi 0, %s66
    %s68 = sphi 0, %s66
    %s69 = sphi 0, %s68
    %s83 = sphi 0, %s69
    %s87 = sphi 0, %s87
    %s89 = sphi 0, %s87
    %s90 = sphi 0, %s89
    %s104 = sphi 0, %s90
    %s110 = sphi 0, %s112
    %s113 = sphi 0, %s110
    %s114 = sphi 0, %s113
    %s130 = sphi 0, %s114
    %s136 = sphi 0, %s138
    %s139 = sphi 0, %s136
    %s140 = sphi 0, %s139
    %s156 = sphi 0, %s140
  $region4: #{cvta_forward.15} parent=0 // loop_header_branch
    %14 = sbr.rel (%p12) target = $region8
  $region5: #{cvta_forward.15} parent=0 // loop_body
    %s16 = ssub.s32 %s11, 1
    %s17 = ssub.s32 %s11, 2
    %s18 = sadd.s32 %s11, 1
    %s19 = ssub.s32 %s11, %s18
    %p20 = scmp.eq.s32.totalorder %s19, 0
    %s22 = sadd.s32 %s21, 1
    %s23 = scalar_select %p20, %s21, %s22
    %p26 = pneg %p20
    %p27 = scmp.eq.s32.totalorder %s11, 1
    %p28 = por %p26, %p27
    %p29 = scmp.ne.s32.totalorder %s21, %s24
    %p30 = scmp.eq.s32.totalorder %s11, 0
    %p31 = por %p29, %p30
    %p32 = scmp.ne.s32.totalorder %s21, %s24
    %p33 = scmp.eq.s32.totalorder %s16, 1
    %p34 = por %p32, %p33
    %p35 = scmp.ne.s32.totalorder %s24, %s25
    %p36 = scmp.eq.s32.totalorder %s16, 0
    %p37 = por %p35, %p36
    %p38 = scmp.ne.s32.totalorder %s24, %s25
    %p39 = scmp.eq.s32.totalorder %s17, 1
    %p40 = por %p38, %p39
    %p42 = scmp.ne.s32.totalorder %s25, %s41
    %p43 = scmp.eq.s32.totalorder %s17, 0
    %p44 = por %p42, %p43
    %s46 = sadd.s32 %s45, 1
    %p49 = scmp.eq.s32.totalorder %s11, 1
    %p50 = scmp.ne.s32.totalorder %s45, %s47
    %p51 = scmp.eq.s32.totalorder %s11, 0
    %p52 = por %p50, %p51
    %p53 = scmp.ne.s32.totalorder %s45, %s47
    %p54 = scmp.eq.s32.totalorder %s16, 1
    %p55 = por %p53, %p54
    %p56 = scmp.ne.s32.totalorder %s47, %s48
    %p57 = scmp.eq.s32.totalorder %s16, 0
    %p58 = por %p56, %p57
    %p59 = scmp.ne.s32.totalorder %s47, %s48
    %p60 = scmp.eq.s32.totalorder %s17, 1
    %p61 = por %p59, %p60
    %p63 = scmp.ne.s32.totalorder %s48, %s62
    %p64 = scmp.eq.s32.totalorder %s17, 0
    %p65 = por %p63, %p64
    %s67 = sadd.s32 %s66, 1
    %p70 = scmp.eq.s32.totalorder %s11, 1
    %p71 = scmp.ne.s32.totalorder %s66, %s68
    %p72 = scmp.eq.s32.totalorder %s11, 0
    %p73 = por %p71, %p72
    %p74 = scmp.ne.s32.totalorder %s66, %s68
    %p75 = scmp.eq.s32.totalorder %s16, 1
    %p76 = por %p74, %p75
    %p77 = scmp.ne.s32.totalorder %s68, %s69
    %p78 = scmp.eq.s32.totalorder %s16, 0
    %p79 = por %p77, %p78
    %p80 = scmp.ne.s32.totalorder %s68, %s69
    %p81 = scmp.eq.s32.totalorder %s17, 1
    %p82 = por %p80, %p81
    %p84 = scmp.ne.s32.totalorder %s69, %s83
    %p85 = scmp.eq.s32.totalorder %s17, 0
    %p86 = por %p84, %p85
    %s88 = sadd.s32 %s87, 1
    %p91 = scmp.eq.s32.totalorder %s11, 1
    %p92 = scmp.ne.s32.totalorder %s87, %s89
    %p93 = scmp.eq.s32.totalorder %s11, 0
    %p94 = por %p92, %p93
    %p95 = scmp.ne.s32.totalorder %s87, %s89
    %p96 = scmp.eq.s32.totalorder %s16, 1
    %p97 = por %p95, %p96
    %p98 = scmp.ne.s32.totalorder %s89, %s90
    %p99 = scmp.eq.s32.totalorder %s16, 0
    %p100 = por %p98, %p99
    %p101 = scmp.ne.s32.totalorder %s89, %s90
    %p102 = scmp.eq.s32.totalorder %s17, 1
    %p103 = por %p101, %p102
    %p105 = scmp.ne.s32.totalorder %s90, %s104
    %p106 = scmp.eq.s32.totalorder %s17, 0
    %p107 = por %p105, %p106
    %s108 = ssub.s32 %s11, %s18
    %p109 = scmp.eq.s32.totalorder %s108, 0
    %s111 = sadd.s32 %s110, 1
    %s112 = scalar_select %p109, %s110, %s111
    %p115 = pneg %p109
    %p116 = scmp.eq.s32.totalorder %s11, 1
    %p117 = por %p115, %p116
    %p118 = scmp.ne.s32.totalorder %s110, %s113
    %p119 = scmp.eq.s32.totalorder %s11, 0
    %p120 = por %p118, %p119
    %p121 = scmp.ne.s32.totalorder %s110, %s113
    %p122 = scmp.eq.s32.totalorder %s16, 1
    %p123 = por %p121, %p122
    %p124 = scmp.ne.s32.totalorder %s113, %s114
    %p125 = scmp.eq.s32.totalorder %s16, 0
    %p126 = por %p124, %p125
    %p127 = scmp.ne.s32.totalorder %s113, %s114
    %p128 = scmp.eq.s32.totalorder %s17, 1
    %p129 = por %p127, %p128
    %p131 = scmp.ne.s32.totalorder %s114, %s130
    %p132 = scmp.eq.s32.totalorder %s17, 0
    %p133 = por %p131, %p132
    %s134 = ssub.s32 %s11, %s18
    %p135 = scmp.eq.s32.totalorder %s134, 0
    %s137 = sadd.s32 %s136, 1
    %s138 = scalar_select %p135, %s136, %s137
    %p141 = pneg %p135
    %p142 = scmp.eq.s32.totalorder %s11, 1
    %p143 = por %p141, %p142
    %p144 = scmp.ne.s32.totalorder %s136, %s139
    %p145 = scmp.eq.s32.totalorder %s11, 0
    %p146 = por %p144, %p145
    %p147 = scmp.ne.s32.totalorder %s136, %s139
    %p148 = scmp.eq.s32.totalorder %s16, 1
    %p149 = por %p147, %p148
    %p150 = scmp.ne.s32.totalorder %s139, %s140
    %p151 = scmp.eq.s32.totalorder %s16, 0
    %p152 = por %p150, %p151
    %p153 = scmp.ne.s32.totalorder %s139, %s140
    %p154 = scmp.eq.s32.totalorder %s17, 1
    %p155 = por %p153, %p154
    %p157 = scmp.ne.s32.totalorder %s140, %s156
    %p158 = scmp.eq.s32.totalorder %s17, 0
    %p159 = por %p157, %p158
    %p160 = scmp.le.s32.totalorder 1, %s11
    %p161 = scmp.lt.s32.totalorder %s11, 3
    %p162 = pnand %p160, %p161
    %p163 = pneg %p162
    // Predicated region
    $region9: #{cvta_forward.15} parent=5 // pred_check
      _
    $region10: #{cvta_forward.15} parent=5 // pred_check_branch
      %165 = sbr.rel (%p162) target = $region12
    $region11: #{cvta_forward.15} parent=5 // pred_region
      %s166 = ssub.s32 %s11, 1
      // Predicated region
      $region13: #{cvta_forward.15} parent=11 // pred_check
        %p167 = pneg %p58
      $region14: #{cvta_forward.15} parent=11 // pred_check_branch
        %169 = sbr.rel (%p167) target = $region16
      $region15: #{cvta_forward.15} parent=11 // pred_region
        _
      $region16: #{cvta_forward.15} parent=11 // pred_fallthru
        _
      // Predicated region
      $region17: #{cvta_forward.15} parent=11 // pred_check
        %p170 = pneg %p79
      $region18: #{cvta_forward.15} parent=11 // pred_check_branch
        %172 = sbr.rel (%p170) target = $region20
      $region19: #{cvta_forward.15} parent=11 // pred_region
        _
      $region20: #{cvta_forward.15} parent=11 // pred_fallthru
        _
      // Predicated region
      $region21: #{cvta_forward.15} parent=11 // pred_check
        %p173 = pneg %p100
      $region22: #{cvta_forward.15} parent=11 // pred_check_branch
        %175 = sbr.rel (%p173) target = $region24
      $region23: #{cvta_forward.15} parent=11 // pred_region
        _
      $region24: #{cvta_forward.15} parent=11 // pred_fallthru
        _
    $region12: #{cvta_forward.15} parent=5 // pred_fallthru
      _
    %p176 = scmp.lt.s32.totalorder %s11, 2
    // Predicated region
    $region25: #{cvta_forward.15} parent=5 // pred_check
      %p177 = pneg %p176
    $region26: #{cvta_forward.15} parent=5 // pred_check_branch
      %179 = sbr.rel (%p177) target = $region28
    $region27: #{cvta_forward.15} parent=5 // pred_region
      // Predicated region
      $region29: #{cvta_forward.15} parent=27 // pred_check
        %p180 = pneg %p31
      $region30: #{cvta_forward.15} parent=27 // pred_check_branch
        %182 = sbr.rel (%p180) target = $region32
      $region31: #{cvta_forward.15} parent=27 // pred_region
        %p183 = scmp.lt.s32.totalorder %s11, 1
        %s184 = scalar_select %p183, %s11, 1
        %s185 = smul.addr %s184, 20
        %s186 = smul.addr %s185, 8
        %s187 = scalar_lea.vmem %s0, %s186
      $region32: #{cvta_forward.15} parent=27 // pred_fallthru
        _
      // Predicated region
      $region33: #{cvta_forward.15} parent=27 // pred_check
        %p188 = pneg %p120
      $region34: #{cvta_forward.15} parent=27 // pred_check_branch
        %190 = sbr.rel (%p188) target = $region36
      $region35: #{cvta_forward.15} parent=27 // pred_region
        %p191 = scmp.lt.s32.totalorder %s11, 1
        %s192 = scalar_select %p191, %s11, 1
        %s193 = smul.addr %s192, 8
        %s194 = smul.addr %s193, 8
        %s195 = scalar_lea.vmem %s4, %s194
      $region36: #{cvta_forward.15} parent=27 // pred_fallthru
        _
    $region28: #{cvta_forward.15} parent=5 // pred_fallthru
      _
    %p196 = scmp.le.s32.totalorder 1, %s11
    %p197 = scmp.lt.s32.totalorder %s11, 3
    %p198 = pnand %p196, %p197
    %p199 = pneg %p198
    // Predicated region
    $region37: #{cvta_forward.15} parent=5 // pred_check
      _
    $region38: #{cvta_forward.15} parent=5 // pred_check_branch
      %201 = sbr.rel (%p198) target = $region40
    $region39: #{cvta_forward.15} parent=5 // pred_region
      %s202 = ssub.s32 %s11, 1
      %p203 = scmp.lt.s32.totalorder %s16, 1
      %s204 = scalar_select %p203, %s16, 1
      %s205 = smul.addr %s204, 20
      %s206 = smul.addr %s205, 8
      %s207 = scalar_lea.vmem %s0, %s206
      %p208 = pneg %p37
      %p209 = pneg %p34
      %p210 = pneg %p58
      %p211 = pneg %p55
      %p212 = pneg %p79
      %p213 = pneg %p76
      %p214 = pneg %p100
      %p215 = pneg %p97
      %p216 = scmp.lt.s32.totalorder %s16, 1
      %s217 = scalar_select %p216, %s16, 1
      %s218 = smul.addr %s217, 8
      %s219 = smul.addr %s218, 8
      %s220 = scalar_lea.vmem %s4, %s219
      %p221 = pneg %p126
      %p222 = pneg %p123
      %p223 = pneg %p152
      %p224 = pneg %p149
      %p225 = scmp.lt.s32.totalorder %s16, 1
      %s226 = scalar_select %p225, %s16, 1
      %s227 = smul.addr %s226, 8
      %s228 = smul.addr %s227, 8
      %s229 = scalar_lea.vmem %s5, %s228
      %p230 = scmp.lt.s32.totalorder %s16, 1
      %s231 = scalar_select %p230, %s16, 1
      %s232 = smul.addr %s231, 20
      %s233 = smul.addr %s232, 8
      %s234 = scalar_lea.vmem %s0, %s233
      %p235 = scmp.lt.s32.totalorder %s16, 1
      %s236 = scalar_select %p235, %s16, 1
      %s237 = smul.addr %s236, 8
      %s238 = smul.addr %s237, 8
      %s239 = scalar_lea.vmem %s4, %s238
      %p240 = scmp.lt.s32.totalorder %s16, 1
      %s241 = scalar_select %p240, %s16, 1
      %s242 = smul.addr %s241, 8
      %s243 = smul.addr %s242, 8
      %s244 = scalar_lea.vmem %s5, %s243
      %v246 = vld [vmem:[%s234] sm:$0xff]
      %v247 = vld [vmem:[%s234 + $0x8] sm:$0x3]
      %v248 = vld [vmem:[%s234 + $0x10] sm:$0xff]
      %v249 = vld [vmem:[%s234 + $0x18] sm:$0x3]
      %v250 = vld [vmem:[%s234 + $0x20] sm:$0xff]
      %v251 = vld [vmem:[%s234 + $0x28] sm:$0x3]
      %v252 = vld [vmem:[%s234 + $0x30] sm:$0xff]
      %v253 = vld [vmem:[%s234 + $0x38] sm:$0x3]
      %v254 = vld [vmem:[%s234 + $0x40] sm:$0xff]
      %v255 = vld [vmem:[%s234 + $0x48] sm:$0x3]
      %v256 = vld [vmem:[%s234 + $0x50] sm:$0xff]
      %v257 = vld [vmem:[%s234 + $0x58] sm:$0x3]
      %v258 = vld [vmem:[%s234 + $0x60] sm:$0xff]
      %v259 = vld [vmem:[%s234 + $0x68] sm:$0x3]
      %v260 = vld [vmem:[%s234 + $0x70] sm:$0xff]
      %v261 = vld [vmem:[%s234 + $0x78] sm:$0x3]
      %v262 = vld [vmem:[%s234 + $0x80] sm:$0xff]
      %v263 = vld [vmem:[%s234 + $0x88] sm:$0x3]
      %v264 = vld [vmem:[%s234 + $0x90] sm:$0xff]
      %v265 = vld [vmem:[%s234 + $0x98] sm:$0x3]
      %v266 = vld [vmem:[%s1] sm:$0xf]
      %v267 = vld [vmem:[%s1 + $0x4] sm:$0xf]
      %v268 = vld [vmem:[%s1 + $0x8] sm:$0xf]
      %v269 = vld [vmem:[%s1 + $0xc] sm:$0xf]
      %v270 = vld [vmem:[%s1 + $0x10] sm:$0xf]
      %v271 = vld [vmem:[%s1 + $0x14] sm:$0xf]
      %v272 = vld [vmem:[%s1 + $0x18] sm:$0xf]
      %v273 = vld [vmem:[%s1 + $0x1c] sm:$0xf]
      %v274 = vld [vmem:[%s1 + $0x20] sm:$0xf]
      %v275 = vld [vmem:[%s1 + $0x24] sm:$0xf]
      %v276 = vld [vmem:[%s1 + $0x28] sm:$0xf]
      %v277 = vld [vmem:[%s1 + $0x2c] sm:$0xf]
      %v278 = vld [vmem:[%s1 + $0x30] sm:$0xf]
      %v279 = vld [vmem:[%s1 + $0x34] sm:$0xf]
      %v280 = vld [vmem:[%s1 + $0x38] sm:$0xf]
      %v281 = vld [vmem:[%s1 + $0x3c] sm:$0xf]
      %v282 = vld [vmem:[%s1 + $0x40] sm:$0xf]
      %v283 = vld [vmem:[%s1 + $0x44] sm:$0xf]
      %v284 = vld [vmem:[%s1 + $0x48] sm:$0xf]
      %v285 = vld [vmem:[%s1 + $0x4c] sm:$0xf]
      %v286 = vld [vmem:[%s1 + $0x50] sm:$0xf]
      %v287 = vld [vmem:[%s1 + $0x54] sm:$0xf]
      %v288 = vld [vmem:[%s1 + $0x58] sm:$0xf]
      %v289 = vld [vmem:[%s1 + $0x5c] sm:$0xf]
      %v290 = vld [vmem:[%s1 + $0x60] sm:$0xf]
      %v291 = vld [vmem:[%s1 + $0x64] sm:$0xf]
      %v292 = vld [vmem:[%s1 + $0x68] sm:$0xf]
      %v293 = vld [vmem:[%s1 + $0x6c] sm:$0xf]
      %v294 = vld [vmem:[%s1 + $0x70] sm:$0xf]
      %v295 = vld [vmem:[%s1 + $0x74] sm:$0xf]
      %v296 = vld [vmem:[%s1 + $0x78] sm:$0xf]
      %v297 = vld [vmem:[%s1 + $0x7c] sm:$0xf]
      %v298 = vld [vmem:[%s1 + $0x80] sm:$0xf]
      %v299 = vld [vmem:[%s1 + $0x84] sm:$0xf]
      %v300 = vld [vmem:[%s1 + $0x88] sm:$0xf]
      %v301 = vld [vmem:[%s1 + $0x8c] sm:$0xf]
      %v302 = vpack.c.bf16 %v248, %v246
      %v303 = vpack.c.bf16 %v252, %v250
      %v304 = vpack.c.bf16 %v256, %v254
      %v305 = vpack.c.bf16 %v260, %v258
      %vm322 = vcmask 1046528
      %v323 = vrot.slane %v246, 1
      %v324 = vrot.slane %v247, 1
      %v325 = vsel %vm322, %v323, %v324
      %v326 = vrot.slane %v248, 1
      %v327 = vrot.slane %v249, 1
      %v328 = vsel %vm322, %v326, %v327
      %v329 = vrot.slane %v250, 1
      %v330 = vrot.slane %v251, 1
      %v331 = vsel %vm322, %v329, %v330
      %v332 = vrot.slane %v252, 1
      %v333 = vrot.slane %v253, 1
      %v334 = vsel %vm322, %v332, %v333
      %v335 = vrot.slane %v254, 1
      %v336 = vrot.slane %v255, 1
      %v337 = vsel %vm322, %v335, %v336
      %v338 = vrot.slane %v256, 1
      %v339 = vrot.slane %v257, 1
      %v340 = vsel %vm322, %v338, %v339
      %v341 = vrot.slane %v258, 1
      %v342 = vrot.slane %v259, 1
      %v343 = vsel %vm322, %v341, %v342
      %v344 = vrot.slane %v260, 1
      %v345 = vrot.slane %v261, 1
      %v346 = vsel %vm322, %v344, %v345
      %v355 = vpack.c.bf16 %v328, %v325
      %v356 = vpack.c.bf16 %v334, %v331
      %v357 = vpack.c.bf16 %v340, %v337
      %v358 = vpack.c.bf16 %v346, %v343
      %v363 = vunpack.c.l.b16 %v270
      %v364 = vunpack.c.l.b16 %v271
      %v365 = vunpack.c.l.b16 %v272
      %v366 = vunpack.c.l.b16 %v273
      %v367 = vpack.c.b16 %v364, %v363
      %v368 = vpack.c.b16 %v366, %v365
      %vm371 = vcmask 261120
      %v373 = vsel %vm371, %v355, 0
      %v376 = vsel %vm371, %v356, 0
      %v379 = vsel %vm371, %v357, 0
      %v382 = vsel %vm371, %v358, 0
      %384 = vmatpush.bf16.msra.mxu0 0
      %385 = vmatpush.bf16.msra.mxu0 0
      %386 = vmatpush.bf16.msra.mxu0 0
      %387 = vmatpush.bf16.msra.mxu0 0
      %388 = vmatpush.bf16.msra.mxu0 0
      %389 = vmatpush.bf16.msra.mxu0 0
      %390 = vmatpush.bf16.msra.mxu0 %v368
      %391 = vmatpush.bf16.msra.mxu0 %v367
      %392 = vmatmul.bf16.gmra.mxu0 %v373
      %v393 = vpop.f32.mrf.mxu0
      %v394 = vadd.f32 0.0, %v393
      %v395 = vpop.f32.mrf.mxu0
      %v396 = vadd.f32 0.0, %v395
      %397 = vmatmul.bf16.gmra.mxu0 %v376
      %v398 = vpop.f32.mrf.mxu0
      %v399 = vadd.f32 0.0, %v398
      %v400 = vpop.f32.mrf.mxu0
      %v401 = vadd.f32 0.0, %v400
      %402 = vmatmul.bf16.gmra.mxu0 %v379
      %v403 = vpop.f32.mrf.mxu0
      %v404 = vadd.f32 0.0, %v403
      %v405 = vpop.f32.mrf.mxu0
      %v406 = vadd.f32 0.0, %v405
      %407 = vmatmul.bf16.gmra.mxu0 %v382
      %v408 = vpop.f32.mrf.mxu0
      %v409 = vadd.f32 0.0, %v408
      %v410 = vpop.f32.mrf.mxu0
      %v411 = vadd.f32 0.0, %v410
      %412 = vdwg.mxu0
      %v417 = vunpack.c.l.b16 %v266
      %v418 = vunpack.c.l.b16 %v267
      %v419 = vunpack.c.l.b16 %v268
      %v420 = vunpack.c.l.b16 %v269
      %v421 = vpack.c.b16 %v418, %v417
      %v422 = vpack.c.b16 %v420, %v419
      %v426 = vsel %vm371, %v302, 0
      %v429 = vsel %vm371, %v303, 0
      %v432 = vsel %vm371, %v304, 0
      %v435 = vsel %vm371, %v305, 0
      %437 = vmatpush.bf16.msra.mxu0 0
      %438 = vmatpush.bf16.msra.mxu0 0
      %439 = vmatpush.bf16.msra.mxu0 0
      %440 = vmatpush.bf16.msra.mxu0 0
      %441 = vmatpush.bf16.msra.mxu0 0
      %442 = vmatpush.bf16.msra.mxu0 0
      %443 = vmatpush.bf16.msra.mxu0 %v422
      %444 = vmatpush.bf16.msra.mxu0 %v421
      %445 = vmatmul.bf16.gmra.mxu0 %v426
      %v446 = vpop.f32.mrf.mxu0
      %v447 = vadd.f32 %v394, %v446
      %v448 = vpop.f32.mrf.mxu0
      %v449 = vadd.f32 %v396, %v448
      %450 = vmatmul.bf16.gmra.mxu0 %v429
      %v451 = vpop.f32.mrf.mxu0
      %v452 = vadd.f32 %v399, %v451
      %v453 = vpop.f32.mrf.mxu0
      %v454 = vadd.f32 %v401, %v453
      %455 = vmatmul.bf16.gmra.mxu0 %v432
      %v456 = vpop.f32.mrf.mxu0
      %v457 = vadd.f32 %v404, %v456
      %v458 = vpop.f32.mrf.mxu0
      %v459 = vadd.f32 %v406, %v458
      %460 = vmatmul.bf16.gmra.mxu0 %v435
      %v461 = vpop.f32.mrf.mxu0
      %v462 = vadd.f32 %v409, %v461
      %v463 = vpop.f32.mrf.mxu0
      %v464 = vadd.f32 %v411, %v463
      %465 = vdwg.mxu0
      %vm466 = vcmask 1045504
      %v467 = vrot.slane %v246, 2
      %v468 = vrot.slane %v247, 2
      %v469 = vsel %vm466, %v467, %v468
      %v470 = vrot.slane %v248, 2
      %v471 = vrot.slane %v249, 2
      %v472 = vsel %vm466, %v470, %v471
      %v473 = vrot.slane %v250, 2
      %v474 = vrot.slane %v251, 2
      %v475 = vsel %vm466, %v473, %v474
      %v476 = vrot.slane %v252, 2
      %v477 = vrot.slane %v253, 2
      %v478 = vsel %vm466, %v476, %v477
      %v479 = vrot.slane %v254, 2
      %v480 = vrot.slane %v255, 2
      %v481 = vsel %vm466, %v479, %v480
      %v482 = vrot.slane %v256, 2
      %v483 = vrot.slane %v257, 2
      %v484 = vsel %vm466, %v482, %v483
      %v485 = vrot.slane %v258, 2
      %v486 = vrot.slane %v259, 2
      %v487 = vsel %vm466, %v485, %v486
      %v488 = vrot.slane %v260, 2
      %v489 = vrot.slane %v261, 2
      %v490 = vsel %vm466, %v488, %v489
      %v499 = vpack.c.bf16 %v472, %v469
      %v500 = vpack.c.bf16 %v478, %v475
      %v501 = vpack.c.bf16 %v484, %v481
      %v502 = vpack.c.bf16 %v490, %v487
      %v507 = vunpack.c.l.b16 %v274
      %v508 = vunpack.c.l.b16 %v275
      %v509 = vunpack.c.l.b16 %v276
      %v510 = vunpack.c.l.b16 %v277
      %v511 = vpack.c.b16 %v508, %v507
      %v512 = vpack.c.b16 %v510, %v509
      %v516 = vsel %vm371, %v499, 0
      %v519 = vsel %vm371, %v500, 0
      %v522 = vsel %vm371, %v501, 0
      %v525 = vsel %vm371, %v502, 0
      %527 = vmatpush.bf16.msra.mxu0 0
      %528 = vmatpush.bf16.msra.mxu0 0
      %529 = vmatpush.bf16.msra.mxu0 0
      %530 = vmatpush.bf16.msra.mxu0 0
      %531 = vmatpush.bf16.msra.mxu0 0
      %532 = vmatpush.bf16.msra.mxu0 0
      %533 = vmatpush.bf16.msra.mxu0 %v512
      %534 = vmatpush.bf16.msra.mxu0 %v511
      %535 = vmatmul.bf16.gmra.mxu0 %v516
      %v536 = vpop.f32.mrf.mxu0
      %v537 = vadd.f32 0.0, %v536
      %v538 = vpop.f32.mrf.mxu0
      %v539 = vadd.f32 0.0, %v538
      %540 = vmatmul.bf16.gmra.mxu0 %v519
      %v541 = vpop.f32.mrf.mxu0
      %v542 = vadd.f32 0.0, %v541
      %v543 = vpop.f32.mrf.mxu0
      %v544 = vadd.f32 0.0, %v543
      %545 = vmatmul.bf16.gmra.mxu0 %v522
      %v546 = vpop.f32.mrf.mxu0
      %v547 = vadd.f32 0.0, %v546
      %v548 = vpop.f32.mrf.mxu0
      %v549 = vadd.f32 0.0, %v548
      %550 = vmatmul.bf16.gmra.mxu0 %v525
      %v551 = vpop.f32.mrf.mxu0
      %v552 = vadd.f32 0.0, %v551
      %v553 = vpop.f32.mrf.mxu0
      %v554 = vadd.f32 0.0, %v553
      %555 = vdwg.mxu0
      %v556 = vadd.f32 %v447, %v537
      %v557 = vadd.f32 %v449, %v539
      %v558 = vadd.f32 %v452, %v542
      %v559 = vadd.f32 %v454, %v544
      %v560 = vadd.f32 %v457, %v547
      %v561 = vadd.f32 %v459, %v549
      %v562 = vadd.f32 %v462, %v552
      %v563 = vadd.f32 %v464, %v554
      %v564 = vpack.c.bf16 %v250, %v248
      %v565 = vpack.c.bf16 %v254, %v252
      %v566 = vpack.c.bf16 %v258, %v256
      %v567 = vpack.c.bf16 %v262, %v260
      %v572 = vunpack.c.l.b16 %v278
      %v573 = vunpack.c.l.b16 %v279
      %v574 = vunpack.c.l.b16 %v280
      %v575 = vunpack.c.l.b16 %v281
      %v576 = vpack.c.b16 %v573, %v572
      %v577 = vpack.c.b16 %v575, %v574
      %v581 = vsel %vm371, %v564, 0
      %v584 = vsel %vm371, %v565, 0
      %v587 = vsel %vm371, %v566, 0
      %v590 = vsel %vm371, %v567, 0
      %592 = vmatpush.bf16.msra.mxu0 0
      %593 = vmatpush.bf16.msra.mxu0 0
      %594 = vmatpush.bf16.msra.mxu0 0
      %595 = vmatpush.bf16.msra.mxu0 0
      %596 = vmatpush.bf16.msra.mxu0 0
      %597 = vmatpush.bf16.msra.mxu0 0
      %598 = vmatpush.bf16.msra.mxu0 %v577
      %599 = vmatpush.bf16.msra.mxu0 %v576
      %600 = vmatmul.bf16.gmra.mxu0 %v581
      %v601 = vpop.f32.mrf.mxu0
      %v602 = vadd.f32 0.0, %v601
      %v603 = vpop.f32.mrf.mxu0
      %v604 = vadd.f32 0.0, %v603
      %605 = vmatmul.bf16.gmra.mxu0 %v584
      %v606 = vpop.f32.mrf.mxu0
      %v607 = vadd.f32 0.0, %v606
      %v608 = vpop.f32.mrf.mxu0
      %v609 = vadd.f32 0.0, %v608
      %610 = vmatmul.bf16.gmra.mxu0 %v587
      %v611 = vpop.f32.mrf.mxu0
      %v612 = vadd.f32 0.0, %v611
      %v613 = vpop.f32.mrf.mxu0
      %v614 = vadd.f32 0.0, %v613
      %615 = vmatmul.bf16.gmra.mxu0 %v590
      %v616 = vpop.f32.mrf.mxu0
      %v617 = vadd.f32 0.0, %v616
      %v618 = vpop.f32.mrf.mxu0
      %v619 = vadd.f32 0.0, %v618
      %620 = vdwg.mxu0
      %v621 = vadd.f32 %v556, %v602
      %v622 = vadd.f32 %v557, %v604
      %v623 = vadd.f32 %v558, %v607
      %v624 = vadd.f32 %v559, %v609
      %v625 = vadd.f32 %v560, %v612
      %v626 = vadd.f32 %v561, %v614
      %v627 = vadd.f32 %v562, %v617
      %v628 = vadd.f32 %v563, %v619
      %v631 = vrot.slane %v262, 1
      %v632 = vrot.slane %v263, 1
      %v633 = vsel %vm322, %v631, %v632
      %v635 = vpack.c.bf16 %v331, %v328
      %v636 = vpack.c.bf16 %v337, %v334
      %v637 = vpack.c.bf16 %v343, %v340
      %v638 = vpack.c.bf16 %v633, %v346
      %v643 = vunpack.c.l.b16 %v282
      %v644 = vunpack.c.l.b16 %v283
      %v645 = vunpack.c.l.b16 %v284
      %v646 = vunpack.c.l.b16 %v285
      %v647 = vpack.c.b16 %v644, %v643
      %v648 = vpack.c.b16 %v646, %v645
      %v652 = vsel %vm371, %v635, 0
      %v655 = vsel %vm371, %v636, 0
      %v658 = vsel %vm371, %v637, 0
      %v661 = vsel %vm371, %v638, 0
      %663 = vmatpush.bf16.msra.mxu0 0
      %664 = vmatpush.bf16.msra.mxu0 0
      %665 = vmatpush.bf16.msra.mxu0 0
      %666 = vmatpush.bf16.msra.mxu0 0
      %667 = vmatpush.bf16.msra.mxu0 0
      %668 = vmatpush.bf16.msra.mxu0 0
      %669 = vmatpush.bf16.msra.mxu0 %v648
      %670 = vmatpush.bf16.msra.mxu0 %v647
      %671 = vmatmul.bf16.gmra.mxu0 %v652
      %v672 = vpop.f32.mrf.mxu0
      %v673 = vadd.f32 0.0, %v672
      %v674 = vpop.f32.mrf.mxu0
      %v675 = vadd.f32 0.0, %v674
      %676 = vmatmul.bf16.gmra.mxu0 %v655
      %v677 = vpop.f32.mrf.mxu0
      %v678 = vadd.f32 0.0, %v677
      %v679 = vpop.f32.mrf.mxu0
      %v680 = vadd.f32 0.0, %v679
      %681 = vmatmul.bf16.gmra.mxu0 %v658
      %v682 = vpop.f32.mrf.mxu0
      %v683 = vadd.f32 0.0, %v682
      %v684 = vpop.f32.mrf.mxu0
      %v685 = vadd.f32 0.0, %v684
      %686 = vmatmul.bf16.gmra.mxu0 %v661
      %v687 = vpop.f32.mrf.mxu0
      %v688 = vadd.f32 0.0, %v687
      %v689 = vpop.f32.mrf.mxu0
      %v690 = vadd.f32 0.0, %v689
      %691 = vdwg.mxu0
      %v692 = vadd.f32 %v621, %v673
      %v693 = vadd.f32 %v622, %v675
      %v694 = vadd.f32 %v623, %v678
      %v695 = vadd.f32 %v624, %v680
      %v696 = vadd.f32 %v625, %v683
      %v697 = vadd.f32 %v626, %v685
      %v698 = vadd.f32 %v627, %v688
      %v699 = vadd.f32 %v628, %v690
      %v700 = vrot.slane %v262, 2
      %v701 = vrot.slane %v263, 2
      %v702 = vsel %vm466, %v700, %v701
      %v704 = vpack.c.bf16 %v475, %v472
      %v705 = vpack.c.bf16 %v481, %v478
      %v706 = vpack.c.bf16 %v487, %v484
      %v707 = vpack.c.bf16 %v702, %v490
      %v712 = vunpack.c.l.b16 %v286
      %v713 = vunpack.c.l.b16 %v287
      %v714 = vunpack.c.l.b16 %v288
      %v715 = vunpack.c.l.b16 %v289
      %v716 = vpack.c.b16 %v713, %v712
      %v717 = vpack.c.b16 %v715, %v714
      %v721 = vsel %vm371, %v704, 0
      %v724 = vsel %vm371, %v705, 0
      %v727 = vsel %vm371, %v706, 0
      %v730 = vsel %vm371, %v707, 0
      %732 = vmatpush.bf16.msra.mxu0 0
      %733 = vmatpush.bf16.msra.mxu0 0
      %734 = vmatpush.bf16.msra.mxu0 0
      %735 = vmatpush.bf16.msra.mxu0 0
      %736 = vmatpush.bf16.msra.mxu0 0
      %737 = vmatpush.bf16.msra.mxu0 0
      %738 = vmatpush.bf16.msra.mxu0 %v717
      %739 = vmatpush.bf16.msra.mxu0 %v716
      %740 = vmatmul.bf16.gmra.mxu0 %v721
      %v741 = vpop.f32.mrf.mxu0
      %v742 = vadd.f32 0.0, %v741
      %v743 = vpop.f32.mrf.mxu0
      %v744 = vadd.f32 0.0, %v743
      %745 = vmatmul.bf16.gmra.mxu0 %v724
      %v746 = vpop.f32.mrf.mxu0
      %v747 = vadd.f32 0.0, %v746
      %v748 = vpop.f32.mrf.mxu0
      %v749 = vadd.f32 0.0, %v748
      %750 = vmatmul.bf16.gmra.mxu0 %v727
      %v751 = vpop.f32.mrf.mxu0
      %v752 = vadd.f32 0.0, %v751
      %v753 = vpop.f32.mrf.mxu0
      %v754 = vadd.f32 0.0, %v753
      %755 = vmatmul.bf16.gmra.mxu0 %v730
      %v756 = vpop.f32.mrf.mxu0
      %v757 = vadd.f32 0.0, %v756
      %v758 = vpop.f32.mrf.mxu0
      %v759 = vadd.f32 0.0, %v758
      %760 = vdwg.mxu0
      %v761 = vadd.f32 %v692, %v742
      %v762 = vadd.f32 %v693, %v744
      %v763 = vadd.f32 %v694, %v747
      %v764 = vadd.f32 %v695, %v749
      %v765 = vadd.f32 %v696, %v752
      %v766 = vadd.f32 %v697, %v754
      %v767 = vadd.f32 %v698, %v757
      %v768 = vadd.f32 %v699, %v759
      %v769 = vpack.c.bf16 %v264, %v262
      %v774 = vunpack.c.l.b16 %v290
      %v775 = vunpack.c.l.b16 %v291
      %v776 = vunpack.c.l.b16 %v292
      %v777 = vunpack.c.l.b16 %v293
      %v778 = vpack.c.b16 %v775, %v774
      %v779 = vpack.c.b16 %v777, %v776
      %v783 = vsel %vm371, %v769, 0
      %785 = vmatpush.bf16.msra.mxu0 0
      %786 = vmatpush.bf16.msra.mxu0 0
      %787 = vmatpush.bf16.msra.mxu0 0
      %788 = vmatpush.bf16.msra.mxu0 0
      %789 = vmatpush.bf16.msra.mxu0 0
      %790 = vmatpush.bf16.msra.mxu0 0
      %791 = vmatpush.bf16.msra.mxu0 %v779
      %792 = vmatpush.bf16.msra.mxu0 %v778
      %793 = vmatmul.bf16.gmra.mxu0 %v429
      %v794 = vpop.f32.mrf.mxu0
      %v795 = vadd.f32 0.0, %v794
      %v796 = vpop.f32.mrf.mxu0
      %v797 = vadd.f32 0.0, %v796
      %798 = vmatmul.bf16.gmra.mxu0 %v432
      %v799 = vpop.f32.mrf.mxu0
      %v800 = vadd.f32 0.0, %v799
      %v801 = vpop.f32.mrf.mxu0
      %v802 = vadd.f32 0.0, %v801
      %803 = vmatmul.bf16.gmra.mxu0 %v435
      %v804 = vpop.f32.mrf.mxu0
      %v805 = vadd.f32 0.0, %v804
      %v806 = vpop.f32.mrf.mxu0
      %v807 = vadd.f32 0.0, %v806
      %808 = vmatmul.bf16.gmra.mxu0 %v783
      %v809 = vpop.f32.mrf.mxu0
      %v810 = vadd.f32 0.0, %v809
      %v811 = vpop.f32.mrf.mxu0
      %v812 = vadd.f32 0.0, %v811
      %813 = vdwg.mxu0
      %v814 = vadd.f32 %v761, %v795
      %v815 = vadd.f32 %v762, %v797
      %v816 = vadd.f32 %v763, %v800
      %v817 = vadd.f32 %v764, %v802
      %v818 = vadd.f32 %v765, %v805
      %v819 = vadd.f32 %v766, %v807
      %v820 = vadd.f32 %v767, %v810
      %v821 = vadd.f32 %v768, %v812
      %v824 = vrot.slane %v264, 1
      %v825 = vrot.slane %v265, 1
      %v826 = vsel %vm322, %v824, %v825
      %v828 = vpack.c.bf16 %v826, %v633
      %v833 = vunpack.c.l.b16 %v294
      %v834 = vunpack.c.l.b16 %v295
      %v835 = vunpack.c.l.b16 %v296
      %v836 = vunpack.c.l.b16 %v297
      %v837 = vpack.c.b16 %v834, %v833
      %v838 = vpack.c.b16 %v836, %v835
      %v842 = vsel %vm371, %v828, 0
      %844 = vmatpush.bf16.msra.mxu0 0
      %845 = vmatpush.bf16.msra.mxu0 0
      %846 = vmatpush.bf16.msra.mxu0 0
      %847 = vmatpush.bf16.msra.mxu0 0
      %848 = vmatpush.bf16.msra.mxu0 0
      %849 = vmatpush.bf16.msra.mxu0 0
      %850 = vmatpush.bf16.msra.mxu0 %v838
      %851 = vmatpush.bf16.msra.mxu0 %v837
      %852 = vmatmul.bf16.gmra.mxu0 %v376
      %v853 = vpop.f32.mrf.mxu0
      %v854 = vadd.f32 0.0, %v853
      %v855 = vpop.f32.mrf.mxu0
      %v856 = vadd.f32 0.0, %v855
      %857 = vmatmul.bf16.gmra.mxu0 %v379
      %v858 = vpop.f32.mrf.mxu0
      %v859 = vadd.f32 0.0, %v858
      %v860 = vpop.f32.mrf.mxu0
      %v861 = vadd.f32 0.0, %v860
      %862 = vmatmul.bf16.gmra.mxu0 %v382
      %v863 = vpop.f32.mrf.mxu0
      %v864 = vadd.f32 0.0, %v863
      %v865 = vpop.f32.mrf.mxu0
      %v866 = vadd.f32 0.0, %v865
      %867 = vmatmul.bf16.gmra.mxu0 %v842
      %v868 = vpop.f32.mrf.mxu0
      %v869 = vadd.f32 0.0, %v868
      %v870 = vpop.f32.mrf.mxu0
      %v871 = vadd.f32 0.0, %v870
      %872 = vdwg.mxu0
      %v873 = vadd.f32 %v814, %v854
      %v874 = vadd.f32 %v815, %v856
      %v875 = vadd.f32 %v816, %v859
      %v876 = vadd.f32 %v817, %v861
      %v877 = vadd.f32 %v818, %v864
      %v878 = vadd.f32 %v819, %v866
      %v879 = vadd.f32 %v820, %v869
      %v880 = vadd.f32 %v821, %v871
      %v881 = vrot.slane %v264, 2
      %v882 = vrot.slane %v265, 2
      %v883 = vsel %vm466, %v881, %v882
      %v885 = vpack.c.bf16 %v883, %v702
      %v890 = vunpack.c.l.b16 %v298
      %v891 = vunpack.c.l.b16 %v299
      %v892 = vunpack.c.l.b16 %v300
      %v893 = vunpack.c.l.b16 %v301
      %v894 = vpack.c.b16 %v891, %v890
      %v895 = vpack.c.b16 %v893, %v892
      %v899 = vsel %vm371, %v885, 0
      %901 = vmatpush.bf16.msra.mxu0 0
      %902 = vmatpush.bf16.msra.mxu0 0
      %903 = vmatpush.bf16.msra.mxu0 0
      %904 = vmatpush.bf16.msra.mxu0 0
      %905 = vmatpush.bf16.msra.mxu0 0
      %906 = vmatpush.bf16.msra.mxu0 0
      %907 = vmatpush.bf16.msra.mxu0 %v895
      %908 = vmatpush.bf16.msra.mxu0 %v894
      %909 = vmatmul.bf16.gmra.mxu0 %v519
      %v910 = vpop.f32.mrf.mxu0
      %v911 = vadd.f32 0.0, %v910
      %v912 = vpop.f32.mrf.mxu0
      %v913 = vadd.f32 0.0, %v912
      %914 = vmatmul.bf16.gmra.mxu0 %v522
      %v915 = vpop.f32.mrf.mxu0
      %v916 = vadd.f32 0.0, %v915
      %v917 = vpop.f32.mrf.mxu0
      %v918 = vadd.f32 0.0, %v917
      %919 = vmatmul.bf16.gmra.mxu0 %v525
      %v920 = vpop.f32.mrf.mxu0
      %v921 = vadd.f32 0.0, %v920
      %v922 = vpop.f32.mrf.mxu0
      %v923 = vadd.f32 0.0, %v922
      %924 = vmatmul.bf16.gmra.mxu0 %v899
      %v925 = vpop.f32.mrf.mxu0
      %v926 = vadd.f32 0.0, %v925
      %v927 = vpop.f32.mrf.mxu0
      %v928 = vadd.f32 0.0, %v927
      %929 = vdwg.mxu0
      %v930 = vadd.f32 %v873, %v911
      %v931 = vadd.f32 %v874, %v913
      %v932 = vadd.f32 %v875, %v916
      %v933 = vadd.f32 %v876, %v918
      %v934 = vadd.f32 %v877, %v921
      %v935 = vadd.f32 %v878, %v923
      %v936 = vadd.f32 %v879, %v926
      %v937 = vadd.f32 %v880, %v928
      %v938 = vld [vmem:[%s2] sm:$0x1]
      %v940 = vperm.slane %v938, 0
      %v942 = vmul.f32 %v930, %v940
      %v943 = vmul.f32 %v931, %v940
      %v944 = vmul.f32 %v932, %v940
      %v945 = vmul.f32 %v933, %v940
      %v946 = vmul.f32 %v934, %v940
      %v947 = vmul.f32 %v935, %v940
      %v948 = vmul.f32 %v936, %v940
      %v949 = vmul.f32 %v937, %v940
      %v950 = vld [vmem:[%s3] sm:$0x1]
      %v952 = vperm.slane %v950, 0
      %v954 = vadd.f32 %v942, %v952
      %v955 = vadd.f32 %v943, %v952
      %v956 = vadd.f32 %v944, %v952
      %v957 = vadd.f32 %v945, %v952
      %v958 = vadd.f32 %v946, %v952
      %v959 = vadd.f32 %v947, %v952
      %v960 = vadd.f32 %v948, %v952
      %v961 = vadd.f32 %v949, %v952
      %v962 = vmul.f32 %v954, 0.5
      %v963 = vmul.f32 %v955, 0.5
      %v964 = vmul.f32 %v956, 0.5
      %v965 = vmul.f32 %v957, 0.5
      %v966 = vmul.f32 %v958, 0.5
      %v967 = vmul.f32 %v959, 0.5
      %v968 = vmul.f32 %v960, 0.5
      %v969 = vmul.f32 %v961, 0.5
      %v970 = vmul.f32 %v954, 0.70710677
      %v971 = vmul.f32 %v955, 0.70710677
      %v972 = vmul.f32 %v956, 0.70710677
      %v973 = vmul.f32 %v957, 0.70710677
      %v974 = vmul.f32 %v958, 0.70710677
      %v975 = vmul.f32 %v959, 0.70710677
      %v976 = vmul.f32 %v960, 0.70710677
      %v977 = vmul.f32 %v961, 0.70710677
      %v978 = vand.u32 2147483647, %v970
      %v979 = vand.u32 2147483647, %v971
      %v980 = vand.u32 2147483647, %v972
      %v981 = vand.u32 2147483647, %v973
      %v982 = vand.u32 2147483647, %v974
      %v983 = vand.u32 2147483647, %v975
      %v984 = vand.u32 2147483647, %v976
      %v985 = vand.u32 2147483647, %v977
      %v986 = vmul.f32 %v978, 0.3275911
      %v987 = vmul.f32 %v979, 0.3275911
      %v988 = vmul.f32 %v980, 0.3275911
      %v989 = vmul.f32 %v981, 0.3275911
      %v990 = vmul.f32 %v982, 0.3275911
      %v991 = vmul.f32 %v983, 0.3275911
      %v992 = vmul.f32 %v984, 0.3275911
      %v993 = vmul.f32 %v985, 0.3275911
      %v994 = vadd.f32 %v986, 1.0
      %v995 = vadd.f32 %v987, 1.0
      %v996 = vadd.f32 %v988, 1.0
      %v997 = vadd.f32 %v989, 1.0
      %v998 = vadd.f32 %v990, 1.0
      %v999 = vadd.f32 %v991, 1.0
      %v1000 = vadd.f32 %v992, 1.0
      %v1001 = vadd.f32 %v993, 1.0
      %v1002 = vrcp.pop %v994
      %v1003 = vmul.f32 %v994, %v1002
      %v1004 = vsub.f32 1.0, %v1003
      %v1005 = vmul.f32 %v1002, %v1004
      %v1006 = vadd.f32 %v1002, %v1005
      %vm1007 = vweird.f32 %v994
      %vm1008 = vweird.f32 %v1002
      %vm1009 = vmor %vm1007, %vm1008
      %v1010 = vsel %vm1009, %v1002, %v1006
      %v1011 = vand.u32 2147483647, %v994
      %vm1012 = vcmp.eq.f32.partialorder %v1011, 8.507059e+37
      %v1013 = vand.u32 %v994, 2147483648
      %v1014 = vor.u32 1.1754944e-38, %v1013
      %v1015 = vsel %vm1012, %v1014, %v1010
      %v1016 = vmul.f32 1.0, %v1015
      %v1017 = vrcp.pop %v995
      %v1018 = vmul.f32 %v995, %v1017
      %v1019 = vsub.f32 1.0, %v1018
      %v1020 = vmul.f32 %v1017, %v1019
      %v1021 = vadd.f32 %v1017, %v1020
      %vm1022 = vweird.f32 %v995
      %vm1023 = vweird.f32 %v1017
      %vm1024 = vmor %vm1022, %vm1023
      %v1025 = vsel %vm1024, %v1017, %v1021
      %v1026 = vand.u32 2147483647, %v995
      %vm1027 = vcmp.eq.f32.partialorder %v1026, 8.507059e+37
      %v1028 = vand.u32 %v995, 2147483648
      %v1029 = vor.u32 1.1754944e-38, %v1028
      %v1030 = vsel %vm1027, %v1029, %v1025
      %v1031 = vmul.f32 1.0, %v1030
      %v1032 = vrcp.pop %v996
      %v1033 = vmul.f32 %v996, %v1032
      %v1034 = vsub.f32 1.0, %v1033
      %v1035 = vmul.f32 %v1032, %v1034
      %v1036 = vadd.f32 %v1032, %v1035
      %vm1037 = vweird.f32 %v996
      %vm1038 = vweird.f32 %v1032
      %vm1039 = vmor %vm1037, %vm1038
      %v1040 = vsel %vm1039, %v1032, %v1036
      %v1041 = vand.u32 2147483647, %v996
      %vm1042 = vcmp.eq.f32.partialorder %v1041, 8.507059e+37
      %v1043 = vand.u32 %v996, 2147483648
      %v1044 = vor.u32 1.1754944e-38, %v1043
      %v1045 = vsel %vm1042, %v1044, %v1040
      %v1046 = vmul.f32 1.0, %v1045
      %v1047 = vrcp.pop %v997
      %v1048 = vmul.f32 %v997, %v1047
      %v1049 = vsub.f32 1.0, %v1048
      %v1050 = vmul.f32 %v1047, %v1049
      %v1051 = vadd.f32 %v1047, %v1050
      %vm1052 = vweird.f32 %v997
      %vm1053 = vweird.f32 %v1047
      %vm1054 = vmor %vm1052, %vm1053
      %v1055 = vsel %vm1054, %v1047, %v1051
      %v1056 = vand.u32 2147483647, %v997
      %vm1057 = vcmp.eq.f32.partialorder %v1056, 8.507059e+37
      %v1058 = vand.u32 %v997, 2147483648
      %v1059 = vor.u32 1.1754944e-38, %v1058
      %v1060 = vsel %vm1057, %v1059, %v1055
      %v1061 = vmul.f32 1.0, %v1060
      %v1062 = vrcp.pop %v998
      %v1063 = vmul.f32 %v998, %v1062
      %v1064 = vsub.f32 1.0, %v1063
      %v1065 = vmul.f32 %v1062, %v1064
      %v1066 = vadd.f32 %v1062, %v1065
      %vm1067 = vweird.f32 %v998
      %vm1068 = vweird.f32 %v1062
      %vm1069 = vmor %vm1067, %vm1068
      %v1070 = vsel %vm1069, %v1062, %v1066
      %v1071 = vand.u32 2147483647, %v998
      %vm1072 = vcmp.eq.f32.partialorder %v1071, 8.507059e+37
      %v1073 = vand.u32 %v998, 2147483648
      %v1074 = vor.u32 1.1754944e-38, %v1073
      %v1075 = vsel %vm1072, %v1074, %v1070
      %v1076 = vmul.f32 1.0, %v1075
      %v1077 = vrcp.pop %v999
      %v1078 = vmul.f32 %v999, %v1077
      %v1079 = vsub.f32 1.0, %v1078
      %v1080 = vmul.f32 %v1077, %v1079
      %v1081 = vadd.f32 %v1077, %v1080
      %vm1082 = vweird.f32 %v999
      %vm1083 = vweird.f32 %v1077
      %vm1084 = vmor %vm1082, %vm1083
      %v1085 = vsel %vm1084, %v1077, %v1081
      %v1086 = vand.u32 2147483647, %v999
      %vm1087 = vcmp.eq.f32.partialorder %v1086, 8.507059e+37
      %v1088 = vand.u32 %v999, 2147483648
      %v1089 = vor.u32 1.1754944e-38, %v1088
      %v1090 = vsel %vm1087, %v1089, %v1085
      %v1091 = vmul.f32 1.0, %v1090
      %v1092 = vrcp.pop %v1000
      %v1093 = vmul.f32 %v1000, %v1092
      %v1094 = vsub.f32 1.0, %v1093
      %v1095 = vmul.f32 %v1092, %v1094
      %v1096 = vadd.f32 %v1092, %v1095
      %vm1097 = vweird.f32 %v1000
      %vm1098 = vweird.f32 %v1092
      %vm1099 = vmor %vm1097, %vm1098
      %v1100 = vsel %vm1099, %v1092, %v1096
      %v1101 = vand.u32 2147483647, %v1000
      %vm1102 = vcmp.eq.f32.partialorder %v1101, 8.507059e+37
      %v1103 = vand.u32 %v1000, 2147483648
      %v1104 = vor.u32 1.1754944e-38, %v1103
      %v1105 = vsel %vm1102, %v1104, %v1100
      %v1106 = vmul.f32 1.0, %v1105
      %v1107 = vrcp.pop %v1001
      %v1108 = vmul.f32 %v1001, %v1107
      %v1109 = vsub.f32 1.0, %v1108
      %v1110 = vmul.f32 %v1107, %v1109
      %v1111 = vadd.f32 %v1107, %v1110
      %vm1112 = vweird.f32 %v1001
      %vm1113 = vweird.f32 %v1107
      %vm1114 = vmor %vm1112, %vm1113
      %v1115 = vsel %vm1114, %v1107, %v1111
      %v1116 = vand.u32 2147483647, %v1001
      %vm1117 = vcmp.eq.f32.partialorder %v1116, 8.507059e+37
      %v1118 = vand.u32 %v1001, 2147483648
      %v1119 = vor.u32 1.1754944e-38, %v1118
      %v1120 = vsel %vm1117, %v1119, %v1115
      %v1121 = vmul.f32 1.0, %v1120
      %v1122 = vmul.f32 %v1016, 1.0614054
      %v1123 = vmul.f32 %v1031, 1.0614054
      %v1124 = vmul.f32 %v1046, 1.0614054
      %v1125 = vmul.f32 %v1061, 1.0614054
      %v1126 = vmul.f32 %v1076, 1.0614054
      %v1127 = vmul.f32 %v1091, 1.0614054
      %v1128 = vmul.f32 %v1106, 1.0614054
      %v1129 = vmul.f32 %v1121, 1.0614054
      %v1130 = vadd.f32 %v1122, -1.4531521
      %v1131 = vadd.f32 %v1123, -1.4531521
      %v1132 = vadd.f32 %v1124, -1.4531521
      %v1133 = vadd.f32 %v1125, -1.4531521
      %v1134 = vadd.f32 %v1126, -1.4531521
      %v1135 = vadd.f32 %v1127, -1.4531521
      %v1136 = vadd.f32 %v1128, -1.4531521
      %v1137 = vadd.f32 %v1129, -1.4531521
      %v1138 = vmul.f32 %v1130, %v1016
      %v1139 = vmul.f32 %v1131, %v1031
      %v1140 = vmul.f32 %v1132, %v1046
      %v1141 = vmul.f32 %v1133, %v1061
      %v1142 = vmul.f32 %v1134, %v1076
      %v1143 = vmul.f32 %v1135, %v1091
      %v1144 = vmul.f32 %v1136, %v1106
      %v1145 = vmul.f32 %v1137, %v1121
      %v1146 = vadd.f32 %v1138, 1.4214138
      %v1147 = vadd.f32 %v1139, 1.4214138
      %v1148 = vadd.f32 %v1140, 1.4214138
      %v1149 = vadd.f32 %v1141, 1.4214138
      %v1150 = vadd.f32 %v1142, 1.4214138
      %v1151 = vadd.f32 %v1143, 1.4214138
      %v1152 = vadd.f32 %v1144, 1.4214138
      %v1153 = vadd.f32 %v1145, 1.4214138
      %v1154 = vmul.f32 %v1146, %v1016
      %v1155 = vmul.f32 %v1147, %v1031
      %v1156 = vmul.f32 %v1148, %v1046
      %v1157 = vmul.f32 %v1149, %v1061
      %v1158 = vmul.f32 %v1150, %v1076
      %v1159 = vmul.f32 %v1151, %v1091
      %v1160 = vmul.f32 %v1152, %v1106
      %v1161 = vmul.f32 %v1153, %v1121
      %v1162 = vadd.f32 %v1154, -0.28449672
      %v1163 = vadd.f32 %v1155, -0.28449672
      %v1164 = vadd.f32 %v1156, -0.28449672
      %v1165 = vadd.f32 %v1157, -0.28449672
      %v1166 = vadd.f32 %v1158, -0.28449672
      %v1167 = vadd.f32 %v1159, -0.28449672
      %v1168 = vadd.f32 %v1160, -0.28449672
      %v1169 = vadd.f32 %v1161, -0.28449672
      %v1170 = vmul.f32 %v1162, %v1016
      %v1171 = vmul.f32 %v1163, %v1031
      %v1172 = vmul.f32 %v1164, %v1046
      %v1173 = vmul.f32 %v1165, %v1061
      %v1174 = vmul.f32 %v1166, %v1076
      %v1175 = vmul.f32 %v1167, %v1091
      %v1176 = vmul.f32 %v1168, %v1106
      %v1177 = vmul.f32 %v1169, %v1121
      %v1178 = vadd.f32 %v1170, 0.2548296
      %v1179 = vadd.f32 %v1171, 0.2548296
      %v1180 = vadd.f32 %v1172, 0.2548296
      %v1181 = vadd.f32 %v1173, 0.2548296
      %v1182 = vadd.f32 %v1174, 0.2548296
      %v1183 = vadd.f32 %v1175, 0.2548296
      %v1184 = vadd.f32 %v1176, 0.2548296
      %v1185 = vadd.f32 %v1177, 0.2548296
      %v1186 = vmul.f32 %v1178, %v1016
      %v1187 = vmul.f32 %v1179, %v1031
      %v1188 = vmul.f32 %v1180, %v1046
      %v1189 = vmul.f32 %v1181, %v1061
      %v1190 = vmul.f32 %v1182, %v1076
      %v1191 = vmul.f32 %v1183, %v1091
      %v1192 = vmul.f32 %v1184, %v1106
      %v1193 = vmul.f32 %v1185, %v1121
      %v1194 = vsub.f32 0.0, %v978
      %v1195 = vsub.f32 0.0, %v979
      %v1196 = vsub.f32 0.0, %v980
      %v1197 = vsub.f32 0.0, %v981
      %v1198 = vsub.f32 0.0, %v982
      %v1199 = vsub.f32 0.0, %v983
      %v1200 = vsub.f32 0.0, %v984
      %v1201 = vsub.f32 0.0, %v985
      %v1202 = vmul.f32 %v1194, %v978
      %v1203 = vmul.f32 %v1195, %v979
      %v1204 = vmul.f32 %v1196, %v980
      %v1205 = vmul.f32 %v1197, %v981
      %v1206 = vmul.f32 %v1198, %v982
      %v1207 = vmul.f32 %v1199, %v983
      %v1208 = vmul.f32 %v1200, %v984
      %v1209 = vmul.f32 %v1201, %v985
      %v1210 = vmul.f32 %v1202, 1.442695
      %v1211 = vpow.pop %v1210
      %v1212 = vmul.f32 %v1203, 1.442695
      %v1213 = vpow.pop %v1212
      %v1214 = vmul.f32 %v1204, 1.442695
      %v1215 = vpow.pop %v1214
      %v1216 = vmul.f32 %v1205, 1.442695
      %v1217 = vpow.pop %v1216
      %v1218 = vmul.f32 %v1206, 1.442695
      %v1219 = vpow.pop %v1218
      %v1220 = vmul.f32 %v1207, 1.442695
      %v1221 = vpow.pop %v1220
      %v1222 = vmul.f32 %v1208, 1.442695
      %v1223 = vpow.pop %v1222
      %v1224 = vmul.f32 %v1209, 1.442695
      %v1225 = vpow.pop %v1224
      %v1226 = vmul.f32 %v1186, %v1211
      %v1227 = vmul.f32 %v1187, %v1213
      %v1228 = vmul.f32 %v1188, %v1215
      %v1229 = vmul.f32 %v1189, %v1217
      %v1230 = vmul.f32 %v1190, %v1219
      %v1231 = vmul.f32 %v1191, %v1221
      %v1232 = vmul.f32 %v1192, %v1223
      %v1233 = vmul.f32 %v1193, %v1225
      %v1234 = vsub.f32 1.0, %v1226
      %v1235 = vsub.f32 1.0, %v1227
      %v1236 = vsub.f32 1.0, %v1228
      %v1237 = vsub.f32 1.0, %v1229
      %v1238 = vsub.f32 1.0, %v1230
      %v1239 = vsub.f32 1.0, %v1231
      %v1240 = vsub.f32 1.0, %v1232
      %v1241 = vsub.f32 1.0, %v1233
      %vm1242 = vcmp.ge.f32.partialorder %v970, 0.0
      %vm1243 = vcmp.ge.f32.partialorder %v971, 0.0
      %vm1244 = vcmp.ge.f32.partialorder %v972, 0.0
      %vm1245 = vcmp.ge.f32.partialorder %v973, 0.0
      %vm1246 = vcmp.ge.f32.partialorder %v974, 0.0
      %vm1247 = vcmp.ge.f32.partialorder %v975, 0.0
      %vm1248 = vcmp.ge.f32.partialorder %v976, 0.0
      %vm1249 = vcmp.ge.f32.partialorder %v977, 0.0
      %v1250 = vsub.f32 0.0, %v1234
      %v1251 = vsub.f32 0.0, %v1235
      %v1252 = vsub.f32 0.0, %v1236
      %v1253 = vsub.f32 0.0, %v1237
      %v1254 = vsub.f32 0.0, %v1238
      %v1255 = vsub.f32 0.0, %v1239
      %v1256 = vsub.f32 0.0, %v1240
      %v1257 = vsub.f32 0.0, %v1241
      %v1258 = vsel %vm1242, %v1234, %v1250
      %v1259 = vsel %vm1243, %v1235, %v1251
      %v1260 = vsel %vm1244, %v1236, %v1252
      %v1261 = vsel %vm1245, %v1237, %v1253
      %v1262 = vsel %vm1246, %v1238, %v1254
      %v1263 = vsel %vm1247, %v1239, %v1255
      %v1264 = vsel %vm1248, %v1240, %v1256
      %v1265 = vsel %vm1249, %v1241, %v1257
      %v1266 = vadd.f32 %v1258, 1.0
      %v1267 = vadd.f32 %v1259, 1.0
      %v1268 = vadd.f32 %v1260, 1.0
      %v1269 = vadd.f32 %v1261, 1.0
      %v1270 = vadd.f32 %v1262, 1.0
      %v1271 = vadd.f32 %v1263, 1.0
      %v1272 = vadd.f32 %v1264, 1.0
      %v1273 = vadd.f32 %v1265, 1.0
      %v1274 = vmul.f32 %v962, %v1266
      %v1275 = vmul.f32 %v963, %v1267
      %v1276 = vmul.f32 %v964, %v1268
      %v1277 = vmul.f32 %v965, %v1269
      %v1278 = vmul.f32 %v966, %v1270
      %v1279 = vmul.f32 %v967, %v1271
      %v1280 = vmul.f32 %v968, %v1272
      %v1281 = vmul.f32 %v969, %v1273
      %v1282 = vld [vmem:[%s239] sm:$0xff]
      %v1283 = vld [vmem:[%s239 + $0x8] sm:$0xff]
      %v1284 = vld [vmem:[%s239 + $0x10] sm:$0xff]
      %v1285 = vld [vmem:[%s239 + $0x18] sm:$0xff]
      %v1286 = vld [vmem:[%s239 + $0x20] sm:$0xff]
      %v1287 = vld [vmem:[%s239 + $0x28] sm:$0xff]
      %v1288 = vld [vmem:[%s239 + $0x30] sm:$0xff]
      %v1289 = vld [vmem:[%s239 + $0x38] sm:$0xff]
      %v1290 = vadd.f32 %v1274, %v1282
      %v1291 = vadd.f32 %v1275, %v1283
      %v1292 = vadd.f32 %v1276, %v1284
      %v1293 = vadd.f32 %v1277, %v1285
      %v1294 = vadd.f32 %v1278, %v1286
      %v1295 = vadd.f32 %v1279, %v1287
      %v1296 = vadd.f32 %v1280, %v1288
      %v1297 = vadd.f32 %v1281, %v1289
      %vm1298 = vcmask 130048
      %1299 = vst.msk [vmem:[%s244] sm:$0xff] %vm1298, %v1290
      %1300 = vst.msk [vmem:[%s244 + $0x8] sm:$0xff] %vm1298, %v1291
      %1301 = vst.msk [vmem:[%s244 + $0x10] sm:$0xff] %vm1298, %v1292
      %1302 = vst.msk [vmem:[%s244 + $0x18] sm:$0xff] %vm1298, %v1293
      %1303 = vst.msk [vmem:[%s244 + $0x20] sm:$0xff] %vm1298, %v1294
      %1304 = vst.msk [vmem:[%s244 + $0x28] sm:$0xff] %vm1298, %v1295
      %1305 = vst.msk [vmem:[%s244 + $0x30] sm:$0xff] %vm1298, %v1296
      %1306 = vst.msk [vmem:[%s244 + $0x38] sm:$0xff] %vm1298, %v1297
      %p1307 = scmp.lt.s32.totalorder %s16, 1
      %s1308 = scalar_select %p1307, %s16, 1
      %s1309 = smul.addr %s1308, 8
      %s1310 = smul.addr %s1309, 8
      %s1311 = scalar_lea.vmem %s5, %s1310
      // Predicated region
      $region41: #{cvta_forward.15} parent=39 // pred_check
        %p1312 = pneg %p149
      $region42: #{cvta_forward.15} parent=39 // pred_check_branch
        %1314 = sbr.rel (%p1312) target = $region44
      $region43: #{cvta_forward.15} parent=39 // pred_region
        _
      $region44: #{cvta_forward.15} parent=39 // pred_fallthru
        _
    $region40: #{cvta_forward.15} parent=5 // pred_fallthru
      _
    %p1315 = scmp.le.s32.totalorder 2, %s11
    // Predicated region
    $region45: #{cvta_forward.15} parent=5 // pred_check
      %p1316 = pneg %p1315
    $region46: #{cvta_forward.15} parent=5 // pred_check_branch
      %1318 = sbr.rel (%p1316) target = $region48
    $region47: #{cvta_forward.15} parent=5 // pred_region
      %s1319 = ssub.s32 %s11, 2
      // Predicated region
      $region49: #{cvta_forward.15} parent=47 // pred_check
        %p1320 = pneg %p155
      $region50: #{cvta_forward.15} parent=47 // pred_check_branch
        %1322 = sbr.rel (%p1320) target = $region52
      $region51: #{cvta_forward.15} parent=47 // pred_region
        %p1323 = scmp.lt.s32.totalorder %s17, 1
        %s1324 = scalar_select %p1323, %s17, 1
        %s1325 = smul.addr %s1324, 8
        %s1326 = smul.addr %s1325, 8
        %s1327 = scalar_lea.vmem %s5, %s1326
      $region52: #{cvta_forward.15} parent=47 // pred_fallthru
        _
    $region48: #{cvta_forward.15} parent=5 // pred_fallthru
      _
  $region6: #{cvta_forward.15} parent=0 // loop_footer
    %s15 = sadd.s32 1, %s11
  $region7: #{cvta_forward.15} parent=0 // loop_footer_branch
    %10 = sbr.rel target = $region3
  $region8: #{cvta_forward.15} parent=0 // loop_exit
    _

// kernel: cvta_forward.17
$region0: #{cvta_forward.17}
  #allocation0 [shape = 'u32[]', space=smem, size = 0x4, offset = 0x4, fixed_abs, tag = 'smem constant byte address 0x4 - core index']
  #allocation1 [shape = 'u32[72,128]{1,0:T(1,128)}', space=vmem, size = 0x9000, scoped, tag = 'internal scratch']
  %s0 = inlined_call_operand.vmem [shape: f32[128,32], index: 0, kind: input, shape index: {}]
  %s1 = inlined_call_operand.vmem [shape: bf16[32,32], index: 1, kind: input, shape index: {}]
  %s2 = inlined_call_operand.vmem [shape: f32[1,32], index: 2, kind: input, shape index: {}]
  %s3 = inlined_call_operand.vmem [shape: f32[1,32], index: 3, kind: input, shape index: {}]
  %s4 = inlined_call_operand.hbm [shape: f32[128,32], index: 4, kind: output, shape index: {}]
  %s5 = sld [smem:[#allocation0]]
  $region26: #{cvta_forward.17} parent=0
    _
  %s7 = ssub.s32 1, %s5
  %s8 = scalar_select 0, %s7, %s5
  $region1: #{cvta_forward.17} parent=0
    #allocation2 [shape = 'u8[65536]{0}', space=vmem, size = 0x10000, scoped, tag = 'output window, operand 0, single buffered']
    #allocation3 [shape = 's32[1]{0}', space=sflag, size = 0x4, scoped, tag = 'scoped memory for cvta_forward.17']
    %9 = vsyncpa [#allocation3], 0
    // Predicated region
    $region2: #{cvta_forward.17} parent=1 // pred_check
      _
    $region3: #{cvta_forward.17} parent=1 // pred_check_branch
      %11 = sbr.rel (0) target = $region5
    $region4: #{cvta_forward.17} parent=1 // pred_region
      _
    $region5: #{cvta_forward.17} parent=1 // pred_fallthru
      _
    // Predicated region
    $region6: #{cvta_forward.17} parent=1 // pred_check
      _
    $region7: #{cvta_forward.17} parent=1 // pred_check_branch
      %13 = sbr.rel (0) target = $region9
    $region8: #{cvta_forward.17} parent=1 // pred_region
      _
    $region9: #{cvta_forward.17} parent=1 // pred_fallthru
      _
    // Predicated region
    $region10: #{cvta_forward.17} parent=1 // pred_check
      _
    $region11: #{cvta_forward.17} parent=1 // pred_check_branch
      %15 = sbr.rel (0) target = $region13
    $region12: #{cvta_forward.17} parent=1 // pred_region
      _
    $region13: #{cvta_forward.17} parent=1 // pred_fallthru
      _
    // Predicated region
    $region14: #{cvta_forward.17} parent=1 // pred_check
      _
    $region15: #{cvta_forward.17} parent=1 // pred_check_branch
      %17 = sbr.rel (0) target = $region17
    $region16: #{cvta_forward.17} parent=1 // pred_region
      _
    $region17: #{cvta_forward.17} parent=1 // pred_fallthru
      _
    %v19 = vld [vmem:[%s0] sm:$0xff]
    %v20 = vld [vmem:[%s0 + $0x8] sm:$0xff]
    %v21 = vld [vmem:[%s0 + $0x10] sm:$0xff]
    %v22 = vld [vmem:[%s0 + $0x18] sm:$0xff]
    %v23 = vld [vmem:[%s0 + $0x20] sm:$0xff]
    %v24 = vld [vmem:[%s0 + $0x28] sm:$0xff]
    %v25 = vld [vmem:[%s0 + $0x30] sm:$0xff]
    %v26 = vld [vmem:[%s0 + $0x38] sm:$0xff]
    %v27 = vld [vmem:[%s0 + $0x40] sm:$0xff]
    %v28 = vld [vmem:[%s0 + $0x48] sm:$0xff]
    %v29 = vld [vmem:[%s0 + $0x50] sm:$0xff]
    %v30 = vld [vmem:[%s0 + $0x58] sm:$0xff]
    %v31 = vld [vmem:[%s0 + $0x60] sm:$0xff]
    %v32 = vld [vmem:[%s0 + $0x68] sm:$0xff]
    %v33 = vld [vmem:[%s0 + $0x70] sm:$0xff]
    %v34 = vld [vmem:[%s0 + $0x78] sm:$0xff]
    %v35 = vpack.c.bf16 %v20, %v19
    %v36 = vpack.c.bf16 %v22, %v21
    %v37 = vpack.c.bf16 %v24, %v23
    %v38 = vpack.c.bf16 %v26, %v25
    %v39 = vpack.c.bf16 %v28, %v27
    %v40 = vpack.c.bf16 %v30, %v29
    %v41 = vpack.c.bf16 %v32, %v31
    %v42 = vpack.c.bf16 %v34, %v33
    %v43 = vld [vmem:[%s1] sm:$0xf]
    %v44 = vld [vmem:[%s1 + $0x4] sm:$0xf]
    %v45 = vld [vmem:[%s1 + $0x8] sm:$0xf]
    %v46 = vld [vmem:[%s1 + $0xc] sm:$0xf]
    %v51 = vunpack.c.l.b16 %v43
    %v52 = vunpack.c.l.b16 %v44
    %v53 = vunpack.c.l.b16 %v45
    %v54 = vunpack.c.l.b16 %v46
    %v55 = vpack.c.b16 %v52, %v51
    %v56 = vpack.c.b16 %v54, %v53
    %vm59 = vcmask 261120
    %v61 = vsel %vm59, %v35, 0
    %v64 = vsel %vm59, %v36, 0
    %v67 = vsel %vm59, %v37, 0
    %v70 = vsel %vm59, %v38, 0
    %v73 = vsel %vm59, %v39, 0
    %v76 = vsel %vm59, %v40, 0
    %v79 = vsel %vm59, %v41, 0
    %v82 = vsel %vm59, %v42, 0
    %84 = vmatpush.bf16.msra.mxu0 0
    %85 = vmatpush.bf16.msra.mxu0 0
    %86 = vmatpush.bf16.msra.mxu0 0
    %87 = vmatpush.bf16.msra.mxu0 0
    %88 = vmatpush.bf16.msra.mxu0 0
    %89 = vmatpush.bf16.msra.mxu0 0
    %90 = vmatpush.bf16.msra.mxu0 %v56
    %91 = vmatpush.bf16.msra.mxu0 %v55
    %92 = vmatmul.bf16.gmra.mxu0 %v61
    %v93 = vpop.f32.mrf.mxu0
    %v94 = vadd.f32 0.0, %v93
    %v95 = vpop.f32.mrf.mxu0
    %v96 = vadd.f32 0.0, %v95
    %97 = vmatmul.bf16.gmra.mxu0 %v64
    %v98 = vpop.f32.mrf.mxu0
    %v99 = vadd.f32 0.0, %v98
    %v100 = vpop.f32.mrf.mxu0
    %v101 = vadd.f32 0.0, %v100
    %102 = vmatmul.bf16.gmra.mxu0 %v67
    %v103 = vpop.f32.mrf.mxu0
    %v104 = vadd.f32 0.0, %v103
    %v105 = vpop.f32.mrf.mxu0
    %v106 = vadd.f32 0.0, %v105
    %107 = vmatmul.bf16.gmra.mxu0 %v70
    %v108 = vpop.f32.mrf.mxu0
    %v109 = vadd.f32 0.0, %v108
    %v110 = vpop.f32.mrf.mxu0
    %v111 = vadd.f32 0.0, %v110
    %112 = vmatmul.bf16.gmra.mxu0 %v73
    %v113 = vpop.f32.mrf.mxu0
    %v114 = vadd.f32 0.0, %v113
    %v115 = vpop.f32.mrf.mxu0
    %v116 = vadd.f32 0.0, %v115
    %117 = vmatmul.bf16.gmra.mxu0 %v76
    %v118 = vpop.f32.mrf.mxu0
    %v119 = vadd.f32 0.0, %v118
    %v120 = vpop.f32.mrf.mxu0
    %v121 = vadd.f32 0.0, %v120
    %122 = vmatmul.bf16.gmra.mxu0 %v79
    %v123 = vpop.f32.mrf.mxu0
    %v124 = vadd.f32 0.0, %v123
    %v125 = vpop.f32.mrf.mxu0
    %v126 = vadd.f32 0.0, %v125
    %127 = vmatmul.bf16.gmra.mxu0 %v82
    %v128 = vpop.f32.mrf.mxu0
    %v129 = vadd.f32 0.0, %v128
    %v130 = vpop.f32.mrf.mxu0
    %v131 = vadd.f32 0.0, %v130
    %132 = vdwg.mxu0
    %v133 = vld [vmem:[%s2] sm:$0x1]
    %v135 = vperm.slane %v133, 0
    %v137 = vmul.f32 %v94, %v135
    %v138 = vmul.f32 %v96, %v135
    %v139 = vmul.f32 %v99, %v135
    %v140 = vmul.f32 %v101, %v135
    %v141 = vmul.f32 %v104, %v135
    %v142 = vmul.f32 %v106, %v135
    %v143 = vmul.f32 %v109, %v135
    %v144 = vmul.f32 %v111, %v135
    %v145 = vmul.f32 %v114, %v135
    %v146 = vmul.f32 %v116, %v135
    %v147 = vmul.f32 %v119, %v135
    %v148 = vmul.f32 %v121, %v135
    %v149 = vmul.f32 %v124, %v135
    %v150 = vmul.f32 %v126, %v135
    %v151 = vmul.f32 %v129, %v135
    %v152 = vmul.f32 %v131, %v135
    %v153 = vld [vmem:[%s3] sm:$0x1]
    %v155 = vperm.slane %v153, 0
    %v157 = vadd.f32 %v137, %v155
    %v158 = vadd.f32 %v138, %v155
    %v159 = vadd.f32 %v139, %v155
    %v160 = vadd.f32 %v140, %v155
    %v161 = vadd.f32 %v141, %v155
    %v162 = vadd.f32 %v142, %v155
    %v163 = vadd.f32 %v143, %v155
    %v164 = vadd.f32 %v144, %v155
    %v165 = vadd.f32 %v145, %v155
    %v166 = vadd.f32 %v146, %v155
    %v167 = vadd.f32 %v147, %v155
    %v168 = vadd.f32 %v148, %v155
    %v169 = vadd.f32 %v149, %v155
    %v170 = vadd.f32 %v150, %v155
    %v171 = vadd.f32 %v151, %v155
    %v172 = vadd.f32 %v152, %v155
    %v173 = vmul.f32 %v157, 0.5
    %v174 = vmul.f32 %v158, 0.5
    %v175 = vmul.f32 %v159, 0.5
    %v176 = vmul.f32 %v160, 0.5
    %v177 = vmul.f32 %v161, 0.5
    %v178 = vmul.f32 %v162, 0.5
    %v179 = vmul.f32 %v163, 0.5
    %v180 = vmul.f32 %v164, 0.5
    %v181 = vmul.f32 %v165, 0.5
    %v182 = vmul.f32 %v166, 0.5
    %v183 = vmul.f32 %v167, 0.5
    %v184 = vmul.f32 %v168, 0.5
    %v185 = vmul.f32 %v169, 0.5
    %v186 = vmul.f32 %v170, 0.5
    %v187 = vmul.f32 %v171, 0.5
    %v188 = vmul.f32 %v172, 0.5
    %v189 = vmul.f32 %v157, 0.70710677
    %v190 = vmul.f32 %v158, 0.70710677
    %v191 = vmul.f32 %v159, 0.70710677
    %v192 = vmul.f32 %v160, 0.70710677
    %v193 = vmul.f32 %v161, 0.70710677
    %v194 = vmul.f32 %v162, 0.70710677
    %v195 = vmul.f32 %v163, 0.70710677
    %v196 = vmul.f32 %v164, 0.70710677
    %v197 = vmul.f32 %v165, 0.70710677
    %v198 = vmul.f32 %v166, 0.70710677
    %v199 = vmul.f32 %v167, 0.70710677
    %v200 = vmul.f32 %v168, 0.70710677
    %v201 = vmul.f32 %v169, 0.70710677
    %v202 = vmul.f32 %v170, 0.70710677
    %v203 = vmul.f32 %v171, 0.70710677
    %v204 = vmul.f32 %v172, 0.70710677
    %v205 = vand.u32 2147483647, %v189
    %v206 = vand.u32 2147483647, %v190
    %v207 = vand.u32 2147483647, %v191
    %v208 = vand.u32 2147483647, %v192
    %v209 = vand.u32 2147483647, %v193
    %v210 = vand.u32 2147483647, %v194
    %v211 = vand.u32 2147483647, %v195
    %v212 = vand.u32 2147483647, %v196
    %v213 = vand.u32 2147483647, %v197
    %v214 = vand.u32 2147483647, %v198
    %v215 = vand.u32 2147483647, %v199
    %v216 = vand.u32 2147483647, %v200
    %v217 = vand.u32 2147483647, %v201
    %v218 = vand.u32 2147483647, %v202
    %v219 = vand.u32 2147483647, %v203
    %v220 = vand.u32 2147483647, %v204
    %v221 = vmul.f32 %v205, 0.3275911
    %v222 = vmul.f32 %v206, 0.3275911
    %v223 = vmul.f32 %v207, 0.3275911
    %v224 = vmul.f32 %v208, 0.3275911
    %v225 = vmul.f32 %v209, 0.3275911
    %v226 = vmul.f32 %v210, 0.3275911
    %v227 = vmul.f32 %v211, 0.3275911
    %v228 = vmul.f32 %v212, 0.3275911
    %v229 = vmul.f32 %v213, 0.3275911
    %v230 = vmul.f32 %v214, 0.3275911
    %v231 = vmul.f32 %v215, 0.3275911
    %v232 = vmul.f32 %v216, 0.3275911
    %v233 = vmul.f32 %v217, 0.3275911
    %v234 = vmul.f32 %v218, 0.3275911
    %v235 = vmul.f32 %v219, 0.3275911
    %v236 = vmul.f32 %v220, 0.3275911
    %v237 = vadd.f32 %v221, 1.0
    %v238 = vadd.f32 %v222, 1.0
    %v239 = vadd.f32 %v223, 1.0
    %v240 = vadd.f32 %v224, 1.0
    %v241 = vadd.f32 %v225, 1.0
    %v242 = vadd.f32 %v226, 1.0
    %v243 = vadd.f32 %v227, 1.0
    %v244 = vadd.f32 %v228, 1.0
    %v245 = vadd.f32 %v229, 1.0
    %v246 = vadd.f32 %v230, 1.0
    %v247 = vadd.f32 %v231, 1.0
    %v248 = vadd.f32 %v232, 1.0
    %v249 = vadd.f32 %v233, 1.0
    %v250 = vadd.f32 %v234, 1.0
    %v251 = vadd.f32 %v235, 1.0
    %v252 = vadd.f32 %v236, 1.0
    %v253 = vrcp.pop %v237
    %v254 = vmul.f32 %v237, %v253
    %v255 = vsub.f32 1.0, %v254
    %v256 = vmul.f32 %v253, %v255
    %v257 = vadd.f32 %v253, %v256
    %vm258 = vweird.f32 %v237
    %vm259 = vweird.f32 %v253
    %vm260 = vmor %vm258, %vm259
    %v261 = vsel %vm260, %v253, %v257
    %v262 = vand.u32 2147483647, %v237
    %vm263 = vcmp.eq.f32.partialorder %v262, 8.507059e+37
    %v264 = vand.u32 %v237, 2147483648
    %v265 = vor.u32 1.1754944e-38, %v264
    %v266 = vsel %vm263, %v265, %v261
    %v267 = vmul.f32 1.0, %v266
    %v268 = vrcp.pop %v238
    %v269 = vmul.f32 %v238, %v268
    %v270 = vsub.f32 1.0, %v269
    %v271 = vmul.f32 %v268, %v270
    %v272 = vadd.f32 %v268, %v271
    %vm273 = vweird.f32 %v238
    %vm274 = vweird.f32 %v268
    %vm275 = vmor %vm273, %vm274
    %v276 = vsel %vm275, %v268, %v272
    %v277 = vand.u32 2147483647, %v238
    %vm278 = vcmp.eq.f32.partialorder %v277, 8.507059e+37
    %v279 = vand.u32 %v238, 2147483648
    %v280 = vor.u32 1.1754944e-38, %v279
    %v281 = vsel %vm278, %v280, %v276
    %v282 = vmul.f32 1.0, %v281
    %v283 = vrcp.pop %v239
    %v284 = vmul.f32 %v239, %v283
    %v285 = vsub.f32 1.0, %v284
    %v286 = vmul.f32 %v283, %v285
    %v287 = vadd.f32 %v283, %v286
    %vm288 = vweird.f32 %v239
    %vm289 = vweird.f32 %v283
    %vm290 = vmor %vm288, %vm289
    %v291 = vsel %vm290, %v283, %v287
    %v292 = vand.u32 2147483647, %v239
    %vm293 = vcmp.eq.f32.partialorder %v292, 8.507059e+37
    %v294 = vand.u32 %v239, 2147483648
    %v295 = vor.u32 1.1754944e-38, %v294
    %v296 = vsel %vm293, %v295, %v291
    %v297 = vmul.f32 1.0, %v296
    %v298 = vrcp.pop %v240
    %v299 = vmul.f32 %v240, %v298
    %v300 = vsub.f32 1.0, %v299
    %v301 = vmul.f32 %v298, %v300
    %v302 = vadd.f32 %v298, %v301
    %vm303 = vweird.f32 %v240
    %vm304 = vweird.f32 %v298
    %vm305 = vmor %vm303, %vm304
    %v306 = vsel %vm305, %v298, %v302
    %v307 = vand.u32 2147483647, %v240
    %vm308 = vcmp.eq.f32.partialorder %v307, 8.507059e+37
    %v309 = vand.u32 %v240, 2147483648
    %v310 = vor.u32 1.1754944e-38, %v309
    %v311 = vsel %vm308, %v310, %v306
    %v312 = vmul.f32 1.0, %v311
    %v313 = vrcp.pop %v241
    %v314 = vmul.f32 %v241, %v313
    %v315 = vsub.f32 1.0, %v314
    %v316 = vmul.f32 %v313, %v315
    %v317 = vadd.f32 %v313, %v316
    %vm318 = vweird.f32 %v241
    %vm319 = vweird.f32 %v313
    %vm320 = vmor %vm318, %vm319
    %v321 = vsel %vm320, %v313, %v317
    %v322 = vand.u32 2147483647, %v241
    %vm323 = vcmp.eq.f32.partialorder %v322, 8.507059e+37
    %v324 = vand.u32 %v241, 2147483648
    %v325 = vor.u32 1.1754944e-38, %v324
    %v326 = vsel %vm323, %v325, %v321
    %v327 = vmul.f32 1.0, %v326
    %v328 = vrcp.pop %v242
    %v329 = vmul.f32 %v242, %v328
    %v330 = vsub.f32 1.0, %v329
    %v331 = vmul.f32 %v328, %v330
    %v332 = vadd.f32 %v328, %v331
    %vm333 = vweird.f32 %v242
    %vm334 = vweird.f32 %v328
    %vm335 = vmor %vm333, %vm334
    %v336 = vsel %vm335, %v328, %v332
    %v337 = vand.u32 2147483647, %v242
    %vm338 = vcmp.eq.f32.partialorder %v337, 8.507059e+37
    %v339 = vand.u32 %v242, 2147483648
    %v340 = vor.u32 1.1754944e-38, %v339
    %v341 = vsel %vm338, %v340, %v336
    %v342 = vmul.f32 1.0, %v341
    %v343 = vrcp.pop %v243
    %v344 = vmul.f32 %v243, %v343
    %v345 = vsub.f32 1.0, %v344
    %v346 = vmul.f32 %v343, %v345
    %v347 = vadd.f32 %v343, %v346
    %vm348 = vweird.f32 %v243
    %vm349 = vweird.f32 %v343
    %vm350 = vmor %vm348, %vm349
    %v351 = vsel %vm350, %v343, %v347
    %v352 = vand.u32 2147483647, %v243
    %vm353 = vcmp.eq.f32.partialorder %v352, 8.507059e+37
    %v354 = vand.u32 %v243, 2147483648
    %v355 = vor.u32 1.1754944e-38, %v354
    %v356 = vsel %vm353, %v355, %v351
    %v357 = vmul.f32 1.0, %v356
    %v358 = vrcp.pop %v244
    %v359 = vmul.f32 %v244, %v358
    %v360 = vsub.f32 1.0, %v359
    %v361 = vmul.f32 %v358, %v360
    %v362 = vadd.f32 %v358, %v361
    %vm363 = vweird.f32 %v244
    %vm364 = vweird.f32 %v358
    %vm365 = vmor %vm363, %vm364
    %v366 = vsel %vm365, %v358, %v362
    %v367 = vand.u32 2147483647, %v244
    %vm368 = vcmp.eq.f32.partialorder %v367, 8.507059e+37
    %v369 = vand.u32 %v244, 2147483648
    %v370 = vor.u32 1.1754944e-38, %v369
    %v371 = vsel %vm368, %v370, %v366
    %v372 = vmul.f32 1.0, %v371
    %v373 = vrcp.pop %v245
    %v374 = vmul.f32 %v245, %v373
    %v375 = vsub.f32 1.0, %v374
    %v376 = vmul.f32 %v373, %v375
    %v377 = vadd.f32 %v373, %v376
    %vm378 = vweird.f32 %v245
    %vm379 = vweird.f32 %v373
    %vm380 = vmor %vm378, %vm379
    %v381 = vsel %vm380, %v373, %v377
    %v382 = vand.u32 2147483647, %v245
    %vm383 = vcmp.eq.f32.partialorder %v382, 8.507059e+37
    %v384 = vand.u32 %v245, 2147483648
    %v385 = vor.u32 1.1754944e-38, %v384
    %v386 = vsel %vm383, %v385, %v381
    %v387 = vmul.f32 1.0, %v386
    %v388 = vrcp.pop %v246
    %v389 = vmul.f32 %v246, %v388
    %v390 = vsub.f32 1.0, %v389
    %v391 = vmul.f32 %v388, %v390
    %v392 = vadd.f32 %v388, %v391
    %vm393 = vweird.f32 %v246
    %vm394 = vweird.f32 %v388
    %vm395 = vmor %vm393, %vm394
    %v396 = vsel %vm395, %v388, %v392
    %v397 = vand.u32 2147483647, %v246
    %vm398 = vcmp.eq.f32.partialorder %v397, 8.507059e+37
    %v399 = vand.u32 %v246, 2147483648
    %v400 = vor.u32 1.1754944e-38, %v399
    %v401 = vsel %vm398, %v400, %v396
    %v402 = vmul.f32 1.0, %v401
    %v403 = vrcp.pop %v247
    %v404 = vmul.f32 %v247, %v403
    %v405 = vsub.f32 1.0, %v404
    %v406 = vmul.f32 %v403, %v405
    %v407 = vadd.f32 %v403, %v406
    %vm408 = vweird.f32 %v247
    %vm409 = vweird.f32 %v403
    %vm410 = vmor %vm408, %vm409
    %v411 = vsel %vm410, %v403, %v407
    %v412 = vand.u32 2147483647, %v247
    %vm413 = vcmp.eq.f32.partialorder %v412, 8.507059e+37
    %v414 = vand.u32 %v247, 2147483648
    %v415 = vor.u32 1.1754944e-38, %v414
    %v416 = vsel %vm413, %v415, %v411
    %v417 = vmul.f32 1.0, %v416
    %v418 = vrcp.pop %v248
    %v419 = vmul.f32 %v248, %v418
    %v420 = vsub.f32 1.0, %v419
    %v421 = vmul.f32 %v418, %v420
    %v422 = vadd.f32 %v418, %v421
    %vm423 = vweird.f32 %v248
    %vm424 = vweird.f32 %v418
    %vm425 = vmor %vm423, %vm424
    %v426 = vsel %vm425, %v418, %v422
    %v427 = vand.u32 2147483647, %v248
    %vm428 = vcmp.eq.f32.partialorder %v427, 8.507059e+37
    %v429 = vand.u32 %v248, 2147483648
    %v430 = vor.u32 1.1754944e-38, %v429
    %v431 = vsel %vm428, %v430, %v426
    %v432 = vmul.f32 1.0, %v431
    %v433 = vrcp.pop %v249
    %v434 = vmul.f32 %v249, %v433
    %v435 = vsub.f32 1.0, %v434
    %v436 = vmul.f32 %v433, %v435
    %v437 = vadd.f32 %v433, %v436
    %vm438 = vweird.f32 %v249
    %vm439 = vweird.f32 %v433
    %vm440 = vmor %vm438, %vm439
    %v441 = vsel %vm440, %v433, %v437
    %v442 = vand.u32 2147483647, %v249
    %vm443 = vcmp.eq.f32.partialorder %v442, 8.507059e+37
    %v444 = vand.u32 %v249, 2147483648
    %v445 = vor.u32 1.1754944e-38, %v444
    %v446 = vsel %vm443, %v445, %v441
    %v447 = vmul.f32 1.0, %v446
    %v448 = vrcp.pop %v250
    %v449 = vmul.f32 %v250, %v448
    %v450 = vsub.f32 1.0, %v449
    %v451 = vmul.f32 %v448, %v450
    %v452 = vadd.f32 %v448, %v451
    %vm453 = vweird.f32 %v250
    %vm454 = vweird.f32 %v448
    %vm455 = vmor %vm453, %vm454
    %v456 = vsel %vm455, %v448, %v452
    %v457 = vand.u32 2147483647, %v250
    %vm458 = vcmp.eq.f32.partialorder %v457, 8.507059e+37
    %v459 = vand.u32 %v250, 2147483648
    %v460 = vor.u32 1.1754944e-38, %v459
    %v461 = vsel %vm458, %v460, %v456
    %v462 = vmul.f32 1.0, %v461
    %v463 = vrcp.pop %v251
    %v464 = vmul.f32 %v251, %v463
    %v465 = vsub.f32 1.0, %v464
    %v466 = vmul.f32 %v463, %v465
    %v467 = vadd.f32 %v463, %v466
    %vm468 = vweird.f32 %v251
    %vm469 = vweird.f32 %v463
    %vm470 = vmor %vm468, %vm469
    %v471 = vsel %vm470, %v463, %v467
    %v472 = vand.u32 2147483647, %v251
    %vm473 = vcmp.eq.f32.partialorder %v472, 8.507059e+37
    %v474 = vand.u32 %v251, 2147483648
    %v475 = vor.u32 1.1754944e-38, %v474
    %v476 = vsel %vm473, %v475, %v471
    %v477 = vmul.f32 1.0, %v476
    %v478 = vrcp.pop %v252
    %v479 = vmul.f32 %v252, %v478
    %v480 = vsub.f32 1.0, %v479
    %v481 = vmul.f32 %v478, %v480
    %v482 = vadd.f32 %v478, %v481
    %vm483 = vweird.f32 %v252
    %vm484 = vweird.f32 %v478
    %vm485 = vmor %vm483, %vm484
    %v486 = vsel %vm485, %v478, %v482
    %v487 = vand.u32 2147483647, %v252
    %vm488 = vcmp.eq.f32.partialorder %v487, 8.507059e+37
    %v489 = vand.u32 %v252, 2147483648
    %v490 = vor.u32 1.1754944e-38, %v489
    %v491 = vsel %vm488, %v490, %v486
    %v492 = vmul.f32 1.0, %v491
    %v493 = vmul.f32 %v267, 1.0614054
    %v494 = vmul.f32 %v282, 1.0614054
    %v495 = vmul.f32 %v297, 1.0614054
    %v496 = vmul.f32 %v312, 1.0614054
    %v497 = vmul.f32 %v327, 1.0614054
    %v498 = vmul.f32 %v342, 1.0614054
    %v499 = vmul.f32 %v357, 1.0614054
    %v500 = vmul.f32 %v372, 1.0614054
    %v501 = vmul.f32 %v387, 1.0614054
    %v502 = vmul.f32 %v402, 1.0614054
    %v503 = vmul.f32 %v417, 1.0614054
    %v504 = vmul.f32 %v432, 1.0614054
    %v505 = vmul.f32 %v447, 1.0614054
    %v506 = vmul.f32 %v462, 1.0614054
    %v507 = vmul.f32 %v477, 1.0614054
    %v508 = vmul.f32 %v492, 1.0614054
    %v509 = vadd.f32 %v493, -1.4531521
    %v510 = vadd.f32 %v494, -1.4531521
    %v511 = vadd.f32 %v495, -1.4531521
    %v512 = vadd.f32 %v496, -1.4531521
    %v513 = vadd.f32 %v497, -1.4531521
    %v514 = vadd.f32 %v498, -1.4531521
    %v515 = vadd.f32 %v499, -1.4531521
    %v516 = vadd.f32 %v500, -1.4531521
    %v517 = vadd.f32 %v501, -1.4531521
    %v518 = vadd.f32 %v502, -1.4531521
    %v519 = vadd.f32 %v503, -1.4531521
    %v520 = vadd.f32 %v504, -1.4531521
    %v521 = vadd.f32 %v505, -1.4531521
    %v522 = vadd.f32 %v506, -1.4531521
    %v523 = vadd.f32 %v507, -1.4531521
    %v524 = vadd.f32 %v508, -1.4531521
    %v525 = vmul.f32 %v509, %v267
    %v526 = vmul.f32 %v510, %v282
    %v527 = vmul.f32 %v511, %v297
    %v528 = vmul.f32 %v512, %v312
    %v529 = vmul.f32 %v513, %v327
    %v530 = vmul.f32 %v514, %v342
    %v531 = vmul.f32 %v515, %v357
    %v532 = vmul.f32 %v516, %v372
    %v533 = vmul.f32 %v517, %v387
    %v534 = vmul.f32 %v518, %v402
    %v535 = vmul.f32 %v519, %v417
    %v536 = vmul.f32 %v520, %v432
    %v537 = vmul.f32 %v521, %v447
    %v538 = vmul.f32 %v522, %v462
    %v539 = vmul.f32 %v523, %v477
    %v540 = vmul.f32 %v524, %v492
    %v541 = vadd.f32 %v525, 1.4214138
    %v542 = vadd.f32 %v526, 1.4214138
    %v543 = vadd.f32 %v527, 1.4214138
    %v544 = vadd.f32 %v528, 1.4214138
    %v545 = vadd.f32 %v529, 1.4214138
    %v546 = vadd.f32 %v530, 1.4214138
    %v547 = vadd.f32 %v531, 1.4214138
    %v548 = vadd.f32 %v532, 1.4214138
    %v549 = vadd.f32 %v533, 1.4214138
    %v550 = vadd.f32 %v534, 1.4214138
    %v551 = vadd.f32 %v535, 1.4214138
    %v552 = vadd.f32 %v536, 1.4214138
    %v553 = vadd.f32 %v537, 1.4214138
    %v554 = vadd.f32 %v538, 1.4214138
    %v555 = vadd.f32 %v539, 1.4214138
    %v556 = vadd.f32 %v540, 1.4214138
    %v557 = vmul.f32 %v541, %v267
    %v558 = vmul.f32 %v542, %v282
    %v559 = vmul.f32 %v543, %v297
    %v560 = vmul.f32 %v544, %v312
    %v561 = vmul.f32 %v545, %v327
    %v562 = vmul.f32 %v546, %v342
    %v563 = vmul.f32 %v547, %v357
    %v564 = vmul.f32 %v548, %v372
    %v565 = vmul.f32 %v549, %v387
    %v566 = vmul.f32 %v550, %v402
    %v567 = vmul.f32 %v551, %v417
    %v568 = vmul.f32 %v552, %v432
    %v569 = vmul.f32 %v553, %v447
    %v570 = vmul.f32 %v554, %v462
    %v571 = vmul.f32 %v555, %v477
    %v572 = vmul.f32 %v556, %v492
    %v573 = vadd.f32 %v557, -0.28449672
    %v574 = vadd.f32 %v558, -0.28449672
    %v575 = vadd.f32 %v559, -0.28449672
    %v576 = vadd.f32 %v560, -0.28449672
    %v577 = vadd.f32 %v561, -0.28449672
    %v578 = vadd.f32 %v562, -0.28449672
    %v579 = vadd.f32 %v563, -0.28449672
    %v580 = vadd.f32 %v564, -0.28449672
    %v581 = vadd.f32 %v565, -0.28449672
    %v582 = vadd.f32 %v566, -0.28449672
    %v583 = vadd.f32 %v567, -0.28449672
    %v584 = vadd.f32 %v568, -0.28449672
    %v585 = vadd.f32 %v569, -0.28449672
    %v586 = vadd.f32 %v570, -0.28449672
    %v587 = vadd.f32 %v571, -0.28449672
    %v588 = vadd.f32 %v572, -0.28449672
    %v589 = vmul.f32 %v573, %v267
    %v590 = vmul.f32 %v574, %v282
    %v591 = vmul.f32 %v575, %v297
    %v592 = vmul.f32 %v576, %v312
    %v593 = vmul.f32 %v577, %v327
    %v594 = vmul.f32 %v578, %v342
    %v595 = vmul.f32 %v579, %v357
    %v596 = vmul.f32 %v580, %v372
    %v597 = vmul.f32 %v581, %v387
    %v598 = vmul.f32 %v582, %v402
    %v599 = vmul.f32 %v583, %v417
    %v600 = vmul.f32 %v584, %v432
    %v601 = vmul.f32 %v585, %v447
    %v602 = vmul.f32 %v586, %v462
    %v603 = vmul.f32 %v587, %v477
    %v604 = vmul.f32 %v588, %v492
    %v605 = vadd.f32 %v589, 0.2548296
    %v606 = vadd.f32 %v590, 0.2548296
    %v607 = vadd.f32 %v591, 0.2548296
    %v608 = vadd.f32 %v592, 0.2548296
    %v609 = vadd.f32 %v593, 0.2548296
    %v610 = vadd.f32 %v594, 0.2548296
    %v611 = vadd.f32 %v595, 0.2548296
    %v612 = vadd.f32 %v596, 0.2548296
    %v613 = vadd.f32 %v597, 0.2548296
    %v614 = vadd.f32 %v598, 0.2548296
    %v615 = vadd.f32 %v599, 0.2548296
    %v616 = vadd.f32 %v600, 0.2548296
    %v617 = vadd.f32 %v601, 0.2548296
    %v618 = vadd.f32 %v602, 0.2548296
    %v619 = vadd.f32 %v603, 0.2548296
    %v620 = vadd.f32 %v604, 0.2548296
    %v621 = vmul.f32 %v605, %v267
    %v622 = vmul.f32 %v606, %v282
    %v623 = vmul.f32 %v607, %v297
    %v624 = vmul.f32 %v608, %v312
    %v625 = vmul.f32 %v609, %v327
    %v626 = vmul.f32 %v610, %v342
    %v627 = vmul.f32 %v611, %v357
    %v628 = vmul.f32 %v612, %v372
    %v629 = vmul.f32 %v613, %v387
    %v630 = vmul.f32 %v614, %v402
    %v631 = vmul.f32 %v615, %v417
    %v632 = vmul.f32 %v616, %v432
    %v633 = vmul.f32 %v617, %v447
    %v634 = vmul.f32 %v618, %v462
    %v635 = vmul.f32 %v619, %v477
    %v636 = vmul.f32 %v620, %v492
    %v637 = vsub.f32 0.0, %v205
    %v638 = vsub.f32 0.0, %v206
    %v639 = vsub.f32 0.0, %v207
    %v640 = vsub.f32 0.0, %v208
    %v641 = vsub.f32 0.0, %v209
    %v642 = vsub.f32 0.0, %v210
    %v643 = vsub.f32 0.0, %v211
    %v644 = vsub.f32 0.0, %v212
    %v645 = vsub.f32 0.0, %v213
    %v646 = vsub.f32 0.0, %v214
    %v647 = vsub.f32 0.0, %v215
    %v648 = vsub.f32 0.0, %v216
    %v649 = vsub.f32 0.0, %v217
    %v650 = vsub.f32 0.0, %v218
    %v651 = vsub.f32 0.0, %v219
    %v652 = vsub.f32 0.0, %v220
    %v653 = vmul.f32 %v637, %v205
    %v654 = vmul.f32 %v638, %v206
    %v655 = vmul.f32 %v639, %v207
    %v656 = vmul.f32 %v640, %v208
    %v657 = vmul.f32 %v641, %v209
    %v658 = vmul.f32 %v642, %v210
    %v659 = vmul.f32 %v643, %v211
    %v660 = vmul.f32 %v644, %v212
    %v661 = vmul.f32 %v645, %v213
    %v662 = vmul.f32 %v646, %v214
    %v663 = vmul.f32 %v647, %v215
    %v664 = vmul.f32 %v648, %v216
    %v665 = vmul.f32 %v649, %v217
    %v666 = vmul.f32 %v650, %v218
    %v667 = vmul.f32 %v651, %v219
    %v668 = vmul.f32 %v652, %v220
    %v669 = vmul.f32 %v653, 1.442695
    %v670 = vpow.pop %v669
    %v671 = vmul.f32 %v654, 1.442695
    %v672 = vpow.pop %v671
    %v673 = vmul.f32 %v655, 1.442695
    %v674 = vpow.pop %v673
    %v675 = vmul.f32 %v656, 1.442695
    %v676 = vpow.pop %v675
    %v677 = vmul.f32 %v657, 1.442695
    %v678 = vpow.pop %v677
    %v679 = vmul.f32 %v658, 1.442695
    %v680 = vpow.pop %v679
    %v681 = vmul.f32 %v659, 1.442695
    %v682 = vpow.pop %v681
    %v683 = vmul.f32 %v660, 1.442695
    %v684 = vpow.pop %v683
    %v685 = vmul.f32 %v661, 1.442695
    %v686 = vpow.pop %v685
    %v687 = vmul.f32 %v662, 1.442695
    %v688 = vpow.pop %v687
    %v689 = vmul.f32 %v663, 1.442695
    %v690 = vpow.pop %v689
    %v691 = vmul.f32 %v664, 1.442695
    %v692 = vpow.pop %v691
    %v693 = vmul.f32 %v665, 1.442695
    %v694 = vpow.pop %v693
    %v695 = vmul.f32 %v666, 1.442695
    %v696 = vpow.pop %v695
    %v697 = vmul.f32 %v667, 1.442695
    %v698 = vpow.pop %v697
    %v699 = vmul.f32 %v668, 1.442695
    %v700 = vpow.pop %v699
    %v701 = vmul.f32 %v621, %v670
    %v702 = vmul.f32 %v622, %v672
    %v703 = vmul.f32 %v623, %v674
    %v704 = vmul.f32 %v624, %v676
    %v705 = vmul.f32 %v625, %v678
    %v706 = vmul.f32 %v626, %v680
    %v707 = vmul.f32 %v627, %v682
    %v708 = vmul.f32 %v628, %v684
    %v709 = vmul.f32 %v629, %v686
    %v710 = vmul.f32 %v630, %v688
    %v711 = vmul.f32 %v631, %v690
    %v712 = vmul.f32 %v632, %v692
    %v713 = vmul.f32 %v633, %v694
    %v714 = vmul.f32 %v634, %v696
    %v715 = vmul.f32 %v635, %v698
    %v716 = vmul.f32 %v636, %v700
    %v717 = vsub.f32 1.0, %v701
    %v718 = vsub.f32 1.0, %v702
    %v719 = vsub.f32 1.0, %v703
    %v720 = vsub.f32 1.0, %v704
    %v721 = vsub.f32 1.0, %v705
    %v722 = vsub.f32 1.0, %v706
    %v723 = vsub.f32 1.0, %v707
    %v724 = vsub.f32 1.0, %v708
    %v725 = vsub.f32 1.0, %v709
    %v726 = vsub.f32 1.0, %v710
    %v727 = vsub.f32 1.0, %v711
    %v728 = vsub.f32 1.0, %v712
    %v729 = vsub.f32 1.0, %v713
    %v730 = vsub.f32 1.0, %v714
    %v731 = vsub.f32 1.0, %v715
    %v732 = vsub.f32 1.0, %v716
    %vm733 = vcmp.ge.f32.partialorder %v189, 0.0
    %vm734 = vcmp.ge.f32.partialorder %v190, 0.0
    %vm735 = vcmp.ge.f32.partialorder %v191, 0.0
    %vm736 = vcmp.ge.f32.partialorder %v192, 0.0
    %vm737 = vcmp.ge.f32.partialorder %v193, 0.0
    %vm738 = vcmp.ge.f32.partialorder %v194, 0.0
    %vm739 = vcmp.ge.f32.partialorder %v195, 0.0
    %vm740 = vcmp.ge.f32.partialorder %v196, 0.0
    %vm741 = vcmp.ge.f32.partialorder %v197, 0.0
    %vm742 = vcmp.ge.f32.partialorder %v198, 0.0
    %vm743 = vcmp.ge.f32.partialorder %v199, 0.0
    %vm744 = vcmp.ge.f32.partialorder %v200, 0.0
    %vm745 = vcmp.ge.f32.partialorder %v201, 0.0
    %vm746 = vcmp.ge.f32.partialorder %v202, 0.0
    %vm747 = vcmp.ge.f32.partialorder %v203, 0.0
    %vm748 = vcmp.ge.f32.partialorder %v204, 0.0
    %v749 = vsub.f32 0.0, %v717
    %v750 = vsub.f32 0.0, %v718
    %v751 = vsub.f32 0.0, %v719
    %v752 = vsub.f32 0.0, %v720
    %v753 = vsub.f32 0.0, %v721
    %v754 = vsub.f32 0.0, %v722
    %v755 = vsub.f32 0.0, %v723
    %v756 = vsub.f32 0.0, %v724
    %v757 = vsub.f32 0.0, %v725
    %v758 = vsub.f32 0.0, %v726
    %v759 = vsub.f32 0.0, %v727
    %v760 = vsub.f32 0.0, %v728
    %v761 = vsub.f32 0.0, %v729
    %v762 = vsub.f32 0.0, %v730
    %v763 = vsub.f32 0.0, %v731
    %v764 = vsub.f32 0.0, %v732
    %v765 = vsel %vm733, %v717, %v749
    %v766 = vsel %vm734, %v718, %v750
    %v767 = vsel %vm735, %v719, %v751
    %v768 = vsel %vm736, %v720, %v752
    %v769 = vsel %vm737, %v721, %v753
    %v770 = vsel %vm738, %v722, %v754
    %v771 = vsel %vm739, %v723, %v755
    %v772 = vsel %vm740, %v724, %v756
    %v773 = vsel %vm741, %v725, %v757
    %v774 = vsel %vm742, %v726, %v758
    %v775 = vsel %vm743, %v727, %v759
    %v776 = vsel %vm744, %v728, %v760
    %v777 = vsel %vm745, %v729, %v761
    %v778 = vsel %vm746, %v730, %v762
    %v779 = vsel %vm747, %v731, %v763
    %v780 = vsel %vm748, %v732, %v764
    %v781 = vadd.f32 %v765, 1.0
    %v782 = vadd.f32 %v766, 1.0
    %v783 = vadd.f32 %v767, 1.0
    %v784 = vadd.f32 %v768, 1.0
    %v785 = vadd.f32 %v769, 1.0
    %v786 = vadd.f32 %v770, 1.0
    %v787 = vadd.f32 %v771, 1.0
    %v788 = vadd.f32 %v772, 1.0
    %v789 = vadd.f32 %v773, 1.0
    %v790 = vadd.f32 %v774, 1.0
    %v791 = vadd.f32 %v775, 1.0
    %v792 = vadd.f32 %v776, 1.0
    %v793 = vadd.f32 %v777, 1.0
    %v794 = vadd.f32 %v778, 1.0
    %v795 = vadd.f32 %v779, 1.0
    %v796 = vadd.f32 %v780, 1.0
    %v797 = vmul.f32 %v173, %v781
    %v798 = vmul.f32 %v174, %v782
    %v799 = vmul.f32 %v175, %v783
    %v800 = vmul.f32 %v176, %v784
    %v801 = vmul.f32 %v177, %v785
    %v802 = vmul.f32 %v178, %v786
    %v803 = vmul.f32 %v179, %v787
    %v804 = vmul.f32 %v180, %v788
    %v805 = vmul.f32 %v181, %v789
    %v806 = vmul.f32 %v182, %v790
    %v807 = vmul.f32 %v183, %v791
    %v808 = vmul.f32 %v184, %v792
    %v809 = vmul.f32 %v185, %v793
    %v810 = vmul.f32 %v186, %v794
    %v811 = vmul.f32 %v187, %v795
    %v812 = vmul.f32 %v188, %v796
    %813 = vst.msk [vmem:[#allocation2] sm:$0xff] %vm59, %v797
    %814 = vst.msk [vmem:[#allocation2 + $0x8] sm:$0xff] %vm59, %v798
    %815 = vst.msk [vmem:[#allocation2 + $0x10] sm:$0xff] %vm59, %v799
    %816 = vst.msk [vmem:[#allocation2 + $0x18] sm:$0xff] %vm59, %v800
    %817 = vst.msk [vmem:[#allocation2 + $0x20] sm:$0xff] %vm59, %v801
    %818 = vst.msk [vmem:[#allocation2 + $0x28] sm:$0xff] %vm59, %v802
    %819 = vst.msk [vmem:[#allocation2 + $0x30] sm:$0xff] %vm59, %v803
    %820 = vst.msk [vmem:[#allocation2 + $0x38] sm:$0xff] %vm59, %v804
    %821 = vst.msk [vmem:[#allocation2 + $0x40] sm:$0xff] %vm59, %v805
    %822 = vst.msk [vmem:[#allocation2 + $0x48] sm:$0xff] %vm59, %v806
    %823 = vst.msk [vmem:[#allocation2 + $0x50] sm:$0xff] %vm59, %v807
    %824 = vst.msk [vmem:[#allocation2 + $0x58] sm:$0xff] %vm59, %v808
    %825 = vst.msk [vmem:[#allocation2 + $0x60] sm:$0xff] %vm59, %v809
    %826 = vst.msk [vmem:[#allocation2 + $0x68] sm:$0xff] %vm59, %v810
    %827 = vst.msk [vmem:[#allocation2 + $0x70] sm:$0xff] %vm59, %v811
    %828 = vst.msk [vmem:[#allocation2 + $0x78] sm:$0xff] %vm59, %v812
    // Predicated region
    $region18: #{cvta_forward.17} parent=1 // pred_check
      _
    $region19: #{cvta_forward.17} parent=1 // pred_check_branch
      %830 = sbr.rel (0) target = $region21
    $region20: #{cvta_forward.17} parent=1 // pred_region
      %832 = vsyncadd [#allocation3], 0
      %s833 = sshll.u32 [#allocation2], 4
      %s834 = int_to_ptr.vmem [resolvable:$true] %s833
      %s835 = sshll.u32 %s4, 4
      %s836 = int_to_ptr.hbm [resolvable:$true] %s835
      %841 = dma.vmem_to_hbm [thread:$0]  %s834, 2048, %s836, [#allocation3], 128, 128, 8
    $region21: #{cvta_forward.17} parent=1 // pred_fallthru
      _
    // Predicated region
    $region22: #{cvta_forward.17} parent=1 // pred_check
      _
    $region23: #{cvta_forward.17} parent=1 // pred_check_branch
      %843 = sbr.rel (0) target = $region25
    $region24: #{cvta_forward.17} parent=1 // pred_region
      %845 = dma.done [#allocation3], 2048
    $region25: #{cvta_forward.17} parent=1 // pred_fallthru
      _
    %846 = vsyncpa [#allocation3], 1

// kernel: cvta_forward.16
$region0: #{cvta_forward.16}
  #allocation0 [shape = 'u32[]', space=smem, size = 0x4, offset = 0x4, fixed_abs, tag = 'smem constant byte address 0x4 - core index']
  #allocation1 [shape = 'u32[72,128]{1,0:T(1,128)}', space=vmem, size = 0x9000, scoped, tag = 'internal scratch']
  #allocation2 [shape = 'f32[10,24,64]{2,1,0:T(8,128)}', space=vmem, size = 0x1e000, scoped, tag = 'scratch operand']
  %s0 = inlined_call_operand.vmem [shape: f32[2,8,8,16], index: 0, kind: input, shape index: {}]
  %s1 = inlined_call_operand.vmem [shape: bf16[16,64], index: 1, kind: input, shape index: {}]
  %s2 = inlined_call_operand.vmem [shape: f32[1,64], index: 2, kind: input, shape index: {}]
  %s3 = inlined_call_operand.vmem [shape: f32[1,64], index: 3, kind: input, shape index: {}]
  %s4 = inlined_call_operand.vmem [shape: f32[9,64], index: 4, kind: input, shape index: {}]
  %s5 = inlined_call_operand.vmem [shape: f32[1,64], index: 5, kind: input, shape index: {}]
  %s6 = inlined_call_operand.vmem [shape: f32[1,64], index: 6, kind: input, shape index: {}]
  %s7 = inlined_call_operand.vmem [shape: bf16[64,16], index: 7, kind: input, shape index: {}]
  %s8 = inlined_call_operand.vmem [shape: f32[1,16], index: 8, kind: input, shape index: {}]
  %s9 = inlined_call_operand.vmem [shape: f32[1,16], index: 9, kind: input, shape index: {}]
  %s10 = inlined_call_operand.vmem [shape: f32[1,16], index: 10, kind: input, shape index: {}]
  %s11 = inlined_call_operand.vmem [shape: f32[1,16], index: 11, kind: input, shape index: {}]
  %s12 = inlined_call_operand.vmem [shape: f32[2,8,8,16], index: 12, kind: output, shape index: {}]
  %s13 = sld [smem:[#allocation0]]
  $region81: #{cvta_forward.16} parent=0
    _
  %s15 = ssub.s32 1, %s13
  %s16 = scalar_select 0, %s15, %s13
  loop: start=0, step=1, limit=4
  $region2: #{cvta_forward.16} parent=0 // loop_pre_header
    _
  $region3: #{cvta_forward.16} parent=0 // loop_header
    %s18 = sphi 0, %s22
    %p19 = scmp.ge.s32.totalorder %s18, 4
    %s28 = sphi 0, %s30
    %s31 = sphi 0, %s28
    %s32 = sphi 0, %s31
    %s48 = sphi 0, %s32
    %s52 = sphi 0, %s52
    %s54 = sphi 0, %s52
    %s55 = sphi 0, %s54
    %s69 = sphi 0, %s55
    %s73 = sphi 0, %s73
    %s75 = sphi 0, %s73
    %s76 = sphi 0, %s75
    %s90 = sphi 0, %s76
    %s94 = sphi 0, %s94
    %s96 = sphi 0, %s94
    %s97 = sphi 0, %s96
    %s111 = sphi 0, %s97
    %s115 = sphi 0, %s115
    %s117 = sphi 0, %s115
    %s118 = sphi 0, %s117
    %s132 = sphi 0, %s118
    %s136 = sphi 0, %s136
    %s138 = sphi 0, %s136
    %s139 = sphi 0, %s138
    %s153 = sphi 0, %s139
    %s157 = sphi 0, %s157
    %s159 = sphi 0, %s157
    %s160 = sphi 0, %s159
    %s174 = sphi 0, %s160
    %s178 = sphi 0, %s178
    %s180 = sphi 0, %s178
    %s181 = sphi 0, %s180
    %s195 = sphi 0, %s181
    %s199 = sphi 0, %s199
    %s201 = sphi 0, %s199
    %s202 = sphi 0, %s201
    %s216 = sphi 0, %s202
    %s220 = sphi 0, %s220
    %s222 = sphi 0, %s220
    %s223 = sphi 0, %s222
    %s237 = sphi 0, %s223
    %s241 = sphi 0, %s241
    %s243 = sphi 0, %s241
    %s244 = sphi 0, %s243
    %s258 = sphi 0, %s244
    %s262 = sphi 0, %s262
    %s264 = sphi 0, %s262
    %s265 = sphi 0, %s264
    %s279 = sphi 0, %s265
    %s285 = sphi 0, %s287
    %s288 = sphi 0, %s285
    %s289 = sphi 0, %s288
    %s305 = sphi 0, %s289
  $region4: #{cvta_forward.16} parent=0 // loop_header_branch
    %21 = sbr.rel (%p19) target = $region8
  $region5: #{cvta_forward.16} parent=0 // loop_body
    %s23 = ssub.s32 %s18, 1
    %s24 = ssub.s32 %s18, 2
    %s25 = sadd.s32 %s18, 1
    %s26 = ssub.s32 %s18, %s25
    %p27 = scmp.eq.s32.totalorder %s26, 0
    %s29 = sadd.s32 %s28, 1
    %s30 = scalar_select %p27, %s28, %s29
    %p33 = pneg %p27
    %p34 = scmp.eq.s32.totalorder %s18, 1
    %p35 = por %p33, %p34
    %p36 = scmp.ne.s32.totalorder %s28, %s31
    %p37 = scmp.eq.s32.totalorder %s18, 0
    %p38 = por %p36, %p37
    %p39 = scmp.ne.s32.totalorder %s28, %s31
    %p40 = scmp.eq.s32.totalorder %s23, 1
    %p41 = por %p39, %p40
    %p42 = scmp.ne.s32.totalorder %s31, %s32
    %p43 = scmp.eq.s32.totalorder %s23, 0
    %p44 = por %p42, %p43
    %p45 = scmp.ne.s32.totalorder %s31, %s32
    %p46 = scmp.eq.s32.totalorder %s24, 1
    %p47 = por %p45, %p46
    %p49 = scmp.ne.s32.totalorder %s32, %s48
    %p50 = scmp.eq.s32.totalorder %s24, 0
    %p51 = por %p49, %p50
    %s53 = sadd.s32 %s52, 1
    %p56 = scmp.eq.s32.totalorder %s18, 1
    %p57 = scmp.ne.s32.totalorder %s52, %s54
    %p58 = scmp.eq.s32.totalorder %s18, 0
    %p59 = por %p57, %p58
    %p60 = scmp.ne.s32.totalorder %s52, %s54
    %p61 = scmp.eq.s32.totalorder %s23, 1
    %p62 = por %p60, %p61
    %p63 = scmp.ne.s32.totalorder %s54, %s55
    %p64 = scmp.eq.s32.totalorder %s23, 0
    %p65 = por %p63, %p64
    %p66 = scmp.ne.s32.totalorder %s54, %s55
    %p67 = scmp.eq.s32.totalorder %s24, 1
    %p68 = por %p66, %p67
    %p70 = scmp.ne.s32.totalorder %s55, %s69
    %p71 = scmp.eq.s32.totalorder %s24, 0
    %p72 = por %p70, %p71
    %s74 = sadd.s32 %s73, 1
    %p77 = scmp.eq.s32.totalorder %s18, 1
    %p78 = scmp.ne.s32.totalorder %s73, %s75
    %p79 = scmp.eq.s32.totalorder %s18, 0
    %p80 = por %p78, %p79
    %p81 = scmp.ne.s32.totalorder %s73, %s75
    %p82 = scmp.eq.s32.totalorder %s23, 1
    %p83 = por %p81, %p82
    %p84 = scmp.ne.s32.totalorder %s75, %s76
    %p85 = scmp.eq.s32.totalorder %s23, 0
    %p86 = por %p84, %p85
    %p87 = scmp.ne.s32.totalorder %s75, %s76
    %p88 = scmp.eq.s32.totalorder %s24, 1
    %p89 = por %p87, %p88
    %p91 = scmp.ne.s32.totalorder %s76, %s90
    %p92 = scmp.eq.s32.totalorder %s24, 0
    %p93 = por %p91, %p92
    %s95 = sadd.s32 %s94, 1
    %p98 = scmp.eq.s32.totalorder %s18, 1
    %p99 = scmp.ne.s32.totalorder %s94, %s96
    %p100 = scmp.eq.s32.totalorder %s18, 0
    %p101 = por %p99, %p100
    %p102 = scmp.ne.s32.totalorder %s94, %s96
    %p103 = scmp.eq.s32.totalorder %s23, 1
    %p104 = por %p102, %p103
    %p105 = scmp.ne.s32.totalorder %s96, %s97
    %p106 = scmp.eq.s32.totalorder %s23, 0
    %p107 = por %p105, %p106
    %p108 = scmp.ne.s32.totalorder %s96, %s97
    %p109 = scmp.eq.s32.totalorder %s24, 1
    %p110 = por %p108, %p109
    %p112 = scmp.ne.s32.totalorder %s97, %s111
    %p113 = scmp.eq.s32.totalorder %s24, 0
    %p114 = por %p112, %p113
    %s116 = sadd.s32 %s115, 1
    %p119 = scmp.eq.s32.totalorder %s18, 1
    %p120 = scmp.ne.s32.totalorder %s115, %s117
    %p121 = scmp.eq.s32.totalorder %s18, 0
    %p122 = por %p120, %p121
    %p123 = scmp.ne.s32.totalorder %s115, %s117
    %p124 = scmp.eq.s32.totalorder %s23, 1
    %p125 = por %p123, %p124
    %p126 = scmp.ne.s32.totalorder %s117, %s118
    %p127 = scmp.eq.s32.totalorder %s23, 0
    %p128 = por %p126, %p127
    %p129 = scmp.ne.s32.totalorder %s117, %s118
    %p130 = scmp.eq.s32.totalorder %s24, 1
    %p131 = por %p129, %p130
    %p133 = scmp.ne.s32.totalorder %s118, %s132
    %p134 = scmp.eq.s32.totalorder %s24, 0
    %p135 = por %p133, %p134
    %s137 = sadd.s32 %s136, 1
    %p140 = scmp.eq.s32.totalorder %s18, 1
    %p141 = scmp.ne.s32.totalorder %s136, %s138
    %p142 = scmp.eq.s32.totalorder %s18, 0
    %p143 = por %p141, %p142
    %p144 = scmp.ne.s32.totalorder %s136, %s138
    %p145 = scmp.eq.s32.totalorder %s23, 1
    %p146 = por %p144, %p145
    %p147 = scmp.ne.s32.totalorder %s138, %s139
    %p148 = scmp.eq.s32.totalorder %s23, 0
    %p149 = por %p147, %p148
    %p150 = scmp.ne.s32.totalorder %s138, %s139
    %p151 = scmp.eq.s32.totalorder %s24, 1
    %p152 = por %p150, %p151
    %p154 = scmp.ne.s32.totalorder %s139, %s153
    %p155 = scmp.eq.s32.totalorder %s24, 0
    %p156 = por %p154, %p155
    %s158 = sadd.s32 %s157, 1
    %p161 = scmp.eq.s32.totalorder %s18, 1
    %p162 = scmp.ne.s32.totalorder %s157, %s159
    %p163 = scmp.eq.s32.totalorder %s18, 0
    %p164 = por %p162, %p163
    %p165 = scmp.ne.s32.totalorder %s157, %s159
    %p166 = scmp.eq.s32.totalorder %s23, 1
    %p167 = por %p165, %p166
    %p168 = scmp.ne.s32.totalorder %s159, %s160
    %p169 = scmp.eq.s32.totalorder %s23, 0
    %p170 = por %p168, %p169
    %p171 = scmp.ne.s32.totalorder %s159, %s160
    %p172 = scmp.eq.s32.totalorder %s24, 1
    %p173 = por %p171, %p172
    %p175 = scmp.ne.s32.totalorder %s160, %s174
    %p176 = scmp.eq.s32.totalorder %s24, 0
    %p177 = por %p175, %p176
    %s179 = sadd.s32 %s178, 1
    %p182 = scmp.eq.s32.totalorder %s18, 1
    %p183 = scmp.ne.s32.totalorder %s178, %s180
    %p184 = scmp.eq.s32.totalorder %s18, 0
    %p185 = por %p183, %p184
    %p186 = scmp.ne.s32.totalorder %s178, %s180
    %p187 = scmp.eq.s32.totalorder %s23, 1
    %p188 = por %p186, %p187
    %p189 = scmp.ne.s32.totalorder %s180, %s181
    %p190 = scmp.eq.s32.totalorder %s23, 0
    %p191 = por %p189, %p190
    %p192 = scmp.ne.s32.totalorder %s180, %s181
    %p193 = scmp.eq.s32.totalorder %s24, 1
    %p194 = por %p192, %p193
    %p196 = scmp.ne.s32.totalorder %s181, %s195
    %p197 = scmp.eq.s32.totalorder %s24, 0
    %p198 = por %p196, %p197
    %s200 = sadd.s32 %s199, 1
    %p203 = scmp.eq.s32.totalorder %s18, 1
    %p204 = scmp.ne.s32.totalorder %s199, %s201
    %p205 = scmp.eq.s32.totalorder %s18, 0
    %p206 = por %p204, %p205
    %p207 = scmp.ne.s32.totalorder %s199, %s201
    %p208 = scmp.eq.s32.totalorder %s23, 1
    %p209 = por %p207, %p208
    %p210 = scmp.ne.s32.totalorder %s201, %s202
    %p211 = scmp.eq.s32.totalorder %s23, 0
    %p212 = por %p210, %p211
    %p213 = scmp.ne.s32.totalorder %s201, %s202
    %p214 = scmp.eq.s32.totalorder %s24, 1
    %p215 = por %p213, %p214
    %p217 = scmp.ne.s32.totalorder %s202, %s216
    %p218 = scmp.eq.s32.totalorder %s24, 0
    %p219 = por %p217, %p218
    %s221 = sadd.s32 %s220, 1
    %p224 = scmp.eq.s32.totalorder %s18, 1
    %p225 = scmp.ne.s32.totalorder %s220, %s222
    %p226 = scmp.eq.s32.totalorder %s18, 0
    %p227 = por %p225, %p226
    %p228 = scmp.ne.s32.totalorder %s220, %s222
    %p229 = scmp.eq.s32.totalorder %s23, 1
    %p230 = por %p228, %p229
    %p231 = scmp.ne.s32.totalorder %s222, %s223
    %p232 = scmp.eq.s32.totalorder %s23, 0
    %p233 = por %p231, %p232
    %p234 = scmp.ne.s32.totalorder %s222, %s223
    %p235 = scmp.eq.s32.totalorder %s24, 1
    %p236 = por %p234, %p235
    %p238 = scmp.ne.s32.totalorder %s223, %s237
    %p239 = scmp.eq.s32.totalorder %s24, 0
    %p240 = por %p238, %p239
    %s242 = sadd.s32 %s241, 1
    %p245 = scmp.eq.s32.totalorder %s18, 1
    %p246 = scmp.ne.s32.totalorder %s241, %s243
    %p247 = scmp.eq.s32.totalorder %s18, 0
    %p248 = por %p246, %p247
    %p249 = scmp.ne.s32.totalorder %s241, %s243
    %p250 = scmp.eq.s32.totalorder %s23, 1
    %p251 = por %p249, %p250
    %p252 = scmp.ne.s32.totalorder %s243, %s244
    %p253 = scmp.eq.s32.totalorder %s23, 0
    %p254 = por %p252, %p253
    %p255 = scmp.ne.s32.totalorder %s243, %s244
    %p256 = scmp.eq.s32.totalorder %s24, 1
    %p257 = por %p255, %p256
    %p259 = scmp.ne.s32.totalorder %s244, %s258
    %p260 = scmp.eq.s32.totalorder %s24, 0
    %p261 = por %p259, %p260
    %s263 = sadd.s32 %s262, 1
    %p266 = scmp.eq.s32.totalorder %s18, 1
    %p267 = scmp.ne.s32.totalorder %s262, %s264
    %p268 = scmp.eq.s32.totalorder %s18, 0
    %p269 = por %p267, %p268
    %p270 = scmp.ne.s32.totalorder %s262, %s264
    %p271 = scmp.eq.s32.totalorder %s23, 1
    %p272 = por %p270, %p271
    %p273 = scmp.ne.s32.totalorder %s264, %s265
    %p274 = scmp.eq.s32.totalorder %s23, 0
    %p275 = por %p273, %p274
    %p276 = scmp.ne.s32.totalorder %s264, %s265
    %p277 = scmp.eq.s32.totalorder %s24, 1
    %p278 = por %p276, %p277
    %p280 = scmp.ne.s32.totalorder %s265, %s279
    %p281 = scmp.eq.s32.totalorder %s24, 0
    %p282 = por %p280, %p281
    %s283 = ssub.s32 %s18, %s25
    %p284 = scmp.eq.s32.totalorder %s283, 0
    %s286 = sadd.s32 %s285, 1
    %s287 = scalar_select %p284, %s285, %s286
    %p290 = pneg %p284
    %p291 = scmp.eq.s32.totalorder %s18, 1
    %p292 = por %p290, %p291
    %p293 = scmp.ne.s32.totalorder %s285, %s288
    %p294 = scmp.eq.s32.totalorder %s18, 0
    %p295 = por %p293, %p294
    %p296 = scmp.ne.s32.totalorder %s285, %s288
    %p297 = scmp.eq.s32.totalorder %s23, 1
    %p298 = por %p296, %p297
    %p299 = scmp.ne.s32.totalorder %s288, %s289
    %p300 = scmp.eq.s32.totalorder %s23, 0
    %p301 = por %p299, %p300
    %p302 = scmp.ne.s32.totalorder %s288, %s289
    %p303 = scmp.eq.s32.totalorder %s24, 1
    %p304 = por %p302, %p303
    %p306 = scmp.ne.s32.totalorder %s289, %s305
    %p307 = scmp.eq.s32.totalorder %s24, 0
    %p308 = por %p306, %p307
    %p309 = scmp.le.s32.totalorder 1, %s18
    %p310 = scmp.lt.s32.totalorder %s18, 3
    %p311 = pnand %p309, %p310
    %p312 = pneg %p311
    // Predicated region
    $region9: #{cvta_forward.16} parent=5 // pred_check
      _
    $region10: #{cvta_forward.16} parent=5 // pred_check_branch
      %314 = sbr.rel (%p311) target = $region12
    $region11: #{cvta_forward.16} parent=5 // pred_region
      %s315 = ssub.s32 %s18, 1
      // Predicated region
      $region13: #{cvta_forward.16} parent=11 // pred_check
        %p316 = pneg %p65
      $region14: #{cvta_forward.16} parent=11 // pred_check_branch
        %318 = sbr.rel (%p316) target = $region16
      $region15: #{cvta_forward.16} parent=11 // pred_region
        _
      $region16: #{cvta_forward.16} parent=11 // pred_fallthru
        _
      // Predicated region
      $region17: #{cvta_forward.16} parent=11 // pred_check
        %p319 = pneg %p86
      $region18: #{cvta_forward.16} parent=11 // pred_check_branch
        %321 = sbr.rel (%p319) target = $region20
      $region19: #{cvta_forward.16} parent=11 // pred_region
        _
      $region20: #{cvta_forward.16} parent=11 // pred_fallthru
        _
      // Predicated region
      $region21: #{cvta_forward.16} parent=11 // pred_check
        %p322 = pneg %p107
      $region22: #{cvta_forward.16} parent=11 // pred_check_branch
        %324 = sbr.rel (%p322) target = $region24
      $region23: #{cvta_forward.16} parent=11 // pred_region
        _
      $region24: #{cvta_forward.16} parent=11 // pred_fallthru
        _
      // Predicated region
      $region25: #{cvta_forward.16} parent=11 // pred_check
        %p325 = pneg %p128
      $region26: #{cvta_forward.16} parent=11 // pred_check_branch
        %327 = sbr.rel (%p325) target = $region28
      $region27: #{cvta_forward.16} parent=11 // pred_region
        _
      $region28: #{cvta_forward.16} parent=11 // pred_fallthru
        _
      // Predicated region
      $region29: #{cvta_forward.16} parent=11 // pred_check
        %p328 = pneg %p149
      $region30: #{cvta_forward.16} parent=11 // pred_check_branch
        %330 = sbr.rel (%p328) target = $region32
      $region31: #{cvta_forward.16} parent=11 // pred_region
        _
      $region32: #{cvta_forward.16} parent=11 // pred_fallthru
        _
      // Predicated region
      $region33: #{cvta_forward.16} parent=11 // pred_check
        %p331 = pneg %p170
      $region34: #{cvta_forward.16} parent=11 // pred_check_branch
        %333 = sbr.rel (%p331) target = $region36
      $region35: #{cvta_forward.16} parent=11 // pred_region
        _
      $region36: #{cvta_forward.16} parent=11 // pred_fallthru
        _
      // Predicated region
      $region37: #{cvta_forward.16} parent=11 // pred_check
        %p334 = pneg %p191
      $region38: #{cvta_forward.16} parent=11 // pred_check_branch
        %336 = sbr.rel (%p334) target = $region40
      $region39: #{cvta_forward.16} parent=11 // pred_region
        _
      $region40: #{cvta_forward.16} parent=11 // pred_fallthru
        _
      // Predicated region
      $region41: #{cvta_forward.16} parent=11 // pred_check
        %p337 = pneg %p212
      $region42: #{cvta_forward.16} parent=11 // pred_check_branch
        %339 = sbr.rel (%p337) target = $region44
      $region43: #{cvta_forward.16} parent=11 // pred_region
        _
      $region44: #{cvta_forward.16} parent=11 // pred_fallthru
        _
      // Predicated region
      $region45: #{cvta_forward.16} parent=11 // pred_check
        %p340 = pneg %p233
      $region46: #{cvta_forward.16} parent=11 // pred_check_branch
        %342 = sbr.rel (%p340) target = $region48
      $region47: #{cvta_forward.16} parent=11 // pred_region
        _
      $region48: #{cvta_forward.16} parent=11 // pred_fallthru
        _
      // Predicated region
      $region49: #{cvta_forward.16} parent=11 // pred_check
        %p343 = pneg %p254
      $region50: #{cvta_forward.16} parent=11 // pred_check_branch
        %345 = sbr.rel (%p343) target = $region52
      $region51: #{cvta_forward.16} parent=11 // pred_region
        _
      $region52: #{cvta_forward.16} parent=11 // pred_fallthru
        _
      // Predicated region
      $region53: #{cvta_forward.16} parent=11 // pred_check
        %p346 = pneg %p275
      $region54: #{cvta_forward.16} parent=11 // pred_check_branch
        %348 = sbr.rel (%p346) target = $region56
      $region55: #{cvta_forward.16} parent=11 // pred_region
        _
      $region56: #{cvta_forward.16} parent=11 // pred_fallthru
        _
    $region12: #{cvta_forward.16} parent=5 // pred_fallthru
      _
    %p349 = scmp.lt.s32.totalorder %s18, 2
    // Predicated region
    $region57: #{cvta_forward.16} parent=5 // pred_check
      %p350 = pneg %p349
    $region58: #{cvta_forward.16} parent=5 // pred_check_branch
      %352 = sbr.rel (%p350) target = $region60
    $region59: #{cvta_forward.16} parent=5 // pred_region
      // Predicated region
      $region61: #{cvta_forward.16} parent=59 // pred_check
        %p353 = pneg %p38
      $region62: #{cvta_forward.16} parent=59 // pred_check_branch
        %355 = sbr.rel (%p353) target = $region64
      $region63: #{cvta_forward.16} parent=59 // pred_region
        %p356 = scmp.lt.s32.totalorder %s18, 1
        %s357 = scalar_select %p356, %s18, 1
        %s358 = smul.addr %s357, 8
        %s359 = smul.addr %s358, 8
        %s360 = scalar_lea.vmem %s0, %s359
      $region64: #{cvta_forward.16} parent=59 // pred_fallthru
        _
    $region60: #{cvta_forward.16} parent=5 // pred_fallthru
      _
    %p361 = scmp.le.s32.totalorder 1, %s18
    %p362 = scmp.lt.s32.totalorder %s18, 3
    %p363 = pnand %p361, %p362
    %p364 = pneg %p363
    // Predicated region
    $region65: #{cvta_forward.16} parent=5 // pred_check
      _
    $region66: #{cvta_forward.16} parent=5 // pred_check_branch
      %366 = sbr.rel (%p363) target = $region68
    $region67: #{cvta_forward.16} parent=5 // pred_region
      %s367 = ssub.s32 %s18, 1
      %p368 = scmp.lt.s32.totalorder %s23, 1
      %s369 = scalar_select %p368, %s23, 1
      %s370 = smul.addr %s369, 8
      %s371 = smul.addr %s370, 8
      %s372 = scalar_lea.vmem %s0, %s371
      %p373 = pneg %p44
      %p374 = pneg %p41
      %p375 = pneg %p65
      %p376 = pneg %p62
      %p377 = pneg %p86
      %p378 = pneg %p83
      %p379 = pneg %p107
      %p380 = pneg %p104
      %p381 = pneg %p128
      %p382 = pneg %p125
      %p383 = pneg %p149
      %p384 = pneg %p146
      %p385 = pneg %p170
      %p386 = pneg %p167
      %p387 = pneg %p191
      %p388 = pneg %p188
      %p389 = pneg %p212
      %p390 = pneg %p209
      %p391 = pneg %p233
      %p392 = pneg %p230
      %p393 = pneg %p254
      %p394 = pneg %p251
      %p395 = pneg %p275
      %p396 = pneg %p272
      %p397 = pneg %p301
      %p398 = pneg %p298
      %p399 = scmp.lt.s32.totalorder %s23, 1
      %s400 = scalar_select %p399, %s23, 1
      %s401 = smul.addr %s400, 8
      %s402 = smul.addr %s401, 8
      %s403 = scalar_lea.vmem %s12, %s402
      %p404 = scmp.lt.s32.totalorder %s23, 1
      %s405 = scalar_select %p404, %s23, 1
      %s406 = smul.addr %s405, 8
      %s407 = smul.addr %s406, 8
      %s408 = scalar_lea.vmem %s0, %s407
      %p409 = scmp.lt.s32.totalorder %s23, 1
      %s410 = scalar_select %p409, %s23, 1
      %s411 = smul.addr %s410, 8
      %s412 = smul.addr %s411, 8
      %s413 = scalar_lea.vmem %s12, %s412
      %v415 = vld [vmem:[%s408] sm:$0xff]
      %v416 = vld [vmem:[%s408 + $0x8] sm:$0xff]
      %v417 = vld [vmem:[%s408 + $0x10] sm:$0xff]
      %v418 = vld [vmem:[%s408 + $0x18] sm:$0xff]
      %v419 = vld [vmem:[%s408 + $0x20] sm:$0xff]
      %v420 = vld [vmem:[%s408 + $0x28] sm:$0xff]
      %v421 = vld [vmem:[%s408 + $0x30] sm:$0xff]
      %v422 = vld [vmem:[%s408 + $0x38] sm:$0xff]
      %v423 = vpack.c.bf16 %v416, %v415
      %v424 = vpack.c.bf16 %v418, %v417
      %v425 = vpack.c.bf16 %v420, %v419
      %v426 = vpack.c.bf16 %v422, %v421
      %v427 = vld [vmem:[%s1] sm:$0xf]
      %v428 = vld [vmem:[%s1 + $0x4] sm:$0xf]
      %v431 = vunpack.c.l.b16 %v427
      %v432 = vunpack.c.l.b16 %v428
      %v433 = vpack.c.b16 %v432, %v431
      %vm435 = vcmask 130048
      %v437 = vsel %vm435, %v423, 0
      %v440 = vsel %vm435, %v424, 0
      %v443 = vsel %vm435, %v425, 0
      %v446 = vsel %vm435, %v426, 0
      %448 = vmatpush.bf16.msra.mxu0 0
      %449 = vmatpush.bf16.msra.mxu0 0
      %450 = vmatpush.bf16.msra.mxu0 0
      %451 = vmatpush.bf16.msra.mxu0 0
      %452 = vmatpush.bf16.msra.mxu0 0
      %453 = vmatpush.bf16.msra.mxu0 0
      %454 = vmatpush.bf16.msra.mxu0 0
      %455 = vmatpush.bf16.msra.mxu0 %v433
      %456 = vmatmul.bf16.gmra.mxu0 %v437
      %v457 = vpop.f32.mrf.mxu0
      %v458 = vadd.f32 0.0, %v457
      %v459 = vpop.f32.mrf.mxu0
      %v460 = vadd.f32 0.0, %v459
      %461 = vmatmul.bf16.gmra.mxu0 %v440
      %v462 = vpop.f32.mrf.mxu0
      %v463 = vadd.f32 0.0, %v462
      %v464 = vpop.f32.mrf.mxu0
      %v465 = vadd.f32 0.0, %v464
      %466 = vmatmul.bf16.gmra.mxu0 %v443
      %v467 = vpop.f32.mrf.mxu0
      %v468 = vadd.f32 0.0, %v467
      %v469 = vpop.f32.mrf.mxu0
      %v470 = vadd.f32 0.0, %v469
      %471 = vmatmul.bf16.gmra.mxu0 %v446
      %v472 = vpop.f32.mrf.mxu0
      %v473 = vadd.f32 0.0, %v472
      %v474 = vpop.f32.mrf.mxu0
      %v475 = vadd.f32 0.0, %v474
      %476 = vdwg.mxu0
      %v477 = vld [vmem:[%s2] sm:$0x1]
      %v479 = vperm.slane %v477, 0
      %v481 = vmul.f32 %v458, %v479
      %v482 = vmul.f32 %v460, %v479
      %v483 = vmul.f32 %v463, %v479
      %v484 = vmul.f32 %v465, %v479
      %v485 = vmul.f32 %v468, %v479
      %v486 = vmul.f32 %v470, %v479
      %v487 = vmul.f32 %v473, %v479
      %v488 = vmul.f32 %v475, %v479
      %v489 = vld [vmem:[%s3] sm:$0x1]
      %v491 = vperm.slane %v489, 0
      %v493 = vadd.f32 %v481, %v491
      %v494 = vadd.f32 %v482, %v491
      %v495 = vadd.f32 %v483, %v491
      %v496 = vadd.f32 %v484, %v491
      %v497 = vadd.f32 %v485, %v491
      %v498 = vadd.f32 %v486, %v491
      %v499 = vadd.f32 %v487, %v491
      %v500 = vadd.f32 %v488, %v491
      %v501 = vmul.f32 %v493, 0.5
      %v502 = vmul.f32 %v494, 0.5
      %v503 = vmul.f32 %v495, 0.5
      %v504 = vmul.f32 %v496, 0.5
      %v505 = vmul.f32 %v497, 0.5
      %v506 = vmul.f32 %v498, 0.5
      %v507 = vmul.f32 %v499, 0.5
      %v508 = vmul.f32 %v500, 0.5
      %v509 = vmul.f32 %v493, 0.70710677
      %v510 = vmul.f32 %v494, 0.70710677
      %v511 = vmul.f32 %v495, 0.70710677
      %v512 = vmul.f32 %v496, 0.70710677
      %v513 = vmul.f32 %v497, 0.70710677
      %v514 = vmul.f32 %v498, 0.70710677
      %v515 = vmul.f32 %v499, 0.70710677
      %v516 = vmul.f32 %v500, 0.70710677
      %v517 = vand.u32 2147483647, %v509
      %v518 = vand.u32 2147483647, %v510
      %v519 = vand.u32 2147483647, %v511
      %v520 = vand.u32 2147483647, %v512
      %v521 = vand.u32 2147483647, %v513
      %v522 = vand.u32 2147483647, %v514
      %v523 = vand.u32 2147483647, %v515
      %v524 = vand.u32 2147483647, %v516
      %v525 = vmul.f32 %v517, 0.3275911
      %v526 = vmul.f32 %v518, 0.3275911
      %v527 = vmul.f32 %v519, 0.3275911
      %v528 = vmul.f32 %v520, 0.3275911
      %v529 = vmul.f32 %v521, 0.3275911
      %v530 = vmul.f32 %v522, 0.3275911
      %v531 = vmul.f32 %v523, 0.3275911
      %v532 = vmul.f32 %v524, 0.3275911
      %v533 = vadd.f32 %v525, 1.0
      %v534 = vadd.f32 %v526, 1.0
      %v535 = vadd.f32 %v527, 1.0
      %v536 = vadd.f32 %v528, 1.0
      %v537 = vadd.f32 %v529, 1.0
      %v538 = vadd.f32 %v530, 1.0
      %v539 = vadd.f32 %v531, 1.0
      %v540 = vadd.f32 %v532, 1.0
      %v541 = vrcp.pop %v533
      %v542 = vmul.f32 %v533, %v541
      %v543 = vsub.f32 1.0, %v542
      %v544 = vmul.f32 %v541, %v543
      %v545 = vadd.f32 %v541, %v544
      %vm546 = vweird.f32 %v533
      %vm547 = vweird.f32 %v541
      %vm548 = vmor %vm546, %vm547
      %v549 = vsel %vm548, %v541, %v545
      %v550 = vand.u32 2147483647, %v533
      %vm551 = vcmp.eq.f32.partialorder %v550, 8.507059e+37
      %v552 = vand.u32 %v533, 2147483648
      %v553 = vor.u32 1.1754944e-38, %v552
      %v554 = vsel %vm551, %v553, %v549
      %v555 = vmul.f32 1.0, %v554
      %v556 = vrcp.pop %v534
      %v557 = vmul.f32 %v534, %v556
      %v558 = vsub.f32 1.0, %v557
      %v559 = vmul.f32 %v556, %v558
      %v560 = vadd.f32 %v556, %v559
      %vm561 = vweird.f32 %v534
      %vm562 = vweird.f32 %v556
      %vm563 = vmor %vm561, %vm562
      %v564 = vsel %vm563, %v556, %v560
      %v565 = vand.u32 2147483647, %v534
      %vm566 = vcmp.eq.f32.partialorder %v565, 8.507059e+37
      %v567 = vand.u32 %v534, 2147483648
      %v568 = vor.u32 1.1754944e-38, %v567
      %v569 = vsel %vm566, %v568, %v564
      %v570 = vmul.f32 1.0, %v569
      %v571 = vrcp.pop %v535
      %v572 = vmul.f32 %v535, %v571
      %v573 = vsub.f32 1.0, %v572
      %v574 = vmul.f32 %v571, %v573
      %v575 = vadd.f32 %v571, %v574
      %vm576 = vweird.f32 %v535
      %vm577 = vweird.f32 %v571
      %vm578 = vmor %vm576, %vm577
      %v579 = vsel %vm578, %v571, %v575
      %v580 = vand.u32 2147483647, %v535
      %vm581 = vcmp.eq.f32.partialorder %v580, 8.507059e+37
      %v582 = vand.u32 %v535, 2147483648
      %v583 = vor.u32 1.1754944e-38, %v582
      %v584 = vsel %vm581, %v583, %v579
      %v585 = vmul.f32 1.0, %v584
      %v586 = vrcp.pop %v536
      %v587 = vmul.f32 %v536, %v586
      %v588 = vsub.f32 1.0, %v587
      %v589 = vmul.f32 %v586, %v588
      %v590 = vadd.f32 %v586, %v589
      %vm591 = vweird.f32 %v536
      %vm592 = vweird.f32 %v586
      %vm593 = vmor %vm591, %vm592
      %v594 = vsel %vm593, %v586, %v590
      %v595 = vand.u32 2147483647, %v536
      %vm596 = vcmp.eq.f32.partialorder %v595, 8.507059e+37
      %v597 = vand.u32 %v536, 2147483648
      %v598 = vor.u32 1.1754944e-38, %v597
      %v599 = vsel %vm596, %v598, %v594
      %v600 = vmul.f32 1.0, %v599
      %v601 = vrcp.pop %v537
      %v602 = vmul.f32 %v537, %v601
      %v603 = vsub.f32 1.0, %v602
      %v604 = vmul.f32 %v601, %v603
      %v605 = vadd.f32 %v601, %v604
      %vm606 = vweird.f32 %v537
      %vm607 = vweird.f32 %v601
      %vm608 = vmor %vm606, %vm607
      %v609 = vsel %vm608, %v601, %v605
      %v610 = vand.u32 2147483647, %v537
      %vm611 = vcmp.eq.f32.partialorder %v610, 8.507059e+37
      %v612 = vand.u32 %v537, 2147483648
      %v613 = vor.u32 1.1754944e-38, %v612
      %v614 = vsel %vm611, %v613, %v609
      %v615 = vmul.f32 1.0, %v614
      %v616 = vrcp.pop %v538
      %v617 = vmul.f32 %v538, %v616
      %v618 = vsub.f32 1.0, %v617
      %v619 = vmul.f32 %v616, %v618
      %v620 = vadd.f32 %v616, %v619
      %vm621 = vweird.f32 %v538
      %vm622 = vweird.f32 %v616
      %vm623 = vmor %vm621, %vm622
      %v624 = vsel %vm623, %v616, %v620
      %v625 = vand.u32 2147483647, %v538
      %vm626 = vcmp.eq.f32.partialorder %v625, 8.507059e+37
      %v627 = vand.u32 %v538, 2147483648
      %v628 = vor.u32 1.1754944e-38, %v627
      %v629 = vsel %vm626, %v628, %v624
      %v630 = vmul.f32 1.0, %v629
      %v631 = vrcp.pop %v539
      %v632 = vmul.f32 %v539, %v631
      %v633 = vsub.f32 1.0, %v632
      %v634 = vmul.f32 %v631, %v633
      %v635 = vadd.f32 %v631, %v634
      %vm636 = vweird.f32 %v539
      %vm637 = vweird.f32 %v631
      %vm638 = vmor %vm636, %vm637
      %v639 = vsel %vm638, %v631, %v635
      %v640 = vand.u32 2147483647, %v539
      %vm641 = vcmp.eq.f32.partialorder %v640, 8.507059e+37
      %v642 = vand.u32 %v539, 2147483648
      %v643 = vor.u32 1.1754944e-38, %v642
      %v644 = vsel %vm641, %v643, %v639
      %v645 = vmul.f32 1.0, %v644
      %v646 = vrcp.pop %v540
      %v647 = vmul.f32 %v540, %v646
      %v648 = vsub.f32 1.0, %v647
      %v649 = vmul.f32 %v646, %v648
      %v650 = vadd.f32 %v646, %v649
      %vm651 = vweird.f32 %v540
      %vm652 = vweird.f32 %v646
      %vm653 = vmor %vm651, %vm652
      %v654 = vsel %vm653, %v646, %v650
      %v655 = vand.u32 2147483647, %v540
      %vm656 = vcmp.eq.f32.partialorder %v655, 8.507059e+37
      %v657 = vand.u32 %v540, 2147483648
      %v658 = vor.u32 1.1754944e-38, %v657
      %v659 = vsel %vm656, %v658, %v654
      %v660 = vmul.f32 1.0, %v659
      %v661 = vmul.f32 %v555, 1.0614054
      %v662 = vmul.f32 %v570, 1.0614054
      %v663 = vmul.f32 %v585, 1.0614054
      %v664 = vmul.f32 %v600, 1.0614054
      %v665 = vmul.f32 %v615, 1.0614054
      %v666 = vmul.f32 %v630, 1.0614054
      %v667 = vmul.f32 %v645, 1.0614054
      %v668 = vmul.f32 %v660, 1.0614054
      %v669 = vadd.f32 %v661, -1.4531521
      %v670 = vadd.f32 %v662, -1.4531521
      %v671 = vadd.f32 %v663, -1.4531521
      %v672 = vadd.f32 %v664, -1.4531521
      %v673 = vadd.f32 %v665, -1.4531521
      %v674 = vadd.f32 %v666, -1.4531521
      %v675 = vadd.f32 %v667, -1.4531521
      %v676 = vadd.f32 %v668, -1.4531521
      %v677 = vmul.f32 %v669, %v555
      %v678 = vmul.f32 %v670, %v570
      %v679 = vmul.f32 %v671, %v585
      %v680 = vmul.f32 %v672, %v600
      %v681 = vmul.f32 %v673, %v615
      %v682 = vmul.f32 %v674, %v630
      %v683 = vmul.f32 %v675, %v645
      %v684 = vmul.f32 %v676, %v660
      %v685 = vadd.f32 %v677, 1.4214138
      %v686 = vadd.f32 %v678, 1.4214138
      %v687 = vadd.f32 %v679, 1.4214138
      %v688 = vadd.f32 %v680, 1.4214138
      %v689 = vadd.f32 %v681, 1.4214138
      %v690 = vadd.f32 %v682, 1.4214138
      %v691 = vadd.f32 %v683, 1.4214138
      %v692 = vadd.f32 %v684, 1.4214138
      %v693 = vmul.f32 %v685, %v555
      %v694 = vmul.f32 %v686, %v570
      %v695 = vmul.f32 %v687, %v585
      %v696 = vmul.f32 %v688, %v600
      %v697 = vmul.f32 %v689, %v615
      %v698 = vmul.f32 %v690, %v630
      %v699 = vmul.f32 %v691, %v645
      %v700 = vmul.f32 %v692, %v660
      %v701 = vadd.f32 %v693, -0.28449672
      %v702 = vadd.f32 %v694, -0.28449672
      %v703 = vadd.f32 %v695, -0.28449672
      %v704 = vadd.f32 %v696, -0.28449672
      %v705 = vadd.f32 %v697, -0.28449672
      %v706 = vadd.f32 %v698, -0.28449672
      %v707 = vadd.f32 %v699, -0.28449672
      %v708 = vadd.f32 %v700, -0.28449672
      %v709 = vmul.f32 %v701, %v555
      %v710 = vmul.f32 %v702, %v570
      %v711 = vmul.f32 %v703, %v585
      %v712 = vmul.f32 %v704, %v600
      %v713 = vmul.f32 %v705, %v615
      %v714 = vmul.f32 %v706, %v630
      %v715 = vmul.f32 %v707, %v645
      %v716 = vmul.f32 %v708, %v660
      %v717 = vadd.f32 %v709, 0.2548296
      %v718 = vadd.f32 %v710, 0.2548296
      %v719 = vadd.f32 %v711, 0.2548296
      %v720 = vadd.f32 %v712, 0.2548296
      %v721 = vadd.f32 %v713, 0.2548296
      %v722 = vadd.f32 %v714, 0.2548296
      %v723 = vadd.f32 %v715, 0.2548296
      %v724 = vadd.f32 %v716, 0.2548296
      %v725 = vmul.f32 %v717, %v555
      %v726 = vmul.f32 %v718, %v570
      %v727 = vmul.f32 %v719, %v585
      %v728 = vmul.f32 %v720, %v600
      %v729 = vmul.f32 %v721, %v615
      %v730 = vmul.f32 %v722, %v630
      %v731 = vmul.f32 %v723, %v645
      %v732 = vmul.f32 %v724, %v660
      %v733 = vsub.f32 0.0, %v517
      %v734 = vsub.f32 0.0, %v518
      %v735 = vsub.f32 0.0, %v519
      %v736 = vsub.f32 0.0, %v520
      %v737 = vsub.f32 0.0, %v521
      %v738 = vsub.f32 0.0, %v522
      %v739 = vsub.f32 0.0, %v523
      %v740 = vsub.f32 0.0, %v524
      %v741 = vmul.f32 %v733, %v517
      %v742 = vmul.f32 %v734, %v518
      %v743 = vmul.f32 %v735, %v519
      %v744 = vmul.f32 %v736, %v520
      %v745 = vmul.f32 %v737, %v521
      %v746 = vmul.f32 %v738, %v522
      %v747 = vmul.f32 %v739, %v523
      %v748 = vmul.f32 %v740, %v524
      %v749 = vmul.f32 %v741, 1.442695
      %v750 = vpow.pop %v749
      %v751 = vmul.f32 %v742, 1.442695
      %v752 = vpow.pop %v751
      %v753 = vmul.f32 %v743, 1.442695
      %v754 = vpow.pop %v753
      %v755 = vmul.f32 %v744, 1.442695
      %v756 = vpow.pop %v755
      %v757 = vmul.f32 %v745, 1.442695
      %v758 = vpow.pop %v757
      %v759 = vmul.f32 %v746, 1.442695
      %v760 = vpow.pop %v759
      %v761 = vmul.f32 %v747, 1.442695
      %v762 = vpow.pop %v761
      %v763 = vmul.f32 %v748, 1.442695
      %v764 = vpow.pop %v763
      %v765 = vmul.f32 %v725, %v750
      %v766 = vmul.f32 %v726, %v752
      %v767 = vmul.f32 %v727, %v754
      %v768 = vmul.f32 %v728, %v756
      %v769 = vmul.f32 %v729, %v758
      %v770 = vmul.f32 %v730, %v760
      %v771 = vmul.f32 %v731, %v762
      %v772 = vmul.f32 %v732, %v764
      %v773 = vsub.f32 1.0, %v765
      %v774 = vsub.f32 1.0, %v766
      %v775 = vsub.f32 1.0, %v767
      %v776 = vsub.f32 1.0, %v768
      %v777 = vsub.f32 1.0, %v769
      %v778 = vsub.f32 1.0, %v770
      %v779 = vsub.f32 1.0, %v771
      %v780 = vsub.f32 1.0, %v772
      %vm781 = vcmp.ge.f32.partialorder %v509, 0.0
      %vm782 = vcmp.ge.f32.partialorder %v510, 0.0
      %vm783 = vcmp.ge.f32.partialorder %v511, 0.0
      %vm784 = vcmp.ge.f32.partialorder %v512, 0.0
      %vm785 = vcmp.ge.f32.partialorder %v513, 0.0
      %vm786 = vcmp.ge.f32.partialorder %v514, 0.0
      %vm787 = vcmp.ge.f32.partialorder %v515, 0.0
      %vm788 = vcmp.ge.f32.partialorder %v516, 0.0
      %v789 = vsub.f32 0.0, %v773
      %v790 = vsub.f32 0.0, %v774
      %v791 = vsub.f32 0.0, %v775
      %v792 = vsub.f32 0.0, %v776
      %v793 = vsub.f32 0.0, %v777
      %v794 = vsub.f32 0.0, %v778
      %v795 = vsub.f32 0.0, %v779
      %v796 = vsub.f32 0.0, %v780
      %v797 = vsel %vm781, %v773, %v789
      %v798 = vsel %vm782, %v774, %v790
      %v799 = vsel %vm783, %v775, %v791
      %v800 = vsel %vm784, %v776, %v792
      %v801 = vsel %vm785, %v777, %v793
      %v802 = vsel %vm786, %v778, %v794
      %v803 = vsel %vm787, %v779, %v795
      %v804 = vsel %vm788, %v780, %v796
      %v805 = vadd.f32 %v797, 1.0
      %v806 = vadd.f32 %v798, 1.0
      %v807 = vadd.f32 %v799, 1.0
      %v808 = vadd.f32 %v800, 1.0
      %v809 = vadd.f32 %v801, 1.0
      %v810 = vadd.f32 %v802, 1.0
      %v811 = vadd.f32 %v803, 1.0
      %v812 = vadd.f32 %v804, 1.0
      %v813 = vmul.f32 %v501, %v805
      %v814 = vmul.f32 %v502, %v806
      %v815 = vmul.f32 %v503, %v807
      %v816 = vmul.f32 %v504, %v808
      %v817 = vmul.f32 %v505, %v809
      %v818 = vmul.f32 %v506, %v810
      %v819 = vmul.f32 %v507, %v811
      %v820 = vmul.f32 %v508, %v812
      %vm821 = vcmask 523264
      %822 = vst.msk [vmem:[#allocation2] sm:$0xff] %vm821, 0.0
      %823 = vst.msk [vmem:[#allocation2 + $0x8] sm:$0xff] %vm821, 0.0
      %824 = vst.msk [vmem:[#allocation2 + $0x10] sm:$0xff] %vm821, 0.0
      %825 = vst.msk [vmem:[#allocation2 + $0x18] sm:$0xff] %vm821, 0.0
      %826 = vst.msk [vmem:[#allocation2 + $0x20] sm:$0xff] %vm821, 0.0
      %827 = vst.msk [vmem:[#allocation2 + $0x28] sm:$0xff] %vm821, 0.0
      %828 = vst.msk [vmem:[#allocation2 + $0x30] sm:$0xff] %vm821, 0.0
      %829 = vst.msk [vmem:[#allocation2 + $0x38] sm:$0xff] %vm821, 0.0
      %830 = vst.msk [vmem:[#allocation2 + $0x40] sm:$0xff] %vm821, 0.0
      %831 = vst.msk [vmem:[#allocation2 + $0x48] sm:$0xff] %vm821, 0.0
      %832 = vst.msk [vmem:[#allocation2 + $0x50] sm:$0xff] %vm821, 0.0
      %833 = vst.msk [vmem:[#allocation2 + $0x58] sm:$0xff] %vm821, 0.0
      %834 = vst.msk [vmem:[#allocation2 + $0x60] sm:$0xff] %vm821, 0.0
      %835 = vst.msk [vmem:[#allocation2 + $0x68] sm:$0xff] %vm821, 0.0
      %836 = vst.msk [vmem:[#allocation2 + $0x70] sm:$0xff] %vm821, 0.0
      %837 = vst.msk [vmem:[#allocation2 + $0x78] sm:$0xff] %vm821, 0.0
      %838 = vst.msk [vmem:[#allocation2 + $0x80] sm:$0xff] %vm821, 0.0
      %839 = vst.msk [vmem:[#allocation2 + $0x88] sm:$0xff] %vm821, 0.0
      %840 = vst.msk [vmem:[#allocation2 + $0x90] sm:$0xff] %vm821, 0.0
      %841 = vst.msk [vmem:[#allocation2 + $0x98] sm:$0xff] %vm821, 0.0
      %842 = vst.msk [vmem:[#allocation2 + $0xa0] sm:$0xff] %vm821, 0.0
      %843 = vst.msk [vmem:[#allocation2 + $0xa8] sm:$0xff] %vm821, 0.0
      %844 = vst.msk [vmem:[#allocation2 + $0xb0] sm:$0xff] %vm821, 0.0
      %845 = vst.msk [vmem:[#allocation2 + $0xb8] sm:$0xff] %vm821, 0.0
      %846 = vst.msk [vmem:[#allocation2 + $0xc0] sm:$0xff] %vm821, 0.0
      %847 = vst.msk [vmem:[#allocation2 + $0xc8] sm:$0xff] %vm821, 0.0
      %848 = vst.msk [vmem:[#allocation2 + $0xd0] sm:$0xff] %vm821, 0.0
      %849 = vst.msk [vmem:[#allocation2 + $0xd8] sm:$0xff] %vm821, 0.0
      %850 = vst.msk [vmem:[#allocation2 + $0xe0] sm:$0xff] %vm821, 0.0
      %851 = vst.msk [vmem:[#allocation2 + $0xe8] sm:$0xff] %vm821, 0.0
      %s852 = scalar_lea.vmem [#allocation2], 24
      %853 = vst.msk [vmem:[%s852 + $0x8] sm:$0xff] %vm821, %v813
      %854 = vst.msk [vmem:[%s852 + $0x20] sm:$0xff] %vm821, %v814
      %855 = vst.msk [vmem:[%s852 + $0x38] sm:$0xff] %vm821, %v815
      %856 = vst.msk [vmem:[%s852 + $0x50] sm:$0xff] %vm821, %v816
      %857 = vst.msk [vmem:[%s852 + $0x68] sm:$0xff] %vm821, %v817
      %858 = vst.msk [vmem:[%s852 + $0x80] sm:$0xff] %vm821, %v818
      %859 = vst.msk [vmem:[%s852 + $0x98] sm:$0xff] %vm821, %v819
      %860 = vst.msk [vmem:[%s852 + $0xb0] sm:$0xff] %vm821, %v820
      %v861 = vld [vmem:[#allocation2] sm:$0xff]
      %v862 = vld [vmem:[#allocation2 + $0x8] sm:$0xff]
      %v863 = vld [vmem:[#allocation2 + $0x10] sm:$0xff]
      %v864 = vld [vmem:[#allocation2 + $0x18] sm:$0xff]
      %v865 = vld [vmem:[#allocation2 + $0x20] sm:$0xff]
      %v866 = vld [vmem:[#allocation2 + $0x28] sm:$0xff]
      %v867 = vld [vmem:[#allocation2 + $0x30] sm:$0xff]
      %v868 = vld [vmem:[#allocation2 + $0x38] sm:$0xff]
      %v869 = vld [vmem:[#allocation2 + $0x40] sm:$0xff]
      %v870 = vld [vmem:[#allocation2 + $0x48] sm:$0xff]
      %v871 = vld [vmem:[#allocation2 + $0x50] sm:$0xff]
      %v872 = vld [vmem:[#allocation2 + $0x58] sm:$0xff]
      %v873 = vld [vmem:[#allocation2 + $0x60] sm:$0xff]
      %v874 = vld [vmem:[#allocation2 + $0x68] sm:$0xff]
      %v875 = vld [vmem:[#allocation2 + $0x70] sm:$0xff]
      %v876 = vld [vmem:[#allocation2 + $0x78] sm:$0xff]
      %v877 = vld [vmem:[#allocation2 + $0x80] sm:$0xff]
      %v878 = vld [vmem:[#allocation2 + $0x88] sm:$0xff]
      %v879 = vld [vmem:[#allocation2 + $0x90] sm:$0xff]
      %v880 = vld [vmem:[#allocation2 + $0x98] sm:$0xff]
      %v881 = vld [vmem:[#allocation2 + $0xa0] sm:$0xff]
      %v882 = vld [vmem:[#allocation2 + $0xa8] sm:$0xff]
      %v883 = vld [vmem:[#allocation2 + $0xb0] sm:$0xff]
      %v884 = vld [vmem:[#allocation2 + $0xb8] sm:$0xff]
      %v885 = vld [vmem:[#allocation2 + $0xc0] sm:$0xff]
      %v886 = vld [vmem:[#allocation2 + $0xc8] sm:$0xff]
      %v887 = vld [vmem:[#allocation2 + $0xd0] sm:$0xff]
      %v888 = vld [vmem:[#allocation2 + $0xd8] sm:$0xff]
      %v889 = vld [vmem:[#allocation2 + $0xe0] sm:$0xff]
      %v890 = vld [vmem:[#allocation2 + $0xe8] sm:$0xff]
      %v891 = vld [vmem:[%s4] sm:$0x1]
      %v892 = vperm.slane %v891, 0
      %v893 = vmul.f32 %v861, %v892
      %v894 = vmul.f32 %v862, %v892
      %v895 = vmul.f32 %v864, %v892
      %v896 = vmul.f32 %v865, %v892
      %v897 = vmul.f32 %v867, %v892
      %v898 = vmul.f32 %v868, %v892
      %v899 = vmul.f32 %v870, %v892
      %v900 = vmul.f32 %v871, %v892
      %v901 = vmul.f32 %v873, %v892
      %v902 = vmul.f32 %v874, %v892
      %v903 = vmul.f32 %v876, %v892
      %v904 = vmul.f32 %v877, %v892
      %v905 = vmul.f32 %v879, %v892
      %v906 = vmul.f32 %v880, %v892
      %v907 = vmul.f32 %v882, %v892
      %v908 = vmul.f32 %v883, %v892
      %v909 = vadd.f32 %v893, 0.0
      %v910 = vadd.f32 %v894, 0.0
      %v911 = vadd.f32 %v895, 0.0
      %v912 = vadd.f32 %v896, 0.0
      %v913 = vadd.f32 %v897, 0.0
      %v914 = vadd.f32 %v898, 0.0
      %v915 = vadd.f32 %v899, 0.0
      %v916 = vadd.f32 %v900, 0.0
      %v917 = vadd.f32 %v901, 0.0
      %v918 = vadd.f32 %v902, 0.0
      %v919 = vadd.f32 %v903, 0.0
      %v920 = vadd.f32 %v904, 0.0
      %v921 = vadd.f32 %v905, 0.0
      %v922 = vadd.f32 %v906, 0.0
      %v923 = vadd.f32 %v907, 0.0
      %v924 = vadd.f32 %v908, 0.0
      %v925 = vld [vmem:[%s4 + $0x1] sm:$0x1]
      %v926 = vperm.slane %v925, 0
      %v927 = vmul.f32 %v862, %v926
      %v928 = vmul.f32 %v865, %v926
      %v929 = vmul.f32 %v868, %v926
      %v930 = vmul.f32 %v871, %v926
      %v931 = vmul.f32 %v874, %v926
      %v932 = vmul.f32 %v877, %v926
      %v933 = vmul.f32 %v880, %v926
      %v934 = vmul.f32 %v883, %v926
      %v943 = vrot.slane %v927, 1
      %v944 = vrot.slane %v928, 1
      %v945 = vrot.slane %v929, 1
      %v946 = vrot.slane %v930, 1
      %v947 = vrot.slane %v931, 1
      %v948 = vrot.slane %v932, 1
      %v949 = vrot.slane %v933, 1
      %v950 = vrot.slane %v934, 1
      %v959 = vadd.f32 %v909, %v943
      %v960 = vadd.f32 %v910, %v943
      %v961 = vadd.f32 %v911, %v944
      %v962 = vadd.f32 %v912, %v944
      %v963 = vadd.f32 %v913, %v945
      %v964 = vadd.f32 %v914, %v945
      %v965 = vadd.f32 %v915, %v946
      %v966 = vadd.f32 %v916, %v946
      %v967 = vadd.f32 %v917, %v947
      %v968 = vadd.f32 %v918, %v947
      %v969 = vadd.f32 %v919, %v948
      %v970 = vadd.f32 %v920, %v948
      %v971 = vadd.f32 %v921, %v949
      %v972 = vadd.f32 %v922, %v949
      %v973 = vadd.f32 %v923, %v950
      %v974 = vadd.f32 %v924, %v950
      %v975 = vld [vmem:[%s4 + $0x2] sm:$0x1]
      %v976 = vperm.slane %v975, 0
      %v977 = vmul.f32 %v862, %v976
      %v978 = vmul.f32 %v863, %v976
      %v979 = vmul.f32 %v865, %v976
      %v980 = vmul.f32 %v866, %v976
      %v981 = vmul.f32 %v868, %v976
      %v982 = vmul.f32 %v869, %v976
      %v983 = vmul.f32 %v871, %v976
      %v984 = vmul.f32 %v872, %v976
      %v985 = vmul.f32 %v874, %v976
      %v986 = vmul.f32 %v875, %v976
      %v987 = vmul.f32 %v877, %v976
      %v988 = vmul.f32 %v878, %v976
      %v989 = vmul.f32 %v880, %v976
      %v990 = vmul.f32 %v881, %v976
      %v991 = vmul.f32 %v883, %v976
      %v992 = vmul.f32 %v884, %v976
      %vm1009 = vcmask 1045504
      %v1010 = vrot.slane %v977, 2
      %v1011 = vrot.slane %v978, 2
      %v1012 = vsel %vm1009, %v1010, %v1011
      %v1013 = vrot.slane %v979, 2
      %v1014 = vrot.slane %v980, 2
      %v1015 = vsel %vm1009, %v1013, %v1014
      %v1016 = vrot.slane %v981, 2
      %v1017 = vrot.slane %v982, 2
      %v1018 = vsel %vm1009, %v1016, %v1017
      %v1019 = vrot.slane %v983, 2
      %v1020 = vrot.slane %v984, 2
      %v1021 = vsel %vm1009, %v1019, %v1020
      %v1022 = vrot.slane %v985, 2
      %v1023 = vrot.slane %v986, 2
      %v1024 = vsel %vm1009, %v1022, %v1023
      %v1025 = vrot.slane %v987, 2
      %v1026 = vrot.slane %v988, 2
      %v1027 = vsel %vm1009, %v1025, %v1026
      %v1028 = vrot.slane %v989, 2
      %v1029 = vrot.slane %v990, 2
      %v1030 = vsel %vm1009, %v1028, %v1029
      %v1031 = vrot.slane %v991, 2
      %v1032 = vrot.slane %v992, 2
      %v1033 = vsel %vm1009, %v1031, %v1032
      %v1050 = vadd.f32 %v959, %v1010
      %v1051 = vadd.f32 %v960, %v1012
      %v1052 = vadd.f32 %v961, %v1013
      %v1053 = vadd.f32 %v962, %v1015
      %v1054 = vadd.f32 %v963, %v1016
      %v1055 = vadd.f32 %v964, %v1018
      %v1056 = vadd.f32 %v965, %v1019
      %v1057 = vadd.f32 %v966, %v1021
      %v1058 = vadd.f32 %v967, %v1022
      %v1059 = vadd.f32 %v968, %v1024
      %v1060 = vadd.f32 %v969, %v1025
      %v1061 = vadd.f32 %v970, %v1027
      %v1062 = vadd.f32 %v971, %v1028
      %v1063 = vadd.f32 %v972, %v1030
      %v1064 = vadd.f32 %v973, %v1031
      %v1065 = vadd.f32 %v974, %v1033
      %v1066 = vld [vmem:[%s4 + $0x3] sm:$0x1]
      %v1067 = vperm.slane %v1066, 0
      %v1068 = vmul.f32 %v864, %v1067
      %v1069 = vmul.f32 %v865, %v1067
      %v1070 = vmul.f32 %v867, %v1067
      %v1071 = vmul.f32 %v868, %v1067
      %v1072 = vmul.f32 %v870, %v1067
      %v1073 = vmul.f32 %v871, %v1067
      %v1074 = vmul.f32 %v873, %v1067
      %v1075 = vmul.f32 %v874, %v1067
      %v1076 = vmul.f32 %v876, %v1067
      %v1077 = vmul.f32 %v877, %v1067
      %v1078 = vmul.f32 %v879, %v1067
      %v1079 = vmul.f32 %v880, %v1067
      %v1080 = vmul.f32 %v882, %v1067
      %v1081 = vmul.f32 %v883, %v1067
      %v1082 = vmul.f32 %v885, %v1067
      %v1083 = vmul.f32 %v886, %v1067
      %v1084 = vadd.f32 %v1050, %v1068
      %v1085 = vadd.f32 %v1051, %v1069
      %v1086 = vadd.f32 %v1052, %v1070
      %v1087 = vadd.f32 %v1053, %v1071
      %v1088 = vadd.f32 %v1054, %v1072
      %v1089 = vadd.f32 %v1055, %v1073
      %v1090 = vadd.f32 %v1056, %v1074
      %v1091 = vadd.f32 %v1057, %v1075
      %v1092 = vadd.f32 %v1058, %v1076
      %v1093 = vadd.f32 %v1059, %v1077
      %v1094 = vadd.f32 %v1060, %v1078
      %v1095 = vadd.f32 %v1061, %v1079
      %v1096 = vadd.f32 %v1062, %v1080
      %v1097 = vadd.f32 %v1063, %v1081
      %v1098 = vadd.f32 %v1064, %v1082
      %v1099 = vadd.f32 %v1065, %v1083
      %v1100 = vld [vmem:[%s4 + $0x4] sm:$0x1]
      %v1101 = vperm.slane %v1100, 0
      %v1102 = vmul.f32 %v865, %v1101
      %v1103 = vmul.f32 %v868, %v1101
      %v1104 = vmul.f32 %v871, %v1101
      %v1105 = vmul.f32 %v874, %v1101
      %v1106 = vmul.f32 %v877, %v1101
      %v1107 = vmul.f32 %v880, %v1101
      %v1108 = vmul.f32 %v883, %v1101
      %v1109 = vmul.f32 %v886, %v1101
      %v1118 = vrot.slane %v1102, 1
      %v1119 = vrot.slane %v1103, 1
      %v1120 = vrot.slane %v1104, 1
      %v1121 = vrot.slane %v1105, 1
      %v1122 = vrot.slane %v1106, 1
      %v1123 = vrot.slane %v1107, 1
      %v1124 = vrot.slane %v1108, 1
      %v1125 = vrot.slane %v1109, 1
      %v1134 = vadd.f32 %v1084, %v1118
      %v1135 = vadd.f32 %v1085, %v1118
      %v1136 = vadd.f32 %v1086, %v1119
      %v1137 = vadd.f32 %v1087, %v1119
      %v1138 = vadd.f32 %v1088, %v1120
      %v1139 = vadd.f32 %v1089, %v1120
      %v1140 = vadd.f32 %v1090, %v1121
      %v1141 = vadd.f32 %v1091, %v1121
      %v1142 = vadd.f32 %v1092, %v1122
      %v1143 = vadd.f32 %v1093, %v1122
      %v1144 = vadd.f32 %v1094, %v1123
      %v1145 = vadd.f32 %v1095, %v1123
      %v1146 = vadd.f32 %v1096, %v1124
      %v1147 = vadd.f32 %v1097, %v1124
      %v1148 = vadd.f32 %v1098, %v1125
      %v1149 = vadd.f32 %v1099, %v1125
      %v1150 = vld [vmem:[%s4 + $0x5] sm:$0x1]
      %v1151 = vperm.slane %v1150, 0
      %v1152 = vmul.f32 %v865, %v1151
      %v1153 = vmul.f32 %v866, %v1151
      %v1154 = vmul.f32 %v868, %v1151
      %v1155 = vmul.f32 %v869, %v1151
      %v1156 = vmul.f32 %v871, %v1151
      %v1157 = vmul.f32 %v872, %v1151
      %v1158 = vmul.f32 %v874, %v1151
      %v1159 = vmul.f32 %v875, %v1151
      %v1160 = vmul.f32 %v877, %v1151
      %v1161 = vmul.f32 %v878, %v1151
      %v1162 = vmul.f32 %v880, %v1151
      %v1163 = vmul.f32 %v881, %v1151
      %v1164 = vmul.f32 %v883, %v1151
      %v1165 = vmul.f32 %v884, %v1151
      %v1166 = vmul.f32 %v886, %v1151
      %v1167 = vmul.f32 %v887, %v1151
      %v1184 = vrot.slane %v1152, 2
      %v1185 = vrot.slane %v1153, 2
      %v1186 = vsel %vm1009, %v1184, %v1185
      %v1187 = vrot.slane %v1154, 2
      %v1188 = vrot.slane %v1155, 2
      %v1189 = vsel %vm1009, %v1187, %v1188
      %v1190 = vrot.slane %v1156, 2
      %v1191 = vrot.slane %v1157, 2
      %v1192 = vsel %vm1009, %v1190, %v1191
      %v1193 = vrot.slane %v1158, 2
      %v1194 = vrot.slane %v1159, 2
      %v1195 = vsel %vm1009, %v1193, %v1194
      %v1196 = vrot.slane %v1160, 2
      %v1197 = vrot.slane %v1161, 2
      %v1198 = vsel %vm1009, %v1196, %v1197
      %v1199 = vrot.slane %v1162, 2
      %v1200 = vrot.slane %v1163, 2
      %v1201 = vsel %vm1009, %v1199, %v1200
      %v1202 = vrot.slane %v1164, 2
      %v1203 = vrot.slane %v1165, 2
      %v1204 = vsel %vm1009, %v1202, %v1203
      %v1205 = vrot.slane %v1166, 2
      %v1206 = vrot.slane %v1167, 2
      %v1207 = vsel %vm1009, %v1205, %v1206
      %v1224 = vadd.f32 %v1134, %v1184
      %v1225 = vadd.f32 %v1135, %v1186
      %v1226 = vadd.f32 %v1136, %v1187
      %v1227 = vadd.f32 %v1137, %v1189
      %v1228 = vadd.f32 %v1138, %v1190
      %v1229 = vadd.f32 %v1139, %v1192
      %v1230 = vadd.f32 %v1140, %v1193
      %v1231 = vadd.f32 %v1141, %v1195
      %v1232 = vadd.f32 %v1142, %v1196
      %v1233 = vadd.f32 %v1143, %v1198
      %v1234 = vadd.f32 %v1144, %v1199
      %v1235 = vadd.f32 %v1145, %v1201
      %v1236 = vadd.f32 %v1146, %v1202
      %v1237 = vadd.f32 %v1147, %v1204
      %v1238 = vadd.f32 %v1148, %v1205
      %v1239 = vadd.f32 %v1149, %v1207
      %v1240 = vld [vmem:[%s4 + $0x6] sm:$0x1]
      %v1241 = vperm.slane %v1240, 0
      %v1242 = vmul.f32 %v867, %v1241
      %v1243 = vmul.f32 %v868, %v1241
      %v1244 = vmul.f32 %v870, %v1241
      %v1245 = vmul.f32 %v871, %v1241
      %v1246 = vmul.f32 %v873, %v1241
      %v1247 = vmul.f32 %v874, %v1241
      %v1248 = vmul.f32 %v876, %v1241
      %v1249 = vmul.f32 %v877, %v1241
      %v1250 = vmul.f32 %v879, %v1241
      %v1251 = vmul.f32 %v880, %v1241
      %v1252 = vmul.f32 %v882, %v1241
      %v1253 = vmul.f32 %v883, %v1241
      %v1254 = vmul.f32 %v885, %v1241
      %v1255 = vmul.f32 %v886, %v1241
      %v1256 = vmul.f32 %v888, %v1241
      %v1257 = vmul.f32 %v889, %v1241
      %v1258 = vadd.f32 %v1224, %v1242
      %v1259 = vadd.f32 %v1225, %v1243
      %v1260 = vadd.f32 %v1226, %v1244
      %v1261 = vadd.f32 %v1227, %v1245
      %v1262 = vadd.f32 %v1228, %v1246
      %v1263 = vadd.f32 %v1229, %v1247
      %v1264 = vadd.f32 %v1230, %v1248
      %v1265 = vadd.f32 %v1231, %v1249
      %v1266 = vadd.f32 %v1232, %v1250
      %v1267 = vadd.f32 %v1233, %v1251
      %v1268 = vadd.f32 %v1234, %v1252
      %v1269 = vadd.f32 %v1235, %v1253
      %v1270 = vadd.f32 %v1236, %v1254
      %v1271 = vadd.f32 %v1237, %v1255
      %v1272 = vadd.f32 %v1238, %v1256
      %v1273 = vadd.f32 %v1239, %v1257
      %v1274 = vld [vmem:[%s4 + $0x7] sm:$0x1]
      %v1275 = vperm.slane %v1274, 0
      %v1276 = vmul.f32 %v868, %v1275
      %v1277 = vmul.f32 %v871, %v1275
      %v1278 = vmul.f32 %v874, %v1275
      %v1279 = vmul.f32 %v877, %v1275
      %v1280 = vmul.f32 %v880, %v1275
      %v1281 = vmul.f32 %v883, %v1275
      %v1282 = vmul.f32 %v886, %v1275
      %v1283 = vmul.f32 %v889, %v1275
      %v1292 = vrot.slane %v1276, 1
      %v1293 = vrot.slane %v1277, 1
      %v1294 = vrot.slane %v1278, 1
      %v1295 = vrot.slane %v1279, 1
      %v1296 = vrot.slane %v1280, 1
      %v1297 = vrot.slane %v1281, 1
      %v1298 = vrot.slane %v1282, 1
      %v1299 = vrot.slane %v1283, 1
      %v1308 = vadd.f32 %v1258, %v1292
      %v1309 = vadd.f32 %v1259, %v1292
      %v1310 = vadd.f32 %v1260, %v1293
      %v1311 = vadd.f32 %v1261, %v1293
      %v1312 = vadd.f32 %v1262, %v1294
      %v1313 = vadd.f32 %v1263, %v1294
      %v1314 = vadd.f32 %v1264, %v1295
      %v1315 = vadd.f32 %v1265, %v1295
      %v1316 = vadd.f32 %v1266, %v1296
      %v1317 = vadd.f32 %v1267, %v1296
      %v1318 = vadd.f32 %v1268, %v1297
      %v1319 = vadd.f32 %v1269, %v1297
      %v1320 = vadd.f32 %v1270, %v1298
      %v1321 = vadd.f32 %v1271, %v1298
      %v1322 = vadd.f32 %v1272, %v1299
      %v1323 = vadd.f32 %v1273, %v1299
      %v1324 = vld [vmem:[%s4 + $0x8] sm:$0x1]
      %v1325 = vperm.slane %v1324, 0
      %v1326 = vmul.f32 %v868, %v1325
      %v1327 = vmul.f32 %v869, %v1325
      %v1328 = vmul.f32 %v871, %v1325
      %v1329 = vmul.f32 %v872, %v1325
      %v1330 = vmul.f32 %v874, %v1325
      %v1331 = vmul.f32 %v875, %v1325
      %v1332 = vmul.f32 %v877, %v1325
      %v1333 = vmul.f32 %v878, %v1325
      %v1334 = vmul.f32 %v880, %v1325
      %v1335 = vmul.f32 %v881, %v1325
      %v1336 = vmul.f32 %v883, %v1325
      %v1337 = vmul.f32 %v884, %v1325
      %v1338 = vmul.f32 %v886, %v1325
      %v1339 = vmul.f32 %v887, %v1325
      %v1340 = vmul.f32 %v889, %v1325
      %v1341 = vmul.f32 %v890, %v1325
      %v1358 = vrot.slane %v1326, 2
      %v1359 = vrot.slane %v1327, 2
      %v1360 = vsel %vm1009, %v1358, %v1359
      %v1361 = vrot.slane %v1328, 2
      %v1362 = vrot.slane %v1329, 2
      %v1363 = vsel %vm1009, %v1361, %v1362
      %v1364 = vrot.slane %v1330, 2
      %v1365 = vrot.slane %v1331, 2
      %v1366 = vsel %vm1009, %v1364, %v1365
      %v1367 = vrot.slane %v1332, 2
      %v1368 = vrot.slane %v1333, 2
      %v1369 = vsel %vm1009, %v1367, %v1368
      %v1370 = vrot.slane %v1334, 2
      %v1371 = vrot.slane %v1335, 2
      %v1372 = vsel %vm1009, %v1370, %v1371
      %v1373 = vrot.slane %v1336, 2
      %v1374 = vrot.slane %v1337, 2
      %v1375 = vsel %vm1009, %v1373, %v1374
      %v1376 = vrot.slane %v1338, 2
      %v1377 = vrot.slane %v1339, 2
      %v1378 = vsel %vm1009, %v1376, %v1377
      %v1379 = vrot.slane %v1340, 2
      %v1380 = vrot.slane %v1341, 2
      %v1381 = vsel %vm1009, %v1379, %v1380
      %v1398 = vadd.f32 %v1308, %v1358
      %v1399 = vadd.f32 %v1309, %v1360
      %v1400 = vadd.f32 %v1310, %v1361
      %v1401 = vadd.f32 %v1311, %v1363
      %v1402 = vadd.f32 %v1312, %v1364
      %v1403 = vadd.f32 %v1313, %v1366
      %v1404 = vadd.f32 %v1314, %v1367
      %v1405 = vadd.f32 %v1315, %v1369
      %v1406 = vadd.f32 %v1316, %v1370
      %v1407 = vadd.f32 %v1317, %v1372
      %v1408 = vadd.f32 %v1318, %v1373
      %v1409 = vadd.f32 %v1319, %v1375
      %v1410 = vadd.f32 %v1320, %v1376
      %v1411 = vadd.f32 %v1321, %v1378
      %v1412 = vadd.f32 %v1322, %v1379
      %v1413 = vadd.f32 %v1323, %v1381
      %v1414 = vld [vmem:[%s5] sm:$0x1]
      %v1416 = vperm.slane %v1414, 0
      %v1418 = vmul.f32 %v1398, %v1416
      %v1419 = vmul.f32 %v1399, %v1416
      %v1420 = vmul.f32 %v1400, %v1416
      %v1421 = vmul.f32 %v1401, %v1416
      %v1422 = vmul.f32 %v1402, %v1416
      %v1423 = vmul.f32 %v1403, %v1416
      %v1424 = vmul.f32 %v1404, %v1416
      %v1425 = vmul.f32 %v1405, %v1416
      %v1426 = vmul.f32 %v1406, %v1416
      %v1427 = vmul.f32 %v1407, %v1416
      %v1428 = vmul.f32 %v1408, %v1416
      %v1429 = vmul.f32 %v1409, %v1416
      %v1430 = vmul.f32 %v1410, %v1416
      %v1431 = vmul.f32 %v1411, %v1416
      %v1432 = vmul.f32 %v1412, %v1416
      %v1433 = vmul.f32 %v1413, %v1416
      %v1434 = vld [vmem:[%s6] sm:$0x1]
      %v1436 = vperm.slane %v1434, 0
      %v1438 = vadd.f32 %v1418, %v1436
      %v1439 = vadd.f32 %v1419, %v1436
      %v1440 = vadd.f32 %v1420, %v1436
      %v1441 = vadd.f32 %v1421, %v1436
      %v1442 = vadd.f32 %v1422, %v1436
      %v1443 = vadd.f32 %v1423, %v1436
      %v1444 = vadd.f32 %v1424, %v1436
      %v1445 = vadd.f32 %v1425, %v1436
      %v1446 = vadd.f32 %v1426, %v1436
      %v1447 = vadd.f32 %v1427, %v1436
      %v1448 = vadd.f32 %v1428, %v1436
      %v1449 = vadd.f32 %v1429, %v1436
      %v1450 = vadd.f32 %v1430, %v1436
      %v1451 = vadd.f32 %v1431, %v1436
      %v1452 = vadd.f32 %v1432, %v1436
      %v1453 = vadd.f32 %v1433, %v1436
      %v1454 = vmul.f32 %v1438, 0.5
      %v1455 = vmul.f32 %v1439, 0.5
      %v1456 = vmul.f32 %v1440, 0.5
      %v1457 = vmul.f32 %v1441, 0.5
      %v1458 = vmul.f32 %v1442, 0.5
      %v1459 = vmul.f32 %v1443, 0.5
      %v1460 = vmul.f32 %v1444, 0.5
      %v1461 = vmul.f32 %v1445, 0.5
      %v1462 = vmul.f32 %v1446, 0.5
      %v1463 = vmul.f32 %v1447, 0.5
      %v1464 = vmul.f32 %v1448, 0.5
      %v1465 = vmul.f32 %v1449, 0.5
      %v1466 = vmul.f32 %v1450, 0.5
      %v1467 = vmul.f32 %v1451, 0.5
      %v1468 = vmul.f32 %v1452, 0.5
      %v1469 = vmul.f32 %v1453, 0.5
      %v1470 = vmul.f32 %v1438, 0.70710677
      %v1471 = vmul.f32 %v1439, 0.70710677
      %v1472 = vmul.f32 %v1440, 0.70710677
      %v1473 = vmul.f32 %v1441, 0.70710677
      %v1474 = vmul.f32 %v1442, 0.70710677
      %v1475 = vmul.f32 %v1443, 0.70710677
      %v1476 = vmul.f32 %v1444, 0.70710677
      %v1477 = vmul.f32 %v1445, 0.70710677
      %v1478 = vmul.f32 %v1446, 0.70710677
      %v1479 = vmul.f32 %v1447, 0.70710677
      %v1480 = vmul.f32 %v1448, 0.70710677
      %v1481 = vmul.f32 %v1449, 0.70710677
      %v1482 = vmul.f32 %v1450, 0.70710677
      %v1483 = vmul.f32 %v1451, 0.70710677
      %v1484 = vmul.f32 %v1452, 0.70710677
      %v1485 = vmul.f32 %v1453, 0.70710677
      %v1486 = vand.u32 2147483647, %v1470
      %v1487 = vand.u32 2147483647, %v1471
      %v1488 = vand.u32 2147483647, %v1472
      %v1489 = vand.u32 2147483647, %v1473
      %v1490 = vand.u32 2147483647, %v1474
      %v1491 = vand.u32 2147483647, %v1475
      %v1492 = vand.u32 2147483647, %v1476
      %v1493 = vand.u32 2147483647, %v1477
      %v1494 = vand.u32 2147483647, %v1478
      %v1495 = vand.u32 2147483647, %v1479
      %v1496 = vand.u32 2147483647, %v1480
      %v1497 = vand.u32 2147483647, %v1481
      %v1498 = vand.u32 2147483647, %v1482
      %v1499 = vand.u32 2147483647, %v1483
      %v1500 = vand.u32 2147483647, %v1484
      %v1501 = vand.u32 2147483647, %v1485
      %v1502 = vmul.f32 %v1486, 0.3275911
      %v1503 = vmul.f32 %v1487, 0.3275911
      %v1504 = vmul.f32 %v1488, 0.3275911
      %v1505 = vmul.f32 %v1489, 0.3275911
      %v1506 = vmul.f32 %v1490, 0.3275911
      %v1507 = vmul.f32 %v1491, 0.3275911
      %v1508 = vmul.f32 %v1492, 0.3275911
      %v1509 = vmul.f32 %v1493, 0.3275911
      %v1510 = vmul.f32 %v1494, 0.3275911
      %v1511 = vmul.f32 %v1495, 0.3275911
      %v1512 = vmul.f32 %v1496, 0.3275911
      %v1513 = vmul.f32 %v1497, 0.3275911
      %v1514 = vmul.f32 %v1498, 0.3275911
      %v1515 = vmul.f32 %v1499, 0.3275911
      %v1516 = vmul.f32 %v1500, 0.3275911
      %v1517 = vmul.f32 %v1501, 0.3275911
      %v1518 = vadd.f32 %v1502, 1.0
      %v1519 = vadd.f32 %v1503, 1.0
      %v1520 = vadd.f32 %v1504, 1.0
      %v1521 = vadd.f32 %v1505, 1.0
      %v1522 = vadd.f32 %v1506, 1.0
      %v1523 = vadd.f32 %v1507, 1.0
      %v1524 = vadd.f32 %v1508, 1.0
      %v1525 = vadd.f32 %v1509, 1.0
      %v1526 = vadd.f32 %v1510, 1.0
      %v1527 = vadd.f32 %v1511, 1.0
      %v1528 = vadd.f32 %v1512, 1.0
      %v1529 = vadd.f32 %v1513, 1.0
      %v1530 = vadd.f32 %v1514, 1.0
      %v1531 = vadd.f32 %v1515, 1.0
      %v1532 = vadd.f32 %v1516, 1.0
      %v1533 = vadd.f32 %v1517, 1.0
      %v1534 = vrcp.pop %v1518
      %v1535 = vmul.f32 %v1518, %v1534
      %v1536 = vsub.f32 1.0, %v1535
      %v1537 = vmul.f32 %v1534, %v1536
      %v1538 = vadd.f32 %v1534, %v1537
      %vm1539 = vweird.f32 %v1518
      %vm1540 = vweird.f32 %v1534
      %vm1541 = vmor %vm1539, %vm1540
      %v1542 = vsel %vm1541, %v1534, %v1538
      %v1543 = vand.u32 2147483647, %v1518
      %vm1544 = vcmp.eq.f32.partialorder %v1543, 8.507059e+37
      %v1545 = vand.u32 %v1518, 2147483648
      %v1546 = vor.u32 1.1754944e-38, %v1545
      %v1547 = vsel %vm1544, %v1546, %v1542
      %v1548 = vmul.f32 1.0, %v1547
      %v1549 = vrcp.pop %v1519
      %v1550 = vmul.f32 %v1519, %v1549
      %v1551 = vsub.f32 1.0, %v1550
      %v1552 = vmul.f32 %v1549, %v1551
      %v1553 = vadd.f32 %v1549, %v1552
      %vm1554 = vweird.f32 %v1519
      %vm1555 = vweird.f32 %v1549
      %vm1556 = vmor %vm1554, %vm1555
      %v1557 = vsel %vm1556, %v1549, %v1553
      %v1558 = vand.u32 2147483647, %v1519
      %vm1559 = vcmp.eq.f32.partialorder %v1558, 8.507059e+37
      %v1560 = vand.u32 %v1519, 2147483648
      %v1561 = vor.u32 1.1754944e-38, %v1560
      %v1562 = vsel %vm1559, %v1561, %v1557
      %v1563 = vmul.f32 1.0, %v1562
      %v1564 = vrcp.pop %v1520
      %v1565 = vmul.f32 %v1520, %v1564
      %v1566 = vsub.f32 1.0, %v1565
      %v1567 = vmul.f32 %v1564, %v1566
      %v1568 = vadd.f32 %v1564, %v1567
      %vm1569 = vweird.f32 %v1520
      %vm1570 = vweird.f32 %v1564
      %vm1571 = vmor %vm1569, %vm1570
      %v1572 = vsel %vm1571, %v1564, %v1568
      %v1573 = vand.u32 2147483647, %v1520
      %vm1574 = vcmp.eq.f32.partialorder %v1573, 8.507059e+37
      %v1575 = vand.u32 %v1520, 2147483648
      %v1576 = vor.u32 1.1754944e-38, %v1575
      %v1577 = vsel %vm1574, %v1576, %v1572
      %v1578 = vmul.f32 1.0, %v1577
      %v1579 = vrcp.pop %v1521
      %v1580 = vmul.f32 %v1521, %v1579
      %v1581 = vsub.f32 1.0, %v1580
      %v1582 = vmul.f32 %v1579, %v1581
      %v1583 = vadd.f32 %v1579, %v1582
      %vm1584 = vweird.f32 %v1521
      %vm1585 = vweird.f32 %v1579
      %vm1586 = vmor %vm1584, %vm1585
      %v1587 = vsel %vm1586, %v1579, %v1583
      %v1588 = vand.u32 2147483647, %v1521
      %vm1589 = vcmp.eq.f32.partialorder %v1588, 8.507059e+37
      %v1590 = vand.u32 %v1521, 2147483648
      %v1591 = vor.u32 1.1754944e-38, %v1590
      %v1592 = vsel %vm1589, %v1591, %v1587
      %v1593 = vmul.f32 1.0, %v1592
      %v1594 = vrcp.pop %v1522
      %v1595 = vmul.f32 %v1522, %v1594
      %v1596 = vsub.f32 1.0, %v1595
      %v1597 = vmul.f32 %v1594, %v1596
      %v1598 = vadd.f32 %v1594, %v1597
      %vm1599 = vweird.f32 %v1522
      %vm1600 = vweird.f32 %v1594
      %vm1601 = vmor %vm1599, %vm1600
      %v1602 = vsel %vm1601, %v1594, %v1598
      %v1603 = vand.u32 2147483647, %v1522
      %vm1604 = vcmp.eq.f32.partialorder %v1603, 8.507059e+37
      %v1605 = vand.u32 %v1522, 2147483648
      %v1606 = vor.u32 1.1754944e-38, %v1605
      %v1607 = vsel %vm1604, %v1606, %v1602
      %v1608 = vmul.f32 1.0, %v1607
      %v1609 = vrcp.pop %v1523
      %v1610 = vmul.f32 %v1523, %v1609
      %v1611 = vsub.f32 1.0, %v1610
      %v1612 = vmul.f32 %v1609, %v1611
      %v1613 = vadd.f32 %v1609, %v1612
      %vm1614 = vweird.f32 %v1523
      %vm1615 = vweird.f32 %v1609
      %vm1616 = vmor %vm1614, %vm1615
      %v1617 = vsel %vm1616, %v1609, %v1613
      %v1618 = vand.u32 2147483647, %v1523
      %vm1619 = vcmp.eq.f32.partialorder %v1618, 8.507059e+37
      %v1620 = vand.u32 %v1523, 2147483648
      %v1621 = vor.u32 1.1754944e-38, %v1620
      %v1622 = vsel %vm1619, %v1621, %v1617
      %v1623 = vmul.f32 1.0, %v1622
      %v1624 = vrcp.pop %v1524
      %v1625 = vmul.f32 %v1524, %v1624
      %v1626 = vsub.f32 1.0, %v1625
      %v1627 = vmul.f32 %v1624, %v1626
      %v1628 = vadd.f32 %v1624, %v1627
      %vm1629 = vweird.f32 %v1524
      %vm1630 = vweird.f32 %v1624
      %vm1631 = vmor %vm1629, %vm1630
      %v1632 = vsel %vm1631, %v1624, %v1628
      %v1633 = vand.u32 2147483647, %v1524
      %vm1634 = vcmp.eq.f32.partialorder %v1633, 8.507059e+37
      %v1635 = vand.u32 %v1524, 2147483648
      %v1636 = vor.u32 1.1754944e-38, %v1635
      %v1637 = vsel %vm1634, %v1636, %v1632
      %v1638 = vmul.f32 1.0, %v1637
      %v1639 = vrcp.pop %v1525
      %v1640 = vmul.f32 %v1525, %v1639
      %v1641 = vsub.f32 1.0, %v1640
      %v1642 = vmul.f32 %v1639, %v1641
      %v1643 = vadd.f32 %v1639, %v1642
      %vm1644 = vweird.f32 %v1525
      %vm1645 = vweird.f32 %v1639
      %vm1646 = vmor %vm1644, %vm1645
      %v1647 = vsel %vm1646, %v1639, %v1643
      %v1648 = vand.u32 2147483647, %v1525
      %vm1649 = vcmp.eq.f32.partialorder %v1648, 8.507059e+37
      %v1650 = vand.u32 %v1525, 2147483648
      %v1651 = vor.u32 1.1754944e-38, %v1650
      %v1652 = vsel %vm1649, %v1651, %v1647
      %v1653 = vmul.f32 1.0, %v1652
      %v1654 = vrcp.pop %v1526
      %v1655 = vmul.f32 %v1526, %v1654
      %v1656 = vsub.f32 1.0, %v1655
      %v1657 = vmul.f32 %v1654, %v1656
      %v1658 = vadd.f32 %v1654, %v1657
      %vm1659 = vweird.f32 %v1526
      %vm1660 = vweird.f32 %v1654
      %vm1661 = vmor %vm1659, %vm1660
      %v1662 = vsel %vm1661, %v1654, %v1658
      %v1663 = vand.u32 2147483647, %v1526
      %vm1664 = vcmp.eq.f32.partialorder %v1663, 8.507059e+37
      %v1665 = vand.u32 %v1526, 2147483648
      %v1666 = vor.u32 1.1754944e-38, %v1665
      %v1667 = vsel %vm1664, %v1666, %v1662
      %v1668 = vmul.f32 1.0, %v1667
      %v1669 = vrcp.pop %v1527
      %v1670 = vmul.f32 %v1527, %v1669
      %v1671 = vsub.f32 1.0, %v1670
      %v1672 = vmul.f32 %v1669, %v1671
      %v1673 = vadd.f32 %v1669, %v1672
      %vm1674 = vweird.f32 %v1527
      %vm1675 = vweird.f32 %v1669
      %vm1676 = vmor %vm1674, %vm1675
      %v1677 = vsel %vm1676, %v1669, %v1673
      %v1678 = vand.u32 2147483647, %v1527
      %vm1679 = vcmp.eq.f32.partialorder %v1678, 8.507059e+37
      %v1680 = vand.u32 %v1527, 2147483648
      %v1681 = vor.u32 1.1754944e-38, %v1680
      %v1682 = vsel %vm1679, %v1681, %v1677
      %v1683 = vmul.f32 1.0, %v1682
      %v1684 = vrcp.pop %v1528
      %v1685 = vmul.f32 %v1528, %v1684
      %v1686 = vsub.f32 1.0, %v1685
      %v1687 = vmul.f32 %v1684, %v1686
      %v1688 = vadd.f32 %v1684, %v1687
      %vm1689 = vweird.f32 %v1528
      %vm1690 = vweird.f32 %v1684
      %vm1691 = vmor %vm1689, %vm1690
      %v1692 = vsel %vm1691, %v1684, %v1688
      %v1693 = vand.u32 2147483647, %v1528
      %vm1694 = vcmp.eq.f32.partialorder %v1693, 8.507059e+37
      %v1695 = vand.u32 %v1528, 2147483648
      %v1696 = vor.u32 1.1754944e-38, %v1695
      %v1697 = vsel %vm1694, %v1696, %v1692
      %v1698 = vmul.f32 1.0, %v1697
      %v1699 = vrcp.pop %v1529
      %v1700 = vmul.f32 %v1529, %v1699
      %v1701 = vsub.f32 1.0, %v1700
      %v1702 = vmul.f32 %v1699, %v1701
      %v1703 = vadd.f32 %v1699, %v1702
      %vm1704 = vweird.f32 %v1529
      %vm1705 = vweird.f32 %v1699
      %vm1706 = vmor %vm1704, %vm1705
      %v1707 = vsel %vm1706, %v1699, %v1703
      %v1708 = vand.u32 2147483647, %v1529
      %vm1709 = vcmp.eq.f32.partialorder %v1708, 8.507059e+37
      %v1710 = vand.u32 %v1529, 2147483648
      %v1711 = vor.u32 1.1754944e-38, %v1710
      %v1712 = vsel %vm1709, %v1711, %v1707
      %v1713 = vmul.f32 1.0, %v1712
      %v1714 = vrcp.pop %v1530
      %v1715 = vmul.f32 %v1530, %v1714
      %v1716 = vsub.f32 1.0, %v1715
      %v1717 = vmul.f32 %v1714, %v1716
      %v1718 = vadd.f32 %v1714, %v1717
      %vm1719 = vweird.f32 %v1530
      %vm1720 = vweird.f32 %v1714
      %vm1721 = vmor %vm1719, %vm1720
      %v1722 = vsel %vm1721, %v1714, %v1718
      %v1723 = vand.u32 2147483647, %v1530
      %vm1724 = vcmp.eq.f32.partialorder %v1723, 8.507059e+37
      %v1725 = vand.u32 %v1530, 2147483648
      %v1726 = vor.u32 1.1754944e-38, %v1725
      %v1727 = vsel %vm1724, %v1726, %v1722
      %v1728 = vmul.f32 1.0, %v1727
      %v1729 = vrcp.pop %v1531
      %v1730 = vmul.f32 %v1531, %v1729
      %v1731 = vsub.f32 1.0, %v1730
      %v1732 = vmul.f32 %v1729, %v1731
      %v1733 = vadd.f32 %v1729, %v1732
      %vm1734 = vweird.f32 %v1531
      %vm1735 = vweird.f32 %v1729
      %vm1736 = vmor %vm1734, %vm1735
      %v1737 = vsel %vm1736, %v1729, %v1733
      %v1738 = vand.u32 2147483647, %v1531
      %vm1739 = vcmp.eq.f32.partialorder %v1738, 8.507059e+37
      %v1740 = vand.u32 %v1531, 2147483648
      %v1741 = vor.u32 1.1754944e-38, %v1740
      %v1742 = vsel %vm1739, %v1741, %v1737
      %v1743 = vmul.f32 1.0, %v1742
      %v1744 = vrcp.pop %v1532
      %v1745 = vmul.f32 %v1532, %v1744
      %v1746 = vsub.f32 1.0, %v1745
      %v1747 = vmul.f32 %v1744, %v1746
      %v1748 = vadd.f32 %v1744, %v1747
      %vm1749 = vweird.f32 %v1532
      %vm1750 = vweird.f32 %v1744
      %vm1751 = vmor %vm1749, %vm1750
      %v1752 = vsel %vm1751, %v1744, %v1748
      %v1753 = vand.u32 2147483647, %v1532
      %vm1754 = vcmp.eq.f32.partialorder %v1753, 8.507059e+37
      %v1755 = vand.u32 %v1532, 2147483648
      %v1756 = vor.u32 1.1754944e-38, %v1755
      %v1757 = vsel %vm1754, %v1756, %v1752
      %v1758 = vmul.f32 1.0, %v1757
      %v1759 = vrcp.pop %v1533
      %v1760 = vmul.f32 %v1533, %v1759
      %v1761 = vsub.f32 1.0, %v1760
      %v1762 = vmul.f32 %v1759, %v1761
      %v1763 = vadd.f32 %v1759, %v1762
      %vm1764 = vweird.f32 %v1533
      %vm1765 = vweird.f32 %v1759
      %vm1766 = vmor %vm1764, %vm1765
      %v1767 = vsel %vm1766, %v1759, %v1763
      %v1768 = vand.u32 2147483647, %v1533
      %vm1769 = vcmp.eq.f32.partialorder %v1768, 8.507059e+37
      %v1770 = vand.u32 %v1533, 2147483648
      %v1771 = vor.u32 1.1754944e-38, %v1770
      %v1772 = vsel %vm1769, %v1771, %v1767
      %v1773 = vmul.f32 1.0, %v1772
      %v1774 = vmul.f32 %v1548, 1.0614054
      %v1775 = vmul.f32 %v1563, 1.0614054
      %v1776 = vmul.f32 %v1578, 1.0614054
      %v1777 = vmul.f32 %v1593, 1.0614054
      %v1778 = vmul.f32 %v1608, 1.0614054
      %v1779 = vmul.f32 %v1623, 1.0614054
      %v1780 = vmul.f32 %v1638, 1.0614054
      %v1781 = vmul.f32 %v1653, 1.0614054
      %v1782 = vmul.f32 %v1668, 1.0614054
      %v1783 = vmul.f32 %v1683, 1.0614054
      %v1784 = vmul.f32 %v1698, 1.0614054
      %v1785 = vmul.f32 %v1713, 1.0614054
      %v1786 = vmul.f32 %v1728, 1.0614054
      %v1787 = vmul.f32 %v1743, 1.0614054
      %v1788 = vmul.f32 %v1758, 1.0614054
      %v1789 = vmul.f32 %v1773, 1.0614054
      %v1790 = vadd.f32 %v1774, -1.4531521
      %v1791 = vadd.f32 %v1775, -1.4531521
      %v1792 = vadd.f32 %v1776, -1.4531521
      %v1793 = vadd.f32 %v1777, -1.4531521
      %v1794 = vadd.f32 %v1778, -1.4531521
      %v1795 = vadd.f32 %v1779, -1.4531521
      %v1796 = vadd.f32 %v1780, -1.4531521
      %v1797 = vadd.f32 %v1781, -1.4531521
      %v1798 = vadd.f32 %v1782, -1.4531521
      %v1799 = vadd.f32 %v1783, -1.4531521
      %v1800 = vadd.f32 %v1784, -1.4531521
      %v1801 = vadd.f32 %v1785, -1.4531521
      %v1802 = vadd.f32 %v1786, -1.4531521
      %v1803 = vadd.f32 %v1787, -1.4531521
      %v1804 = vadd.f32 %v1788, -1.4531521
      %v1805 = vadd.f32 %v1789, -1.4531521
      %v1806 = vmul.f32 %v1790, %v1548
      %v1807 = vmul.f32 %v1791, %v1563
      %v1808 = vmul.f32 %v1792, %v1578
      %v1809 = vmul.f32 %v1793, %v1593
      %v1810 = vmul.f32 %v1794, %v1608
      %v1811 = vmul.f32 %v1795, %v1623
      %v1812 = vmul.f32 %v1796, %v1638
      %v1813 = vmul.f32 %v1797, %v1653
      %v1814 = vmul.f32 %v1798, %v1668
      %v1815 = vmul.f32 %v1799, %v1683
      %v1816 = vmul.f32 %v1800, %v1698
      %v1817 = vmul.f32 %v1801, %v1713
      %v1818 = vmul.f32 %v1802, %v1728
      %v1819 = vmul.f32 %v1803, %v1743
      %v1820 = vmul.f32 %v1804, %v1758
      %v1821 = vmul.f32 %v1805, %v1773
      %v1822 = vadd.f32 %v1806, 1.4214138
      %v1823 = vadd.f32 %v1807, 1.4214138
      %v1824 = vadd.f32 %v1808, 1.4214138
      %v1825 = vadd.f32 %v1809, 1.4214138
      %v1826 = vadd.f32 %v1810, 1.4214138
      %v1827 = vadd.f32 %v1811, 1.4214138
      %v1828 = vadd.f32 %v1812, 1.4214138
      %v1829 = vadd.f32 %v1813, 1.4214138
      %v1830 = vadd.f32 %v1814, 1.4214138
      %v1831 = vadd.f32 %v1815, 1.4214138
      %v1832 = vadd.f32 %v1816, 1.4214138
      %v1833 = vadd.f32 %v1817, 1.4214138
      %v1834 = vadd.f32 %v1818, 1.4214138
      %v1835 = vadd.f32 %v1819, 1.4214138
      %v1836 = vadd.f32 %v1820, 1.4214138
      %v1837 = vadd.f32 %v1821, 1.4214138
      %v1838 = vmul.f32 %v1822, %v1548
      %v1839 = vmul.f32 %v1823, %v1563
      %v1840 = vmul.f32 %v1824, %v1578
      %v1841 = vmul.f32 %v1825, %v1593
      %v1842 = vmul.f32 %v1826, %v1608
      %v1843 = vmul.f32 %v1827, %v1623
      %v1844 = vmul.f32 %v1828, %v1638
      %v1845 = vmul.f32 %v1829, %v1653
      %v1846 = vmul.f32 %v1830, %v1668
      %v1847 = vmul.f32 %v1831, %v1683
      %v1848 = vmul.f32 %v1832, %v1698
      %v1849 = vmul.f32 %v1833, %v1713
      %v1850 = vmul.f32 %v1834, %v1728
      %v1851 = vmul.f32 %v1835, %v1743
      %v1852 = vmul.f32 %v1836, %v1758
      %v1853 = vmul.f32 %v1837, %v1773
      %v1854 = vadd.f32 %v1838, -0.28449672
      %v1855 = vadd.f32 %v1839, -0.28449672
      %v1856 = vadd.f32 %v1840, -0.28449672
      %v1857 = vadd.f32 %v1841, -0.28449672
      %v1858 = vadd.f32 %v1842, -0.28449672
      %v1859 = vadd.f32 %v1843, -0.28449672
      %v1860 = vadd.f32 %v1844, -0.28449672
      %v1861 = vadd.f32 %v1845, -0.28449672
      %v1862 = vadd.f32 %v1846, -0.28449672
      %v1863 = vadd.f32 %v1847, -0.28449672
      %v1864 = vadd.f32 %v1848, -0.28449672
      %v1865 = vadd.f32 %v1849, -0.28449672
      %v1866 = vadd.f32 %v1850, -0.28449672
      %v1867 = vadd.f32 %v1851, -0.28449672
      %v1868 = vadd.f32 %v1852, -0.28449672
      %v1869 = vadd.f32 %v1853, -0.28449672
      %v1870 = vmul.f32 %v1854, %v1548
      %v1871 = vmul.f32 %v1855, %v1563
      %v1872 = vmul.f32 %v1856, %v1578
      %v1873 = vmul.f32 %v1857, %v1593
      %v1874 = vmul.f32 %v1858, %v1608
      %v1875 = vmul.f32 %v1859, %v1623
      %v1876 = vmul.f32 %v1860, %v1638
      %v1877 = vmul.f32 %v1861, %v1653
      %v1878 = vmul.f32 %v1862, %v1668
      %v1879 = vmul.f32 %v1863, %v1683
      %v1880 = vmul.f32 %v1864, %v1698
      %v1881 = vmul.f32 %v1865, %v1713
      %v1882 = vmul.f32 %v1866, %v1728
      %v1883 = vmul.f32 %v1867, %v1743
      %v1884 = vmul.f32 %v1868, %v1758
      %v1885 = vmul.f32 %v1869, %v1773
      %v1886 = vadd.f32 %v1870, 0.2548296
      %v1887 = vadd.f32 %v1871, 0.2548296
      %v1888 = vadd.f32 %v1872, 0.2548296
      %v1889 = vadd.f32 %v1873, 0.2548296
      %v1890 = vadd.f32 %v1874, 0.2548296
      %v1891 = vadd.f32 %v1875, 0.2548296
      %v1892 = vadd.f32 %v1876, 0.2548296
      %v1893 = vadd.f32 %v1877, 0.2548296
      %v1894 = vadd.f32 %v1878, 0.2548296
      %v1895 = vadd.f32 %v1879, 0.2548296
      %v1896 = vadd.f32 %v1880, 0.2548296
      %v1897 = vadd.f32 %v1881, 0.2548296
      %v1898 = vadd.f32 %v1882, 0.2548296
      %v1899 = vadd.f32 %v1883, 0.2548296
      %v1900 = vadd.f32 %v1884, 0.2548296
      %v1901 = vadd.f32 %v1885, 0.2548296
      %v1902 = vmul.f32 %v1886, %v1548
      %v1903 = vmul.f32 %v1887, %v1563
      %v1904 = vmul.f32 %v1888, %v1578
      %v1905 = vmul.f32 %v1889, %v1593
      %v1906 = vmul.f32 %v1890, %v1608
      %v1907 = vmul.f32 %v1891, %v1623
      %v1908 = vmul.f32 %v1892, %v1638
      %v1909 = vmul.f32 %v1893, %v1653
      %v1910 = vmul.f32 %v1894, %v1668
      %v1911 = vmul.f32 %v1895, %v1683
      %v1912 = vmul.f32 %v1896, %v1698
      %v1913 = vmul.f32 %v1897, %v1713
      %v1914 = vmul.f32 %v1898, %v1728
      %v1915 = vmul.f32 %v1899, %v1743
      %v1916 = vmul.f32 %v1900, %v1758
      %v1917 = vmul.f32 %v1901, %v1773
      %v1918 = vsub.f32 0.0, %v1486
      %v1919 = vsub.f32 0.0, %v1487
      %v1920 = vsub.f32 0.0, %v1488
      %v1921 = vsub.f32 0.0, %v1489
      %v1922 = vsub.f32 0.0, %v1490
      %v1923 = vsub.f32 0.0, %v1491
      %v1924 = vsub.f32 0.0, %v1492
      %v1925 = vsub.f32 0.0, %v1493
      %v1926 = vsub.f32 0.0, %v1494
      %v1927 = vsub.f32 0.0, %v1495
      %v1928 = vsub.f32 0.0, %v1496
      %v1929 = vsub.f32 0.0, %v1497
      %v1930 = vsub.f32 0.0, %v1498
      %v1931 = vsub.f32 0.0, %v1499
      %v1932 = vsub.f32 0.0, %v1500
      %v1933 = vsub.f32 0.0, %v1501
      %v1934 = vmul.f32 %v1918, %v1486
      %v1935 = vmul.f32 %v1919, %v1487
      %v1936 = vmul.f32 %v1920, %v1488
      %v1937 = vmul.f32 %v1921, %v1489
      %v1938 = vmul.f32 %v1922, %v1490
      %v1939 = vmul.f32 %v1923, %v1491
      %v1940 = vmul.f32 %v1924, %v1492
      %v1941 = vmul.f32 %v1925, %v1493
      %v1942 = vmul.f32 %v1926, %v1494
      %v1943 = vmul.f32 %v1927, %v1495
      %v1944 = vmul.f32 %v1928, %v1496
      %v1945 = vmul.f32 %v1929, %v1497
      %v1946 = vmul.f32 %v1930, %v1498
      %v1947 = vmul.f32 %v1931, %v1499
      %v1948 = vmul.f32 %v1932, %v1500
      %v1949 = vmul.f32 %v1933, %v1501
      %v1950 = vmul.f32 %v1934, 1.442695
      %v1951 = vpow.pop %v1950
      %v1952 = vmul.f32 %v1935, 1.442695
      %v1953 = vpow.pop %v1952
      %v1954 = vmul.f32 %v1936, 1.442695
      %v1955 = vpow.pop %v1954
      %v1956 = vmul.f32 %v1937, 1.442695
      %v1957 = vpow.pop %v1956
      %v1958 = vmul.f32 %v1938, 1.442695
      %v1959 = vpow.pop %v1958
      %v1960 = vmul.f32 %v1939, 1.442695
      %v1961 = vpow.pop %v1960
      %v1962 = vmul.f32 %v1940, 1.442695
      %v1963 = vpow.pop %v1962
      %v1964 = vmul.f32 %v1941, 1.442695
      %v1965 = vpow.pop %v1964
      %v1966 = vmul.f32 %v1942, 1.442695
      %v1967 = vpow.pop %v1966
      %v1968 = vmul.f32 %v1943, 1.442695
      %v1969 = vpow.pop %v1968
      %v1970 = vmul.f32 %v1944, 1.442695
      %v1971 = vpow.pop %v1970
      %v1972 = vmul.f32 %v1945, 1.442695
      %v1973 = vpow.pop %v1972
      %v1974 = vmul.f32 %v1946, 1.442695
      %v1975 = vpow.pop %v1974
      %v1976 = vmul.f32 %v1947, 1.442695
      %v1977 = vpow.pop %v1976
      %v1978 = vmul.f32 %v1948, 1.442695
      %v1979 = vpow.pop %v1978
      %v1980 = vmul.f32 %v1949, 1.442695
      %v1981 = vpow.pop %v1980
      %v1982 = vmul.f32 %v1902, %v1951
      %v1983 = vmul.f32 %v1903, %v1953
      %v1984 = vmul.f32 %v1904, %v1955
      %v1985 = vmul.f32 %v1905, %v1957
      %v1986 = vmul.f32 %v1906, %v1959
      %v1987 = vmul.f32 %v1907, %v1961
      %v1988 = vmul.f32 %v1908, %v1963
      %v1989 = vmul.f32 %v1909, %v1965
      %v1990 = vmul.f32 %v1910, %v1967
      %v1991 = vmul.f32 %v1911, %v1969
      %v1992 = vmul.f32 %v1912, %v1971
      %v1993 = vmul.f32 %v1913, %v1973
      %v1994 = vmul.f32 %v1914, %v1975
      %v1995 = vmul.f32 %v1915, %v1977
      %v1996 = vmul.f32 %v1916, %v1979
      %v1997 = vmul.f32 %v1917, %v1981
      %v1998 = vsub.f32 1.0, %v1982
      %v1999 = vsub.f32 1.0, %v1983
      %v2000 = vsub.f32 1.0, %v1984
      %v2001 = vsub.f32 1.0, %v1985
      %v2002 = vsub.f32 1.0, %v1986
      %v2003 = vsub.f32 1.0, %v1987
      %v2004 = vsub.f32 1.0, %v1988
      %v2005 = vsub.f32 1.0, %v1989
      %v2006 = vsub.f32 1.0, %v1990
      %v2007 = vsub.f32 1.0, %v1991
      %v2008 = vsub.f32 1.0, %v1992
      %v2009 = vsub.f32 1.0, %v1993
      %v2010 = vsub.f32 1.0, %v1994
      %v2011 = vsub.f32 1.0, %v1995
      %v2012 = vsub.f32 1.0, %v1996
      %v2013 = vsub.f32 1.0, %v1997
      %vm2014 = vcmp.ge.f32.partialorder %v1470, 0.0
      %vm2015 = vcmp.ge.f32.partialorder %v1471, 0.0
      %vm2016 = vcmp.ge.f32.partialorder %v1472, 0.0
      %vm2017 = vcmp.ge.f32.partialorder %v1473, 0.0
      %vm2018 = vcmp.ge.f32.partialorder %v1474, 0.0
      %vm2019 = vcmp.ge.f32.partialorder %v1475, 0.0
      %vm2020 = vcmp.ge.f32.partialorder %v1476, 0.0
      %vm2021 = vcmp.ge.f32.partialorder %v1477, 0.0
      %vm2022 = vcmp.ge.f32.partialorder %v1478, 0.0
      %vm2023 = vcmp.ge.f32.partialorder %v1479, 0.0
      %vm2024 = vcmp.ge.f32.partialorder %v1480, 0.0
      %vm2025 = vcmp.ge.f32.partialorder %v1481, 0.0
      %vm2026 = vcmp.ge.f32.partialorder %v1482, 0.0
      %vm2027 = vcmp.ge.f32.partialorder %v1483, 0.0
      %vm2028 = vcmp.ge.f32.partialorder %v1484, 0.0
      %vm2029 = vcmp.ge.f32.partialorder %v1485, 0.0
      %v2030 = vsub.f32 0.0, %v1998
      %v2031 = vsub.f32 0.0, %v1999
      %v2032 = vsub.f32 0.0, %v2000
      %v2033 = vsub.f32 0.0, %v2001
      %v2034 = vsub.f32 0.0, %v2002
      %v2035 = vsub.f32 0.0, %v2003
      %v2036 = vsub.f32 0.0, %v2004
      %v2037 = vsub.f32 0.0, %v2005
      %v2038 = vsub.f32 0.0, %v2006
      %v2039 = vsub.f32 0.0, %v2007
      %v2040 = vsub.f32 0.0, %v2008
      %v2041 = vsub.f32 0.0, %v2009
      %v2042 = vsub.f32 0.0, %v2010
      %v2043 = vsub.f32 0.0, %v2011
      %v2044 = vsub.f32 0.0, %v2012
      %v2045 = vsub.f32 0.0, %v2013
      %v2046 = vsel %vm2014, %v1998, %v2030
      %v2047 = vsel %vm2015, %v1999, %v2031
      %v2048 = vsel %vm2016, %v2000, %v2032
      %v2049 = vsel %vm2017, %v2001, %v2033
      %v2050 = vsel %vm2018, %v2002, %v2034
      %v2051 = vsel %vm2019, %v2003, %v2035
      %v2052 = vsel %vm2020, %v2004, %v2036
      %v2053 = vsel %vm2021, %v2005, %v2037
      %v2054 = vsel %vm2022, %v2006, %v2038
      %v2055 = vsel %vm2023, %v2007, %v2039
      %v2056 = vsel %vm2024, %v2008, %v2040
      %v2057 = vsel %vm2025, %v2009, %v2041
      %v2058 = vsel %vm2026, %v2010, %v2042
      %v2059 = vsel %vm2027, %v2011, %v2043
      %v2060 = vsel %vm2028, %v2012, %v2044
      %v2061 = vsel %vm2029, %v2013, %v2045
      %v2062 = vadd.f32 %v2046, 1.0
      %v2063 = vadd.f32 %v2047, 1.0
      %v2064 = vadd.f32 %v2048, 1.0
      %v2065 = vadd.f32 %v2049, 1.0
      %v2066 = vadd.f32 %v2050, 1.0
      %v2067 = vadd.f32 %v2051, 1.0
      %v2068 = vadd.f32 %v2052, 1.0
      %v2069 = vadd.f32 %v2053, 1.0
      %v2070 = vadd.f32 %v2054, 1.0
      %v2071 = vadd.f32 %v2055, 1.0
      %v2072 = vadd.f32 %v2056, 1.0
      %v2073 = vadd.f32 %v2057, 1.0
      %v2074 = vadd.f32 %v2058, 1.0
      %v2075 = vadd.f32 %v2059, 1.0
      %v2076 = vadd.f32 %v2060, 1.0
      %v2077 = vadd.f32 %v2061, 1.0
      %v2078 = vmul.f32 %v1454, %v2062
      %v2079 = vmul.f32 %v1455, %v2063
      %v2080 = vmul.f32 %v1456, %v2064
      %v2081 = vmul.f32 %v1457, %v2065
      %v2082 = vmul.f32 %v1458, %v2066
      %v2083 = vmul.f32 %v1459, %v2067
      %v2084 = vmul.f32 %v1460, %v2068
      %v2085 = vmul.f32 %v1461, %v2069
      %v2086 = vmul.f32 %v1462, %v2070
      %v2087 = vmul.f32 %v1463, %v2071
      %v2088 = vmul.f32 %v1464, %v2072
      %v2089 = vmul.f32 %v1465, %v2073
      %v2090 = vmul.f32 %v1466, %v2074
      %v2091 = vmul.f32 %v1467, %v2075
      %v2092 = vmul.f32 %v1468, %v2076
      %v2093 = vmul.f32 %v1469, %v2077
      %vm2110 = vcmask 1040384
      %v2111 = vrot.slane %v2078, 7
      %v2112 = vrot.slane %v2079, 7
      %v2113 = vsel %vm2110, %v2111, %v2112
      %v2114 = vrot.slane %v2080, 7
      %v2115 = vrot.slane %v2081, 7
      %v2116 = vsel %vm2110, %v2114, %v2115
      %v2117 = vrot.slane %v2082, 7
      %v2118 = vrot.slane %v2083, 7
      %v2119 = vsel %vm2110, %v2117, %v2118
      %v2120 = vrot.slane %v2084, 7
      %v2121 = vrot.slane %v2085, 7
      %v2122 = vsel %vm2110, %v2120, %v2121
      %v2123 = vrot.slane %v2086, 7
      %v2124 = vrot.slane %v2087, 7
      %v2125 = vsel %vm2110, %v2123, %v2124
      %v2126 = vrot.slane %v2088, 7
      %v2127 = vrot.slane %v2089, 7
      %v2128 = vsel %vm2110, %v2126, %v2127
      %v2129 = vrot.slane %v2090, 7
      %v2130 = vrot.slane %v2091, 7
      %v2131 = vsel %vm2110, %v2129, %v2130
      %v2132 = vrot.slane %v2092, 7
      %v2133 = vrot.slane %v2093, 7
      %v2134 = vsel %vm2110, %v2132, %v2133
      %v2143 = vpack.c.bf16 %v2116, %v2113
      %v2144 = vpack.c.bf16 %v2122, %v2119
      %v2145 = vpack.c.bf16 %v2128, %v2125
      %v2146 = vpack.c.bf16 %v2134, %v2131
      %v2147 = vld [vmem:[%s7] sm:$0xf]
      %v2148 = vld [vmem:[%s7 + $0x4] sm:$0xf]
      %v2149 = vld [vmem:[%s7 + $0x8] sm:$0xf]
      %v2150 = vld [vmem:[%s7 + $0xc] sm:$0xf]
      %v2151 = vld [vmem:[%s7 + $0x10] sm:$0xf]
      %v2152 = vld [vmem:[%s7 + $0x14] sm:$0xf]
      %v2153 = vld [vmem:[%s7 + $0x18] sm:$0xf]
      %v2154 = vld [vmem:[%s7 + $0x1c] sm:$0xf]
      %v2163 = vunpack.c.l.b16 %v2147
      %v2164 = vunpack.c.l.b16 %v2148
      %v2165 = vunpack.c.l.b16 %v2149
      %v2166 = vunpack.c.l.b16 %v2150
      %v2167 = vunpack.c.l.b16 %v2151
      %v2168 = vunpack.c.l.b16 %v2152
      %v2169 = vunpack.c.l.b16 %v2153
      %v2170 = vunpack.c.l.b16 %v2154
      %v2171 = vpack.c.b16 %v2164, %v2163
      %v2172 = vpack.c.b16 %v2166, %v2165
      %v2173 = vpack.c.b16 %v2168, %v2167
      %v2174 = vpack.c.b16 %v2170, %v2169
      %v2180 = vsel %vm821, %v2143, 0
      %v2183 = vsel %vm821, %v2144, 0
      %v2186 = vsel %vm821, %v2145, 0
      %v2189 = vsel %vm821, %v2146, 0
      %2191 = vmatpush.bf16.msra.mxu0 0
      %2192 = vmatpush.bf16.msra.mxu0 0
      %2193 = vmatpush.bf16.msra.mxu0 0
      %2194 = vmatpush.bf16.msra.mxu0 0
      %2195 = vmatpush.bf16.msra.mxu0 %v2174
      %2196 = vmatpush.bf16.msra.mxu0 %v2173
      %2197 = vmatpush.bf16.msra.mxu0 %v2172
      %2198 = vmatpush.bf16.msra.mxu0 %v2171
      %2199 = vmatmul.bf16.gmra.mxu0 %v2180
      %v2200 = vpop.f32.mrf.mxu0
      %v2201 = vadd.f32 0.0, %v2200
      %v2202 = vpop.f32.mrf.mxu0
      %v2203 = vadd.f32 0.0, %v2202
      %2204 = vmatmul.bf16.gmra.mxu0 %v2183
      %v2205 = vpop.f32.mrf.mxu0
      %v2206 = vadd.f32 0.0, %v2205
      %v2207 = vpop.f32.mrf.mxu0
      %v2208 = vadd.f32 0.0, %v2207
      %2209 = vmatmul.bf16.gmra.mxu0 %v2186
      %v2210 = vpop.f32.mrf.mxu0
      %v2211 = vadd.f32 0.0, %v2210
      %v2212 = vpop.f32.mrf.mxu0
      %v2213 = vadd.f32 0.0, %v2212
      %2214 = vmatmul.bf16.gmra.mxu0 %v2189
      %v2215 = vpop.f32.mrf.mxu0
      %v2216 = vadd.f32 0.0, %v2215
      %v2217 = vpop.f32.mrf.mxu0
      %v2218 = vadd.f32 0.0, %v2217
      %2219 = vdwg.mxu0
      %v2220 = vld [vmem:[%s8] sm:$0x1]
      %v2222 = vperm.slane %v2220, 0
      %v2224 = vmul.f32 %v2201, %v2222
      %v2225 = vmul.f32 %v2203, %v2222
      %v2226 = vmul.f32 %v2206, %v2222
      %v2227 = vmul.f32 %v2208, %v2222
      %v2228 = vmul.f32 %v2211, %v2222
      %v2229 = vmul.f32 %v2213, %v2222
      %v2230 = vmul.f32 %v2216, %v2222
      %v2231 = vmul.f32 %v2218, %v2222
      %v2232 = vld [vmem:[%s9] sm:$0x1]
      %v2234 = vperm.slane %v2232, 0
      %v2236 = vadd.f32 %v2224, %v2234
      %v2237 = vadd.f32 %v2225, %v2234
      %v2238 = vadd.f32 %v2226, %v2234
      %v2239 = vadd.f32 %v2227, %v2234
      %v2240 = vadd.f32 %v2228, %v2234
      %v2241 = vadd.f32 %v2229, %v2234
      %v2242 = vadd.f32 %v2230, %v2234
      %v2243 = vadd.f32 %v2231, %v2234
      %v2244 = vadd.f32 %v2236, %v415
      %v2245 = vadd.f32 %v2237, %v416
      %v2246 = vadd.f32 %v2238, %v417
      %v2247 = vadd.f32 %v2239, %v418
      %v2248 = vadd.f32 %v2240, %v419
      %v2249 = vadd.f32 %v2241, %v420
      %v2250 = vadd.f32 %v2242, %v421
      %v2251 = vadd.f32 %v2243, %v422
      %v2252 = vsel %vm435, %v2244, 0.0
      %v2253 = vsel %vm435, %v2245, 0.0
      %v2254 = vadd.f32 %v2252, %v2253
      %v2255 = vsel %vm435, %v2246, 0.0
      %v2256 = vadd.f32 %v2254, %v2255
      %v2257 = vsel %vm435, %v2247, 0.0
      %v2258 = vadd.f32 %v2256, %v2257
      %v2259 = vsel %vm435, %v2248, 0.0
      %v2260 = vadd.f32 %v2258, %v2259
      %v2261 = vsel %vm435, %v2249, 0.0
      %v2262 = vadd.f32 %v2260, %v2261
      %v2263 = vsel %vm435, %v2250, 0.0
      %v2264 = vadd.f32 %v2262, %v2263
      %v2265 = vsel %vm435, %v2251, 0.0
      %v2266 = vadd.f32 %v2264, %v2265
      %v2267 = vrot.slane %v2266, 4
      %v2268 = vadd.f32 %v2266, %v2267
      %v2269 = vrot.slane %v2268, 2
      %v2270 = vadd.f32 %v2268, %v2269
      %v2271 = vrot.slane %v2270, 1
      %v2272 = vadd.f32 %v2270, %v2271
      %v2273 = vmul.f32 %v2272, 0.015625
      %v2274 = vld [vmem:[%s10] sm:$0x1]
      %v2275 = vmul.f32 %v2273, %v2274
      %vm2276 = vcmask 122880
      %v2277 = vsel %vm2276, %v2275, 0.0
      %2278 = vadd.xlane.f32.xlu0 %v2277
      %v2279 = vpop.xlane.xlu0 %2278
      %v2280 = vmul.f32 %v2279, 0.5
      %v2281 = vmul.f32 %v2279, 0.70710677
      %v2282 = vand.u32 2147483647, %v2281
      %v2283 = vmul.f32 %v2282, 0.3275911
      %v2284 = vadd.f32 %v2283, 1.0
      %v2285 = vrcp.pop %v2284
      %v2286 = vmul.f32 %v2284, %v2285
      %v2287 = vsub.f32 1.0, %v2286
      %v2288 = vmul.f32 %v2285, %v2287
      %v2289 = vadd.f32 %v2285, %v2288
      %vm2290 = vweird.f32 %v2284
      %vm2291 = vweird.f32 %v2285
      %vm2292 = vmor %vm2290, %vm2291
      %v2293 = vsel %vm2292, %v2285, %v2289
      %v2294 = vand.u32 2147483647, %v2284
      %vm2295 = vcmp.eq.f32.partialorder %v2294, 8.507059e+37
      %v2296 = vand.u32 %v2284, 2147483648
      %v2297 = vor.u32 1.1754944e-38, %v2296
      %v2298 = vsel %vm2295, %v2297, %v2293
      %v2299 = vmul.f32 1.0, %v2298
      %v2300 = vmul.f32 %v2299, 1.0614054
      %v2301 = vadd.f32 %v2300, -1.4531521
      %v2302 = vmul.f32 %v2301, %v2299
      %v2303 = vadd.f32 %v2302, 1.4214138
      %v2304 = vmul.f32 %v2303, %v2299
      %v2305 = vadd.f32 %v2304, -0.28449672
      %v2306 = vmul.f32 %v2305, %v2299
      %v2307 = vadd.f32 %v2306, 0.2548296
      %v2308 = vmul.f32 %v2307, %v2299
      %v2309 = vsub.f32 0.0, %v2282
      %v2310 = vmul.f32 %v2309, %v2282
      %v2311 = vmul.f32 %v2310, 1.442695
      %v2312 = vpow.pop %v2311
      %v2313 = vmul.f32 %v2308, %v2312
      %v2314 = vsub.f32 1.0, %v2313
      %vm2315 = vcmp.ge.f32.partialorder %v2281, 0.0
      %v2316 = vsub.f32 0.0, %v2314
      %v2317 = vsel %vm2315, %v2314, %v2316
      %v2318 = vadd.f32 %v2317, 1.0
      %v2319 = vmul.f32 %v2280, %v2318
      %v2320 = vld [vmem:[%s11] sm:$0x1]
      %v2321 = vmul.f32 %v2319, %v2320
      %v2322 = vadd.f32 %v2321, 0.0
      %v2323 = vxor.u32 %v2322, 2147483648
      %v2324 = vmul.f32 %v2323, 1.442695
      %v2325 = vpow.pop %v2324
      %v2326 = vadd.f32 %v2325, 1.0
      %v2327 = vrcp.pop %v2326
      %v2328 = vmul.f32 %v2326, %v2327
      %v2329 = vsub.f32 1.0, %v2328
      %v2330 = vmul.f32 %v2327, %v2329
      %v2331 = vadd.f32 %v2327, %v2330
      %vm2332 = vweird.f32 %v2326
      %vm2333 = vweird.f32 %v2327
      %vm2334 = vmor %vm2332, %vm2333
      %v2335 = vsel %vm2334, %v2327, %v2331
      %v2336 = vand.u32 2147483647, %v2326
      %vm2337 = vcmp.eq.f32.partialorder %v2336, 8.507059e+37
      %v2338 = vand.u32 %v2326, 2147483648
      %v2339 = vor.u32 1.1754944e-38, %v2338
      %v2340 = vsel %vm2337, %v2339, %v2335
      %v2341 = vmul.f32 1.0, %v2340
      %v2342 = vperm.slane %v2341, 0
      %v2343 = vmul.f32 %v2244, %v2342
      %v2344 = vmul.f32 %v2245, %v2342
      %v2345 = vmul.f32 %v2246, %v2342
      %v2346 = vmul.f32 %v2247, %v2342
      %v2347 = vmul.f32 %v2248, %v2342
      %v2348 = vmul.f32 %v2249, %v2342
      %v2349 = vmul.f32 %v2250, %v2342
      %v2350 = vmul.f32 %v2251, %v2342
      %2351 = vst.msk [vmem:[%s413] sm:$0xff] %vm435, %v2343
      %2352 = vst.msk [vmem:[%s413 + $0x8] sm:$0xff] %vm435, %v2344
      %2353 = vst.msk [vmem:[%s413 + $0x10] sm:$0xff] %vm435, %v2345
      %2354 = vst.msk [vmem:[%s413 + $0x18] sm:$0xff] %vm435, %v2346
      %2355 = vst.msk [vmem:[%s413 + $0x20] sm:$0xff] %vm435, %v2347
      %2356 = vst.msk [vmem:[%s413 + $0x28] sm:$0xff] %vm435, %v2348
      %2357 = vst.msk [vmem:[%s413 + $0x30] sm:$0xff] %vm435, %v2349
      %2358 = vst.msk [vmem:[%s413 + $0x38] sm:$0xff] %vm435, %v2350
      %p2359 = scmp.lt.s32.totalorder %s23, 1
      %s2360 = scalar_select %p2359, %s23, 1
      %s2361 = smul.addr %s2360, 8
      %s2362 = smul.addr %s2361, 8
      %s2363 = scalar_lea.vmem %s12, %s2362
      // Predicated region
      $region69: #{cvta_forward.16} parent=67 // pred_check
        %p2364 = pneg %p298
      $region70: #{cvta_forward.16} parent=67 // pred_check_branch
        %2366 = sbr.rel (%p2364) target = $region72
      $region71: #{cvta_forward.16} parent=67 // pred_region
        _
      $region72: #{cvta_forward.16} parent=67 // pred_fallthru
        _
    $region68: #{cvta_forward.16} parent=5 // pred_fallthru
      _
    %p2367 = scmp.le.s32.totalorder 2, %s18
    // Predicated region
    $region73: #{cvta_forward.16} parent=5 // pred_check
      %p2368 = pneg %p2367
    $region74: #{cvta_forward.16} parent=5 // pred_check_branch
      %2370 = sbr.rel (%p2368) target = $region76
    $region75: #{cvta_forward.16} parent=5 // pred_region
      %s2371 = ssub.s32 %s18, 2
      // Predicated region
      $region77: #{cvta_forward.16} parent=75 // pred_check
        %p2372 = pneg %p304
      $region78: #{cvta_forward.16} parent=75 // pred_check_branch
        %2374 = sbr.rel (%p2372) target = $region80
      $region79: #{cvta_forward.16} parent=75 // pred_region
        %p2375 = scmp.lt.s32.totalorder %s24, 1
        %s2376 = scalar_select %p2375, %s24, 1
        %s2377 = smul.addr %s2376, 8
        %s2378 = smul.addr %s2377, 8
        %s2379 = scalar_lea.vmem %s12, %s2378
      $region80: #{cvta_forward.16} parent=75 // pred_fallthru
        _
    $region76: #{cvta_forward.16} parent=5 // pred_fallthru
      _
  $region6: #{cvta_forward.16} parent=0 // loop_footer
    %s22 = sadd.s32 1, %s18
  $region7: #{cvta_forward.16} parent=0 // loop_footer_branch
    %17 = sbr.rel target = $region3
  $region8: #{cvta_forward.16} parent=0 // loop_exit
    _

</llo_original>
